<compile_context>
chip_gen: v5e
topology: v5e:2x2
jax: 0.10.0
libtpu: 0.0.40
codegen_flags: <defaults>
</compile_context>

<pallas_src>
import itertools
import numpy as np

import jax
import jax.numpy as jnp
from jax import lax
from jax.experimental import pallas as pl
from jax.experimental.pallas import tpu as pltpu

# ---------------- TinyViTBlock hyper-parameters (small, self-consistent) ----------------
DIM        = 64                      # embedding channels
NUM_HEADS  = 4
HEAD_DIM   = DIM // NUM_HEADS        # key_dim == d (attn_ratio = 1)
WINDOW     = 8                       # window_size
H_RES, W_RES = 16, 16                # input_resolution
N_WIN_H, N_WIN_W = H_RES // WINDOW, W_RES // WINDOW
N_WIN      = N_WIN_H * N_WIN_W       # 4 windows
WIN_TOK    = WINDOW * WINDOW         # 64 tokens / window
BATCH      = 2
MLP_RATIO  = 4.0
MLP_HIDDEN = int(DIM * MLP_RATIO)
LOCAL_CONV = 3                       # local_conv_size (depthwise, pad=1)
SCALE      = HEAD_DIM ** -0.5
N_TOK      = H_RES * W_RES           # tokens per image
LN_EPS     = 1e-5
BN_EPS     = 1e-5
PAD_W      = 32                      # padded scratch width for the depthwise conv
W_OFF      = 8                       # sublane-aligned column offset of the image in the scratch


# ---------------- static table: per-window relative-position-bias index -----------------
def _build_window_bias_index(ws):
    points = list(itertools.product(range(ws), range(ws)))
    offsets = {}
    idxs = []
    for p1 in points:
        for p2 in points:
            off = (abs(p1[0] - p2[0]), abs(p1[1] - p2[1]))
            if off not in offsets:
                offsets[off] = len(offsets)
            idxs.append(offsets[off])
    return np.asarray(idxs, np.int32).reshape(ws * ws, ws * ws), len(offsets)


WINDOW_BIAS_IDX, NUM_OFFSETS = _build_window_bias_index(WINDOW)


def _const_spec(shape):
    zero = (0,) * len(shape)
    return pl.BlockSpec(shape, lambda i, _z=zero: _z)


# ---------------- in-kernel window partition / merge (aligned slices + concats only) ----
def _window_partition(t):
    """(N_TOK, C) image-order -> (N_WIN, WIN_TOK, C) window-major, (ry, rx) row-major."""
    c = t.shape[-1]
    img = t.reshape(H_RES, W_RES, c)
    parts = []
    for wy in range(N_WIN_H):
        for wx in range(N_WIN_W):
            win = img[wy * WINDOW:(wy + 1) * WINDOW, wx * WINDOW:(wx + 1) * WINDOW, :]
            parts.append(win.reshape(1, WIN_TOK, c))
    return jnp.concatenate(parts, axis=0)


def _window_merge(t):
    """(N_WIN, WIN_TOK, C) window-major -> (N_TOK, C) image-order."""
    c = t.shape[-1]
    rows = []
    for wy in range(N_WIN_H):
        row = jnp.concatenate(
            [t[wy * N_WIN_W + wx].reshape(WINDOW, WINDOW, c) for wx in range(N_WIN_W)],
            axis=1)                                            # (WINDOW, W_RES, c)
        rows.append(row)
    return jnp.concatenate(rows, axis=0).reshape(N_TOK, c)


# =========================== fused TinyViTBlock kernel ==================================
def _tiny_vit_block_kernel(x_ref, ln1w_ref, ln1b_ref, watt_ref, batt_ref, bias_ref,
                           bproj_ref, convw_ref, bns_ref, bnb_ref,
                           ln2w_ref, ln2b_ref, w1_ref, b1_ref, w2_ref, b2_ref,
                           o_ref, xpad_ref):
    f32, bf16 = jnp.float32, jnp.bfloat16

    x = x_ref[0]                                               # (N_TOK, DIM) f32

    # ---------------- attention: LN1 -> fused [q|k|v@proj] -> per-window softmax --------
    mu = jnp.mean(x, axis=-1, keepdims=True)
    var = jnp.mean(jnp.square(x - mu), axis=-1, keepdims=True)
    xn = (x - mu) * lax.rsqrt(var + LN_EPS) * ln1w_ref[...] + ln1b_ref[...]

    # single projection: columns = [scaled q (64) | k (64) | per-head v@w_proj (256)]
    qkvp = jnp.dot(xn.astype(bf16), watt_ref[...], preferred_element_type=f32) + batt_ref[...]
    qkvp_w = _window_partition(qkvp).astype(bf16)              # (N_WIN, WIN_TOK, 384) bf16

    attn_w = jnp.zeros((N_WIN, WIN_TOK, DIM), f32)
    for h in range(NUM_HEADS):
        q = qkvp_w[:, :, h * HEAD_DIM:(h + 1) * HEAD_DIM]                 # (4, 64, 16)
        k = qkvp_w[:, :, DIM + h * HEAD_DIM:DIM + (h + 1) * HEAD_DIM]     # (4, 64, 16)
        vp = qkvp_w[:, :, 2 * DIM + h * DIM:2 * DIM + (h + 1) * DIM]      # (4, 64, 64)
        logits = lax.dot_general(q, k, (((2,), (2,)), ((0,), (0,))),
                                 preferred_element_type=f32)              # (4, 64, 64)
        logits = logits + bias_ref[h]                          # rel-pos bias, shared by windows
        logits = logits - jnp.max(logits, axis=-1, keepdims=True)
        p = jnp.exp(logits)
        p = p * (1.0 / jnp.sum(p, axis=-1, keepdims=True))     # exact normalisation
        attn_w = attn_w + lax.dot_general(p.astype(bf16), vp, (((2,), (1,)), ((0,), (0,))),
                                          preferred_element_type=f32)
    attn = _window_merge(attn_w) + bproj_ref[...]              # (N_TOK, DIM)

    x1 = x + attn                                              # first residual

    # ---------------- 3x3 depthwise conv + fused eval-mode BatchNorm (zero-padded) ------
    # halo-only zeroing (all stores sublane-aligned); re-done every grid step by design.
    xpad_ref[0:1, :, :] = jnp.zeros((1, PAD_W, DIM), f32)
    xpad_ref[H_RES + 1:H_RES + 2, :, :] = jnp.zeros((1, PAD_W, DIM), f32)
    xpad_ref[1:H_RES + 1, 0:W_OFF, :] = jnp.zeros((H_RES, W_OFF, DIM), f32)
    xpad_ref[1:H_RES + 1, W_OFF + W_RES:PAD_W, :] = jnp.zeros((H_RES, PAD_W - W_OFF - W_RES, DIM), f32)
    xpad_ref[1:H_RES + 1, W_OFF:W_OFF + W_RES, :] = x1.reshape(H_RES, W_RES, DIM)

    cw = convw_ref[...]                                        # (9, DIM)
    acc = jnp.zeros((H_RES, W_RES, DIM), f32)
    for dx in range(LOCAL_CONV):
        # one width-shifted view per dx (dx=1 aligned; dx=0/2 realigned), reused for all dy
        xs = xpad_ref[:, W_OFF - 1 + dx:W_OFF - 1 + dx + W_RES, :]        # (H_RES+2, W_RES, DIM)
        for dy in range(LOCAL_CONV):
            acc = acc + xs[dy:dy + H_RES] * cw[dy * LOCAL_CONV + dx]
    x2 = (acc * bns_ref[...] + bnb_ref[...]).reshape(N_TOK, DIM)

    # ---------------- MLP (LN2 -> fc1 -> GELU -> fc2) + residual ------------------------
    mu2 = jnp.mean(x2, axis=-1, keepdims=True)
    var2 = jnp.mean(jnp.square(x2 - mu2), axis=-1, keepdims=True)
    x2n = (x2 - mu2) * lax.rsqrt(var2 + LN_EPS) * ln2w_ref[...] + ln2b_ref[...]
    hid = jnp.dot(x2n.astype(bf16), w1_ref[...], preferred_element_type=f32) + b1_ref[...]
    # TODO(synk): nn.GELU defaults to the exact erf form; tanh approximation used here for
    #             guaranteed Mosaic lowering (max abs deviation ~1e-3).
    hid = 0.5 * hid * (1.0 + jnp.tanh(0.7978845608028654 * (hid + 0.044715 * hid * hid * hid)))
    y = jnp.dot(hid.astype(bf16), w2_ref[...], preferred_element_type=f32) + b2_ref[...]

    o_ref[0] = (x2 + y).astype(o_ref.dtype)                    # second residual


# =========================== forward wrapper ============================================
def tiny_vit_block_forward(x, prep):
    b, l, c = x.shape
    assert l == N_TOK and c == DIM, (l, c)

    weight_args = (prep["ln1_w"], prep["ln1_b"], prep["w_att"], prep["b_att"],
                   prep["bias"], prep["b_proj"], prep["conv_w"],
                   prep["bn_scale"], prep["bn_bias"], prep["ln2_w"], prep["ln2_b"],
                   prep["w_fc1"], prep["b_fc1"], prep["w_fc2"], prep["b_fc2"])

    matmul_flops = (2 * l * DIM * (2 * DIM + NUM_HEADS * DIM)          # fused q|k|v@proj
                    + NUM_HEADS * N_WIN * 2 * WIN_TOK * WIN_TOK * (HEAD_DIM + DIM)  # logits + p@vp
                    + 4 * l * DIM * MLP_HIDDEN)                        # fc1 + fc2
    conv_flops = 2 * LOCAL_CONV * LOCAL_CONV * l * DIM
    flops = b * (matmul_flops + conv_flops)
    transcendentals = b * (NUM_HEADS * N_WIN * WIN_TOK * WIN_TOK + l * MLP_HIDDEN + 2 * l)
    weight_bytes = sum(int(np.prod(a.shape)) * a.dtype.itemsize for a in weight_args)
    bytes_accessed = 2 * b * l * c * 4 + weight_bytes
    cost = pl.CostEstimate(flops=flops, transcendentals=transcendentals,
                           bytes_accessed=bytes_accessed)

    # TODO(synk): for v7x with B == 1 (or odd B) a second "parallel" grid axis (e.g. the two
    #             8-row halves with a conv halo) would be needed to keep both TensorCores busy.
    return pl.pallas_call(
        _tiny_vit_block_kernel,
        out_shape=jax.ShapeDtypeStruct((b, l, c), jnp.float32),
        grid=(b,),
        in_specs=[pl.BlockSpec((1, l, c), lambda i: (i, 0, 0))]
                 + [_const_spec(tuple(a.shape)) for a in weight_args],
        out_specs=pl.BlockSpec((1, l, c), lambda i: (i, 0, 0)),
        scratch_shapes=[pltpu.VMEM((H_RES + 2, PAD_W, DIM), jnp.float32)],
        compiler_params=pltpu.CompilerParams(dimension_semantics=("parallel",)),
        cost_estimate=cost,
    )(x, *weight_args)


# =========================== one-time parameter preprocessing ===========================
def prepare_params(params):
    w_qkv = params["w_qkv"]                      # (DIM, 3*DIM), per-head interleaved [q|k|v]
    b_qkv = params["b_qkv"].reshape(-1)          # (3*DIM,)
    w_proj = params["w_proj"]                    # (DIM, DIM), rows = head-major attn channels

    wq_cols, wk_cols, wvp_cols, bq, bk, bvp = [], [], [], [], [], []
    for h in range(NUM_HEADS):
        base = h * 3 * HEAD_DIM
        wq = w_qkv[:, base:base + HEAD_DIM]
        wk = w_qkv[:, base + HEAD_DIM:base + 2 * HEAD_DIM]
        wv = w_qkv[:, base + 2 * HEAD_DIM:base + 3 * HEAD_DIM]
        bqh = b_qkv[base:base + HEAD_DIM]
        bkh = b_qkv[base + HEAD_DIM:base + 2 * HEAD_DIM]
        bvh = b_qkv[base + 2 * HEAD_DIM:base + 3 * HEAD_DIM]
        wp = w_proj[h * HEAD_DIM:(h + 1) * HEAD_DIM, :]        # (HEAD_DIM, DIM)
        wq_cols.append(wq * SCALE)
        bq.append(bqh * SCALE)                                 # softmax scale folded into q
        wk_cols.append(wk)
        bk.append(bkh)
        wvp_cols.append(wv @ wp)                               # fused v -> proj weight (DIM, DIM)
        bvp.append(bvh @ wp)                                   # fused v-bias -> proj

    w_att = jnp.concatenate(wq_cols + wk_cols + wvp_cols, axis=1)      # (DIM, 2*DIM + 4*DIM)
    b_att = jnp.concatenate(bq + bk + bvp)[None, :]                     # (1, 384)
    bias = params["attention_biases"][:, jnp.asarray(WINDOW_BIAS_IDX)]  # (heads, 64, 64)
    bn_scale = params["bn_w"] * lax.rsqrt(params["bn_var"] + BN_EPS)
    bn_bias = params["bn_b"] - params["bn_mean"] * bn_scale
    return {
        "ln1_w": params["ln1_w"], "ln1_b": params["ln1_b"],
        "w_att": w_att.astype(jnp.bfloat16), "b_att": b_att.astype(jnp.float32),
        "bias": bias.astype(jnp.float32),
        "b_proj": params["b_proj"],
        "conv_w": params["conv_w"].reshape(LOCAL_CONV * LOCAL_CONV, DIM),
        "bn_scale": bn_scale.reshape(1, DIM), "bn_bias": bn_bias.reshape(1, DIM),
        "ln2_w": params["ln2_w"], "ln2_b": params["ln2_b"],
        "w_fc1": params["w_fc1"].astype(jnp.bfloat16), "b_fc1": params["b_fc1"],
        "w_fc2": params["w_fc2"].astype(jnp.bfloat16), "b_fc2": params["b_fc2"],
    }


# =========================== deterministic parameter init ===============================
def init_params(key):
    ks = jax.random.split(key, 8)

    def lin(k, fan_in, fan_out):
        lim = 1.0 / np.sqrt(fan_in)
        return jax.random.uniform(k, (fan_in, fan_out), jnp.float32, -lim, lim)

    return {
        # attention (norm + qkv + proj + relative-position bias table for the 8x8 window)
        "ln1_w": jnp.ones((1, DIM), jnp.float32),
        "ln1_b": jnp.zeros((1, DIM), jnp.float32),
        "w_qkv": lin(ks[0], DIM, 3 * DIM),                     # PyTorch per-head [q|k|v] columns
        "b_qkv": jax.random.uniform(ks[1], (1, 3 * DIM), jnp.float32, -0.02, 0.02),
        "w_proj": lin(ks[2], DIM, DIM),
        "b_proj": jax.random.uniform(ks[3], (1, DIM), jnp.float32, -0.02, 0.02),
        "attention_biases": 0.02 * jax.random.normal(ks[4], (NUM_HEADS, NUM_OFFSETS), jnp.float32),
        # local depthwise conv + BatchNorm (eval-mode running stats)
        "conv_w": 0.1 * jax.random.normal(ks[5], (LOCAL_CONV, LOCAL_CONV, DIM), jnp.float32),
        "bn_w": jnp.ones((DIM,), jnp.float32),
        "bn_b": jnp.zeros((DIM,), jnp.float32),
        "bn_mean": jnp.zeros((DIM,), jnp.float32),
        "bn_var": jnp.ones((DIM,), jnp.float32),
        # MLP
        "ln2_w": jnp.ones((1, DIM), jnp.float32),
        "ln2_b": jnp.zeros((1, DIM), jnp.float32),
        "w_fc1": lin(ks[6], DIM, MLP_HIDDEN),
        "b_fc1": jnp.zeros((1, MLP_HIDDEN), jnp.float32),
        "w_fc2": lin(ks[7], MLP_HIDDEN, DIM),
        "b_fc2": jnp.zeros((1, DIM), jnp.float32),
    }


if __name__ == "__main__":
    key = jax.random.PRNGKey(0)
    pkey, xkey = jax.random.split(key)
    params = init_params(pkey)
    prep = prepare_params(params)                              # one-time preprocessing (hoisted)
    x = jax.random.normal(xkey, (BATCH, N_TOK, DIM), jnp.float32)

    fwd = jax.jit(tiny_vit_block_forward)
    out = fwd(x, prep)
    jax.block_until_ready(out)

    assert out.shape == (BATCH, N_TOK, DIM), out.shape
    assert bool(jnp.isfinite(out).all())
    print("KERNEL_OK")
</pallas_src>

<mosaic_0001>
module attributes {stable_mosaic.version = 11 : i64} {
  func.func @_tiny_vit_block_kernel(%arg0: i32, %arg1: memref<1x256x64xf32, #tpu.memory_space<vmem>>, %arg2: memref<1x64xf32, #tpu.memory_space<vmem>>, %arg3: memref<1x64xf32, #tpu.memory_space<vmem>>, %arg4: memref<64x384xbf16, #tpu.memory_space<vmem>>, %arg5: memref<1x384xf32, #tpu.memory_space<vmem>>, %arg6: memref<4x64x64xf32, #tpu.memory_space<vmem>>, %arg7: memref<1x64xf32, #tpu.memory_space<vmem>>, %arg8: memref<9x64xf32, #tpu.memory_space<vmem>>, %arg9: memref<1x64xf32, #tpu.memory_space<vmem>>, %arg10: memref<1x64xf32, #tpu.memory_space<vmem>>, %arg11: memref<1x64xf32, #tpu.memory_space<vmem>>, %arg12: memref<1x64xf32, #tpu.memory_space<vmem>>, %arg13: memref<64x256xbf16, #tpu.memory_space<vmem>>, %arg14: memref<1x256xf32, #tpu.memory_space<vmem>>, %arg15: memref<256x64xbf16, #tpu.memory_space<vmem>>, %arg16: memref<1x64xf32, #tpu.memory_space<vmem>>, %arg17: memref<1x256x64xf32, #tpu.memory_space<vmem>>, %arg18: memref<18x32x64xf32, #tpu.memory_space<vmem>>) attributes {dimension_semantics = [#tpu.dimension_semantics<parallel>], iteration_bounds = array<i64: 2>, scalar_prefetch = 0 : i64, scratch_operands = 1 : i64, tpu.core_type = #tpu.core_type<tc>, window_params = [{transform_indices = @transform_0, window_bounds = array<i64: 1, 256, 64>}, {pipeline_mode = #tpu.pipeline_mode<synchronous>, transform_indices = @transform_1, window_bounds = array<i64: 1, 64>}, {pipeline_mode = #tpu.pipeline_mode<synchronous>, transform_indices = @transform_2, window_bounds = array<i64: 1, 64>}, {pipeline_mode = #tpu.pipeline_mode<synchronous>, transform_indices = @transform_3, window_bounds = array<i64: 64, 384>}, {pipeline_mode = #tpu.pipeline_mode<synchronous>, transform_indices = @transform_4, window_bounds = array<i64: 1, 384>}, {pipeline_mode = #tpu.pipeline_mode<synchronous>, transform_indices = @transform_5, window_bounds = array<i64: 4, 64, 64>}, {pipeline_mode = #tpu.pipeline_mode<synchronous>, transform_indices = @transform_6, window_bounds = array<i64: 1, 64>}, {pipeline_mode = #tpu.pipeline_mode<synchronous>, transform_indices = @transform_7, window_bounds = array<i64: 9, 64>}, {pipeline_mode = #tpu.pipeline_mode<synchronous>, transform_indices = @transform_8, window_bounds = array<i64: 1, 64>}, {pipeline_mode = #tpu.pipeline_mode<synchronous>, transform_indices = @transform_9, window_bounds = array<i64: 1, 64>}, {pipeline_mode = #tpu.pipeline_mode<synchronous>, transform_indices = @transform_10, window_bounds = array<i64: 1, 64>}, {pipeline_mode = #tpu.pipeline_mode<synchronous>, transform_indices = @transform_11, window_bounds = array<i64: 1, 64>}, {pipeline_mode = #tpu.pipeline_mode<synchronous>, transform_indices = @transform_12, window_bounds = array<i64: 64, 256>}, {pipeline_mode = #tpu.pipeline_mode<synchronous>, transform_indices = @transform_13, window_bounds = array<i64: 1, 256>}, {pipeline_mode = #tpu.pipeline_mode<synchronous>, transform_indices = @transform_14, window_bounds = array<i64: 256, 64>}, {pipeline_mode = #tpu.pipeline_mode<synchronous>, transform_indices = @transform_15, window_bounds = array<i64: 1, 64>}, {transform_indices = @transform_16, window_bounds = array<i64: 1, 256, 64>}]} {
    %c0 = arith.constant 0 : index
    %c0_0 = arith.constant 0 : index
    %c0_1 = arith.constant 0 : index
    %0 = vector.load %arg1[%c0, %c0_0, %c0_1] : memref<1x256x64xf32, #tpu.memory_space<vmem>>, vector<1x256x64xf32>
    %1 = vector.shape_cast %0 : vector<1x256x64xf32> to vector<256x64xf32>
    %cst = arith.constant dense<0.000000e+00> : vector<256xf32>
    %2 = vector.multi_reduction <add>, %1, %cst [1] : vector<256x64xf32> to vector<256xf32>
    %3 = vector.shape_cast %2 : vector<256xf32> to vector<256x1xf32>
    %cst_2 = arith.constant 6.400000e+01 : f32
    %4 = vector.broadcast %cst_2 : f32 to vector<256x1xf32>
    %5 = arith.divf %3, %4 : vector<256x1xf32>
    %6 = vector.broadcast %5 : vector<256x1xf32> to vector<256x64xf32>
    %7 = arith.subf %1, %6 : vector<256x64xf32>
    %8 = arith.mulf %7, %7 : vector<256x64xf32>
    %cst_3 = arith.constant dense<0.000000e+00> : vector<256xf32>
    %9 = vector.multi_reduction <add>, %8, %cst_3 [1] : vector<256x64xf32> to vector<256xf32>
    %10 = vector.shape_cast %9 : vector<256xf32> to vector<256x1xf32>
    %cst_4 = arith.constant 6.400000e+01 : f32
    %11 = vector.broadcast %cst_4 : f32 to vector<256x1xf32>
    %12 = arith.divf %10, %11 : vector<256x1xf32>
    %13 = vector.broadcast %5 : vector<256x1xf32> to vector<256x64xf32>
    %14 = arith.subf %1, %13 : vector<256x64xf32>
    %cst_5 = arith.constant 9.99999974E-6 : f32
    %15 = vector.broadcast %cst_5 : f32 to vector<256x1xf32>
    %16 = arith.addf %12, %15 : vector<256x1xf32>
    %17 = math.rsqrt %16 : vector<256x1xf32>
    %18 = vector.broadcast %17 : vector<256x1xf32> to vector<256x64xf32>
    %19 = arith.mulf %14, %18 : vector<256x64xf32>
    %c0_6 = arith.constant 0 : index
    %c0_7 = arith.constant 0 : index
    %20 = vector.load %arg2[%c0_6, %c0_7] : memref<1x64xf32, #tpu.memory_space<vmem>>, vector<1x64xf32>
    %21 = vector.broadcast %20 : vector<1x64xf32> to vector<256x64xf32>
    %22 = arith.mulf %19, %21 : vector<256x64xf32>
    %c0_8 = arith.constant 0 : index
    %c0_9 = arith.constant 0 : index
    %23 = vector.load %arg3[%c0_8, %c0_9] : memref<1x64xf32, #tpu.memory_space<vmem>>, vector<1x64xf32>
    %24 = vector.broadcast %23 : vector<1x64xf32> to vector<256x64xf32>
    %25 = arith.addf %22, %24 : vector<256x64xf32>
    %26 = arith.truncf %25 : vector<256x64xf32> to vector<256x64xbf16>
    %c0_10 = arith.constant 0 : index
    %c0_11 = arith.constant 0 : index
    %27 = vector.load %arg4[%c0_10, %c0_11] : memref<64x384xbf16, #tpu.memory_space<vmem>>, vector<64x384xbf16>
    %cst_12 = arith.constant dense<0.000000e+00> : vector<256x384xf32>
    %28 = tpu.matmul %26, %27, %cst_12 {dimension_numbers = #tpu.dot_dimension_numbers<[1], [0], [0], [1], [0, 0, 1, 1], [], []>} : vector<256x64xbf16>, vector<64x384xbf16>, vector<256x384xf32> -> vector<256x384xf32>
    %c0_13 = arith.constant 0 : index
    %c0_14 = arith.constant 0 : index
    %29 = vector.load %arg5[%c0_13, %c0_14] : memref<1x384xf32, #tpu.memory_space<vmem>>, vector<1x384xf32>
    %30 = vector.broadcast %29 : vector<1x384xf32> to vector<256x384xf32>
    %31 = arith.addf %28, %30 : vector<256x384xf32>
    %32 = vector.shape_cast %31 : vector<256x384xf32> to vector<16x16x384xf32>
    %33 = vector.extract_strided_slice %32 {offsets = [0, 0, 0], sizes = [8, 8, 384], strides = [1, 1, 1]} : vector<16x16x384xf32> to vector<8x8x384xf32>
    %34 = vector.shape_cast %33 : vector<8x8x384xf32> to vector<1x64x384xf32>
    %35 = vector.extract_strided_slice %32 {offsets = [0, 8, 0], sizes = [8, 8, 384], strides = [1, 1, 1]} : vector<16x16x384xf32> to vector<8x8x384xf32>
    %36 = vector.shape_cast %35 : vector<8x8x384xf32> to vector<1x64x384xf32>
    %37 = vector.extract_strided_slice %32 {offsets = [8, 0, 0], sizes = [8, 8, 384], strides = [1, 1, 1]} : vector<16x16x384xf32> to vector<8x8x384xf32>
    %38 = vector.shape_cast %37 : vector<8x8x384xf32> to vector<1x64x384xf32>
    %39 = vector.extract_strided_slice %32 {offsets = [8, 8, 0], sizes = [8, 8, 384], strides = [1, 1, 1]} : vector<16x16x384xf32> to vector<8x8x384xf32>
    %40 = vector.shape_cast %39 : vector<8x8x384xf32> to vector<1x64x384xf32>
    %41 = tpu.concatenate %34, %36, %38, %40 in 0 : vector<1x64x384xf32>, vector<1x64x384xf32>, vector<1x64x384xf32>, vector<1x64x384xf32> -> vector<4x64x384xf32>
    %42 = arith.truncf %41 : vector<4x64x384xf32> to vector<4x64x384xbf16>
    %cst_15 = arith.constant 0.000000e+00 : f32
    %43 = vector.broadcast %cst_15 : f32 to vector<4x64x64xf32>
    %44 = vector.extract_strided_slice %42 {offsets = [0, 0, 0], sizes = [4, 64, 16], strides = [1, 1, 1]} : vector<4x64x384xbf16> to vector<4x64x16xbf16>
    %45 = vector.extract_strided_slice %42 {offsets = [0, 0, 64], sizes = [4, 64, 16], strides = [1, 1, 1]} : vector<4x64x384xbf16> to vector<4x64x16xbf16>
    %46 = vector.extract_strided_slice %42 {offsets = [0, 0, 128], sizes = [4, 64, 64], strides = [1, 1, 1]} : vector<4x64x384xbf16> to vector<4x64x64xbf16>
    %cst_16 = arith.constant dense<0.000000e+00> : vector<4x64x64xf32>
    %47 = tpu.matmul %44, %45, %cst_16 {dimension_numbers = #tpu.dot_dimension_numbers<[2], [2], [1], [1], [0, 0, 0, 1, 1, 1], [0], [0]>} : vector<4x64x16xbf16>, vector<4x64x16xbf16>, vector<4x64x64xf32> -> vector<4x64x64xf32>
    %c0_17 = arith.constant 0 : index
    %c0_18 = arith.constant 0 : index
    %c0_19 = arith.constant 0 : index
    %48 = vector.load %arg6[%c0_17, %c0_18, %c0_19] : memref<4x64x64xf32, #tpu.memory_space<vmem>>, vector<1x64x64xf32>
    %49 = vector.shape_cast %48 : vector<1x64x64xf32> to vector<64x64xf32>
    %50 = vector.shape_cast %49 : vector<64x64xf32> to vector<1x64x64xf32>
    %51 = vector.broadcast %50 : vector<1x64x64xf32> to vector<4x64x64xf32>
    %52 = arith.addf %47, %51 : vector<4x64x64xf32>
    %cst_20 = arith.constant dense<0xFF800000> : vector<4x64xf32>
    %53 = vector.multi_reduction <maximumf>, %52, %cst_20 [2] : vector<4x64x64xf32> to vector<4x64xf32>
    %54 = vector.shape_cast %53 : vector<4x64xf32> to vector<4x64x1xf32>
    %55 = vector.broadcast %54 : vector<4x64x1xf32> to vector<4x64x64xf32>
    %56 = arith.subf %52, %55 : vector<4x64x64xf32>
    %57 = math.exp %56 : vector<4x64x64xf32>
    %cst_21 = arith.constant dense<0.000000e+00> : vector<4x64xf32>
    %58 = vector.multi_reduction <add>, %57, %cst_21 [2] : vector<4x64x64xf32> to vector<4x64xf32>
    %59 = vector.shape_cast %58 : vector<4x64xf32> to vector<4x64x1xf32>
    %cst_22 = arith.constant 1.000000e+00 : f32
    %60 = vector.broadcast %cst_22 : f32 to vector<4x64x1xf32>
    %61 = arith.divf %60, %59 : vector<4x64x1xf32>
    %62 = vector.broadcast %61 : vector<4x64x1xf32> to vector<4x64x64xf32>
    %63 = arith.mulf %57, %62 : vector<4x64x64xf32>
    %64 = arith.truncf %63 : vector<4x64x64xf32> to vector<4x64x64xbf16>
    %cst_23 = arith.constant dense<0.000000e+00> : vector<4x64x64xf32>
    %65 = tpu.matmul %64, %46, %cst_23 {dimension_numbers = #tpu.dot_dimension_numbers<[2], [1], [1], [2], [0, 0, 0, 1, 1, 2], [0], [0]>} : vector<4x64x64xbf16>, vector<4x64x64xbf16>, vector<4x64x64xf32> -> vector<4x64x64xf32>
    %66 = arith.addf %43, %65 : vector<4x64x64xf32>
    %67 = vector.extract_strided_slice %42 {offsets = [0, 0, 16], sizes = [4, 64, 16], strides = [1, 1, 1]} : vector<4x64x384xbf16> to vector<4x64x16xbf16>
    %68 = vector.extract_strided_slice %42 {offsets = [0, 0, 80], sizes = [4, 64, 16], strides = [1, 1, 1]} : vector<4x64x384xbf16> to vector<4x64x16xbf16>
    %69 = vector.extract_strided_slice %42 {offsets = [0, 0, 192], sizes = [4, 64, 64], strides = [1, 1, 1]} : vector<4x64x384xbf16> to vector<4x64x64xbf16>
    %cst_24 = arith.constant dense<0.000000e+00> : vector<4x64x64xf32>
    %70 = tpu.matmul %67, %68, %cst_24 {dimension_numbers = #tpu.dot_dimension_numbers<[2], [2], [1], [1], [0, 0, 0, 1, 1, 1], [0], [0]>} : vector<4x64x16xbf16>, vector<4x64x16xbf16>, vector<4x64x64xf32> -> vector<4x64x64xf32>
    %c1 = arith.constant 1 : index
    %c0_25 = arith.constant 0 : index
    %c0_26 = arith.constant 0 : index
    %71 = vector.load %arg6[%c1, %c0_25, %c0_26] : memref<4x64x64xf32, #tpu.memory_space<vmem>>, vector<1x64x64xf32>
    %72 = vector.shape_cast %71 : vector<1x64x64xf32> to vector<64x64xf32>
    %73 = vector.shape_cast %72 : vector<64x64xf32> to vector<1x64x64xf32>
    %74 = vector.broadcast %73 : vector<1x64x64xf32> to vector<4x64x64xf32>
    %75 = arith.addf %70, %74 : vector<4x64x64xf32>
    %cst_27 = arith.constant dense<0xFF800000> : vector<4x64xf32>
    %76 = vector.multi_reduction <maximumf>, %75, %cst_27 [2] : vector<4x64x64xf32> to vector<4x64xf32>
    %77 = vector.shape_cast %76 : vector<4x64xf32> to vector<4x64x1xf32>
    %78 = vector.broadcast %77 : vector<4x64x1xf32> to vector<4x64x64xf32>
    %79 = arith.subf %75, %78 : vector<4x64x64xf32>
    %80 = math.exp %79 : vector<4x64x64xf32>
    %cst_28 = arith.constant dense<0.000000e+00> : vector<4x64xf32>
    %81 = vector.multi_reduction <add>, %80, %cst_28 [2] : vector<4x64x64xf32> to vector<4x64xf32>
    %82 = vector.shape_cast %81 : vector<4x64xf32> to vector<4x64x1xf32>
    %cst_29 = arith.constant 1.000000e+00 : f32
    %83 = vector.broadcast %cst_29 : f32 to vector<4x64x1xf32>
    %84 = arith.divf %83, %82 : vector<4x64x1xf32>
    %85 = vector.broadcast %84 : vector<4x64x1xf32> to vector<4x64x64xf32>
    %86 = arith.mulf %80, %85 : vector<4x64x64xf32>
    %87 = arith.truncf %86 : vector<4x64x64xf32> to vector<4x64x64xbf16>
    %cst_30 = arith.constant dense<0.000000e+00> : vector<4x64x64xf32>
    %88 = tpu.matmul %87, %69, %cst_30 {dimension_numbers = #tpu.dot_dimension_numbers<[2], [1], [1], [2], [0, 0, 0, 1, 1, 2], [0], [0]>} : vector<4x64x64xbf16>, vector<4x64x64xbf16>, vector<4x64x64xf32> -> vector<4x64x64xf32>
    %89 = arith.addf %66, %88 : vector<4x64x64xf32>
    %90 = vector.extract_strided_slice %42 {offsets = [0, 0, 32], sizes = [4, 64, 16], strides = [1, 1, 1]} : vector<4x64x384xbf16> to vector<4x64x16xbf16>
    %91 = vector.extract_strided_slice %42 {offsets = [0, 0, 96], sizes = [4, 64, 16], strides = [1, 1, 1]} : vector<4x64x384xbf16> to vector<4x64x16xbf16>
    %92 = vector.extract_strided_slice %42 {offsets = [0, 0, 256], sizes = [4, 64, 64], strides = [1, 1, 1]} : vector<4x64x384xbf16> to vector<4x64x64xbf16>
    %cst_31 = arith.constant dense<0.000000e+00> : vector<4x64x64xf32>
    %93 = tpu.matmul %90, %91, %cst_31 {dimension_numbers = #tpu.dot_dimension_numbers<[2], [2], [1], [1], [0, 0, 0, 1, 1, 1], [0], [0]>} : vector<4x64x16xbf16>, vector<4x64x16xbf16>, vector<4x64x64xf32> -> vector<4x64x64xf32>
    %c2 = arith.constant 2 : index
    %c0_32 = arith.constant 0 : index
    %c0_33 = arith.constant 0 : index
    %94 = vector.load %arg6[%c2, %c0_32, %c0_33] : memref<4x64x64xf32, #tpu.memory_space<vmem>>, vector<1x64x64xf32>
    %95 = vector.shape_cast %94 : vector<1x64x64xf32> to vector<64x64xf32>
    %96 = vector.shape_cast %95 : vector<64x64xf32> to vector<1x64x64xf32>
    %97 = vector.broadcast %96 : vector<1x64x64xf32> to vector<4x64x64xf32>
    %98 = arith.addf %93, %97 : vector<4x64x64xf32>
    %cst_34 = arith.constant dense<0xFF800000> : vector<4x64xf32>
    %99 = vector.multi_reduction <maximumf>, %98, %cst_34 [2] : vector<4x64x64xf32> to vector<4x64xf32>
    %100 = vector.shape_cast %99 : vector<4x64xf32> to vector<4x64x1xf32>
    %101 = vector.broadcast %100 : vector<4x64x1xf32> to vector<4x64x64xf32>
    %102 = arith.subf %98, %101 : vector<4x64x64xf32>
    %103 = math.exp %102 : vector<4x64x64xf32>
    %cst_35 = arith.constant dense<0.000000e+00> : vector<4x64xf32>
    %104 = vector.multi_reduction <add>, %103, %cst_35 [2] : vector<4x64x64xf32> to vector<4x64xf32>
    %105 = vector.shape_cast %104 : vector<4x64xf32> to vector<4x64x1xf32>
    %cst_36 = arith.constant 1.000000e+00 : f32
    %106 = vector.broadcast %cst_36 : f32 to vector<4x64x1xf32>
    %107 = arith.divf %106, %105 : vector<4x64x1xf32>
    %108 = vector.broadcast %107 : vector<4x64x1xf32> to vector<4x64x64xf32>
    %109 = arith.mulf %103, %108 : vector<4x64x64xf32>
    %110 = arith.truncf %109 : vector<4x64x64xf32> to vector<4x64x64xbf16>
    %cst_37 = arith.constant dense<0.000000e+00> : vector<4x64x64xf32>
    %111 = tpu.matmul %110, %92, %cst_37 {dimension_numbers = #tpu.dot_dimension_numbers<[2], [1], [1], [2], [0, 0, 0, 1, 1, 2], [0], [0]>} : vector<4x64x64xbf16>, vector<4x64x64xbf16>, vector<4x64x64xf32> -> vector<4x64x64xf32>
    %112 = arith.addf %89, %111 : vector<4x64x64xf32>
    %113 = vector.extract_strided_slice %42 {offsets = [0, 0, 48], sizes = [4, 64, 16], strides = [1, 1, 1]} : vector<4x64x384xbf16> to vector<4x64x16xbf16>
    %114 = vector.extract_strided_slice %42 {offsets = [0, 0, 112], sizes = [4, 64, 16], strides = [1, 1, 1]} : vector<4x64x384xbf16> to vector<4x64x16xbf16>
    %115 = vector.extract_strided_slice %42 {offsets = [0, 0, 320], sizes = [4, 64, 64], strides = [1, 1, 1]} : vector<4x64x384xbf16> to vector<4x64x64xbf16>
    %cst_38 = arith.constant dense<0.000000e+00> : vector<4x64x64xf32>
    %116 = tpu.matmul %113, %114, %cst_38 {dimension_numbers = #tpu.dot_dimension_numbers<[2], [2], [1], [1], [0, 0, 0, 1, 1, 1], [0], [0]>} : vector<4x64x16xbf16>, vector<4x64x16xbf16>, vector<4x64x64xf32> -> vector<4x64x64xf32>
    %c3 = arith.constant 3 : index
    %c0_39 = arith.constant 0 : index
    %c0_40 = arith.constant 0 : index
    %117 = vector.load %arg6[%c3, %c0_39, %c0_40] : memref<4x64x64xf32, #tpu.memory_space<vmem>>, vector<1x64x64xf32>
    %118 = vector.shape_cast %117 : vector<1x64x64xf32> to vector<64x64xf32>
    %119 = vector.shape_cast %118 : vector<64x64xf32> to vector<1x64x64xf32>
    %120 = vector.broadcast %119 : vector<1x64x64xf32> to vector<4x64x64xf32>
    %121 = arith.addf %116, %120 : vector<4x64x64xf32>
    %cst_41 = arith.constant dense<0xFF800000> : vector<4x64xf32>
    %122 = vector.multi_reduction <maximumf>, %121, %cst_41 [2] : vector<4x64x64xf32> to vector<4x64xf32>
    %123 = vector.shape_cast %122 : vector<4x64xf32> to vector<4x64x1xf32>
    %124 = vector.broadcast %123 : vector<4x64x1xf32> to vector<4x64x64xf32>
    %125 = arith.subf %121, %124 : vector<4x64x64xf32>
    %126 = math.exp %125 : vector<4x64x64xf32>
    %cst_42 = arith.constant dense<0.000000e+00> : vector<4x64xf32>
    %127 = vector.multi_reduction <add>, %126, %cst_42 [2] : vector<4x64x64xf32> to vector<4x64xf32>
    %128 = vector.shape_cast %127 : vector<4x64xf32> to vector<4x64x1xf32>
    %cst_43 = arith.constant 1.000000e+00 : f32
    %129 = vector.broadcast %cst_43 : f32 to vector<4x64x1xf32>
    %130 = arith.divf %129, %128 : vector<4x64x1xf32>
    %131 = vector.broadcast %130 : vector<4x64x1xf32> to vector<4x64x64xf32>
    %132 = arith.mulf %126, %131 : vector<4x64x64xf32>
    %133 = arith.truncf %132 : vector<4x64x64xf32> to vector<4x64x64xbf16>
    %cst_44 = arith.constant dense<0.000000e+00> : vector<4x64x64xf32>
    %134 = tpu.matmul %133, %115, %cst_44 {dimension_numbers = #tpu.dot_dimension_numbers<[2], [1], [1], [2], [0, 0, 0, 1, 1, 2], [0], [0]>} : vector<4x64x64xbf16>, vector<4x64x64xbf16>, vector<4x64x64xf32> -> vector<4x64x64xf32>
    %135 = arith.addf %112, %134 : vector<4x64x64xf32>
    %136 = vector.extract_strided_slice %135 {offsets = [0, 0, 0], sizes = [1, 64, 64], strides = [1, 1, 1]} : vector<4x64x64xf32> to vector<1x64x64xf32>
    %137 = vector.shape_cast %136 : vector<1x64x64xf32> to vector<64x64xf32>
    %138 = vector.shape_cast %137 : vector<64x64xf32> to vector<8x8x64xf32>
    %139 = vector.extract_strided_slice %135 {offsets = [1, 0, 0], sizes = [1, 64, 64], strides = [1, 1, 1]} : vector<4x64x64xf32> to vector<1x64x64xf32>
    %140 = vector.shape_cast %139 : vector<1x64x64xf32> to vector<64x64xf32>
    %141 = vector.shape_cast %140 : vector<64x64xf32> to vector<8x8x64xf32>
    %142 = tpu.concatenate %138, %141 in 1 : vector<8x8x64xf32>, vector<8x8x64xf32> -> vector<8x16x64xf32>
    %143 = vector.extract_strided_slice %135 {offsets = [2, 0, 0], sizes = [1, 64, 64], strides = [1, 1, 1]} : vector<4x64x64xf32> to vector<1x64x64xf32>
    %144 = vector.shape_cast %143 : vector<1x64x64xf32> to vector<64x64xf32>
    %145 = vector.shape_cast %144 : vector<64x64xf32> to vector<8x8x64xf32>
    %146 = vector.extract_strided_slice %135 {offsets = [3, 0, 0], sizes = [1, 64, 64], strides = [1, 1, 1]} : vector<4x64x64xf32> to vector<1x64x64xf32>
    %147 = vector.shape_cast %146 : vector<1x64x64xf32> to vector<64x64xf32>
    %148 = vector.shape_cast %147 : vector<64x64xf32> to vector<8x8x64xf32>
    %149 = tpu.concatenate %145, %148 in 1 : vector<8x8x64xf32>, vector<8x8x64xf32> -> vector<8x16x64xf32>
    %150 = tpu.concatenate %142, %149 in 0 : vector<8x16x64xf32>, vector<8x16x64xf32> -> vector<16x16x64xf32>
    %151 = vector.shape_cast %150 : vector<16x16x64xf32> to vector<256x64xf32>
    %c0_45 = arith.constant 0 : index
    %c0_46 = arith.constant 0 : index
    %152 = vector.load %arg7[%c0_45, %c0_46] : memref<1x64xf32, #tpu.memory_space<vmem>>, vector<1x64xf32>
    %153 = vector.broadcast %152 : vector<1x64xf32> to vector<256x64xf32>
    %154 = arith.addf %151, %153 : vector<256x64xf32>
    %155 = arith.addf %1, %154 : vector<256x64xf32>
    %cst_47 = arith.constant 0.000000e+00 : f32
    %156 = vector.broadcast %cst_47 : f32 to vector<1x32x64xf32>
    %c0_48 = arith.constant 0 : index
    %c0_49 = arith.constant 0 : index
    %c0_50 = arith.constant 0 : index
    %157 = vector.load %arg18[%c0_48, %c0_49, %c0_50] : memref<18x32x64xf32, #tpu.memory_space<vmem>>, vector<1x32x64xf32>
    tpu.vector_store %arg18[%c0_48, %c0_49, %c0_50], %156 {strides = array<i32>} : memref<18x32x64xf32, #tpu.memory_space<vmem>>, vector<1x32x64xf32>,
    %cst_51 = arith.constant 0.000000e+00 : f32
    %158 = vector.broadcast %cst_51 : f32 to vector<1x32x64xf32>
    %c17 = arith.constant 17 : index
    %c0_52 = arith.constant 0 : index
    %c0_53 = arith.constant 0 : index
    %159 = vector.load %arg18[%c17, %c0_52, %c0_53] : memref<18x32x64xf32, #tpu.memory_space<vmem>>, vector<1x32x64xf32>
    tpu.vector_store %arg18[%c17, %c0_52, %c0_53], %158 {strides = array<i32>} : memref<18x32x64xf32, #tpu.memory_space<vmem>>, vector<1x32x64xf32>,
    %cst_54 = arith.constant 0.000000e+00 : f32
    %160 = vector.broadcast %cst_54 : f32 to vector<16x8x64xf32>
    %c1_55 = arith.constant 1 : index
    %c0_56 = arith.constant 0 : index
    %c0_57 = arith.constant 0 : index
    %161 = vector.load %arg18[%c1_55, %c0_56, %c0_57] : memref<18x32x64xf32, #tpu.memory_space<vmem>>, vector<16x8x64xf32>
    tpu.vector_store %arg18[%c1_55, %c0_56, %c0_57], %160 {strides = array<i32>} : memref<18x32x64xf32, #tpu.memory_space<vmem>>, vector<16x8x64xf32>,
    %cst_58 = arith.constant 0.000000e+00 : f32
    %162 = vector.broadcast %cst_58 : f32 to vector<16x8x64xf32>
    %c1_59 = arith.constant 1 : index
    %c24 = arith.constant 24 : index
    %c0_60 = arith.constant 0 : index
    %163 = vector.load %arg18[%c1_59, %c24, %c0_60] : memref<18x32x64xf32, #tpu.memory_space<vmem>>, vector<16x8x64xf32>
    tpu.vector_store %arg18[%c1_59, %c24, %c0_60], %162 {strides = array<i32>} : memref<18x32x64xf32, #tpu.memory_space<vmem>>, vector<16x8x64xf32>,
    %164 = vector.shape_cast %155 : vector<256x64xf32> to vector<16x16x64xf32>
    %c1_61 = arith.constant 1 : index
    %c8 = arith.constant 8 : index
    %c0_62 = arith.constant 0 : index
    %165 = vector.load %arg18[%c1_61, %c8, %c0_62] : memref<18x32x64xf32, #tpu.memory_space<vmem>>, vector<16x16x64xf32>
    tpu.vector_store %arg18[%c1_61, %c8, %c0_62], %164 {strides = array<i32>} : memref<18x32x64xf32, #tpu.memory_space<vmem>>, vector<16x16x64xf32>,
    %c0_63 = arith.constant 0 : index
    %c0_64 = arith.constant 0 : index
    %166 = vector.load %arg8[%c0_63, %c0_64] : memref<9x64xf32, #tpu.memory_space<vmem>>, vector<9x64xf32>
    %cst_65 = arith.constant 0.000000e+00 : f32
    %167 = vector.broadcast %cst_65 : f32 to vector<16x16x64xf32>
    %c0_66 = arith.constant 0 : index
    %c7 = arith.constant 7 : index
    %c0_67 = arith.constant 0 : index
    %168 = vector.load %arg18[%c0_66, %c7, %c0_67] : memref<18x32x64xf32, #tpu.memory_space<vmem>>, vector<18x16x64xf32>
    %169 = vector.extract_strided_slice %168 {offsets = [0, 0, 0], sizes = [16, 16, 64], strides = [1, 1, 1]} : vector<18x16x64xf32> to vector<16x16x64xf32>
    %170 = vector.extract_strided_slice %166 {offsets = [0, 0], sizes = [1, 64], strides = [1, 1]} : vector<9x64xf32> to vector<1x64xf32>
    %171 = vector.shape_cast %170 : vector<1x64xf32> to vector<64xf32>
    %172 = vector.shape_cast %171 : vector<64xf32> to vector<1x1x64xf32>
    %173 = vector.broadcast %172 : vector<1x1x64xf32> to vector<16x16x64xf32>
    %174 = arith.mulf %169, %173 : vector<16x16x64xf32>
    %175 = arith.addf %167, %174 : vector<16x16x64xf32>
    %176 = vector.extract_strided_slice %168 {offsets = [1, 0, 0], sizes = [16, 16, 64], strides = [1, 1, 1]} : vector<18x16x64xf32> to vector<16x16x64xf32>
    %177 = vector.extract_strided_slice %166 {offsets = [3, 0], sizes = [1, 64], strides = [1, 1]} : vector<9x64xf32> to vector<1x64xf32>
    %178 = vector.shape_cast %177 : vector<1x64xf32> to vector<64xf32>
    %179 = vector.shape_cast %178 : vector<64xf32> to vector<1x1x64xf32>
    %180 = vector.broadcast %179 : vector<1x1x64xf32> to vector<16x16x64xf32>
    %181 = arith.mulf %176, %180 : vector<16x16x64xf32>
    %182 = arith.addf %175, %181 : vector<16x16x64xf32>
    %183 = vector.extract_strided_slice %168 {offsets = [2, 0, 0], sizes = [16, 16, 64], strides = [1, 1, 1]} : vector<18x16x64xf32> to vector<16x16x64xf32>
    %184 = vector.extract_strided_slice %166 {offsets = [6, 0], sizes = [1, 64], strides = [1, 1]} : vector<9x64xf32> to vector<1x64xf32>
    %185 = vector.shape_cast %184 : vector<1x64xf32> to vector<64xf32>
    %186 = vector.shape_cast %185 : vector<64xf32> to vector<1x1x64xf32>
    %187 = vector.broadcast %186 : vector<1x1x64xf32> to vector<16x16x64xf32>
    %188 = arith.mulf %183, %187 : vector<16x16x64xf32>
    %189 = arith.addf %182, %188 : vector<16x16x64xf32>
    %c0_68 = arith.constant 0 : index
    %c8_69 = arith.constant 8 : index
    %c0_70 = arith.constant 0 : index
    %190 = vector.load %arg18[%c0_68, %c8_69, %c0_70] : memref<18x32x64xf32, #tpu.memory_space<vmem>>, vector<18x16x64xf32>
    %191 = vector.extract_strided_slice %190 {offsets = [0, 0, 0], sizes = [16, 16, 64], strides = [1, 1, 1]} : vector<18x16x64xf32> to vector<16x16x64xf32>
    %192 = vector.extract_strided_slice %166 {offsets = [1, 0], sizes = [1, 64], strides = [1, 1]} : vector<9x64xf32> to vector<1x64xf32>
    %193 = vector.shape_cast %192 : vector<1x64xf32> to vector<64xf32>
    %194 = vector.shape_cast %193 : vector<64xf32> to vector<1x1x64xf32>
    %195 = vector.broadcast %194 : vector<1x1x64xf32> to vector<16x16x64xf32>
    %196 = arith.mulf %191, %195 : vector<16x16x64xf32>
    %197 = arith.addf %189, %196 : vector<16x16x64xf32>
    %198 = vector.extract_strided_slice %190 {offsets = [1, 0, 0], sizes = [16, 16, 64], strides = [1, 1, 1]} : vector<18x16x64xf32> to vector<16x16x64xf32>
    %199 = vector.extract_strided_slice %166 {offsets = [4, 0], sizes = [1, 64], strides = [1, 1]} : vector<9x64xf32> to vector<1x64xf32>
    %200 = vector.shape_cast %199 : vector<1x64xf32> to vector<64xf32>
    %201 = vector.shape_cast %200 : vector<64xf32> to vector<1x1x64xf32>
    %202 = vector.broadcast %201 : vector<1x1x64xf32> to vector<16x16x64xf32>
    %203 = arith.mulf %198, %202 : vector<16x16x64xf32>
    %204 = arith.addf %197, %203 : vector<16x16x64xf32>
    %205 = vector.extract_strided_slice %190 {offsets = [2, 0, 0], sizes = [16, 16, 64], strides = [1, 1, 1]} : vector<18x16x64xf32> to vector<16x16x64xf32>
    %206 = vector.extract_strided_slice %166 {offsets = [7, 0], sizes = [1, 64], strides = [1, 1]} : vector<9x64xf32> to vector<1x64xf32>
    %207 = vector.shape_cast %206 : vector<1x64xf32> to vector<64xf32>
    %208 = vector.shape_cast %207 : vector<64xf32> to vector<1x1x64xf32>
    %209 = vector.broadcast %208 : vector<1x1x64xf32> to vector<16x16x64xf32>
    %210 = arith.mulf %205, %209 : vector<16x16x64xf32>
    %211 = arith.addf %204, %210 : vector<16x16x64xf32>
    %c0_71 = arith.constant 0 : index
    %c9 = arith.constant 9 : index
    %c0_72 = arith.constant 0 : index
    %212 = vector.load %arg18[%c0_71, %c9, %c0_72] : memref<18x32x64xf32, #tpu.memory_space<vmem>>, vector<18x16x64xf32>
    %213 = vector.extract_strided_slice %212 {offsets = [0, 0, 0], sizes = [16, 16, 64], strides = [1, 1, 1]} : vector<18x16x64xf32> to vector<16x16x64xf32>
    %214 = vector.extract_strided_slice %166 {offsets = [2, 0], sizes = [1, 64], strides = [1, 1]} : vector<9x64xf32> to vector<1x64xf32>
    %215 = vector.shape_cast %214 : vector<1x64xf32> to vector<64xf32>
    %216 = vector.shape_cast %215 : vector<64xf32> to vector<1x1x64xf32>
    %217 = vector.broadcast %216 : vector<1x1x64xf32> to vector<16x16x64xf32>
    %218 = arith.mulf %213, %217 : vector<16x16x64xf32>
    %219 = arith.addf %211, %218 : vector<16x16x64xf32>
    %220 = vector.extract_strided_slice %212 {offsets = [1, 0, 0], sizes = [16, 16, 64], strides = [1, 1, 1]} : vector<18x16x64xf32> to vector<16x16x64xf32>
    %221 = vector.extract_strided_slice %166 {offsets = [5, 0], sizes = [1, 64], strides = [1, 1]} : vector<9x64xf32> to vector<1x64xf32>
    %222 = vector.shape_cast %221 : vector<1x64xf32> to vector<64xf32>
    %223 = vector.shape_cast %222 : vector<64xf32> to vector<1x1x64xf32>
    %224 = vector.broadcast %223 : vector<1x1x64xf32> to vector<16x16x64xf32>
    %225 = arith.mulf %220, %224 : vector<16x16x64xf32>
    %226 = arith.addf %219, %225 : vector<16x16x64xf32>
    %227 = vector.extract_strided_slice %212 {offsets = [2, 0, 0], sizes = [16, 16, 64], strides = [1, 1, 1]} : vector<18x16x64xf32> to vector<16x16x64xf32>
    %228 = vector.extract_strided_slice %166 {offsets = [8, 0], sizes = [1, 64], strides = [1, 1]} : vector<9x64xf32> to vector<1x64xf32>
    %229 = vector.shape_cast %228 : vector<1x64xf32> to vector<64xf32>
    %230 = vector.shape_cast %229 : vector<64xf32> to vector<1x1x64xf32>
    %231 = vector.broadcast %230 : vector<1x1x64xf32> to vector<16x16x64xf32>
    %232 = arith.mulf %227, %231 : vector<16x16x64xf32>
    %233 = arith.addf %226, %232 : vector<16x16x64xf32>
    %c0_73 = arith.constant 0 : index
    %c0_74 = arith.constant 0 : index
    %234 = vector.load %arg9[%c0_73, %c0_74] : memref<1x64xf32, #tpu.memory_space<vmem>>, vector<1x64xf32>
    %235 = vector.shape_cast %234 : vector<1x64xf32> to vector<1x1x64xf32>
    %236 = vector.broadcast %235 : vector<1x1x64xf32> to vector<16x16x64xf32>
    %237 = arith.mulf %233, %236 : vector<16x16x64xf32>
    %c0_75 = arith.constant 0 : index
    %c0_76 = arith.constant 0 : index
    %238 = vector.load %arg10[%c0_75, %c0_76] : memref<1x64xf32, #tpu.memory_space<vmem>>, vector<1x64xf32>
    %239 = vector.shape_cast %238 : vector<1x64xf32> to vector<1x1x64xf32>
    %240 = vector.broadcast %239 : vector<1x1x64xf32> to vector<16x16x64xf32>
    %241 = arith.addf %237, %240 : vector<16x16x64xf32>
    %242 = vector.shape_cast %241 : vector<16x16x64xf32> to vector<256x64xf32>
    %cst_77 = arith.constant dense<0.000000e+00> : vector<256xf32>
    %243 = vector.multi_reduction <add>, %242, %cst_77 [1] : vector<256x64xf32> to vector<256xf32>
    %244 = vector.shape_cast %243 : vector<256xf32> to vector<256x1xf32>
    %cst_78 = arith.constant 6.400000e+01 : f32
    %245 = vector.broadcast %cst_78 : f32 to vector<256x1xf32>
    %246 = arith.divf %244, %245 : vector<256x1xf32>
    %247 = vector.broadcast %246 : vector<256x1xf32> to vector<256x64xf32>
    %248 = arith.subf %242, %247 : vector<256x64xf32>
    %249 = arith.mulf %248, %248 : vector<256x64xf32>
    %cst_79 = arith.constant dense<0.000000e+00> : vector<256xf32>
    %250 = vector.multi_reduction <add>, %249, %cst_79 [1] : vector<256x64xf32> to vector<256xf32>
    %251 = vector.shape_cast %250 : vector<256xf32> to vector<256x1xf32>
    %cst_80 = arith.constant 6.400000e+01 : f32
    %252 = vector.broadcast %cst_80 : f32 to vector<256x1xf32>
    %253 = arith.divf %251, %252 : vector<256x1xf32>
    %254 = vector.broadcast %246 : vector<256x1xf32> to vector<256x64xf32>
    %255 = arith.subf %242, %254 : vector<256x64xf32>
    %cst_81 = arith.constant 9.99999974E-6 : f32
    %256 = vector.broadcast %cst_81 : f32 to vector<256x1xf32>
    %257 = arith.addf %253, %256 : vector<256x1xf32>
    %258 = math.rsqrt %257 : vector<256x1xf32>
    %259 = vector.broadcast %258 : vector<256x1xf32> to vector<256x64xf32>
    %260 = arith.mulf %255, %259 : vector<256x64xf32>
    %c0_82 = arith.constant 0 : index
    %c0_83 = arith.constant 0 : index
    %261 = vector.load %arg11[%c0_82, %c0_83] : memref<1x64xf32, #tpu.memory_space<vmem>>, vector<1x64xf32>
    %262 = vector.broadcast %261 : vector<1x64xf32> to vector<256x64xf32>
    %263 = arith.mulf %260, %262 : vector<256x64xf32>
    %c0_84 = arith.constant 0 : index
    %c0_85 = arith.constant 0 : index
    %264 = vector.load %arg12[%c0_84, %c0_85] : memref<1x64xf32, #tpu.memory_space<vmem>>, vector<1x64xf32>
    %265 = vector.broadcast %264 : vector<1x64xf32> to vector<256x64xf32>
    %266 = arith.addf %263, %265 : vector<256x64xf32>
    %267 = arith.truncf %266 : vector<256x64xf32> to vector<256x64xbf16>
    %c0_86 = arith.constant 0 : index
    %c0_87 = arith.constant 0 : index
    %268 = vector.load %arg13[%c0_86, %c0_87] : memref<64x256xbf16, #tpu.memory_space<vmem>>, vector<64x256xbf16>
    %cst_88 = arith.constant dense<0.000000e+00> : vector<256x256xf32>
    %269 = tpu.matmul %267, %268, %cst_88 {dimension_numbers = #tpu.dot_dimension_numbers<[1], [0], [0], [1], [0, 0, 1, 1], [], []>} : vector<256x64xbf16>, vector<64x256xbf16>, vector<256x256xf32> -> vector<256x256xf32>
    %c0_89 = arith.constant 0 : index
    %c0_90 = arith.constant 0 : index
    %270 = vector.load %arg14[%c0_89, %c0_90] : memref<1x256xf32, #tpu.memory_space<vmem>>, vector<1x256xf32>
    %271 = vector.broadcast %270 : vector<1x256xf32> to vector<256x256xf32>
    %272 = arith.addf %269, %271 : vector<256x256xf32>
    %cst_91 = arith.constant 5.000000e-01 : f32
    %273 = vector.broadcast %cst_91 : f32 to vector<256x256xf32>
    %274 = arith.mulf %273, %272 : vector<256x256xf32>
    %cst_92 = arith.constant 4.471500e-02 : f32
    %275 = vector.broadcast %cst_92 : f32 to vector<256x256xf32>
    %276 = arith.mulf %275, %272 : vector<256x256xf32>
    %277 = arith.mulf %276, %272 : vector<256x256xf32>
    %278 = arith.mulf %277, %272 : vector<256x256xf32>
    %279 = arith.addf %272, %278 : vector<256x256xf32>
    %cst_93 = arith.constant 0.797884583 : f32
    %280 = vector.broadcast %cst_93 : f32 to vector<256x256xf32>
    %281 = arith.mulf %280, %279 : vector<256x256xf32>
    %282 = math.tanh %281 : vector<256x256xf32>
    %cst_94 = arith.constant 1.000000e+00 : f32
    %283 = vector.broadcast %cst_94 : f32 to vector<256x256xf32>
    %284 = arith.addf %283, %282 : vector<256x256xf32>
    %285 = arith.mulf %274, %284 : vector<256x256xf32>
    %286 = arith.truncf %285 : vector<256x256xf32> to vector<256x256xbf16>
    %c0_95 = arith.constant 0 : index
    %c0_96 = arith.constant 0 : index
    %287 = vector.load %arg15[%c0_95, %c0_96] : memref<256x64xbf16, #tpu.memory_space<vmem>>, vector<256x64xbf16>
    %cst_97 = arith.constant dense<0.000000e+00> : vector<256x64xf32>
    %288 = tpu.matmul %286, %287, %cst_97 {dimension_numbers = #tpu.dot_dimension_numbers<[1], [0], [0], [1], [0, 0, 1, 1], [], []>} : vector<256x256xbf16>, vector<256x64xbf16>, vector<256x64xf32> -> vector<256x64xf32>
    %c0_98 = arith.constant 0 : index
    %c0_99 = arith.constant 0 : index
    %289 = vector.load %arg16[%c0_98, %c0_99] : memref<1x64xf32, #tpu.memory_space<vmem>>, vector<1x64xf32>
    %290 = vector.broadcast %289 : vector<1x64xf32> to vector<256x64xf32>
    %291 = arith.addf %288, %290 : vector<256x64xf32>
    %292 = arith.addf %242, %291 : vector<256x64xf32>
    %c0_100 = arith.constant 0 : index
    %c0_101 = arith.constant 0 : index
    %c0_102 = arith.constant 0 : index
    %293 = vector.load %arg17[%c0_100, %c0_101, %c0_102] : memref<1x256x64xf32, #tpu.memory_space<vmem>>, vector<1x256x64xf32>
    %294 = vector.shape_cast %293 : vector<1x256x64xf32> to vector<256x64xf32>
    %295 = vector.shape_cast %292 : vector<256x64xf32> to vector<1x256x64xf32>
    tpu.vector_store %arg17[%c0_100, %c0_101, %c0_102], %295 {strides = array<i32>} : memref<1x256x64xf32, #tpu.memory_space<vmem>>, vector<1x256x64xf32>,
    return
  }
  func.func @transform_0(%arg0: i32) -> (i32, i32, i32) {
    %c0_i32 = arith.constant 0 : i32
    %c0_i32_0 = arith.constant 0 : i32
    %c0_i32_1 = arith.constant 0 : i32
    return %arg0, %c0_i32, %c0_i32_0 : i32, i32, i32
  }
  func.func @transform_1(%arg0: i32) -> (i32, i32) {
    %c0_i32 = arith.constant 0 : i32
    %c0_i32_0 = arith.constant 0 : i32
    %c0_i32_1 = arith.constant 0 : i32
    return %c0_i32, %c0_i32_0 : i32, i32
  }
  func.func @transform_2(%arg0: i32) -> (i32, i32) {
    %c0_i32 = arith.constant 0 : i32
    %c0_i32_0 = arith.constant 0 : i32
    %c0_i32_1 = arith.constant 0 : i32
    return %c0_i32, %c0_i32_0 : i32, i32
  }
  func.func @transform_3(%arg0: i32) -> (i32, i32) {
    %c0_i32 = arith.constant 0 : i32
    %c0_i32_0 = arith.constant 0 : i32
    %c0_i32_1 = arith.constant 0 : i32
    return %c0_i32, %c0_i32_0 : i32, i32
  }
  func.func @transform_4(%arg0: i32) -> (i32, i32) {
    %c0_i32 = arith.constant 0 : i32
    %c0_i32_0 = arith.constant 0 : i32
    %c0_i32_1 = arith.constant 0 : i32
    return %c0_i32, %c0_i32_0 : i32, i32
  }
  func.func @transform_5(%arg0: i32) -> (i32, i32, i32) {
    %c0_i32 = arith.constant 0 : i32
    %c0_i32_0 = arith.constant 0 : i32
    %c0_i32_1 = arith.constant 0 : i32
    %c0_i32_2 = arith.constant 0 : i32
    return %c0_i32, %c0_i32_0, %c0_i32_1 : i32, i32, i32
  }
  func.func @transform_6(%arg0: i32) -> (i32, i32) {
    %c0_i32 = arith.constant 0 : i32
    %c0_i32_0 = arith.constant 0 : i32
    %c0_i32_1 = arith.constant 0 : i32
    return %c0_i32, %c0_i32_0 : i32, i32
  }
  func.func @transform_7(%arg0: i32) -> (i32, i32) {
    %c0_i32 = arith.constant 0 : i32
    %c0_i32_0 = arith.constant 0 : i32
    %c0_i32_1 = arith.constant 0 : i32
    return %c0_i32, %c0_i32_0 : i32, i32
  }
  func.func @transform_8(%arg0: i32) -> (i32, i32) {
    %c0_i32 = arith.constant 0 : i32
    %c0_i32_0 = arith.constant 0 : i32
    %c0_i32_1 = arith.constant 0 : i32
    return %c0_i32, %c0_i32_0 : i32, i32
  }
  func.func @transform_9(%arg0: i32) -> (i32, i32) {
    %c0_i32 = arith.constant 0 : i32
    %c0_i32_0 = arith.constant 0 : i32
    %c0_i32_1 = arith.constant 0 : i32
    return %c0_i32, %c0_i32_0 : i32, i32
  }
  func.func @transform_10(%arg0: i32) -> (i32, i32) {
    %c0_i32 = arith.constant 0 : i32
    %c0_i32_0 = arith.constant 0 : i32
    %c0_i32_1 = arith.constant 0 : i32
    return %c0_i32, %c0_i32_0 : i32, i32
  }
  func.func @transform_11(%arg0: i32) -> (i32, i32) {
    %c0_i32 = arith.constant 0 : i32
    %c0_i32_0 = arith.constant 0 : i32
    %c0_i32_1 = arith.constant 0 : i32
    return %c0_i32, %c0_i32_0 : i32, i32
  }
  func.func @transform_12(%arg0: i32) -> (i32, i32) {
    %c0_i32 = arith.constant 0 : i32
    %c0_i32_0 = arith.constant 0 : i32
    %c0_i32_1 = arith.constant 0 : i32
    return %c0_i32, %c0_i32_0 : i32, i32
  }
  func.func @transform_13(%arg0: i32) -> (i32, i32) {
    %c0_i32 = arith.constant 0 : i32
    %c0_i32_0 = arith.constant 0 : i32
    %c0_i32_1 = arith.constant 0 : i32
    return %c0_i32, %c0_i32_0 : i32, i32
  }
  func.func @transform_14(%arg0: i32) -> (i32, i32) {
    %c0_i32 = arith.constant 0 : i32
    %c0_i32_0 = arith.constant 0 : i32
    %c0_i32_1 = arith.constant 0 : i32
    return %c0_i32, %c0_i32_0 : i32, i32
  }
  func.func @transform_15(%arg0: i32) -> (i32, i32) {
    %c0_i32 = arith.constant 0 : i32
    %c0_i32_0 = arith.constant 0 : i32
    %c0_i32_1 = arith.constant 0 : i32
    return %c0_i32, %c0_i32_0 : i32, i32
  }
  func.func @transform_16(%arg0: i32) -> (i32, i32, i32) {
    %c0_i32 = arith.constant 0 : i32
    %c0_i32_0 = arith.constant 0 : i32
    %c0_i32_1 = arith.constant 0 : i32
    return %arg0, %c0_i32, %c0_i32_0 : i32, i32, i32
  }
}

</mosaic_0001>

<llo_original>
// kernel: tiny_vit_block_forward.1
$region0: #{tiny_vit_block_forward.1}
  #allocation0 [shape = 'u32[]', space=smem, size = 0x4, offset = 0x4, fixed_abs, tag = 'smem constant byte address 0x4 - core index']
  #allocation1 [shape = 'u32[72,128]{1,0:T(1,128)}', space=vmem, size = 0x9000, scoped, tag = 'internal scratch']
  #allocation2 [shape = 'f32[18,32,64]{2,1,0:T(8,128)}', space=vmem, size = 0x48000, scoped, tag = 'scratch operand']
  %s0 = inlined_call_operand.vmem [shape: f32[2,256,64], index: 0, kind: input, shape index: {}]
  %s1 = inlined_call_operand.vmem [shape: f32[1,64], index: 1, kind: input, shape index: {}]
  %s2 = inlined_call_operand.vmem [shape: f32[1,64], index: 2, kind: input, shape index: {}]
  %s3 = inlined_call_operand.vmem [shape: bf16[64,384], index: 3, kind: input, shape index: {}]
  %s4 = inlined_call_operand.vmem [shape: f32[1,384], index: 4, kind: input, shape index: {}]
  %s5 = inlined_call_operand.vmem [shape: f32[4,64,64], index: 5, kind: input, shape index: {}]
  %s6 = inlined_call_operand.vmem [shape: f32[1,64], index: 6, kind: input, shape index: {}]
  %s7 = inlined_call_operand.vmem [shape: f32[9,64], index: 7, kind: input, shape index: {}]
  %s8 = inlined_call_operand.vmem [shape: f32[1,64], index: 8, kind: input, shape index: {}]
  %s9 = inlined_call_operand.vmem [shape: f32[1,64], index: 9, kind: input, shape index: {}]
  %s10 = inlined_call_operand.vmem [shape: f32[1,64], index: 10, kind: input, shape index: {}]
  %s11 = inlined_call_operand.vmem [shape: f32[1,64], index: 11, kind: input, shape index: {}]
  %s12 = inlined_call_operand.vmem [shape: bf16[64,256], index: 12, kind: input, shape index: {}]
  %s13 = inlined_call_operand.vmem [shape: f32[1,256], index: 13, kind: input, shape index: {}]
  %s14 = inlined_call_operand.vmem [shape: bf16[256,64], index: 14, kind: input, shape index: {}]
  %s15 = inlined_call_operand.vmem [shape: f32[1,64], index: 15, kind: input, shape index: {}]
  %s16 = inlined_call_operand.vmem [shape: f32[2,256,64], index: 16, kind: output, shape index: {}]
  %s17 = sld [smem:[#allocation0]]
  $region97: #{tiny_vit_block_forward.1} parent=0
    _
  %s19 = ssub.s32 1, %s17
  %s20 = scalar_select 0, %s19, %s17
  loop: start=0, step=1, limit=4
  $region2: #{tiny_vit_block_forward.1} parent=0 // loop_pre_header
    _
  $region3: #{tiny_vit_block_forward.1} parent=0 // loop_header
    %s22 = sphi 0, %s26
    %p23 = scmp.ge.s32.totalorder %s22, 4
    %s32 = sphi 0, %s34
    %s35 = sphi 0, %s32
    %s36 = sphi 0, %s35
    %s52 = sphi 0, %s36
    %s56 = sphi 0, %s56
    %s58 = sphi 0, %s56
    %s59 = sphi 0, %s58
    %s73 = sphi 0, %s59
    %s77 = sphi 0, %s77
    %s79 = sphi 0, %s77
    %s80 = sphi 0, %s79
    %s94 = sphi 0, %s80
    %s98 = sphi 0, %s98
    %s100 = sphi 0, %s98
    %s101 = sphi 0, %s100
    %s115 = sphi 0, %s101
    %s119 = sphi 0, %s119
    %s121 = sphi 0, %s119
    %s122 = sphi 0, %s121
    %s136 = sphi 0, %s122
    %s140 = sphi 0, %s140
    %s142 = sphi 0, %s140
    %s143 = sphi 0, %s142
    %s157 = sphi 0, %s143
    %s161 = sphi 0, %s161
    %s163 = sphi 0, %s161
    %s164 = sphi 0, %s163
    %s178 = sphi 0, %s164
    %s182 = sphi 0, %s182
    %s184 = sphi 0, %s182
    %s185 = sphi 0, %s184
    %s199 = sphi 0, %s185
    %s203 = sphi 0, %s203
    %s205 = sphi 0, %s203
    %s206 = sphi 0, %s205
    %s220 = sphi 0, %s206
    %s224 = sphi 0, %s224
    %s226 = sphi 0, %s224
    %s227 = sphi 0, %s226
    %s241 = sphi 0, %s227
    %s245 = sphi 0, %s245
    %s247 = sphi 0, %s245
    %s248 = sphi 0, %s247
    %s262 = sphi 0, %s248
    %s266 = sphi 0, %s266
    %s268 = sphi 0, %s266
    %s269 = sphi 0, %s268
    %s283 = sphi 0, %s269
    %s287 = sphi 0, %s287
    %s289 = sphi 0, %s287
    %s290 = sphi 0, %s289
    %s304 = sphi 0, %s290
    %s308 = sphi 0, %s308
    %s310 = sphi 0, %s308
    %s311 = sphi 0, %s310
    %s325 = sphi 0, %s311
    %s329 = sphi 0, %s329
    %s331 = sphi 0, %s329
    %s332 = sphi 0, %s331
    %s346 = sphi 0, %s332
    %s350 = sphi 0, %s350
    %s352 = sphi 0, %s350
    %s353 = sphi 0, %s352
    %s367 = sphi 0, %s353
    %s373 = sphi 0, %s375
    %s376 = sphi 0, %s373
    %s377 = sphi 0, %s376
    %s393 = sphi 0, %s377
  $region4: #{tiny_vit_block_forward.1} parent=0 // loop_header_branch
    %25 = sbr.rel (%p23) target = $region8
  $region5: #{tiny_vit_block_forward.1} parent=0 // loop_body
    %s27 = ssub.s32 %s22, 1
    %s28 = ssub.s32 %s22, 2
    %s29 = sadd.s32 %s22, 1
    %s30 = ssub.s32 %s22, %s29
    %p31 = scmp.eq.s32.totalorder %s30, 0
    %s33 = sadd.s32 %s32, 1
    %s34 = scalar_select %p31, %s32, %s33
    %p37 = pneg %p31
    %p38 = scmp.eq.s32.totalorder %s22, 1
    %p39 = por %p37, %p38
    %p40 = scmp.ne.s32.totalorder %s32, %s35
    %p41 = scmp.eq.s32.totalorder %s22, 0
    %p42 = por %p40, %p41
    %p43 = scmp.ne.s32.totalorder %s32, %s35
    %p44 = scmp.eq.s32.totalorder %s27, 1
    %p45 = por %p43, %p44
    %p46 = scmp.ne.s32.totalorder %s35, %s36
    %p47 = scmp.eq.s32.totalorder %s27, 0
    %p48 = por %p46, %p47
    %p49 = scmp.ne.s32.totalorder %s35, %s36
    %p50 = scmp.eq.s32.totalorder %s28, 1
    %p51 = por %p49, %p50
    %p53 = scmp.ne.s32.totalorder %s36, %s52
    %p54 = scmp.eq.s32.totalorder %s28, 0
    %p55 = por %p53, %p54
    %s57 = sadd.s32 %s56, 1
    %p60 = scmp.eq.s32.totalorder %s22, 1
    %p61 = scmp.ne.s32.totalorder %s56, %s58
    %p62 = scmp.eq.s32.totalorder %s22, 0
    %p63 = por %p61, %p62
    %p64 = scmp.ne.s32.totalorder %s56, %s58
    %p65 = scmp.eq.s32.totalorder %s27, 1
    %p66 = por %p64, %p65
    %p67 = scmp.ne.s32.totalorder %s58, %s59
    %p68 = scmp.eq.s32.totalorder %s27, 0
    %p69 = por %p67, %p68
    %p70 = scmp.ne.s32.totalorder %s58, %s59
    %p71 = scmp.eq.s32.totalorder %s28, 1
    %p72 = por %p70, %p71
    %p74 = scmp.ne.s32.totalorder %s59, %s73
    %p75 = scmp.eq.s32.totalorder %s28, 0
    %p76 = por %p74, %p75
    %s78 = sadd.s32 %s77, 1
    %p81 = scmp.eq.s32.totalorder %s22, 1
    %p82 = scmp.ne.s32.totalorder %s77, %s79
    %p83 = scmp.eq.s32.totalorder %s22, 0
    %p84 = por %p82, %p83
    %p85 = scmp.ne.s32.totalorder %s77, %s79
    %p86 = scmp.eq.s32.totalorder %s27, 1
    %p87 = por %p85, %p86
    %p88 = scmp.ne.s32.totalorder %s79, %s80
    %p89 = scmp.eq.s32.totalorder %s27, 0
    %p90 = por %p88, %p89
    %p91 = scmp.ne.s32.totalorder %s79, %s80
    %p92 = scmp.eq.s32.totalorder %s28, 1
    %p93 = por %p91, %p92
    %p95 = scmp.ne.s32.totalorder %s80, %s94
    %p96 = scmp.eq.s32.totalorder %s28, 0
    %p97 = por %p95, %p96
    %s99 = sadd.s32 %s98, 1
    %p102 = scmp.eq.s32.totalorder %s22, 1
    %p103 = scmp.ne.s32.totalorder %s98, %s100
    %p104 = scmp.eq.s32.totalorder %s22, 0
    %p105 = por %p103, %p104
    %p106 = scmp.ne.s32.totalorder %s98, %s100
    %p107 = scmp.eq.s32.totalorder %s27, 1
    %p108 = por %p106, %p107
    %p109 = scmp.ne.s32.totalorder %s100, %s101
    %p110 = scmp.eq.s32.totalorder %s27, 0
    %p111 = por %p109, %p110
    %p112 = scmp.ne.s32.totalorder %s100, %s101
    %p113 = scmp.eq.s32.totalorder %s28, 1
    %p114 = por %p112, %p113
    %p116 = scmp.ne.s32.totalorder %s101, %s115
    %p117 = scmp.eq.s32.totalorder %s28, 0
    %p118 = por %p116, %p117
    %s120 = sadd.s32 %s119, 1
    %p123 = scmp.eq.s32.totalorder %s22, 1
    %p124 = scmp.ne.s32.totalorder %s119, %s121
    %p125 = scmp.eq.s32.totalorder %s22, 0
    %p126 = por %p124, %p125
    %p127 = scmp.ne.s32.totalorder %s119, %s121
    %p128 = scmp.eq.s32.totalorder %s27, 1
    %p129 = por %p127, %p128
    %p130 = scmp.ne.s32.totalorder %s121, %s122
    %p131 = scmp.eq.s32.totalorder %s27, 0
    %p132 = por %p130, %p131
    %p133 = scmp.ne.s32.totalorder %s121, %s122
    %p134 = scmp.eq.s32.totalorder %s28, 1
    %p135 = por %p133, %p134
    %p137 = scmp.ne.s32.totalorder %s122, %s136
    %p138 = scmp.eq.s32.totalorder %s28, 0
    %p139 = por %p137, %p138
    %s141 = sadd.s32 %s140, 1
    %p144 = scmp.eq.s32.totalorder %s22, 1
    %p145 = scmp.ne.s32.totalorder %s140, %s142
    %p146 = scmp.eq.s32.totalorder %s22, 0
    %p147 = por %p145, %p146
    %p148 = scmp.ne.s32.totalorder %s140, %s142
    %p149 = scmp.eq.s32.totalorder %s27, 1
    %p150 = por %p148, %p149
    %p151 = scmp.ne.s32.totalorder %s142, %s143
    %p152 = scmp.eq.s32.totalorder %s27, 0
    %p153 = por %p151, %p152
    %p154 = scmp.ne.s32.totalorder %s142, %s143
    %p155 = scmp.eq.s32.totalorder %s28, 1
    %p156 = por %p154, %p155
    %p158 = scmp.ne.s32.totalorder %s143, %s157
    %p159 = scmp.eq.s32.totalorder %s28, 0
    %p160 = por %p158, %p159
    %s162 = sadd.s32 %s161, 1
    %p165 = scmp.eq.s32.totalorder %s22, 1
    %p166 = scmp.ne.s32.totalorder %s161, %s163
    %p167 = scmp.eq.s32.totalorder %s22, 0
    %p168 = por %p166, %p167
    %p169 = scmp.ne.s32.totalorder %s161, %s163
    %p170 = scmp.eq.s32.totalorder %s27, 1
    %p171 = por %p169, %p170
    %p172 = scmp.ne.s32.totalorder %s163, %s164
    %p173 = scmp.eq.s32.totalorder %s27, 0
    %p174 = por %p172, %p173
    %p175 = scmp.ne.s32.totalorder %s163, %s164
    %p176 = scmp.eq.s32.totalorder %s28, 1
    %p177 = por %p175, %p176
    %p179 = scmp.ne.s32.totalorder %s164, %s178
    %p180 = scmp.eq.s32.totalorder %s28, 0
    %p181 = por %p179, %p180
    %s183 = sadd.s32 %s182, 1
    %p186 = scmp.eq.s32.totalorder %s22, 1
    %p187 = scmp.ne.s32.totalorder %s182, %s184
    %p188 = scmp.eq.s32.totalorder %s22, 0
    %p189 = por %p187, %p188
    %p190 = scmp.ne.s32.totalorder %s182, %s184
    %p191 = scmp.eq.s32.totalorder %s27, 1
    %p192 = por %p190, %p191
    %p193 = scmp.ne.s32.totalorder %s184, %s185
    %p194 = scmp.eq.s32.totalorder %s27, 0
    %p195 = por %p193, %p194
    %p196 = scmp.ne.s32.totalorder %s184, %s185
    %p197 = scmp.eq.s32.totalorder %s28, 1
    %p198 = por %p196, %p197
    %p200 = scmp.ne.s32.totalorder %s185, %s199
    %p201 = scmp.eq.s32.totalorder %s28, 0
    %p202 = por %p200, %p201
    %s204 = sadd.s32 %s203, 1
    %p207 = scmp.eq.s32.totalorder %s22, 1
    %p208 = scmp.ne.s32.totalorder %s203, %s205
    %p209 = scmp.eq.s32.totalorder %s22, 0
    %p210 = por %p208, %p209
    %p211 = scmp.ne.s32.totalorder %s203, %s205
    %p212 = scmp.eq.s32.totalorder %s27, 1
    %p213 = por %p211, %p212
    %p214 = scmp.ne.s32.totalorder %s205, %s206
    %p215 = scmp.eq.s32.totalorder %s27, 0
    %p216 = por %p214, %p215
    %p217 = scmp.ne.s32.totalorder %s205, %s206
    %p218 = scmp.eq.s32.totalorder %s28, 1
    %p219 = por %p217, %p218
    %p221 = scmp.ne.s32.totalorder %s206, %s220
    %p222 = scmp.eq.s32.totalorder %s28, 0
    %p223 = por %p221, %p222
    %s225 = sadd.s32 %s224, 1
    %p228 = scmp.eq.s32.totalorder %s22, 1
    %p229 = scmp.ne.s32.totalorder %s224, %s226
    %p230 = scmp.eq.s32.totalorder %s22, 0
    %p231 = por %p229, %p230
    %p232 = scmp.ne.s32.totalorder %s224, %s226
    %p233 = scmp.eq.s32.totalorder %s27, 1
    %p234 = por %p232, %p233
    %p235 = scmp.ne.s32.totalorder %s226, %s227
    %p236 = scmp.eq.s32.totalorder %s27, 0
    %p237 = por %p235, %p236
    %p238 = scmp.ne.s32.totalorder %s226, %s227
    %p239 = scmp.eq.s32.totalorder %s28, 1
    %p240 = por %p238, %p239
    %p242 = scmp.ne.s32.totalorder %s227, %s241
    %p243 = scmp.eq.s32.totalorder %s28, 0
    %p244 = por %p242, %p243
    %s246 = sadd.s32 %s245, 1
    %p249 = scmp.eq.s32.totalorder %s22, 1
    %p250 = scmp.ne.s32.totalorder %s245, %s247
    %p251 = scmp.eq.s32.totalorder %s22, 0
    %p252 = por %p250, %p251
    %p253 = scmp.ne.s32.totalorder %s245, %s247
    %p254 = scmp.eq.s32.totalorder %s27, 1
    %p255 = por %p253, %p254
    %p256 = scmp.ne.s32.totalorder %s247, %s248
    %p257 = scmp.eq.s32.totalorder %s27, 0
    %p258 = por %p256, %p257
    %p259 = scmp.ne.s32.totalorder %s247, %s248
    %p260 = scmp.eq.s32.totalorder %s28, 1
    %p261 = por %p259, %p260
    %p263 = scmp.ne.s32.totalorder %s248, %s262
    %p264 = scmp.eq.s32.totalorder %s28, 0
    %p265 = por %p263, %p264
    %s267 = sadd.s32 %s266, 1
    %p270 = scmp.eq.s32.totalorder %s22, 1
    %p271 = scmp.ne.s32.totalorder %s266, %s268
    %p272 = scmp.eq.s32.totalorder %s22, 0
    %p273 = por %p271, %p272
    %p274 = scmp.ne.s32.totalorder %s266, %s268
    %p275 = scmp.eq.s32.totalorder %s27, 1
    %p276 = por %p274, %p275
    %p277 = scmp.ne.s32.totalorder %s268, %s269
    %p278 = scmp.eq.s32.totalorder %s27, 0
    %p279 = por %p277, %p278
    %p280 = scmp.ne.s32.totalorder %s268, %s269
    %p281 = scmp.eq.s32.totalorder %s28, 1
    %p282 = por %p280, %p281
    %p284 = scmp.ne.s32.totalorder %s269, %s283
    %p285 = scmp.eq.s32.totalorder %s28, 0
    %p286 = por %p284, %p285
    %s288 = sadd.s32 %s287, 1
    %p291 = scmp.eq.s32.totalorder %s22, 1
    %p292 = scmp.ne.s32.totalorder %s287, %s289
    %p293 = scmp.eq.s32.totalorder %s22, 0
    %p294 = por %p292, %p293
    %p295 = scmp.ne.s32.totalorder %s287, %s289
    %p296 = scmp.eq.s32.totalorder %s27, 1
    %p297 = por %p295, %p296
    %p298 = scmp.ne.s32.totalorder %s289, %s290
    %p299 = scmp.eq.s32.totalorder %s27, 0
    %p300 = por %p298, %p299
    %p301 = scmp.ne.s32.totalorder %s289, %s290
    %p302 = scmp.eq.s32.totalorder %s28, 1
    %p303 = por %p301, %p302
    %p305 = scmp.ne.s32.totalorder %s290, %s304
    %p306 = scmp.eq.s32.totalorder %s28, 0
    %p307 = por %p305, %p306
    %s309 = sadd.s32 %s308, 1
    %p312 = scmp.eq.s32.totalorder %s22, 1
    %p313 = scmp.ne.s32.totalorder %s308, %s310
    %p314 = scmp.eq.s32.totalorder %s22, 0
    %p315 = por %p313, %p314
    %p316 = scmp.ne.s32.totalorder %s308, %s310
    %p317 = scmp.eq.s32.totalorder %s27, 1
    %p318 = por %p316, %p317
    %p319 = scmp.ne.s32.totalorder %s310, %s311
    %p320 = scmp.eq.s32.totalorder %s27, 0
    %p321 = por %p319, %p320
    %p322 = scmp.ne.s32.totalorder %s310, %s311
    %p323 = scmp.eq.s32.totalorder %s28, 1
    %p324 = por %p322, %p323
    %p326 = scmp.ne.s32.totalorder %s311, %s325
    %p327 = scmp.eq.s32.totalorder %s28, 0
    %p328 = por %p326, %p327
    %s330 = sadd.s32 %s329, 1
    %p333 = scmp.eq.s32.totalorder %s22, 1
    %p334 = scmp.ne.s32.totalorder %s329, %s331
    %p335 = scmp.eq.s32.totalorder %s22, 0
    %p336 = por %p334, %p335
    %p337 = scmp.ne.s32.totalorder %s329, %s331
    %p338 = scmp.eq.s32.totalorder %s27, 1
    %p339 = por %p337, %p338
    %p340 = scmp.ne.s32.totalorder %s331, %s332
    %p341 = scmp.eq.s32.totalorder %s27, 0
    %p342 = por %p340, %p341
    %p343 = scmp.ne.s32.totalorder %s331, %s332
    %p344 = scmp.eq.s32.totalorder %s28, 1
    %p345 = por %p343, %p344
    %p347 = scmp.ne.s32.totalorder %s332, %s346
    %p348 = scmp.eq.s32.totalorder %s28, 0
    %p349 = por %p347, %p348
    %s351 = sadd.s32 %s350, 1
    %p354 = scmp.eq.s32.totalorder %s22, 1
    %p355 = scmp.ne.s32.totalorder %s350, %s352
    %p356 = scmp.eq.s32.totalorder %s22, 0
    %p357 = por %p355, %p356
    %p358 = scmp.ne.s32.totalorder %s350, %s352
    %p359 = scmp.eq.s32.totalorder %s27, 1
    %p360 = por %p358, %p359
    %p361 = scmp.ne.s32.totalorder %s352, %s353
    %p362 = scmp.eq.s32.totalorder %s27, 0
    %p363 = por %p361, %p362
    %p364 = scmp.ne.s32.totalorder %s352, %s353
    %p365 = scmp.eq.s32.totalorder %s28, 1
    %p366 = por %p364, %p365
    %p368 = scmp.ne.s32.totalorder %s353, %s367
    %p369 = scmp.eq.s32.totalorder %s28, 0
    %p370 = por %p368, %p369
    %s371 = ssub.s32 %s22, %s29
    %p372 = scmp.eq.s32.totalorder %s371, 0
    %s374 = sadd.s32 %s373, 1
    %s375 = scalar_select %p372, %s373, %s374
    %p378 = pneg %p372
    %p379 = scmp.eq.s32.totalorder %s22, 1
    %p380 = por %p378, %p379
    %p381 = scmp.ne.s32.totalorder %s373, %s376
    %p382 = scmp.eq.s32.totalorder %s22, 0
    %p383 = por %p381, %p382
    %p384 = scmp.ne.s32.totalorder %s373, %s376
    %p385 = scmp.eq.s32.totalorder %s27, 1
    %p386 = por %p384, %p385
    %p387 = scmp.ne.s32.totalorder %s376, %s377
    %p388 = scmp.eq.s32.totalorder %s27, 0
    %p389 = por %p387, %p388
    %p390 = scmp.ne.s32.totalorder %s376, %s377
    %p391 = scmp.eq.s32.totalorder %s28, 1
    %p392 = por %p390, %p391
    %p394 = scmp.ne.s32.totalorder %s377, %s393
    %p395 = scmp.eq.s32.totalorder %s28, 0
    %p396 = por %p394, %p395
    %p397 = scmp.le.s32.totalorder 1, %s22
    %p398 = scmp.lt.s32.totalorder %s22, 3
    %p399 = pnand %p397, %p398
    %p400 = pneg %p399
    // Predicated region
    $region9: #{tiny_vit_block_forward.1} parent=5 // pred_check
      _
    $region10: #{tiny_vit_block_forward.1} parent=5 // pred_check_branch
      %402 = sbr.rel (%p399) target = $region12
    $region11: #{tiny_vit_block_forward.1} parent=5 // pred_region
      %s403 = ssub.s32 %s22, 1
      // Predicated region
      $region13: #{tiny_vit_block_forward.1} parent=11 // pred_check
        %p404 = pneg %p69
      $region14: #{tiny_vit_block_forward.1} parent=11 // pred_check_branch
        %406 = sbr.rel (%p404) target = $region16
      $region15: #{tiny_vit_block_forward.1} parent=11 // pred_region
        _
      $region16: #{tiny_vit_block_forward.1} parent=11 // pred_fallthru
        _
      // Predicated region
      $region17: #{tiny_vit_block_forward.1} parent=11 // pred_check
        %p407 = pneg %p90
      $region18: #{tiny_vit_block_forward.1} parent=11 // pred_check_branch
        %409 = sbr.rel (%p407) target = $region20
      $region19: #{tiny_vit_block_forward.1} parent=11 // pred_region
        _
      $region20: #{tiny_vit_block_forward.1} parent=11 // pred_fallthru
        _
      // Predicated region
      $region21: #{tiny_vit_block_forward.1} parent=11 // pred_check
        %p410 = pneg %p111
      $region22: #{tiny_vit_block_forward.1} parent=11 // pred_check_branch
        %412 = sbr.rel (%p410) target = $region24
      $region23: #{tiny_vit_block_forward.1} parent=11 // pred_region
        _
      $region24: #{tiny_vit_block_forward.1} parent=11 // pred_fallthru
        _
      // Predicated region
      $region25: #{tiny_vit_block_forward.1} parent=11 // pred_check
        %p413 = pneg %p132
      $region26: #{tiny_vit_block_forward.1} parent=11 // pred_check_branch
        %415 = sbr.rel (%p413) target = $region28
      $region27: #{tiny_vit_block_forward.1} parent=11 // pred_region
        _
      $region28: #{tiny_vit_block_forward.1} parent=11 // pred_fallthru
        _
      // Predicated region
      $region29: #{tiny_vit_block_forward.1} parent=11 // pred_check
        %p416 = pneg %p153
      $region30: #{tiny_vit_block_forward.1} parent=11 // pred_check_branch
        %418 = sbr.rel (%p416) target = $region32
      $region31: #{tiny_vit_block_forward.1} parent=11 // pred_region
        _
      $region32: #{tiny_vit_block_forward.1} parent=11 // pred_fallthru
        _
      // Predicated region
      $region33: #{tiny_vit_block_forward.1} parent=11 // pred_check
        %p419 = pneg %p174
      $region34: #{tiny_vit_block_forward.1} parent=11 // pred_check_branch
        %421 = sbr.rel (%p419) target = $region36
      $region35: #{tiny_vit_block_forward.1} parent=11 // pred_region
        _
      $region36: #{tiny_vit_block_forward.1} parent=11 // pred_fallthru
        _
      // Predicated region
      $region37: #{tiny_vit_block_forward.1} parent=11 // pred_check
        %p422 = pneg %p195
      $region38: #{tiny_vit_block_forward.1} parent=11 // pred_check_branch
        %424 = sbr.rel (%p422) target = $region40
      $region39: #{tiny_vit_block_forward.1} parent=11 // pred_region
        _
      $region40: #{tiny_vit_block_forward.1} parent=11 // pred_fallthru
        _
      // Predicated region
      $region41: #{tiny_vit_block_forward.1} parent=11 // pred_check
        %p425 = pneg %p216
      $region42: #{tiny_vit_block_forward.1} parent=11 // pred_check_branch
        %427 = sbr.rel (%p425) target = $region44
      $region43: #{tiny_vit_block_forward.1} parent=11 // pred_region
        _
      $region44: #{tiny_vit_block_forward.1} parent=11 // pred_fallthru
        _
      // Predicated region
      $region45: #{tiny_vit_block_forward.1} parent=11 // pred_check
        %p428 = pneg %p237
      $region46: #{tiny_vit_block_forward.1} parent=11 // pred_check_branch
        %430 = sbr.rel (%p428) target = $region48
      $region47: #{tiny_vit_block_forward.1} parent=11 // pred_region
        _
      $region48: #{tiny_vit_block_forward.1} parent=11 // pred_fallthru
        _
      // Predicated region
      $region49: #{tiny_vit_block_forward.1} parent=11 // pred_check
        %p431 = pneg %p258
      $region50: #{tiny_vit_block_forward.1} parent=11 // pred_check_branch
        %433 = sbr.rel (%p431) target = $region52
      $region51: #{tiny_vit_block_forward.1} parent=11 // pred_region
        _
      $region52: #{tiny_vit_block_forward.1} parent=11 // pred_fallthru
        _
      // Predicated region
      $region53: #{tiny_vit_block_forward.1} parent=11 // pred_check
        %p434 = pneg %p279
      $region54: #{tiny_vit_block_forward.1} parent=11 // pred_check_branch
        %436 = sbr.rel (%p434) target = $region56
      $region55: #{tiny_vit_block_forward.1} parent=11 // pred_region
        _
      $region56: #{tiny_vit_block_forward.1} parent=11 // pred_fallthru
        _
      // Predicated region
      $region57: #{tiny_vit_block_forward.1} parent=11 // pred_check
        %p437 = pneg %p300
      $region58: #{tiny_vit_block_forward.1} parent=11 // pred_check_branch
        %439 = sbr.rel (%p437) target = $region60
      $region59: #{tiny_vit_block_forward.1} parent=11 // pred_region
        _
      $region60: #{tiny_vit_block_forward.1} parent=11 // pred_fallthru
        _
      // Predicated region
      $region61: #{tiny_vit_block_forward.1} parent=11 // pred_check
        %p440 = pneg %p321
      $region62: #{tiny_vit_block_forward.1} parent=11 // pred_check_branch
        %442 = sbr.rel (%p440) target = $region64
      $region63: #{tiny_vit_block_forward.1} parent=11 // pred_region
        _
      $region64: #{tiny_vit_block_forward.1} parent=11 // pred_fallthru
        _
      // Predicated region
      $region65: #{tiny_vit_block_forward.1} parent=11 // pred_check
        %p443 = pneg %p342
      $region66: #{tiny_vit_block_forward.1} parent=11 // pred_check_branch
        %445 = sbr.rel (%p443) target = $region68
      $region67: #{tiny_vit_block_forward.1} parent=11 // pred_region
        _
      $region68: #{tiny_vit_block_forward.1} parent=11 // pred_fallthru
        _
      // Predicated region
      $region69: #{tiny_vit_block_forward.1} parent=11 // pred_check
        %p446 = pneg %p363
      $region70: #{tiny_vit_block_forward.1} parent=11 // pred_check_branch
        %448 = sbr.rel (%p446) target = $region72
      $region71: #{tiny_vit_block_forward.1} parent=11 // pred_region
        _
      $region72: #{tiny_vit_block_forward.1} parent=11 // pred_fallthru
        _
    $region12: #{tiny_vit_block_forward.1} parent=5 // pred_fallthru
      _
    %p449 = scmp.lt.s32.totalorder %s22, 2
    // Predicated region
    $region73: #{tiny_vit_block_forward.1} parent=5 // pred_check
      %p450 = pneg %p449
    $region74: #{tiny_vit_block_forward.1} parent=5 // pred_check_branch
      %452 = sbr.rel (%p450) target = $region76
    $region75: #{tiny_vit_block_forward.1} parent=5 // pred_region
      // Predicated region
      $region77: #{tiny_vit_block_forward.1} parent=75 // pred_check
        %p453 = pneg %p42
      $region78: #{tiny_vit_block_forward.1} parent=75 // pred_check_branch
        %455 = sbr.rel (%p453) target = $region80
      $region79: #{tiny_vit_block_forward.1} parent=75 // pred_region
        %p456 = scmp.lt.s32.totalorder %s22, 1
        %s457 = scalar_select %p456, %s22, 1
        %s458 = smul.addr %s457, 32
        %s459 = smul.addr %s458, 8
        %s460 = scalar_lea.vmem %s0, %s459
      $region80: #{tiny_vit_block_forward.1} parent=75 // pred_fallthru
        _
    $region76: #{tiny_vit_block_forward.1} parent=5 // pred_fallthru
      _
    %p461 = scmp.le.s32.totalorder 1, %s22
    %p462 = scmp.lt.s32.totalorder %s22, 3
    %p463 = pnand %p461, %p462
    %p464 = pneg %p463
    // Predicated region
    $region81: #{tiny_vit_block_forward.1} parent=5 // pred_check
      _
    $region82: #{tiny_vit_block_forward.1} parent=5 // pred_check_branch
      %466 = sbr.rel (%p463) target = $region84
    $region83: #{tiny_vit_block_forward.1} parent=5 // pred_region
      %s467 = ssub.s32 %s22, 1
      %p468 = scmp.lt.s32.totalorder %s27, 1
      %s469 = scalar_select %p468, %s27, 1
      %s470 = smul.addr %s469, 32
      %s471 = smul.addr %s470, 8
      %s472 = scalar_lea.vmem %s0, %s471
      %p473 = pneg %p48
      %p474 = pneg %p45
      %p475 = pneg %p69
      %p476 = pneg %p66
      %p477 = pneg %p90
      %p478 = pneg %p87
      %p479 = pneg %p111
      %p480 = pneg %p108
      %p481 = pneg %p132
      %p482 = pneg %p129
      %p483 = pneg %p153
      %p484 = pneg %p150
      %p485 = pneg %p174
      %p486 = pneg %p171
      %p487 = pneg %p195
      %p488 = pneg %p192
      %p489 = pneg %p216
      %p490 = pneg %p213
      %p491 = pneg %p237
      %p492 = pneg %p234
      %p493 = pneg %p258
      %p494 = pneg %p255
      %p495 = pneg %p279
      %p496 = pneg %p276
      %p497 = pneg %p300
      %p498 = pneg %p297
      %p499 = pneg %p321
      %p500 = pneg %p318
      %p501 = pneg %p342
      %p502 = pneg %p339
      %p503 = pneg %p363
      %p504 = pneg %p360
      %p505 = pneg %p389
      %p506 = pneg %p386
      %p507 = scmp.lt.s32.totalorder %s27, 1
      %s508 = scalar_select %p507, %s27, 1
      %s509 = smul.addr %s508, 32
      %s510 = smul.addr %s509, 8
      %s511 = scalar_lea.vmem %s16, %s510
      %p512 = scmp.lt.s32.totalorder %s27, 1
      %s513 = scalar_select %p512, %s27, 1
      %s514 = smul.addr %s513, 32
      %s515 = smul.addr %s514, 8
      %s516 = scalar_lea.vmem %s0, %s515
      %p517 = scmp.lt.s32.totalorder %s27, 1
      %s518 = scalar_select %p517, %s27, 1
      %s519 = smul.addr %s518, 32
      %s520 = smul.addr %s519, 8
      %s521 = scalar_lea.vmem %s16, %s520
      %v523 = vld [vmem:[%s516] sm:$0xff]
      %v524 = vld [vmem:[%s516 + $0x8] sm:$0xff]
      %v525 = vld [vmem:[%s516 + $0x10] sm:$0xff]
      %v526 = vld [vmem:[%s516 + $0x18] sm:$0xff]
      %v527 = vld [vmem:[%s516 + $0x20] sm:$0xff]
      %v528 = vld [vmem:[%s516 + $0x28] sm:$0xff]
      %v529 = vld [vmem:[%s516 + $0x30] sm:$0xff]
      %v530 = vld [vmem:[%s516 + $0x38] sm:$0xff]
      %v531 = vld [vmem:[%s516 + $0x40] sm:$0xff]
      %v532 = vld [vmem:[%s516 + $0x48] sm:$0xff]
      %v533 = vld [vmem:[%s516 + $0x50] sm:$0xff]
      %v534 = vld [vmem:[%s516 + $0x58] sm:$0xff]
      %v535 = vld [vmem:[%s516 + $0x60] sm:$0xff]
      %v536 = vld [vmem:[%s516 + $0x68] sm:$0xff]
      %v537 = vld [vmem:[%s516 + $0x70] sm:$0xff]
      %v538 = vld [vmem:[%s516 + $0x78] sm:$0xff]
      %v539 = vld [vmem:[%s516 + $0x80] sm:$0xff]
      %v540 = vld [vmem:[%s516 + $0x88] sm:$0xff]
      %v541 = vld [vmem:[%s516 + $0x90] sm:$0xff]
      %v542 = vld [vmem:[%s516 + $0x98] sm:$0xff]
      %v543 = vld [vmem:[%s516 + $0xa0] sm:$0xff]
      %v544 = vld [vmem:[%s516 + $0xa8] sm:$0xff]
      %v545 = vld [vmem:[%s516 + $0xb0] sm:$0xff]
      %v546 = vld [vmem:[%s516 + $0xb8] sm:$0xff]
      %v547 = vld [vmem:[%s516 + $0xc0] sm:$0xff]
      %v548 = vld [vmem:[%s516 + $0xc8] sm:$0xff]
      %v549 = vld [vmem:[%s516 + $0xd0] sm:$0xff]
      %v550 = vld [vmem:[%s516 + $0xd8] sm:$0xff]
      %v551 = vld [vmem:[%s516 + $0xe0] sm:$0xff]
      %v552 = vld [vmem:[%s516 + $0xe8] sm:$0xff]
      %v553 = vld [vmem:[%s516 + $0xf0] sm:$0xff]
      %v554 = vld [vmem:[%s516 + $0xf8] sm:$0xff]
      %vm555 = vcmask 523264
      %v556 = vsel %vm555, %v523, 0.0
      %557 = vadd.xlane.f32.xlu0 %v556
      %v558 = vpop.xlane.xlu0 %557
      %v559 = vsel %vm555, %v524, 0.0
      %560 = vadd.xlane.f32.xlu0 %v559
      %v561 = vpop.xlane.xlu0 %560
      %v562 = vsel %vm555, %v525, 0.0
      %563 = vadd.xlane.f32.xlu0 %v562
      %v564 = vpop.xlane.xlu0 %563
      %v565 = vsel %vm555, %v526, 0.0
      %566 = vadd.xlane.f32.xlu0 %v565
      %v567 = vpop.xlane.xlu0 %566
      %v568 = vsel %vm555, %v527, 0.0
      %569 = vadd.xlane.f32.xlu0 %v568
      %v570 = vpop.xlane.xlu0 %569
      %v571 = vsel %vm555, %v528, 0.0
      %572 = vadd.xlane.f32.xlu0 %v571
      %v573 = vpop.xlane.xlu0 %572
      %v574 = vsel %vm555, %v529, 0.0
      %575 = vadd.xlane.f32.xlu0 %v574
      %v576 = vpop.xlane.xlu0 %575
      %v577 = vsel %vm555, %v530, 0.0
      %578 = vadd.xlane.f32.xlu0 %v577
      %v579 = vpop.xlane.xlu0 %578
      %v580 = vsel %vm555, %v531, 0.0
      %581 = vadd.xlane.f32.xlu0 %v580
      %v582 = vpop.xlane.xlu0 %581
      %v583 = vsel %vm555, %v532, 0.0
      %584 = vadd.xlane.f32.xlu0 %v583
      %v585 = vpop.xlane.xlu0 %584
      %v586 = vsel %vm555, %v533, 0.0
      %587 = vadd.xlane.f32.xlu0 %v586
      %v588 = vpop.xlane.xlu0 %587
      %v589 = vsel %vm555, %v534, 0.0
      %590 = vadd.xlane.f32.xlu0 %v589
      %v591 = vpop.xlane.xlu0 %590
      %v592 = vsel %vm555, %v535, 0.0
      %593 = vadd.xlane.f32.xlu0 %v592
      %v594 = vpop.xlane.xlu0 %593
      %v595 = vsel %vm555, %v536, 0.0
      %596 = vadd.xlane.f32.xlu0 %v595
      %v597 = vpop.xlane.xlu0 %596
      %v598 = vsel %vm555, %v537, 0.0
      %599 = vadd.xlane.f32.xlu0 %v598
      %v600 = vpop.xlane.xlu0 %599
      %v601 = vsel %vm555, %v538, 0.0
      %602 = vadd.xlane.f32.xlu0 %v601
      %v603 = vpop.xlane.xlu0 %602
      %v604 = vsel %vm555, %v539, 0.0
      %605 = vadd.xlane.f32.xlu0 %v604
      %v606 = vpop.xlane.xlu0 %605
      %v607 = vsel %vm555, %v540, 0.0
      %608 = vadd.xlane.f32.xlu0 %v607
      %v609 = vpop.xlane.xlu0 %608
      %v610 = vsel %vm555, %v541, 0.0
      %611 = vadd.xlane.f32.xlu0 %v610
      %v612 = vpop.xlane.xlu0 %611
      %v613 = vsel %vm555, %v542, 0.0
      %614 = vadd.xlane.f32.xlu0 %v613
      %v615 = vpop.xlane.xlu0 %614
      %v616 = vsel %vm555, %v543, 0.0
      %617 = vadd.xlane.f32.xlu0 %v616
      %v618 = vpop.xlane.xlu0 %617
      %v619 = vsel %vm555, %v544, 0.0
      %620 = vadd.xlane.f32.xlu0 %v619
      %v621 = vpop.xlane.xlu0 %620
      %v622 = vsel %vm555, %v545, 0.0
      %623 = vadd.xlane.f32.xlu0 %v622
      %v624 = vpop.xlane.xlu0 %623
      %v625 = vsel %vm555, %v546, 0.0
      %626 = vadd.xlane.f32.xlu0 %v625
      %v627 = vpop.xlane.xlu0 %626
      %v628 = vsel %vm555, %v547, 0.0
      %629 = vadd.xlane.f32.xlu0 %v628
      %v630 = vpop.xlane.xlu0 %629
      %v631 = vsel %vm555, %v548, 0.0
      %632 = vadd.xlane.f32.xlu0 %v631
      %v633 = vpop.xlane.xlu0 %632
      %v634 = vsel %vm555, %v549, 0.0
      %635 = vadd.xlane.f32.xlu0 %v634
      %v636 = vpop.xlane.xlu0 %635
      %v637 = vsel %vm555, %v550, 0.0
      %638 = vadd.xlane.f32.xlu0 %v637
      %v639 = vpop.xlane.xlu0 %638
      %v640 = vsel %vm555, %v551, 0.0
      %641 = vadd.xlane.f32.xlu0 %v640
      %v642 = vpop.xlane.xlu0 %641
      %v643 = vsel %vm555, %v552, 0.0
      %644 = vadd.xlane.f32.xlu0 %v643
      %v645 = vpop.xlane.xlu0 %644
      %v646 = vsel %vm555, %v553, 0.0
      %647 = vadd.xlane.f32.xlu0 %v646
      %v648 = vpop.xlane.xlu0 %647
      %v649 = vsel %vm555, %v554, 0.0
      %650 = vadd.xlane.f32.xlu0 %v649
      %v651 = vpop.xlane.xlu0 %650
      %v652 = vrcp.pop 64.0
      %v653 = vmul.f32 64.0, %v652
      %v654 = vsub.f32 1.0, %v653
      %v655 = vmul.f32 %v652, %v654
      %v656 = vadd.f32 %v652, %v655
      %vm657 = vweird.f32 %v652
      %v658 = vsel %vm657, %v652, %v656
      %v659 = vmul.f32 %v558, %v658
      %v660 = vmul.f32 %v561, %v658
      %v661 = vmul.f32 %v564, %v658
      %v662 = vmul.f32 %v567, %v658
      %v663 = vmul.f32 %v570, %v658
      %v664 = vmul.f32 %v573, %v658
      %v665 = vmul.f32 %v576, %v658
      %v666 = vmul.f32 %v579, %v658
      %v667 = vmul.f32 %v582, %v658
      %v668 = vmul.f32 %v585, %v658
      %v669 = vmul.f32 %v588, %v658
      %v670 = vmul.f32 %v591, %v658
      %v671 = vmul.f32 %v594, %v658
      %v672 = vmul.f32 %v597, %v658
      %v673 = vmul.f32 %v600, %v658
      %v674 = vmul.f32 %v603, %v658
      %v675 = vmul.f32 %v606, %v658
      %v676 = vmul.f32 %v609, %v658
      %v677 = vmul.f32 %v612, %v658
      %v678 = vmul.f32 %v615, %v658
      %v679 = vmul.f32 %v618, %v658
      %v680 = vmul.f32 %v621, %v658
      %v681 = vmul.f32 %v624, %v658
      %v682 = vmul.f32 %v627, %v658
      %v683 = vmul.f32 %v630, %v658
      %v684 = vmul.f32 %v633, %v658
      %v685 = vmul.f32 %v636, %v658
      %v686 = vmul.f32 %v639, %v658
      %v687 = vmul.f32 %v642, %v658
      %v688 = vmul.f32 %v645, %v658
      %v689 = vmul.f32 %v648, %v658
      %v690 = vmul.f32 %v651, %v658
      %v691 = vsub.f32 %v523, %v659
      %v692 = vsub.f32 %v524, %v660
      %v693 = vsub.f32 %v525, %v661
      %v694 = vsub.f32 %v526, %v662
      %v695 = vsub.f32 %v527, %v663
      %v696 = vsub.f32 %v528, %v664
      %v697 = vsub.f32 %v529, %v665
      %v698 = vsub.f32 %v530, %v666
      %v699 = vsub.f32 %v531, %v667
      %v700 = vsub.f32 %v532, %v668
      %v701 = vsub.f32 %v533, %v669
      %v702 = vsub.f32 %v534, %v670
      %v703 = vsub.f32 %v535, %v671
      %v704 = vsub.f32 %v536, %v672
      %v705 = vsub.f32 %v537, %v673
      %v706 = vsub.f32 %v538, %v674
      %v707 = vsub.f32 %v539, %v675
      %v708 = vsub.f32 %v540, %v676
      %v709 = vsub.f32 %v541, %v677
      %v710 = vsub.f32 %v542, %v678
      %v711 = vsub.f32 %v543, %v679
      %v712 = vsub.f32 %v544, %v680
      %v713 = vsub.f32 %v545, %v681
      %v714 = vsub.f32 %v546, %v682
      %v715 = vsub.f32 %v547, %v683
      %v716 = vsub.f32 %v548, %v684
      %v717 = vsub.f32 %v549, %v685
      %v718 = vsub.f32 %v550, %v686
      %v719 = vsub.f32 %v551, %v687
      %v720 = vsub.f32 %v552, %v688
      %v721 = vsub.f32 %v553, %v689
      %v722 = vsub.f32 %v554, %v690
      %v723 = vmul.f32 %v691, %v691
      %v724 = vmul.f32 %v692, %v692
      %v725 = vmul.f32 %v693, %v693
      %v726 = vmul.f32 %v694, %v694
      %v727 = vmul.f32 %v695, %v695
      %v728 = vmul.f32 %v696, %v696
      %v729 = vmul.f32 %v697, %v697
      %v730 = vmul.f32 %v698, %v698
      %v731 = vmul.f32 %v699, %v699
      %v732 = vmul.f32 %v700, %v700
      %v733 = vmul.f32 %v701, %v701
      %v734 = vmul.f32 %v702, %v702
      %v735 = vmul.f32 %v703, %v703
      %v736 = vmul.f32 %v704, %v704
      %v737 = vmul.f32 %v705, %v705
      %v738 = vmul.f32 %v706, %v706
      %v739 = vmul.f32 %v707, %v707
      %v740 = vmul.f32 %v708, %v708
      %v741 = vmul.f32 %v709, %v709
      %v742 = vmul.f32 %v710, %v710
      %v743 = vmul.f32 %v711, %v711
      %v744 = vmul.f32 %v712, %v712
      %v745 = vmul.f32 %v713, %v713
      %v746 = vmul.f32 %v714, %v714
      %v747 = vmul.f32 %v715, %v715
      %v748 = vmul.f32 %v716, %v716
      %v749 = vmul.f32 %v717, %v717
      %v750 = vmul.f32 %v718, %v718
      %v751 = vmul.f32 %v719, %v719
      %v752 = vmul.f32 %v720, %v720
      %v753 = vmul.f32 %v721, %v721
      %v754 = vmul.f32 %v722, %v722
      %v755 = vsel %vm555, %v723, 0.0
      %756 = vadd.xlane.f32.xlu0 %v755
      %v757 = vpop.xlane.xlu0 %756
      %v758 = vsel %vm555, %v724, 0.0
      %759 = vadd.xlane.f32.xlu0 %v758
      %v760 = vpop.xlane.xlu0 %759
      %v761 = vsel %vm555, %v725, 0.0
      %762 = vadd.xlane.f32.xlu0 %v761
      %v763 = vpop.xlane.xlu0 %762
      %v764 = vsel %vm555, %v726, 0.0
      %765 = vadd.xlane.f32.xlu0 %v764
      %v766 = vpop.xlane.xlu0 %765
      %v767 = vsel %vm555, %v727, 0.0
      %768 = vadd.xlane.f32.xlu0 %v767
      %v769 = vpop.xlane.xlu0 %768
      %v770 = vsel %vm555, %v728, 0.0
      %771 = vadd.xlane.f32.xlu0 %v770
      %v772 = vpop.xlane.xlu0 %771
      %v773 = vsel %vm555, %v729, 0.0
      %774 = vadd.xlane.f32.xlu0 %v773
      %v775 = vpop.xlane.xlu0 %774
      %v776 = vsel %vm555, %v730, 0.0
      %777 = vadd.xlane.f32.xlu0 %v776
      %v778 = vpop.xlane.xlu0 %777
      %v779 = vsel %vm555, %v731, 0.0
      %780 = vadd.xlane.f32.xlu0 %v779
      %v781 = vpop.xlane.xlu0 %780
      %v782 = vsel %vm555, %v732, 0.0
      %783 = vadd.xlane.f32.xlu0 %v782
      %v784 = vpop.xlane.xlu0 %783
      %v785 = vsel %vm555, %v733, 0.0
      %786 = vadd.xlane.f32.xlu0 %v785
      %v787 = vpop.xlane.xlu0 %786
      %v788 = vsel %vm555, %v734, 0.0
      %789 = vadd.xlane.f32.xlu0 %v788
      %v790 = vpop.xlane.xlu0 %789
      %v791 = vsel %vm555, %v735, 0.0
      %792 = vadd.xlane.f32.xlu0 %v791
      %v793 = vpop.xlane.xlu0 %792
      %v794 = vsel %vm555, %v736, 0.0
      %795 = vadd.xlane.f32.xlu0 %v794
      %v796 = vpop.xlane.xlu0 %795
      %v797 = vsel %vm555, %v737, 0.0
      %798 = vadd.xlane.f32.xlu0 %v797
      %v799 = vpop.xlane.xlu0 %798
      %v800 = vsel %vm555, %v738, 0.0
      %801 = vadd.xlane.f32.xlu0 %v800
      %v802 = vpop.xlane.xlu0 %801
      %v803 = vsel %vm555, %v739, 0.0
      %804 = vadd.xlane.f32.xlu0 %v803
      %v805 = vpop.xlane.xlu0 %804
      %v806 = vsel %vm555, %v740, 0.0
      %807 = vadd.xlane.f32.xlu0 %v806
      %v808 = vpop.xlane.xlu0 %807
      %v809 = vsel %vm555, %v741, 0.0
      %810 = vadd.xlane.f32.xlu0 %v809
      %v811 = vpop.xlane.xlu0 %810
      %v812 = vsel %vm555, %v742, 0.0
      %813 = vadd.xlane.f32.xlu0 %v812
      %v814 = vpop.xlane.xlu0 %813
      %v815 = vsel %vm555, %v743, 0.0
      %816 = vadd.xlane.f32.xlu0 %v815
      %v817 = vpop.xlane.xlu0 %816
      %v818 = vsel %vm555, %v744, 0.0
      %819 = vadd.xlane.f32.xlu0 %v818
      %v820 = vpop.xlane.xlu0 %819
      %v821 = vsel %vm555, %v745, 0.0
      %822 = vadd.xlane.f32.xlu0 %v821
      %v823 = vpop.xlane.xlu0 %822
      %v824 = vsel %vm555, %v746, 0.0
      %825 = vadd.xlane.f32.xlu0 %v824
      %v826 = vpop.xlane.xlu0 %825
      %v827 = vsel %vm555, %v747, 0.0
      %828 = vadd.xlane.f32.xlu0 %v827
      %v829 = vpop.xlane.xlu0 %828
      %v830 = vsel %vm555, %v748, 0.0
      %831 = vadd.xlane.f32.xlu0 %v830
      %v832 = vpop.xlane.xlu0 %831
      %v833 = vsel %vm555, %v749, 0.0
      %834 = vadd.xlane.f32.xlu0 %v833
      %v835 = vpop.xlane.xlu0 %834
      %v836 = vsel %vm555, %v750, 0.0
      %837 = vadd.xlane.f32.xlu0 %v836
      %v838 = vpop.xlane.xlu0 %837
      %v839 = vsel %vm555, %v751, 0.0
      %840 = vadd.xlane.f32.xlu0 %v839
      %v841 = vpop.xlane.xlu0 %840
      %v842 = vsel %vm555, %v752, 0.0
      %843 = vadd.xlane.f32.xlu0 %v842
      %v844 = vpop.xlane.xlu0 %843
      %v845 = vsel %vm555, %v753, 0.0
      %846 = vadd.xlane.f32.xlu0 %v845
      %v847 = vpop.xlane.xlu0 %846
      %v848 = vsel %vm555, %v754, 0.0
      %849 = vadd.xlane.f32.xlu0 %v848
      %v850 = vpop.xlane.xlu0 %849
      %v851 = vmul.f32 %v757, %v658
      %v852 = vmul.f32 %v760, %v658
      %v853 = vmul.f32 %v763, %v658
      %v854 = vmul.f32 %v766, %v658
      %v855 = vmul.f32 %v769, %v658
      %v856 = vmul.f32 %v772, %v658
      %v857 = vmul.f32 %v775, %v658
      %v858 = vmul.f32 %v778, %v658
      %v859 = vmul.f32 %v781, %v658
      %v860 = vmul.f32 %v784, %v658
      %v861 = vmul.f32 %v787, %v658
      %v862 = vmul.f32 %v790, %v658
      %v863 = vmul.f32 %v793, %v658
      %v864 = vmul.f32 %v796, %v658
      %v865 = vmul.f32 %v799, %v658
      %v866 = vmul.f32 %v802, %v658
      %v867 = vmul.f32 %v805, %v658
      %v868 = vmul.f32 %v808, %v658
      %v869 = vmul.f32 %v811, %v658
      %v870 = vmul.f32 %v814, %v658
      %v871 = vmul.f32 %v817, %v658
      %v872 = vmul.f32 %v820, %v658
      %v873 = vmul.f32 %v823, %v658
      %v874 = vmul.f32 %v826, %v658
      %v875 = vmul.f32 %v829, %v658
      %v876 = vmul.f32 %v832, %v658
      %v877 = vmul.f32 %v835, %v658
      %v878 = vmul.f32 %v838, %v658
      %v879 = vmul.f32 %v841, %v658
      %v880 = vmul.f32 %v844, %v658
      %v881 = vmul.f32 %v847, %v658
      %v882 = vmul.f32 %v850, %v658
      %v883 = vadd.f32 %v851, 1e-05
      %v884 = vadd.f32 %v852, 1e-05
      %v885 = vadd.f32 %v853, 1e-05
      %v886 = vadd.f32 %v854, 1e-05
      %v887 = vadd.f32 %v855, 1e-05
      %v888 = vadd.f32 %v856, 1e-05
      %v889 = vadd.f32 %v857, 1e-05
      %v890 = vadd.f32 %v858, 1e-05
      %v891 = vadd.f32 %v859, 1e-05
      %v892 = vadd.f32 %v860, 1e-05
      %v893 = vadd.f32 %v861, 1e-05
      %v894 = vadd.f32 %v862, 1e-05
      %v895 = vadd.f32 %v863, 1e-05
      %v896 = vadd.f32 %v864, 1e-05
      %v897 = vadd.f32 %v865, 1e-05
      %v898 = vadd.f32 %v866, 1e-05
      %v899 = vadd.f32 %v867, 1e-05
      %v900 = vadd.f32 %v868, 1e-05
      %v901 = vadd.f32 %v869, 1e-05
      %v902 = vadd.f32 %v870, 1e-05
      %v903 = vadd.f32 %v871, 1e-05
      %v904 = vadd.f32 %v872, 1e-05
      %v905 = vadd.f32 %v873, 1e-05
      %v906 = vadd.f32 %v874, 1e-05
      %v907 = vadd.f32 %v875, 1e-05
      %v908 = vadd.f32 %v876, 1e-05
      %v909 = vadd.f32 %v877, 1e-05
      %v910 = vadd.f32 %v878, 1e-05
      %v911 = vadd.f32 %v879, 1e-05
      %v912 = vadd.f32 %v880, 1e-05
      %v913 = vadd.f32 %v881, 1e-05
      %v914 = vadd.f32 %v882, 1e-05
      %v915 = vrsqrt.pop %v883
      %v916 = vmul.f32 %v915, %v883
      %v917 = vmul.f32 %v916, %v915
      %v918 = vmul.f32 0.5, %v917
      %v919 = vsub.f32 1.5, %v918
      %v920 = vmul.f32 %v915, %v919
      %vm921 = vweird.f32 %v883
      %vm922 = vweird.f32 %v915
      %vm923 = vmor %vm921, %vm922
      %v924 = vsel %vm923, %v915, %v920
      %v925 = vrsqrt.pop %v884
      %v926 = vmul.f32 %v925, %v884
      %v927 = vmul.f32 %v926, %v925
      %v928 = vmul.f32 0.5, %v927
      %v929 = vsub.f32 1.5, %v928
      %v930 = vmul.f32 %v925, %v929
      %vm931 = vweird.f32 %v884
      %vm932 = vweird.f32 %v925
      %vm933 = vmor %vm931, %vm932
      %v934 = vsel %vm933, %v925, %v930
      %v935 = vrsqrt.pop %v885
      %v936 = vmul.f32 %v935, %v885
      %v937 = vmul.f32 %v936, %v935
      %v938 = vmul.f32 0.5, %v937
      %v939 = vsub.f32 1.5, %v938
      %v940 = vmul.f32 %v935, %v939
      %vm941 = vweird.f32 %v885
      %vm942 = vweird.f32 %v935
      %vm943 = vmor %vm941, %vm942
      %v944 = vsel %vm943, %v935, %v940
      %v945 = vrsqrt.pop %v886
      %v946 = vmul.f32 %v945, %v886
      %v947 = vmul.f32 %v946, %v945
      %v948 = vmul.f32 0.5, %v947
      %v949 = vsub.f32 1.5, %v948
      %v950 = vmul.f32 %v945, %v949
      %vm951 = vweird.f32 %v886
      %vm952 = vweird.f32 %v945
      %vm953 = vmor %vm951, %vm952
      %v954 = vsel %vm953, %v945, %v950
      %v955 = vrsqrt.pop %v887
      %v956 = vmul.f32 %v955, %v887
      %v957 = vmul.f32 %v956, %v955
      %v958 = vmul.f32 0.5, %v957
      %v959 = vsub.f32 1.5, %v958
      %v960 = vmul.f32 %v955, %v959
      %vm961 = vweird.f32 %v887
      %vm962 = vweird.f32 %v955
      %vm963 = vmor %vm961, %vm962
      %v964 = vsel %vm963, %v955, %v960
      %v965 = vrsqrt.pop %v888
      %v966 = vmul.f32 %v965, %v888
      %v967 = vmul.f32 %v966, %v965
      %v968 = vmul.f32 0.5, %v967
      %v969 = vsub.f32 1.5, %v968
      %v970 = vmul.f32 %v965, %v969
      %vm971 = vweird.f32 %v888
      %vm972 = vweird.f32 %v965
      %vm973 = vmor %vm971, %vm972
      %v974 = vsel %vm973, %v965, %v970
      %v975 = vrsqrt.pop %v889
      %v976 = vmul.f32 %v975, %v889
      %v977 = vmul.f32 %v976, %v975
      %v978 = vmul.f32 0.5, %v977
      %v979 = vsub.f32 1.5, %v978
      %v980 = vmul.f32 %v975, %v979
      %vm981 = vweird.f32 %v889
      %vm982 = vweird.f32 %v975
      %vm983 = vmor %vm981, %vm982
      %v984 = vsel %vm983, %v975, %v980
      %v985 = vrsqrt.pop %v890
      %v986 = vmul.f32 %v985, %v890
      %v987 = vmul.f32 %v986, %v985
      %v988 = vmul.f32 0.5, %v987
      %v989 = vsub.f32 1.5, %v988
      %v990 = vmul.f32 %v985, %v989
      %vm991 = vweird.f32 %v890
      %vm992 = vweird.f32 %v985
      %vm993 = vmor %vm991, %vm992
      %v994 = vsel %vm993, %v985, %v990
      %v995 = vrsqrt.pop %v891
      %v996 = vmul.f32 %v995, %v891
      %v997 = vmul.f32 %v996, %v995
      %v998 = vmul.f32 0.5, %v997
      %v999 = vsub.f32 1.5, %v998
      %v1000 = vmul.f32 %v995, %v999
      %vm1001 = vweird.f32 %v891
      %vm1002 = vweird.f32 %v995
      %vm1003 = vmor %vm1001, %vm1002
      %v1004 = vsel %vm1003, %v995, %v1000
      %v1005 = vrsqrt.pop %v892
      %v1006 = vmul.f32 %v1005, %v892
      %v1007 = vmul.f32 %v1006, %v1005
      %v1008 = vmul.f32 0.5, %v1007
      %v1009 = vsub.f32 1.5, %v1008
      %v1010 = vmul.f32 %v1005, %v1009
      %vm1011 = vweird.f32 %v892
      %vm1012 = vweird.f32 %v1005
      %vm1013 = vmor %vm1011, %vm1012
      %v1014 = vsel %vm1013, %v1005, %v1010
      %v1015 = vrsqrt.pop %v893
      %v1016 = vmul.f32 %v1015, %v893
      %v1017 = vmul.f32 %v1016, %v1015
      %v1018 = vmul.f32 0.5, %v1017
      %v1019 = vsub.f32 1.5, %v1018
      %v1020 = vmul.f32 %v1015, %v1019
      %vm1021 = vweird.f32 %v893
      %vm1022 = vweird.f32 %v1015
      %vm1023 = vmor %vm1021, %vm1022
      %v1024 = vsel %vm1023, %v1015, %v1020
      %v1025 = vrsqrt.pop %v894
      %v1026 = vmul.f32 %v1025, %v894
      %v1027 = vmul.f32 %v1026, %v1025
      %v1028 = vmul.f32 0.5, %v1027
      %v1029 = vsub.f32 1.5, %v1028
      %v1030 = vmul.f32 %v1025, %v1029
      %vm1031 = vweird.f32 %v894
      %vm1032 = vweird.f32 %v1025
      %vm1033 = vmor %vm1031, %vm1032
      %v1034 = vsel %vm1033, %v1025, %v1030
      %v1035 = vrsqrt.pop %v895
      %v1036 = vmul.f32 %v1035, %v895
      %v1037 = vmul.f32 %v1036, %v1035
      %v1038 = vmul.f32 0.5, %v1037
      %v1039 = vsub.f32 1.5, %v1038
      %v1040 = vmul.f32 %v1035, %v1039
      %vm1041 = vweird.f32 %v895
      %vm1042 = vweird.f32 %v1035
      %vm1043 = vmor %vm1041, %vm1042
      %v1044 = vsel %vm1043, %v1035, %v1040
      %v1045 = vrsqrt.pop %v896
      %v1046 = vmul.f32 %v1045, %v896
      %v1047 = vmul.f32 %v1046, %v1045
      %v1048 = vmul.f32 0.5, %v1047
      %v1049 = vsub.f32 1.5, %v1048
      %v1050 = vmul.f32 %v1045, %v1049
      %vm1051 = vweird.f32 %v896
      %vm1052 = vweird.f32 %v1045
      %vm1053 = vmor %vm1051, %vm1052
      %v1054 = vsel %vm1053, %v1045, %v1050
      %v1055 = vrsqrt.pop %v897
      %v1056 = vmul.f32 %v1055, %v897
      %v1057 = vmul.f32 %v1056, %v1055
      %v1058 = vmul.f32 0.5, %v1057
      %v1059 = vsub.f32 1.5, %v1058
      %v1060 = vmul.f32 %v1055, %v1059
      %vm1061 = vweird.f32 %v897
      %vm1062 = vweird.f32 %v1055
      %vm1063 = vmor %vm1061, %vm1062
      %v1064 = vsel %vm1063, %v1055, %v1060
      %v1065 = vrsqrt.pop %v898
      %v1066 = vmul.f32 %v1065, %v898
      %v1067 = vmul.f32 %v1066, %v1065
      %v1068 = vmul.f32 0.5, %v1067
      %v1069 = vsub.f32 1.5, %v1068
      %v1070 = vmul.f32 %v1065, %v1069
      %vm1071 = vweird.f32 %v898
      %vm1072 = vweird.f32 %v1065
      %vm1073 = vmor %vm1071, %vm1072
      %v1074 = vsel %vm1073, %v1065, %v1070
      %v1075 = vrsqrt.pop %v899
      %v1076 = vmul.f32 %v1075, %v899
      %v1077 = vmul.f32 %v1076, %v1075
      %v1078 = vmul.f32 0.5, %v1077
      %v1079 = vsub.f32 1.5, %v1078
      %v1080 = vmul.f32 %v1075, %v1079
      %vm1081 = vweird.f32 %v899
      %vm1082 = vweird.f32 %v1075
      %vm1083 = vmor %vm1081, %vm1082
      %v1084 = vsel %vm1083, %v1075, %v1080
      %v1085 = vrsqrt.pop %v900
      %v1086 = vmul.f32 %v1085, %v900
      %v1087 = vmul.f32 %v1086, %v1085
      %v1088 = vmul.f32 0.5, %v1087
      %v1089 = vsub.f32 1.5, %v1088
      %v1090 = vmul.f32 %v1085, %v1089
      %vm1091 = vweird.f32 %v900
      %vm1092 = vweird.f32 %v1085
      %vm1093 = vmor %vm1091, %vm1092
      %v1094 = vsel %vm1093, %v1085, %v1090
      %v1095 = vrsqrt.pop %v901
      %v1096 = vmul.f32 %v1095, %v901
      %v1097 = vmul.f32 %v1096, %v1095
      %v1098 = vmul.f32 0.5, %v1097
      %v1099 = vsub.f32 1.5, %v1098
      %v1100 = vmul.f32 %v1095, %v1099
      %vm1101 = vweird.f32 %v901
      %vm1102 = vweird.f32 %v1095
      %vm1103 = vmor %vm1101, %vm1102
      %v1104 = vsel %vm1103, %v1095, %v1100
      %v1105 = vrsqrt.pop %v902
      %v1106 = vmul.f32 %v1105, %v902
      %v1107 = vmul.f32 %v1106, %v1105
      %v1108 = vmul.f32 0.5, %v1107
      %v1109 = vsub.f32 1.5, %v1108
      %v1110 = vmul.f32 %v1105, %v1109
      %vm1111 = vweird.f32 %v902
      %vm1112 = vweird.f32 %v1105
      %vm1113 = vmor %vm1111, %vm1112
      %v1114 = vsel %vm1113, %v1105, %v1110
      %v1115 = vrsqrt.pop %v903
      %v1116 = vmul.f32 %v1115, %v903
      %v1117 = vmul.f32 %v1116, %v1115
      %v1118 = vmul.f32 0.5, %v1117
      %v1119 = vsub.f32 1.5, %v1118
      %v1120 = vmul.f32 %v1115, %v1119
      %vm1121 = vweird.f32 %v903
      %vm1122 = vweird.f32 %v1115
      %vm1123 = vmor %vm1121, %vm1122
      %v1124 = vsel %vm1123, %v1115, %v1120
      %v1125 = vrsqrt.pop %v904
      %v1126 = vmul.f32 %v1125, %v904
      %v1127 = vmul.f32 %v1126, %v1125
      %v1128 = vmul.f32 0.5, %v1127
      %v1129 = vsub.f32 1.5, %v1128
      %v1130 = vmul.f32 %v1125, %v1129
      %vm1131 = vweird.f32 %v904
      %vm1132 = vweird.f32 %v1125
      %vm1133 = vmor %vm1131, %vm1132
      %v1134 = vsel %vm1133, %v1125, %v1130
      %v1135 = vrsqrt.pop %v905
      %v1136 = vmul.f32 %v1135, %v905
      %v1137 = vmul.f32 %v1136, %v1135
      %v1138 = vmul.f32 0.5, %v1137
      %v1139 = vsub.f32 1.5, %v1138
      %v1140 = vmul.f32 %v1135, %v1139
      %vm1141 = vweird.f32 %v905
      %vm1142 = vweird.f32 %v1135
      %vm1143 = vmor %vm1141, %vm1142
      %v1144 = vsel %vm1143, %v1135, %v1140
      %v1145 = vrsqrt.pop %v906
      %v1146 = vmul.f32 %v1145, %v906
      %v1147 = vmul.f32 %v1146, %v1145
      %v1148 = vmul.f32 0.5, %v1147
      %v1149 = vsub.f32 1.5, %v1148
      %v1150 = vmul.f32 %v1145, %v1149
      %vm1151 = vweird.f32 %v906
      %vm1152 = vweird.f32 %v1145
      %vm1153 = vmor %vm1151, %vm1152
      %v1154 = vsel %vm1153, %v1145, %v1150
      %v1155 = vrsqrt.pop %v907
      %v1156 = vmul.f32 %v1155, %v907
      %v1157 = vmul.f32 %v1156, %v1155
      %v1158 = vmul.f32 0.5, %v1157
      %v1159 = vsub.f32 1.5, %v1158
      %v1160 = vmul.f32 %v1155, %v1159
      %vm1161 = vweird.f32 %v907
      %vm1162 = vweird.f32 %v1155
      %vm1163 = vmor %vm1161, %vm1162
      %v1164 = vsel %vm1163, %v1155, %v1160
      %v1165 = vrsqrt.pop %v908
      %v1166 = vmul.f32 %v1165, %v908
      %v1167 = vmul.f32 %v1166, %v1165
      %v1168 = vmul.f32 0.5, %v1167
      %v1169 = vsub.f32 1.5, %v1168
      %v1170 = vmul.f32 %v1165, %v1169
      %vm1171 = vweird.f32 %v908
      %vm1172 = vweird.f32 %v1165
      %vm1173 = vmor %vm1171, %vm1172
      %v1174 = vsel %vm1173, %v1165, %v1170
      %v1175 = vrsqrt.pop %v909
      %v1176 = vmul.f32 %v1175, %v909
      %v1177 = vmul.f32 %v1176, %v1175
      %v1178 = vmul.f32 0.5, %v1177
      %v1179 = vsub.f32 1.5, %v1178
      %v1180 = vmul.f32 %v1175, %v1179
      %vm1181 = vweird.f32 %v909
      %vm1182 = vweird.f32 %v1175
      %vm1183 = vmor %vm1181, %vm1182
      %v1184 = vsel %vm1183, %v1175, %v1180
      %v1185 = vrsqrt.pop %v910
      %v1186 = vmul.f32 %v1185, %v910
      %v1187 = vmul.f32 %v1186, %v1185
      %v1188 = vmul.f32 0.5, %v1187
      %v1189 = vsub.f32 1.5, %v1188
      %v1190 = vmul.f32 %v1185, %v1189
      %vm1191 = vweird.f32 %v910
      %vm1192 = vweird.f32 %v1185
      %vm1193 = vmor %vm1191, %vm1192
      %v1194 = vsel %vm1193, %v1185, %v1190
      %v1195 = vrsqrt.pop %v911
      %v1196 = vmul.f32 %v1195, %v911
      %v1197 = vmul.f32 %v1196, %v1195
      %v1198 = vmul.f32 0.5, %v1197
      %v1199 = vsub.f32 1.5, %v1198
      %v1200 = vmul.f32 %v1195, %v1199
      %vm1201 = vweird.f32 %v911
      %vm1202 = vweird.f32 %v1195
      %vm1203 = vmor %vm1201, %vm1202
      %v1204 = vsel %vm1203, %v1195, %v1200
      %v1205 = vrsqrt.pop %v912
      %v1206 = vmul.f32 %v1205, %v912
      %v1207 = vmul.f32 %v1206, %v1205
      %v1208 = vmul.f32 0.5, %v1207
      %v1209 = vsub.f32 1.5, %v1208
      %v1210 = vmul.f32 %v1205, %v1209
      %vm1211 = vweird.f32 %v912
      %vm1212 = vweird.f32 %v1205
      %vm1213 = vmor %vm1211, %vm1212
      %v1214 = vsel %vm1213, %v1205, %v1210
      %v1215 = vrsqrt.pop %v913
      %v1216 = vmul.f32 %v1215, %v913
      %v1217 = vmul.f32 %v1216, %v1215
      %v1218 = vmul.f32 0.5, %v1217
      %v1219 = vsub.f32 1.5, %v1218
      %v1220 = vmul.f32 %v1215, %v1219
      %vm1221 = vweird.f32 %v913
      %vm1222 = vweird.f32 %v1215
      %vm1223 = vmor %vm1221, %vm1222
      %v1224 = vsel %vm1223, %v1215, %v1220
      %v1225 = vrsqrt.pop %v914
      %v1226 = vmul.f32 %v1225, %v914
      %v1227 = vmul.f32 %v1226, %v1225
      %v1228 = vmul.f32 0.5, %v1227
      %v1229 = vsub.f32 1.5, %v1228
      %v1230 = vmul.f32 %v1225, %v1229
      %vm1231 = vweird.f32 %v914
      %vm1232 = vweird.f32 %v1225
      %vm1233 = vmor %vm1231, %vm1232
      %v1234 = vsel %vm1233, %v1225, %v1230
      %v1235 = vmul.f32 %v691, %v924
      %v1236 = vmul.f32 %v692, %v934
      %v1237 = vmul.f32 %v693, %v944
      %v1238 = vmul.f32 %v694, %v954
      %v1239 = vmul.f32 %v695, %v964
      %v1240 = vmul.f32 %v696, %v974
      %v1241 = vmul.f32 %v697, %v984
      %v1242 = vmul.f32 %v698, %v994
      %v1243 = vmul.f32 %v699, %v1004
      %v1244 = vmul.f32 %v700, %v1014
      %v1245 = vmul.f32 %v701, %v1024
      %v1246 = vmul.f32 %v702, %v1034
      %v1247 = vmul.f32 %v703, %v1044
      %v1248 = vmul.f32 %v704, %v1054
      %v1249 = vmul.f32 %v705, %v1064
      %v1250 = vmul.f32 %v706, %v1074
      %v1251 = vmul.f32 %v707, %v1084
      %v1252 = vmul.f32 %v708, %v1094
      %v1253 = vmul.f32 %v709, %v1104
      %v1254 = vmul.f32 %v710, %v1114
      %v1255 = vmul.f32 %v711, %v1124
      %v1256 = vmul.f32 %v712, %v1134
      %v1257 = vmul.f32 %v713, %v1144
      %v1258 = vmul.f32 %v714, %v1154
      %v1259 = vmul.f32 %v715, %v1164
      %v1260 = vmul.f32 %v716, %v1174
      %v1261 = vmul.f32 %v717, %v1184
      %v1262 = vmul.f32 %v718, %v1194
      %v1263 = vmul.f32 %v719, %v1204
      %v1264 = vmul.f32 %v720, %v1214
      %v1265 = vmul.f32 %v721, %v1224
      %v1266 = vmul.f32 %v722, %v1234
      %v1267 = vld [vmem:[%s1] sm:$0x1]
      %v1269 = vperm.slane %v1267, 0
      %v1271 = vmul.f32 %v1235, %v1269
      %v1272 = vmul.f32 %v1236, %v1269
      %v1273 = vmul.f32 %v1237, %v1269
      %v1274 = vmul.f32 %v1238, %v1269
      %v1275 = vmul.f32 %v1239, %v1269
      %v1276 = vmul.f32 %v1240, %v1269
      %v1277 = vmul.f32 %v1241, %v1269
      %v1278 = vmul.f32 %v1242, %v1269
      %v1279 = vmul.f32 %v1243, %v1269
      %v1280 = vmul.f32 %v1244, %v1269
      %v1281 = vmul.f32 %v1245, %v1269
      %v1282 = vmul.f32 %v1246, %v1269
      %v1283 = vmul.f32 %v1247, %v1269
      %v1284 = vmul.f32 %v1248, %v1269
      %v1285 = vmul.f32 %v1249, %v1269
      %v1286 = vmul.f32 %v1250, %v1269
      %v1287 = vmul.f32 %v1251, %v1269
      %v1288 = vmul.f32 %v1252, %v1269
      %v1289 = vmul.f32 %v1253, %v1269
      %v1290 = vmul.f32 %v1254, %v1269
      %v1291 = vmul.f32 %v1255, %v1269
      %v1292 = vmul.f32 %v1256, %v1269
      %v1293 = vmul.f32 %v1257, %v1269
      %v1294 = vmul.f32 %v1258, %v1269
      %v1295 = vmul.f32 %v1259, %v1269
      %v1296 = vmul.f32 %v1260, %v1269
      %v1297 = vmul.f32 %v1261, %v1269
      %v1298 = vmul.f32 %v1262, %v1269
      %v1299 = vmul.f32 %v1263, %v1269
      %v1300 = vmul.f32 %v1264, %v1269
      %v1301 = vmul.f32 %v1265, %v1269
      %v1302 = vmul.f32 %v1266, %v1269
      %v1303 = vld [vmem:[%s2] sm:$0x1]
      %v1305 = vperm.slane %v1303, 0
      %v1307 = vadd.f32 %v1271, %v1305
      %v1308 = vadd.f32 %v1272, %v1305
      %v1309 = vadd.f32 %v1273, %v1305
      %v1310 = vadd.f32 %v1274, %v1305
      %v1311 = vadd.f32 %v1275, %v1305
      %v1312 = vadd.f32 %v1276, %v1305
      %v1313 = vadd.f32 %v1277, %v1305
      %v1314 = vadd.f32 %v1278, %v1305
      %v1315 = vadd.f32 %v1279, %v1305
      %v1316 = vadd.f32 %v1280, %v1305
      %v1317 = vadd.f32 %v1281, %v1305
      %v1318 = vadd.f32 %v1282, %v1305
      %v1319 = vadd.f32 %v1283, %v1305
      %v1320 = vadd.f32 %v1284, %v1305
      %v1321 = vadd.f32 %v1285, %v1305
      %v1322 = vadd.f32 %v1286, %v1305
      %v1323 = vadd.f32 %v1287, %v1305
      %v1324 = vadd.f32 %v1288, %v1305
      %v1325 = vadd.f32 %v1289, %v1305
      %v1326 = vadd.f32 %v1290, %v1305
      %v1327 = vadd.f32 %v1291, %v1305
      %v1328 = vadd.f32 %v1292, %v1305
      %v1329 = vadd.f32 %v1293, %v1305
      %v1330 = vadd.f32 %v1294, %v1305
      %v1331 = vadd.f32 %v1295, %v1305
      %v1332 = vadd.f32 %v1296, %v1305
      %v1333 = vadd.f32 %v1297, %v1305
      %v1334 = vadd.f32 %v1298, %v1305
      %v1335 = vadd.f32 %v1299, %v1305
      %v1336 = vadd.f32 %v1300, %v1305
      %v1337 = vadd.f32 %v1301, %v1305
      %v1338 = vadd.f32 %v1302, %v1305
      %v1339 = vpack.c.bf16 %v1308, %v1307
      %v1340 = vpack.c.bf16 %v1310, %v1309
      %v1341 = vpack.c.bf16 %v1312, %v1311
      %v1342 = vpack.c.bf16 %v1314, %v1313
      %v1343 = vpack.c.bf16 %v1316, %v1315
      %v1344 = vpack.c.bf16 %v1318, %v1317
      %v1345 = vpack.c.bf16 %v1320, %v1319
      %v1346 = vpack.c.bf16 %v1322, %v1321
      %v1347 = vpack.c.bf16 %v1324, %v1323
      %v1348 = vpack.c.bf16 %v1326, %v1325
      %v1349 = vpack.c.bf16 %v1328, %v1327
      %v1350 = vpack.c.bf16 %v1330, %v1329
      %v1351 = vpack.c.bf16 %v1332, %v1331
      %v1352 = vpack.c.bf16 %v1334, %v1333
      %v1353 = vpack.c.bf16 %v1336, %v1335
      %v1354 = vpack.c.bf16 %v1338, %v1337
      %v1355 = vld [vmem:[%s3] sm:$0xff]
      %v1356 = vld [vmem:[%s3 + $0x8] sm:$0xf]
      %v1357 = vld [vmem:[%s3 + $0xc] sm:$0xff]
      %v1358 = vld [vmem:[%s3 + $0x14] sm:$0xf]
      %v1359 = vld [vmem:[%s3 + $0x18] sm:$0xff]
      %v1360 = vld [vmem:[%s3 + $0x20] sm:$0xf]
      %v1361 = vld [vmem:[%s3 + $0x24] sm:$0xff]
      %v1362 = vld [vmem:[%s3 + $0x2c] sm:$0xf]
      %v1363 = vld [vmem:[%s3 + $0x30] sm:$0xff]
      %v1364 = vld [vmem:[%s3 + $0x38] sm:$0xf]
      %v1365 = vld [vmem:[%s3 + $0x3c] sm:$0xff]
      %v1366 = vld [vmem:[%s3 + $0x44] sm:$0xf]
      %v1367 = vld [vmem:[%s3 + $0x48] sm:$0xff]
      %v1368 = vld [vmem:[%s3 + $0x50] sm:$0xf]
      %v1369 = vld [vmem:[%s3 + $0x54] sm:$0xff]
      %v1370 = vld [vmem:[%s3 + $0x5c] sm:$0xf]
      %v1371 = vld [vmem:[%s4] sm:$0x7]
      %v1373 = vperm.slane %v1371, 0
      %v1374 = vperm.slane %v1371, 1
      %v1375 = vperm.slane %v1371, 2
      %v1395 = vunpack.c.l.b16 %v1355
      %v1396 = vunpack.c.h.b16 %v1355
      %v1397 = vunpack.c.l.b16 %v1356
      %v1398 = vunpack.c.l.b16 %v1357
      %v1399 = vunpack.c.h.b16 %v1357
      %v1400 = vunpack.c.l.b16 %v1358
      %v1401 = vunpack.c.l.b16 %v1359
      %v1402 = vunpack.c.h.b16 %v1359
      %v1403 = vunpack.c.l.b16 %v1360
      %v1404 = vunpack.c.l.b16 %v1361
      %v1405 = vunpack.c.h.b16 %v1361
      %v1406 = vunpack.c.l.b16 %v1362
      %v1407 = vunpack.c.l.b16 %v1363
      %v1408 = vunpack.c.h.b16 %v1363
      %v1409 = vunpack.c.l.b16 %v1364
      %v1410 = vunpack.c.l.b16 %v1365
      %v1411 = vunpack.c.h.b16 %v1365
      %v1412 = vunpack.c.l.b16 %v1366
      %v1413 = vunpack.c.l.b16 %v1367
      %v1414 = vunpack.c.h.b16 %v1367
      %v1415 = vunpack.c.l.b16 %v1368
      %v1416 = vunpack.c.l.b16 %v1369
      %v1417 = vunpack.c.h.b16 %v1369
      %v1418 = vunpack.c.l.b16 %v1370
      %v1419 = vpack.c.b16 %v1398, %v1395
      %v1420 = vpack.c.b16 %v1399, %v1396
      %v1421 = vpack.c.b16 %v1400, %v1397
      %v1422 = vpack.c.b16 %v1404, %v1401
      %v1423 = vpack.c.b16 %v1405, %v1402
      %v1424 = vpack.c.b16 %v1406, %v1403
      %v1425 = vpack.c.b16 %v1410, %v1407
      %v1426 = vpack.c.b16 %v1411, %v1408
      %v1427 = vpack.c.b16 %v1412, %v1409
      %v1428 = vpack.c.b16 %v1416, %v1413
      %v1429 = vpack.c.b16 %v1417, %v1414
      %v1430 = vpack.c.b16 %v1418, %v1415
      %v1444 = vsel %vm555, %v1339, 0
      %v1447 = vsel %vm555, %v1340, 0
      %v1450 = vsel %vm555, %v1341, 0
      %v1453 = vsel %vm555, %v1342, 0
      %v1456 = vsel %vm555, %v1343, 0
      %v1459 = vsel %vm555, %v1344, 0
      %v1462 = vsel %vm555, %v1345, 0
      %v1465 = vsel %vm555, %v1346, 0
      %v1468 = vsel %vm555, %v1347, 0
      %v1471 = vsel %vm555, %v1348, 0
      %v1474 = vsel %vm555, %v1349, 0
      %v1477 = vsel %vm555, %v1350, 0
      %v1480 = vsel %vm555, %v1351, 0
      %v1483 = vsel %vm555, %v1352, 0
      %v1486 = vsel %vm555, %v1353, 0
      %v1489 = vsel %vm555, %v1354, 0
      %1491 = vmatpush.bf16.msra.mxu0 0
      %1492 = vmatpush.bf16.msra.mxu0 0
      %1493 = vmatpush.bf16.msra.mxu0 0
      %1494 = vmatpush.bf16.msra.mxu0 0
      %1495 = vmatpush.bf16.msra.mxu0 %v1428
      %1496 = vmatpush.bf16.msra.mxu0 %v1425
      %1497 = vmatpush.bf16.msra.mxu0 %v1422
      %1498 = vmatpush.bf16.msra.mxu0 %v1419
      %1499 = vmatmul.bf16.gmra.mxu0 %v1444
      %v1500 = vpop.f32.mrf.mxu0
      %v1501 = vadd.f32 %v1373, %v1500
      %v1502 = vpop.f32.mrf.mxu0
      %v1503 = vadd.f32 %v1373, %v1502
      %1504 = vmatmul.bf16.gmra.mxu0 %v1447
      %v1505 = vpop.f32.mrf.mxu0
      %v1506 = vadd.f32 %v1373, %v1505
      %v1507 = vpop.f32.mrf.mxu0
      %v1508 = vadd.f32 %v1373, %v1507
      %1509 = vmatmul.bf16.gmra.mxu0 %v1450
      %v1510 = vpop.f32.mrf.mxu0
      %v1511 = vadd.f32 %v1373, %v1510
      %v1512 = vpop.f32.mrf.mxu0
      %v1513 = vadd.f32 %v1373, %v1512
      %1514 = vmatmul.bf16.gmra.mxu0 %v1453
      %v1515 = vpop.f32.mrf.mxu0
      %v1516 = vadd.f32 %v1373, %v1515
      %v1517 = vpop.f32.mrf.mxu0
      %v1518 = vadd.f32 %v1373, %v1517
      %1519 = vmatmul.bf16.gmra.mxu0 %v1456
      %v1520 = vpop.f32.mrf.mxu0
      %v1521 = vadd.f32 %v1373, %v1520
      %v1522 = vpop.f32.mrf.mxu0
      %v1523 = vadd.f32 %v1373, %v1522
      %1524 = vmatmul.bf16.gmra.mxu0 %v1459
      %v1525 = vpop.f32.mrf.mxu0
      %v1526 = vadd.f32 %v1373, %v1525
      %v1527 = vpop.f32.mrf.mxu0
      %v1528 = vadd.f32 %v1373, %v1527
      %1529 = vmatmul.bf16.gmra.mxu0 %v1462
      %v1530 = vpop.f32.mrf.mxu0
      %v1531 = vadd.f32 %v1373, %v1530
      %v1532 = vpop.f32.mrf.mxu0
      %v1533 = vadd.f32 %v1373, %v1532
      %1534 = vmatmul.bf16.gmra.mxu0 %v1465
      %v1535 = vpop.f32.mrf.mxu0
      %v1536 = vadd.f32 %v1373, %v1535
      %v1537 = vpop.f32.mrf.mxu0
      %v1538 = vadd.f32 %v1373, %v1537
      %1539 = vmatmul.bf16.gmra.mxu0 %v1468
      %v1540 = vpop.f32.mrf.mxu0
      %v1541 = vadd.f32 %v1373, %v1540
      %v1542 = vpop.f32.mrf.mxu0
      %v1543 = vadd.f32 %v1373, %v1542
      %1544 = vmatmul.bf16.gmra.mxu0 %v1471
      %v1545 = vpop.f32.mrf.mxu0
      %v1546 = vadd.f32 %v1373, %v1545
      %v1547 = vpop.f32.mrf.mxu0
      %v1548 = vadd.f32 %v1373, %v1547
      %1549 = vmatmul.bf16.gmra.mxu0 %v1474
      %v1550 = vpop.f32.mrf.mxu0
      %v1551 = vadd.f32 %v1373, %v1550
      %v1552 = vpop.f32.mrf.mxu0
      %v1553 = vadd.f32 %v1373, %v1552
      %1554 = vmatmul.bf16.gmra.mxu0 %v1477
      %v1555 = vpop.f32.mrf.mxu0
      %v1556 = vadd.f32 %v1373, %v1555
      %v1557 = vpop.f32.mrf.mxu0
      %v1558 = vadd.f32 %v1373, %v1557
      %1559 = vmatmul.bf16.gmra.mxu0 %v1480
      %v1560 = vpop.f32.mrf.mxu0
      %v1561 = vadd.f32 %v1373, %v1560
      %v1562 = vpop.f32.mrf.mxu0
      %v1563 = vadd.f32 %v1373, %v1562
      %1564 = vmatmul.bf16.gmra.mxu0 %v1483
      %v1565 = vpop.f32.mrf.mxu0
      %v1566 = vadd.f32 %v1373, %v1565
      %v1567 = vpop.f32.mrf.mxu0
      %v1568 = vadd.f32 %v1373, %v1567
      %1569 = vmatmul.bf16.gmra.mxu0 %v1486
      %v1570 = vpop.f32.mrf.mxu0
      %v1571 = vadd.f32 %v1373, %v1570
      %v1572 = vpop.f32.mrf.mxu0
      %v1573 = vadd.f32 %v1373, %v1572
      %1574 = vmatmul.bf16.gmra.mxu0 %v1489
      %v1575 = vpop.f32.mrf.mxu0
      %v1576 = vadd.f32 %v1373, %v1575
      %v1577 = vpop.f32.mrf.mxu0
      %v1578 = vadd.f32 %v1373, %v1577
      %1579 = vdwg.mxu0
      %1580 = vmatpush.bf16.msra.mxu0 0
      %1581 = vmatpush.bf16.msra.mxu0 0
      %1582 = vmatpush.bf16.msra.mxu0 0
      %1583 = vmatpush.bf16.msra.mxu0 0
      %1584 = vmatpush.bf16.msra.mxu0 %v1429
      %1585 = vmatpush.bf16.msra.mxu0 %v1426
      %1586 = vmatpush.bf16.msra.mxu0 %v1423
      %1587 = vmatpush.bf16.msra.mxu0 %v1420
      %1588 = vmatmul.bf16.gmra.mxu0 %v1444
      %v1589 = vpop.f32.mrf.mxu0
      %v1590 = vadd.f32 %v1374, %v1589
      %v1591 = vpop.f32.mrf.mxu0
      %v1592 = vadd.f32 %v1374, %v1591
      %1593 = vmatmul.bf16.gmra.mxu0 %v1447
      %v1594 = vpop.f32.mrf.mxu0
      %v1595 = vadd.f32 %v1374, %v1594
      %v1596 = vpop.f32.mrf.mxu0
      %v1597 = vadd.f32 %v1374, %v1596
      %1598 = vmatmul.bf16.gmra.mxu0 %v1450
      %v1599 = vpop.f32.mrf.mxu0
      %v1600 = vadd.f32 %v1374, %v1599
      %v1601 = vpop.f32.mrf.mxu0
      %v1602 = vadd.f32 %v1374, %v1601
      %1603 = vmatmul.bf16.gmra.mxu0 %v1453
      %v1604 = vpop.f32.mrf.mxu0
      %v1605 = vadd.f32 %v1374, %v1604
      %v1606 = vpop.f32.mrf.mxu0
      %v1607 = vadd.f32 %v1374, %v1606
      %1608 = vmatmul.bf16.gmra.mxu0 %v1456
      %v1609 = vpop.f32.mrf.mxu0
      %v1610 = vadd.f32 %v1374, %v1609
      %v1611 = vpop.f32.mrf.mxu0
      %v1612 = vadd.f32 %v1374, %v1611
      %1613 = vmatmul.bf16.gmra.mxu0 %v1459
      %v1614 = vpop.f32.mrf.mxu0
      %v1615 = vadd.f32 %v1374, %v1614
      %v1616 = vpop.f32.mrf.mxu0
      %v1617 = vadd.f32 %v1374, %v1616
      %1618 = vmatmul.bf16.gmra.mxu0 %v1462
      %v1619 = vpop.f32.mrf.mxu0
      %v1620 = vadd.f32 %v1374, %v1619
      %v1621 = vpop.f32.mrf.mxu0
      %v1622 = vadd.f32 %v1374, %v1621
      %1623 = vmatmul.bf16.gmra.mxu0 %v1465
      %v1624 = vpop.f32.mrf.mxu0
      %v1625 = vadd.f32 %v1374, %v1624
      %v1626 = vpop.f32.mrf.mxu0
      %v1627 = vadd.f32 %v1374, %v1626
      %1628 = vmatmul.bf16.gmra.mxu0 %v1468
      %v1629 = vpop.f32.mrf.mxu0
      %v1630 = vadd.f32 %v1374, %v1629
      %v1631 = vpop.f32.mrf.mxu0
      %v1632 = vadd.f32 %v1374, %v1631
      %1633 = vmatmul.bf16.gmra.mxu0 %v1471
      %v1634 = vpop.f32.mrf.mxu0
      %v1635 = vadd.f32 %v1374, %v1634
      %v1636 = vpop.f32.mrf.mxu0
      %v1637 = vadd.f32 %v1374, %v1636
      %1638 = vmatmul.bf16.gmra.mxu0 %v1474
      %v1639 = vpop.f32.mrf.mxu0
      %v1640 = vadd.f32 %v1374, %v1639
      %v1641 = vpop.f32.mrf.mxu0
      %v1642 = vadd.f32 %v1374, %v1641
      %1643 = vmatmul.bf16.gmra.mxu0 %v1477
      %v1644 = vpop.f32.mrf.mxu0
      %v1645 = vadd.f32 %v1374, %v1644
      %v1646 = vpop.f32.mrf.mxu0
      %v1647 = vadd.f32 %v1374, %v1646
      %1648 = vmatmul.bf16.gmra.mxu0 %v1480
      %v1649 = vpop.f32.mrf.mxu0
      %v1650 = vadd.f32 %v1374, %v1649
      %v1651 = vpop.f32.mrf.mxu0
      %v1652 = vadd.f32 %v1374, %v1651
      %1653 = vmatmul.bf16.gmra.mxu0 %v1483
      %v1654 = vpop.f32.mrf.mxu0
      %v1655 = vadd.f32 %v1374, %v1654
      %v1656 = vpop.f32.mrf.mxu0
      %v1657 = vadd.f32 %v1374, %v1656
      %1658 = vmatmul.bf16.gmra.mxu0 %v1486
      %v1659 = vpop.f32.mrf.mxu0
      %v1660 = vadd.f32 %v1374, %v1659
      %v1661 = vpop.f32.mrf.mxu0
      %v1662 = vadd.f32 %v1374, %v1661
      %1663 = vmatmul.bf16.gmra.mxu0 %v1489
      %v1664 = vpop.f32.mrf.mxu0
      %v1665 = vadd.f32 %v1374, %v1664
      %v1666 = vpop.f32.mrf.mxu0
      %v1667 = vadd.f32 %v1374, %v1666
      %1668 = vdwg.mxu0
      %1669 = vmatpush.bf16.msra.mxu0 0
      %1670 = vmatpush.bf16.msra.mxu0 0
      %1671 = vmatpush.bf16.msra.mxu0 0
      %1672 = vmatpush.bf16.msra.mxu0 0
      %1673 = vmatpush.bf16.msra.mxu0 %v1430
      %1674 = vmatpush.bf16.msra.mxu0 %v1427
      %1675 = vmatpush.bf16.msra.mxu0 %v1424
      %1676 = vmatpush.bf16.msra.mxu0 %v1421
      %1677 = vmatmul.bf16.gmra.mxu0 %v1444
      %v1678 = vpop.f32.mrf.mxu0
      %v1679 = vadd.f32 %v1375, %v1678
      %v1680 = vpop.f32.mrf.mxu0
      %v1681 = vadd.f32 %v1375, %v1680
      %1682 = vmatmul.bf16.gmra.mxu0 %v1447
      %v1683 = vpop.f32.mrf.mxu0
      %v1684 = vadd.f32 %v1375, %v1683
      %v1685 = vpop.f32.mrf.mxu0
      %v1686 = vadd.f32 %v1375, %v1685
      %1687 = vmatmul.bf16.gmra.mxu0 %v1450
      %v1688 = vpop.f32.mrf.mxu0
      %v1689 = vadd.f32 %v1375, %v1688
      %v1690 = vpop.f32.mrf.mxu0
      %v1691 = vadd.f32 %v1375, %v1690
      %1692 = vmatmul.bf16.gmra.mxu0 %v1453
      %v1693 = vpop.f32.mrf.mxu0
      %v1694 = vadd.f32 %v1375, %v1693
      %v1695 = vpop.f32.mrf.mxu0
      %v1696 = vadd.f32 %v1375, %v1695
      %1697 = vmatmul.bf16.gmra.mxu0 %v1456
      %v1698 = vpop.f32.mrf.mxu0
      %v1699 = vadd.f32 %v1375, %v1698
      %v1700 = vpop.f32.mrf.mxu0
      %v1701 = vadd.f32 %v1375, %v1700
      %1702 = vmatmul.bf16.gmra.mxu0 %v1459
      %v1703 = vpop.f32.mrf.mxu0
      %v1704 = vadd.f32 %v1375, %v1703
      %v1705 = vpop.f32.mrf.mxu0
      %v1706 = vadd.f32 %v1375, %v1705
      %1707 = vmatmul.bf16.gmra.mxu0 %v1462
      %v1708 = vpop.f32.mrf.mxu0
      %v1709 = vadd.f32 %v1375, %v1708
      %v1710 = vpop.f32.mrf.mxu0
      %v1711 = vadd.f32 %v1375, %v1710
      %1712 = vmatmul.bf16.gmra.mxu0 %v1465
      %v1713 = vpop.f32.mrf.mxu0
      %v1714 = vadd.f32 %v1375, %v1713
      %v1715 = vpop.f32.mrf.mxu0
      %v1716 = vadd.f32 %v1375, %v1715
      %1717 = vmatmul.bf16.gmra.mxu0 %v1468
      %v1718 = vpop.f32.mrf.mxu0
      %v1719 = vadd.f32 %v1375, %v1718
      %v1720 = vpop.f32.mrf.mxu0
      %v1721 = vadd.f32 %v1375, %v1720
      %1722 = vmatmul.bf16.gmra.mxu0 %v1471
      %v1723 = vpop.f32.mrf.mxu0
      %v1724 = vadd.f32 %v1375, %v1723
      %v1725 = vpop.f32.mrf.mxu0
      %v1726 = vadd.f32 %v1375, %v1725
      %1727 = vmatmul.bf16.gmra.mxu0 %v1474
      %v1728 = vpop.f32.mrf.mxu0
      %v1729 = vadd.f32 %v1375, %v1728
      %v1730 = vpop.f32.mrf.mxu0
      %v1731 = vadd.f32 %v1375, %v1730
      %1732 = vmatmul.bf16.gmra.mxu0 %v1477
      %v1733 = vpop.f32.mrf.mxu0
      %v1734 = vadd.f32 %v1375, %v1733
      %v1735 = vpop.f32.mrf.mxu0
      %v1736 = vadd.f32 %v1375, %v1735
      %1737 = vmatmul.bf16.gmra.mxu0 %v1480
      %v1738 = vpop.f32.mrf.mxu0
      %v1739 = vadd.f32 %v1375, %v1738
      %v1740 = vpop.f32.mrf.mxu0
      %v1741 = vadd.f32 %v1375, %v1740
      %1742 = vmatmul.bf16.gmra.mxu0 %v1483
      %v1743 = vpop.f32.mrf.mxu0
      %v1744 = vadd.f32 %v1375, %v1743
      %v1745 = vpop.f32.mrf.mxu0
      %v1746 = vadd.f32 %v1375, %v1745
      %1747 = vmatmul.bf16.gmra.mxu0 %v1486
      %v1748 = vpop.f32.mrf.mxu0
      %v1749 = vadd.f32 %v1375, %v1748
      %v1750 = vpop.f32.mrf.mxu0
      %v1751 = vadd.f32 %v1375, %v1750
      %1752 = vmatmul.bf16.gmra.mxu0 %v1489
      %v1753 = vpop.f32.mrf.mxu0
      %v1754 = vadd.f32 %v1375, %v1753
      %v1755 = vpop.f32.mrf.mxu0
      %v1756 = vadd.f32 %v1375, %v1755
      %1757 = vdwg.mxu0
      %v1758 = vpack.c.bf16 %v1590, %v1501
      %v1759 = vpack.c.bf16 %v1679, %v1679
      %v1760 = vpack.c.bf16 %v1595, %v1506
      %v1761 = vpack.c.bf16 %v1684, %v1684
      %v1762 = vpack.c.bf16 %v1600, %v1511
      %v1763 = vpack.c.bf16 %v1689, %v1689
      %v1764 = vpack.c.bf16 %v1605, %v1516
      %v1765 = vpack.c.bf16 %v1694, %v1694
      %v1766 = vpack.c.bf16 %v1610, %v1521
      %v1767 = vpack.c.bf16 %v1699, %v1699
      %v1768 = vpack.c.bf16 %v1615, %v1526
      %v1769 = vpack.c.bf16 %v1704, %v1704
      %v1770 = vpack.c.bf16 %v1620, %v1531
      %v1771 = vpack.c.bf16 %v1709, %v1709
      %v1772 = vpack.c.bf16 %v1625, %v1536
      %v1773 = vpack.c.bf16 %v1714, %v1714
      %v1774 = vpack.c.bf16 %v1592, %v1503
      %v1775 = vpack.c.bf16 %v1681, %v1681
      %v1776 = vpack.c.bf16 %v1597, %v1508
      %v1777 = vpack.c.bf16 %v1686, %v1686
      %v1778 = vpack.c.bf16 %v1602, %v1513
      %v1779 = vpack.c.bf16 %v1691, %v1691
      %v1780 = vpack.c.bf16 %v1607, %v1518
      %v1781 = vpack.c.bf16 %v1696, %v1696
      %v1782 = vpack.c.bf16 %v1612, %v1523
      %v1783 = vpack.c.bf16 %v1701, %v1701
      %v1784 = vpack.c.bf16 %v1617, %v1528
      %v1785 = vpack.c.bf16 %v1706, %v1706
      %v1786 = vpack.c.bf16 %v1622, %v1533
      %v1787 = vpack.c.bf16 %v1711, %v1711
      %v1788 = vpack.c.bf16 %v1627, %v1538
      %v1789 = vpack.c.bf16 %v1716, %v1716
      %v1790 = vpack.c.bf16 %v1630, %v1541
      %v1791 = vpack.c.bf16 %v1719, %v1719
      %v1792 = vpack.c.bf16 %v1635, %v1546
      %v1793 = vpack.c.bf16 %v1724, %v1724
      %v1794 = vpack.c.bf16 %v1640, %v1551
      %v1795 = vpack.c.bf16 %v1729, %v1729
      %v1796 = vpack.c.bf16 %v1645, %v1556
      %v1797 = vpack.c.bf16 %v1734, %v1734
      %v1798 = vpack.c.bf16 %v1650, %v1561
      %v1799 = vpack.c.bf16 %v1739, %v1739
      %v1800 = vpack.c.bf16 %v1655, %v1566
      %v1801 = vpack.c.bf16 %v1744, %v1744
      %v1802 = vpack.c.bf16 %v1660, %v1571
      %v1803 = vpack.c.bf16 %v1749, %v1749
      %v1804 = vpack.c.bf16 %v1665, %v1576
      %v1805 = vpack.c.bf16 %v1754, %v1754
      %v1806 = vpack.c.bf16 %v1632, %v1543
      %v1807 = vpack.c.bf16 %v1721, %v1721
      %v1808 = vpack.c.bf16 %v1637, %v1548
      %v1809 = vpack.c.bf16 %v1726, %v1726
      %v1810 = vpack.c.bf16 %v1642, %v1553
      %v1811 = vpack.c.bf16 %v1731, %v1731
      %v1812 = vpack.c.bf16 %v1647, %v1558
      %v1813 = vpack.c.bf16 %v1736, %v1736
      %v1814 = vpack.c.bf16 %v1652, %v1563
      %v1815 = vpack.c.bf16 %v1741, %v1741
      %v1816 = vpack.c.bf16 %v1657, %v1568
      %v1817 = vpack.c.bf16 %v1746, %v1746
      %v1818 = vpack.c.bf16 %v1662, %v1573
      %v1819 = vpack.c.bf16 %v1751, %v1751
      %v1820 = vpack.c.bf16 %v1667, %v1578
      %v1821 = vpack.c.bf16 %v1756, %v1756
      %v1822 = vld [vmem:[%s5] sm:$0xff]
      %v1823 = vld [vmem:[%s5 + $0x8] sm:$0xff]
      %v1824 = vld [vmem:[%s5 + $0x10] sm:$0xff]
      %v1825 = vld [vmem:[%s5 + $0x18] sm:$0xff]
      %v1826 = vld [vmem:[%s5 + $0x20] sm:$0xff]
      %v1827 = vld [vmem:[%s5 + $0x28] sm:$0xff]
      %v1828 = vld [vmem:[%s5 + $0x30] sm:$0xff]
      %v1829 = vld [vmem:[%s5 + $0x38] sm:$0xff]
      %v1838 = vunpack.c.l.b16 %v1758
      %v1839 = vunpack.c.l.b16 %v1760
      %v1840 = vunpack.c.l.b16 %v1762
      %v1841 = vunpack.c.l.b16 %v1764
      %v1842 = vunpack.c.l.b16 %v1766
      %v1843 = vunpack.c.l.b16 %v1768
      %v1844 = vunpack.c.l.b16 %v1770
      %v1845 = vunpack.c.l.b16 %v1772
      %v1846 = vpack.c.b16 %v1839, %v1838
      %v1847 = vpack.c.b16 %v1841, %v1840
      %v1848 = vpack.c.b16 %v1843, %v1842
      %v1849 = vpack.c.b16 %v1845, %v1844
      %1850 = vrot.lane.b32.xlu0 %v1846, 64
      %v1851 = vpop.permute.xlu0 %1850
      %1852 = vrot.lane.b32.xlu0 %v1847, 64
      %v1853 = vpop.permute.xlu0 %1852
      %1854 = vrot.lane.b32.xlu0 %v1848, 64
      %v1855 = vpop.permute.xlu0 %1854
      %1856 = vrot.lane.b32.xlu0 %v1849, 64
      %v1857 = vpop.permute.xlu0 %1856
      %vm1858 = vcmask 130048
      %v1860 = vsel %vm1858, %v1846, 0
      %v1863 = vsel %vm1858, %v1847, 0
      %v1866 = vsel %vm1858, %v1848, 0
      %v1869 = vsel %vm1858, %v1849, 0
      %v1872 = vsel %vm1858, %v1851, 0
      %v1875 = vsel %vm1858, %v1853, 0
      %v1878 = vsel %vm1858, %v1855, 0
      %v1881 = vsel %vm1858, %v1857, 0
      %1883 = vmatpush.bf16.xpose.msra.mxu0 0
      %1884 = vmatpush.bf16.xpose.msra.mxu0 0
      %1885 = vmatpush.bf16.xpose.msra.mxu0 0
      %1886 = vmatpush.bf16.xpose.msra.mxu0 0
      %1887 = vmatpush.bf16.xpose.msra.mxu0 %v1881
      %1888 = vmatpush.bf16.xpose.msra.mxu0 %v1878
      %1889 = vmatpush.bf16.xpose.msra.mxu0 %v1875
      %1890 = vmatpush.bf16.xpose.msra.mxu0 %v1872
      %1891 = vmatmul.bf16.gmra.mxu0 %v1860
      %v1892 = vpop.f32.mrf.mxu0
      %v1893 = vadd.f32 %v1822, %v1892
      %v1894 = vpop.f32.mrf.mxu0
      %v1895 = vadd.f32 %v1823, %v1894
      %1896 = vmatmul.bf16.gmra.mxu0 %v1863
      %v1897 = vpop.f32.mrf.mxu0
      %v1898 = vadd.f32 %v1824, %v1897
      %v1899 = vpop.f32.mrf.mxu0
      %v1900 = vadd.f32 %v1825, %v1899
      %1901 = vmatmul.bf16.gmra.mxu0 %v1866
      %v1902 = vpop.f32.mrf.mxu0
      %v1903 = vadd.f32 %v1826, %v1902
      %v1904 = vpop.f32.mrf.mxu0
      %v1905 = vadd.f32 %v1827, %v1904
      %1906 = vmatmul.bf16.gmra.mxu0 %v1869
      %v1907 = vpop.f32.mrf.mxu0
      %v1908 = vadd.f32 %v1828, %v1907
      %v1909 = vpop.f32.mrf.mxu0
      %v1910 = vadd.f32 %v1829, %v1909
      %1911 = vdwg.mxu0
      %v1920 = vunpack.c.l.b16 %v1774
      %v1921 = vunpack.c.l.b16 %v1776
      %v1922 = vunpack.c.l.b16 %v1778
      %v1923 = vunpack.c.l.b16 %v1780
      %v1924 = vunpack.c.l.b16 %v1782
      %v1925 = vunpack.c.l.b16 %v1784
      %v1926 = vunpack.c.l.b16 %v1786
      %v1927 = vunpack.c.l.b16 %v1788
      %v1928 = vpack.c.b16 %v1921, %v1920
      %v1929 = vpack.c.b16 %v1923, %v1922
      %v1930 = vpack.c.b16 %v1925, %v1924
      %v1931 = vpack.c.b16 %v1927, %v1926
      %1932 = vrot.lane.b32.xlu0 %v1928, 64
      %v1933 = vpop.permute.xlu0 %1932
      %1934 = vrot.lane.b32.xlu0 %v1929, 64
      %v1935 = vpop.permute.xlu0 %1934
      %1936 = vrot.lane.b32.xlu0 %v1930, 64
      %v1937 = vpop.permute.xlu0 %1936
      %1938 = vrot.lane.b32.xlu0 %v1931, 64
      %v1939 = vpop.permute.xlu0 %1938
      %v1941 = vsel %vm1858, %v1928, 0
      %v1944 = vsel %vm1858, %v1929, 0
      %v1947 = vsel %vm1858, %v1930, 0
      %v1950 = vsel %vm1858, %v1931, 0
      %v1953 = vsel %vm1858, %v1933, 0
      %v1956 = vsel %vm1858, %v1935, 0
      %v1959 = vsel %vm1858, %v1937, 0
      %v1962 = vsel %vm1858, %v1939, 0
      %1964 = vmatpush.bf16.xpose.msra.mxu0 0
      %1965 = vmatpush.bf16.xpose.msra.mxu0 0
      %1966 = vmatpush.bf16.xpose.msra.mxu0 0
      %1967 = vmatpush.bf16.xpose.msra.mxu0 0
      %1968 = vmatpush.bf16.xpose.msra.mxu0 %v1962
      %1969 = vmatpush.bf16.xpose.msra.mxu0 %v1959
      %1970 = vmatpush.bf16.xpose.msra.mxu0 %v1956
      %1971 = vmatpush.bf16.xpose.msra.mxu0 %v1953
      %1972 = vmatmul.bf16.gmra.mxu0 %v1941
      %v1973 = vpop.f32.mrf.mxu0
      %v1974 = vadd.f32 %v1822, %v1973
      %v1975 = vpop.f32.mrf.mxu0
      %v1976 = vadd.f32 %v1823, %v1975
      %1977 = vmatmul.bf16.gmra.mxu0 %v1944
      %v1978 = vpop.f32.mrf.mxu0
      %v1979 = vadd.f32 %v1824, %v1978
      %v1980 = vpop.f32.mrf.mxu0
      %v1981 = vadd.f32 %v1825, %v1980
      %1982 = vmatmul.bf16.gmra.mxu0 %v1947
      %v1983 = vpop.f32.mrf.mxu0
      %v1984 = vadd.f32 %v1826, %v1983
      %v1985 = vpop.f32.mrf.mxu0
      %v1986 = vadd.f32 %v1827, %v1985
      %1987 = vmatmul.bf16.gmra.mxu0 %v1950
      %v1988 = vpop.f32.mrf.mxu0
      %v1989 = vadd.f32 %v1828, %v1988
      %v1990 = vpop.f32.mrf.mxu0
      %v1991 = vadd.f32 %v1829, %v1990
      %1992 = vdwg.mxu0
      %v2001 = vunpack.c.l.b16 %v1790
      %v2002 = vunpack.c.l.b16 %v1792
      %v2003 = vunpack.c.l.b16 %v1794
      %v2004 = vunpack.c.l.b16 %v1796
      %v2005 = vunpack.c.l.b16 %v1798
      %v2006 = vunpack.c.l.b16 %v1800
      %v2007 = vunpack.c.l.b16 %v1802
      %v2008 = vunpack.c.l.b16 %v1804
      %v2009 = vpack.c.b16 %v2002, %v2001
      %v2010 = vpack.c.b16 %v2004, %v2003
      %v2011 = vpack.c.b16 %v2006, %v2005
      %v2012 = vpack.c.b16 %v2008, %v2007
      %2013 = vrot.lane.b32.xlu0 %v2009, 64
      %v2014 = vpop.permute.xlu0 %2013
      %2015 = vrot.lane.b32.xlu0 %v2010, 64
      %v2016 = vpop.permute.xlu0 %2015
      %2017 = vrot.lane.b32.xlu0 %v2011, 64
      %v2018 = vpop.permute.xlu0 %2017
      %2019 = vrot.lane.b32.xlu0 %v2012, 64
      %v2020 = vpop.permute.xlu0 %2019
      %v2022 = vsel %vm1858, %v2009, 0
      %v2025 = vsel %vm1858, %v2010, 0
      %v2028 = vsel %vm1858, %v2011, 0
      %v2031 = vsel %vm1858, %v2012, 0
      %v2034 = vsel %vm1858, %v2014, 0
      %v2037 = vsel %vm1858, %v2016, 0
      %v2040 = vsel %vm1858, %v2018, 0
      %v2043 = vsel %vm1858, %v2020, 0
      %2045 = vmatpush.bf16.xpose.msra.mxu0 0
      %2046 = vmatpush.bf16.xpose.msra.mxu0 0
      %2047 = vmatpush.bf16.xpose.msra.mxu0 0
      %2048 = vmatpush.bf16.xpose.msra.mxu0 0
      %2049 = vmatpush.bf16.xpose.msra.mxu0 %v2043
      %2050 = vmatpush.bf16.xpose.msra.mxu0 %v2040
      %2051 = vmatpush.bf16.xpose.msra.mxu0 %v2037
      %2052 = vmatpush.bf16.xpose.msra.mxu0 %v2034
      %2053 = vmatmul.bf16.gmra.mxu0 %v2022
      %v2054 = vpop.f32.mrf.mxu0
      %v2055 = vadd.f32 %v1822, %v2054
      %v2056 = vpop.f32.mrf.mxu0
      %v2057 = vadd.f32 %v1823, %v2056
      %2058 = vmatmul.bf16.gmra.mxu0 %v2025
      %v2059 = vpop.f32.mrf.mxu0
      %v2060 = vadd.f32 %v1824, %v2059
      %v2061 = vpop.f32.mrf.mxu0
      %v2062 = vadd.f32 %v1825, %v2061
      %2063 = vmatmul.bf16.gmra.mxu0 %v2028
      %v2064 = vpop.f32.mrf.mxu0
      %v2065 = vadd.f32 %v1826, %v2064
      %v2066 = vpop.f32.mrf.mxu0
      %v2067 = vadd.f32 %v1827, %v2066
      %2068 = vmatmul.bf16.gmra.mxu0 %v2031
      %v2069 = vpop.f32.mrf.mxu0
      %v2070 = vadd.f32 %v1828, %v2069
      %v2071 = vpop.f32.mrf.mxu0
      %v2072 = vadd.f32 %v1829, %v2071
      %2073 = vdwg.mxu0
      %v2082 = vunpack.c.l.b16 %v1806
      %v2083 = vunpack.c.l.b16 %v1808
      %v2084 = vunpack.c.l.b16 %v1810
      %v2085 = vunpack.c.l.b16 %v1812
      %v2086 = vunpack.c.l.b16 %v1814
      %v2087 = vunpack.c.l.b16 %v1816
      %v2088 = vunpack.c.l.b16 %v1818
      %v2089 = vunpack.c.l.b16 %v1820
      %v2090 = vpack.c.b16 %v2083, %v2082
      %v2091 = vpack.c.b16 %v2085, %v2084
      %v2092 = vpack.c.b16 %v2087, %v2086
      %v2093 = vpack.c.b16 %v2089, %v2088
      %2094 = vrot.lane.b32.xlu0 %v2090, 64
      %v2095 = vpop.permute.xlu0 %2094
      %2096 = vrot.lane.b32.xlu0 %v2091, 64
      %v2097 = vpop.permute.xlu0 %2096
      %2098 = vrot.lane.b32.xlu0 %v2092, 64
      %v2099 = vpop.permute.xlu0 %2098
      %2100 = vrot.lane.b32.xlu0 %v2093, 64
      %v2101 = vpop.permute.xlu0 %2100
      %v2103 = vsel %vm1858, %v2090, 0
      %v2106 = vsel %vm1858, %v2091, 0
      %v2109 = vsel %vm1858, %v2092, 0
      %v2112 = vsel %vm1858, %v2093, 0
      %v2115 = vsel %vm1858, %v2095, 0
      %v2118 = vsel %vm1858, %v2097, 0
      %v2121 = vsel %vm1858, %v2099, 0
      %v2124 = vsel %vm1858, %v2101, 0
      %2126 = vmatpush.bf16.xpose.msra.mxu0 0
      %2127 = vmatpush.bf16.xpose.msra.mxu0 0
      %2128 = vmatpush.bf16.xpose.msra.mxu0 0
      %2129 = vmatpush.bf16.xpose.msra.mxu0 0
      %2130 = vmatpush.bf16.xpose.msra.mxu0 %v2124
      %2131 = vmatpush.bf16.xpose.msra.mxu0 %v2121
      %2132 = vmatpush.bf16.xpose.msra.mxu0 %v2118
      %2133 = vmatpush.bf16.xpose.msra.mxu0 %v2115
      %2134 = vmatmul.bf16.gmra.mxu0 %v2103
      %v2135 = vpop.f32.mrf.mxu0
      %v2136 = vadd.f32 %v1822, %v2135
      %v2137 = vpop.f32.mrf.mxu0
      %v2138 = vadd.f32 %v1823, %v2137
      %2139 = vmatmul.bf16.gmra.mxu0 %v2106
      %v2140 = vpop.f32.mrf.mxu0
      %v2141 = vadd.f32 %v1824, %v2140
      %v2142 = vpop.f32.mrf.mxu0
      %v2143 = vadd.f32 %v1825, %v2142
      %2144 = vmatmul.bf16.gmra.mxu0 %v2109
      %v2145 = vpop.f32.mrf.mxu0
      %v2146 = vadd.f32 %v1826, %v2145
      %v2147 = vpop.f32.mrf.mxu0
      %v2148 = vadd.f32 %v1827, %v2147
      %2149 = vmatmul.bf16.gmra.mxu0 %v2112
      %v2150 = vpop.f32.mrf.mxu0
      %v2151 = vadd.f32 %v1828, %v2150
      %v2152 = vpop.f32.mrf.mxu0
      %v2153 = vadd.f32 %v1829, %v2152
      %2154 = vdwg.mxu0
      %v2155 = vsel %vm555, %v1893, -inf
      %2156 = vmax.xlane.f32.xlu0 %v2155
      %v2157 = vpop.xlane.xlu0 %2156
      %v2158 = vsel %vm555, %v1895, -inf
      %2159 = vmax.xlane.f32.xlu0 %v2158
      %v2160 = vpop.xlane.xlu0 %2159
      %v2161 = vsel %vm555, %v1898, -inf
      %2162 = vmax.xlane.f32.xlu0 %v2161
      %v2163 = vpop.xlane.xlu0 %2162
      %v2164 = vsel %vm555, %v1900, -inf
      %2165 = vmax.xlane.f32.xlu0 %v2164
      %v2166 = vpop.xlane.xlu0 %2165
      %v2167 = vsel %vm555, %v1903, -inf
      %2168 = vmax.xlane.f32.xlu0 %v2167
      %v2169 = vpop.xlane.xlu0 %2168
      %v2170 = vsel %vm555, %v1905, -inf
      %2171 = vmax.xlane.f32.xlu0 %v2170
      %v2172 = vpop.xlane.xlu0 %2171
      %v2173 = vsel %vm555, %v1908, -inf
      %2174 = vmax.xlane.f32.xlu0 %v2173
      %v2175 = vpop.xlane.xlu0 %2174
      %v2176 = vsel %vm555, %v1910, -inf
      %2177 = vmax.xlane.f32.xlu0 %v2176
      %v2178 = vpop.xlane.xlu0 %2177
      %v2179 = vsel %vm555, %v1974, -inf
      %2180 = vmax.xlane.f32.xlu0 %v2179
      %v2181 = vpop.xlane.xlu0 %2180
      %v2182 = vsel %vm555, %v1976, -inf
      %2183 = vmax.xlane.f32.xlu0 %v2182
      %v2184 = vpop.xlane.xlu0 %2183
      %v2185 = vsel %vm555, %v1979, -inf
      %2186 = vmax.xlane.f32.xlu0 %v2185
      %v2187 = vpop.xlane.xlu0 %2186
      %v2188 = vsel %vm555, %v1981, -inf
      %2189 = vmax.xlane.f32.xlu0 %v2188
      %v2190 = vpop.xlane.xlu0 %2189
      %v2191 = vsel %vm555, %v1984, -inf
      %2192 = vmax.xlane.f32.xlu0 %v2191
      %v2193 = vpop.xlane.xlu0 %2192
      %v2194 = vsel %vm555, %v1986, -inf
      %2195 = vmax.xlane.f32.xlu0 %v2194
      %v2196 = vpop.xlane.xlu0 %2195
      %v2197 = vsel %vm555, %v1989, -inf
      %2198 = vmax.xlane.f32.xlu0 %v2197
      %v2199 = vpop.xlane.xlu0 %2198
      %v2200 = vsel %vm555, %v1991, -inf
      %2201 = vmax.xlane.f32.xlu0 %v2200
      %v2202 = vpop.xlane.xlu0 %2201
      %v2203 = vsel %vm555, %v2055, -inf
      %2204 = vmax.xlane.f32.xlu0 %v2203
      %v2205 = vpop.xlane.xlu0 %2204
      %v2206 = vsel %vm555, %v2057, -inf
      %2207 = vmax.xlane.f32.xlu0 %v2206
      %v2208 = vpop.xlane.xlu0 %2207
      %v2209 = vsel %vm555, %v2060, -inf
      %2210 = vmax.xlane.f32.xlu0 %v2209
      %v2211 = vpop.xlane.xlu0 %2210
      %v2212 = vsel %vm555, %v2062, -inf
      %2213 = vmax.xlane.f32.xlu0 %v2212
      %v2214 = vpop.xlane.xlu0 %2213
      %v2215 = vsel %vm555, %v2065, -inf
      %2216 = vmax.xlane.f32.xlu0 %v2215
      %v2217 = vpop.xlane.xlu0 %2216
      %v2218 = vsel %vm555, %v2067, -inf
      %2219 = vmax.xlane.f32.xlu0 %v2218
      %v2220 = vpop.xlane.xlu0 %2219
      %v2221 = vsel %vm555, %v2070, -inf
      %2222 = vmax.xlane.f32.xlu0 %v2221
      %v2223 = vpop.xlane.xlu0 %2222
      %v2224 = vsel %vm555, %v2072, -inf
      %2225 = vmax.xlane.f32.xlu0 %v2224
      %v2226 = vpop.xlane.xlu0 %2225
      %v2227 = vsel %vm555, %v2136, -inf
      %2228 = vmax.xlane.f32.xlu0 %v2227
      %v2229 = vpop.xlane.xlu0 %2228
      %v2230 = vsel %vm555, %v2138, -inf
      %2231 = vmax.xlane.f32.xlu0 %v2230
      %v2232 = vpop.xlane.xlu0 %2231
      %v2233 = vsel %vm555, %v2141, -inf
      %2234 = vmax.xlane.f32.xlu0 %v2233
      %v2235 = vpop.xlane.xlu0 %2234
      %v2236 = vsel %vm555, %v2143, -inf
      %2237 = vmax.xlane.f32.xlu0 %v2236
      %v2238 = vpop.xlane.xlu0 %2237
      %v2239 = vsel %vm555, %v2146, -inf
      %2240 = vmax.xlane.f32.xlu0 %v2239
      %v2241 = vpop.xlane.xlu0 %2240
      %v2242 = vsel %vm555, %v2148, -inf
      %2243 = vmax.xlane.f32.xlu0 %v2242
      %v2244 = vpop.xlane.xlu0 %2243
      %v2245 = vsel %vm555, %v2151, -inf
      %2246 = vmax.xlane.f32.xlu0 %v2245
      %v2247 = vpop.xlane.xlu0 %2246
      %v2248 = vsel %vm555, %v2153, -inf
      %2249 = vmax.xlane.f32.xlu0 %v2248
      %v2250 = vpop.xlane.xlu0 %2249
      %v2251 = vsub.f32 %v1893, %v2157
      %v2252 = vsub.f32 %v1895, %v2160
      %v2253 = vsub.f32 %v1898, %v2163
      %v2254 = vsub.f32 %v1900, %v2166
      %v2255 = vsub.f32 %v1903, %v2169
      %v2256 = vsub.f32 %v1905, %v2172
      %v2257 = vsub.f32 %v1908, %v2175
      %v2258 = vsub.f32 %v1910, %v2178
      %v2259 = vsub.f32 %v1974, %v2181
      %v2260 = vsub.f32 %v1976, %v2184
      %v2261 = vsub.f32 %v1979, %v2187
      %v2262 = vsub.f32 %v1981, %v2190
      %v2263 = vsub.f32 %v1984, %v2193
      %v2264 = vsub.f32 %v1986, %v2196
      %v2265 = vsub.f32 %v1989, %v2199
      %v2266 = vsub.f32 %v1991, %v2202
      %v2267 = vsub.f32 %v2055, %v2205
      %v2268 = vsub.f32 %v2057, %v2208
      %v2269 = vsub.f32 %v2060, %v2211
      %v2270 = vsub.f32 %v2062, %v2214
      %v2271 = vsub.f32 %v2065, %v2217
      %v2272 = vsub.f32 %v2067, %v2220
      %v2273 = vsub.f32 %v2070, %v2223
      %v2274 = vsub.f32 %v2072, %v2226
      %v2275 = vsub.f32 %v2136, %v2229
      %v2276 = vsub.f32 %v2138, %v2232
      %v2277 = vsub.f32 %v2141, %v2235
      %v2278 = vsub.f32 %v2143, %v2238
      %v2279 = vsub.f32 %v2146, %v2241
      %v2280 = vsub.f32 %v2148, %v2244
      %v2281 = vsub.f32 %v2151, %v2247
      %v2282 = vsub.f32 %v2153, %v2250
      %v2283 = vmul.f32 %v2251, 1.442695
      %v2284 = vpow.pop %v2283
      %v2285 = vmul.f32 %v2252, 1.442695
      %v2286 = vpow.pop %v2285
      %v2287 = vmul.f32 %v2253, 1.442695
      %v2288 = vpow.pop %v2287
      %v2289 = vmul.f32 %v2254, 1.442695
      %v2290 = vpow.pop %v2289
      %v2291 = vmul.f32 %v2255, 1.442695
      %v2292 = vpow.pop %v2291
      %v2293 = vmul.f32 %v2256, 1.442695
      %v2294 = vpow.pop %v2293
      %v2295 = vmul.f32 %v2257, 1.442695
      %v2296 = vpow.pop %v2295
      %v2297 = vmul.f32 %v2258, 1.442695
      %v2298 = vpow.pop %v2297
      %v2299 = vmul.f32 %v2259, 1.442695
      %v2300 = vpow.pop %v2299
      %v2301 = vmul.f32 %v2260, 1.442695
      %v2302 = vpow.pop %v2301
      %v2303 = vmul.f32 %v2261, 1.442695
      %v2304 = vpow.pop %v2303
      %v2305 = vmul.f32 %v2262, 1.442695
      %v2306 = vpow.pop %v2305
      %v2307 = vmul.f32 %v2263, 1.442695
      %v2308 = vpow.pop %v2307
      %v2309 = vmul.f32 %v2264, 1.442695
      %v2310 = vpow.pop %v2309
      %v2311 = vmul.f32 %v2265, 1.442695
      %v2312 = vpow.pop %v2311
      %v2313 = vmul.f32 %v2266, 1.442695
      %v2314 = vpow.pop %v2313
      %v2315 = vmul.f32 %v2267, 1.442695
      %v2316 = vpow.pop %v2315
      %v2317 = vmul.f32 %v2268, 1.442695
      %v2318 = vpow.pop %v2317
      %v2319 = vmul.f32 %v2269, 1.442695
      %v2320 = vpow.pop %v2319
      %v2321 = vmul.f32 %v2270, 1.442695
      %v2322 = vpow.pop %v2321
      %v2323 = vmul.f32 %v2271, 1.442695
      %v2324 = vpow.pop %v2323
      %v2325 = vmul.f32 %v2272, 1.442695
      %v2326 = vpow.pop %v2325
      %v2327 = vmul.f32 %v2273, 1.442695
      %v2328 = vpow.pop %v2327
      %v2329 = vmul.f32 %v2274, 1.442695
      %v2330 = vpow.pop %v2329
      %v2331 = vmul.f32 %v2275, 1.442695
      %v2332 = vpow.pop %v2331
      %v2333 = vmul.f32 %v2276, 1.442695
      %v2334 = vpow.pop %v2333
      %v2335 = vmul.f32 %v2277, 1.442695
      %v2336 = vpow.pop %v2335
      %v2337 = vmul.f32 %v2278, 1.442695
      %v2338 = vpow.pop %v2337
      %v2339 = vmul.f32 %v2279, 1.442695
      %v2340 = vpow.pop %v2339
      %v2341 = vmul.f32 %v2280, 1.442695
      %v2342 = vpow.pop %v2341
      %v2343 = vmul.f32 %v2281, 1.442695
      %v2344 = vpow.pop %v2343
      %v2345 = vmul.f32 %v2282, 1.442695
      %v2346 = vpow.pop %v2345
      %v2347 = vsel %vm555, %v2284, 0.0
      %2348 = vadd.xlane.f32.xlu0 %v2347
      %v2349 = vpop.xlane.xlu0 %2348
      %v2350 = vsel %vm555, %v2286, 0.0
      %2351 = vadd.xlane.f32.xlu0 %v2350
      %v2352 = vpop.xlane.xlu0 %2351
      %v2353 = vsel %vm555, %v2288, 0.0
      %2354 = vadd.xlane.f32.xlu0 %v2353
      %v2355 = vpop.xlane.xlu0 %2354
      %v2356 = vsel %vm555, %v2290, 0.0
      %2357 = vadd.xlane.f32.xlu0 %v2356
      %v2358 = vpop.xlane.xlu0 %2357
      %v2359 = vsel %vm555, %v2292, 0.0
      %2360 = vadd.xlane.f32.xlu0 %v2359
      %v2361 = vpop.xlane.xlu0 %2360
      %v2362 = vsel %vm555, %v2294, 0.0
      %2363 = vadd.xlane.f32.xlu0 %v2362
      %v2364 = vpop.xlane.xlu0 %2363
      %v2365 = vsel %vm555, %v2296, 0.0
      %2366 = vadd.xlane.f32.xlu0 %v2365
      %v2367 = vpop.xlane.xlu0 %2366
      %v2368 = vsel %vm555, %v2298, 0.0
      %2369 = vadd.xlane.f32.xlu0 %v2368
      %v2370 = vpop.xlane.xlu0 %2369
      %v2371 = vsel %vm555, %v2300, 0.0
      %2372 = vadd.xlane.f32.xlu0 %v2371
      %v2373 = vpop.xlane.xlu0 %2372
      %v2374 = vsel %vm555, %v2302, 0.0
      %2375 = vadd.xlane.f32.xlu0 %v2374
      %v2376 = vpop.xlane.xlu0 %2375
      %v2377 = vsel %vm555, %v2304, 0.0
      %2378 = vadd.xlane.f32.xlu0 %v2377
      %v2379 = vpop.xlane.xlu0 %2378
      %v2380 = vsel %vm555, %v2306, 0.0
      %2381 = vadd.xlane.f32.xlu0 %v2380
      %v2382 = vpop.xlane.xlu0 %2381
      %v2383 = vsel %vm555, %v2308, 0.0
      %2384 = vadd.xlane.f32.xlu0 %v2383
      %v2385 = vpop.xlane.xlu0 %2384
      %v2386 = vsel %vm555, %v2310, 0.0
      %2387 = vadd.xlane.f32.xlu0 %v2386
      %v2388 = vpop.xlane.xlu0 %2387
      %v2389 = vsel %vm555, %v2312, 0.0
      %2390 = vadd.xlane.f32.xlu0 %v2389
      %v2391 = vpop.xlane.xlu0 %2390
      %v2392 = vsel %vm555, %v2314, 0.0
      %2393 = vadd.xlane.f32.xlu0 %v2392
      %v2394 = vpop.xlane.xlu0 %2393
      %v2395 = vsel %vm555, %v2316, 0.0
      %2396 = vadd.xlane.f32.xlu0 %v2395
      %v2397 = vpop.xlane.xlu0 %2396
      %v2398 = vsel %vm555, %v2318, 0.0
      %2399 = vadd.xlane.f32.xlu0 %v2398
      %v2400 = vpop.xlane.xlu0 %2399
      %v2401 = vsel %vm555, %v2320, 0.0
      %2402 = vadd.xlane.f32.xlu0 %v2401
      %v2403 = vpop.xlane.xlu0 %2402
      %v2404 = vsel %vm555, %v2322, 0.0
      %2405 = vadd.xlane.f32.xlu0 %v2404
      %v2406 = vpop.xlane.xlu0 %2405
      %v2407 = vsel %vm555, %v2324, 0.0
      %2408 = vadd.xlane.f32.xlu0 %v2407
      %v2409 = vpop.xlane.xlu0 %2408
      %v2410 = vsel %vm555, %v2326, 0.0
      %2411 = vadd.xlane.f32.xlu0 %v2410
      %v2412 = vpop.xlane.xlu0 %2411
      %v2413 = vsel %vm555, %v2328, 0.0
      %2414 = vadd.xlane.f32.xlu0 %v2413
      %v2415 = vpop.xlane.xlu0 %2414
      %v2416 = vsel %vm555, %v2330, 0.0
      %2417 = vadd.xlane.f32.xlu0 %v2416
      %v2418 = vpop.xlane.xlu0 %2417
      %v2419 = vsel %vm555, %v2332, 0.0
      %2420 = vadd.xlane.f32.xlu0 %v2419
      %v2421 = vpop.xlane.xlu0 %2420
      %v2422 = vsel %vm555, %v2334, 0.0
      %2423 = vadd.xlane.f32.xlu0 %v2422
      %v2424 = vpop.xlane.xlu0 %2423
      %v2425 = vsel %vm555, %v2336, 0.0
      %2426 = vadd.xlane.f32.xlu0 %v2425
      %v2427 = vpop.xlane.xlu0 %2426
      %v2428 = vsel %vm555, %v2338, 0.0
      %2429 = vadd.xlane.f32.xlu0 %v2428
      %v2430 = vpop.xlane.xlu0 %2429
      %v2431 = vsel %vm555, %v2340, 0.0
      %2432 = vadd.xlane.f32.xlu0 %v2431
      %v2433 = vpop.xlane.xlu0 %2432
      %v2434 = vsel %vm555, %v2342, 0.0
      %2435 = vadd.xlane.f32.xlu0 %v2434
      %v2436 = vpop.xlane.xlu0 %2435
      %v2437 = vsel %vm555, %v2344, 0.0
      %2438 = vadd.xlane.f32.xlu0 %v2437
      %v2439 = vpop.xlane.xlu0 %2438
      %v2440 = vsel %vm555, %v2346, 0.0
      %2441 = vadd.xlane.f32.xlu0 %v2440
      %v2442 = vpop.xlane.xlu0 %2441
      %v2443 = vrcp.pop %v2349
      %v2444 = vmul.f32 %v2349, %v2443
      %v2445 = vsub.f32 1.0, %v2444
      %v2446 = vmul.f32 %v2443, %v2445
      %v2447 = vadd.f32 %v2443, %v2446
      %vm2448 = vweird.f32 %v2349
      %vm2449 = vweird.f32 %v2443
      %vm2450 = vmor %vm2448, %vm2449
      %v2451 = vsel %vm2450, %v2443, %v2447
      %v2452 = vand.u32 2147483647, %v2349
      %vm2453 = vcmp.eq.f32.partialorder %v2452, 8.507059e+37
      %v2454 = vand.u32 %v2349, 2147483648
      %v2455 = vor.u32 1.1754944e-38, %v2454
      %v2456 = vsel %vm2453, %v2455, %v2451
      %v2457 = vmul.f32 1.0, %v2456
      %v2458 = vrcp.pop %v2352
      %v2459 = vmul.f32 %v2352, %v2458
      %v2460 = vsub.f32 1.0, %v2459
      %v2461 = vmul.f32 %v2458, %v2460
      %v2462 = vadd.f32 %v2458, %v2461
      %vm2463 = vweird.f32 %v2352
      %vm2464 = vweird.f32 %v2458
      %vm2465 = vmor %vm2463, %vm2464
      %v2466 = vsel %vm2465, %v2458, %v2462
      %v2467 = vand.u32 2147483647, %v2352
      %vm2468 = vcmp.eq.f32.partialorder %v2467, 8.507059e+37
      %v2469 = vand.u32 %v2352, 2147483648
      %v2470 = vor.u32 1.1754944e-38, %v2469
      %v2471 = vsel %vm2468, %v2470, %v2466
      %v2472 = vmul.f32 1.0, %v2471
      %v2473 = vrcp.pop %v2355
      %v2474 = vmul.f32 %v2355, %v2473
      %v2475 = vsub.f32 1.0, %v2474
      %v2476 = vmul.f32 %v2473, %v2475
      %v2477 = vadd.f32 %v2473, %v2476
      %vm2478 = vweird.f32 %v2355
      %vm2479 = vweird.f32 %v2473
      %vm2480 = vmor %vm2478, %vm2479
      %v2481 = vsel %vm2480, %v2473, %v2477
      %v2482 = vand.u32 2147483647, %v2355
      %vm2483 = vcmp.eq.f32.partialorder %v2482, 8.507059e+37
      %v2484 = vand.u32 %v2355, 2147483648
      %v2485 = vor.u32 1.1754944e-38, %v2484
      %v2486 = vsel %vm2483, %v2485, %v2481
      %v2487 = vmul.f32 1.0, %v2486
      %v2488 = vrcp.pop %v2358
      %v2489 = vmul.f32 %v2358, %v2488
      %v2490 = vsub.f32 1.0, %v2489
      %v2491 = vmul.f32 %v2488, %v2490
      %v2492 = vadd.f32 %v2488, %v2491
      %vm2493 = vweird.f32 %v2358
      %vm2494 = vweird.f32 %v2488
      %vm2495 = vmor %vm2493, %vm2494
      %v2496 = vsel %vm2495, %v2488, %v2492
      %v2497 = vand.u32 2147483647, %v2358
      %vm2498 = vcmp.eq.f32.partialorder %v2497, 8.507059e+37
      %v2499 = vand.u32 %v2358, 2147483648
      %v2500 = vor.u32 1.1754944e-38, %v2499
      %v2501 = vsel %vm2498, %v2500, %v2496
      %v2502 = vmul.f32 1.0, %v2501
      %v2503 = vrcp.pop %v2361
      %v2504 = vmul.f32 %v2361, %v2503
      %v2505 = vsub.f32 1.0, %v2504
      %v2506 = vmul.f32 %v2503, %v2505
      %v2507 = vadd.f32 %v2503, %v2506
      %vm2508 = vweird.f32 %v2361
      %vm2509 = vweird.f32 %v2503
      %vm2510 = vmor %vm2508, %vm2509
      %v2511 = vsel %vm2510, %v2503, %v2507
      %v2512 = vand.u32 2147483647, %v2361
      %vm2513 = vcmp.eq.f32.partialorder %v2512, 8.507059e+37
      %v2514 = vand.u32 %v2361, 2147483648
      %v2515 = vor.u32 1.1754944e-38, %v2514
      %v2516 = vsel %vm2513, %v2515, %v2511
      %v2517 = vmul.f32 1.0, %v2516
      %v2518 = vrcp.pop %v2364
      %v2519 = vmul.f32 %v2364, %v2518
      %v2520 = vsub.f32 1.0, %v2519
      %v2521 = vmul.f32 %v2518, %v2520
      %v2522 = vadd.f32 %v2518, %v2521
      %vm2523 = vweird.f32 %v2364
      %vm2524 = vweird.f32 %v2518
      %vm2525 = vmor %vm2523, %vm2524
      %v2526 = vsel %vm2525, %v2518, %v2522
      %v2527 = vand.u32 2147483647, %v2364
      %vm2528 = vcmp.eq.f32.partialorder %v2527, 8.507059e+37
      %v2529 = vand.u32 %v2364, 2147483648
      %v2530 = vor.u32 1.1754944e-38, %v2529
      %v2531 = vsel %vm2528, %v2530, %v2526
      %v2532 = vmul.f32 1.0, %v2531
      %v2533 = vrcp.pop %v2367
      %v2534 = vmul.f32 %v2367, %v2533
      %v2535 = vsub.f32 1.0, %v2534
      %v2536 = vmul.f32 %v2533, %v2535
      %v2537 = vadd.f32 %v2533, %v2536
      %vm2538 = vweird.f32 %v2367
      %vm2539 = vweird.f32 %v2533
      %vm2540 = vmor %vm2538, %vm2539
      %v2541 = vsel %vm2540, %v2533, %v2537
      %v2542 = vand.u32 2147483647, %v2367
      %vm2543 = vcmp.eq.f32.partialorder %v2542, 8.507059e+37
      %v2544 = vand.u32 %v2367, 2147483648
      %v2545 = vor.u32 1.1754944e-38, %v2544
      %v2546 = vsel %vm2543, %v2545, %v2541
      %v2547 = vmul.f32 1.0, %v2546
      %v2548 = vrcp.pop %v2370
      %v2549 = vmul.f32 %v2370, %v2548
      %v2550 = vsub.f32 1.0, %v2549
      %v2551 = vmul.f32 %v2548, %v2550
      %v2552 = vadd.f32 %v2548, %v2551
      %vm2553 = vweird.f32 %v2370
      %vm2554 = vweird.f32 %v2548
      %vm2555 = vmor %vm2553, %vm2554
      %v2556 = vsel %vm2555, %v2548, %v2552
      %v2557 = vand.u32 2147483647, %v2370
      %vm2558 = vcmp.eq.f32.partialorder %v2557, 8.507059e+37
      %v2559 = vand.u32 %v2370, 2147483648
      %v2560 = vor.u32 1.1754944e-38, %v2559
      %v2561 = vsel %vm2558, %v2560, %v2556
      %v2562 = vmul.f32 1.0, %v2561
      %v2563 = vrcp.pop %v2373
      %v2564 = vmul.f32 %v2373, %v2563
      %v2565 = vsub.f32 1.0, %v2564
      %v2566 = vmul.f32 %v2563, %v2565
      %v2567 = vadd.f32 %v2563, %v2566
      %vm2568 = vweird.f32 %v2373
      %vm2569 = vweird.f32 %v2563
      %vm2570 = vmor %vm2568, %vm2569
      %v2571 = vsel %vm2570, %v2563, %v2567
      %v2572 = vand.u32 2147483647, %v2373
      %vm2573 = vcmp.eq.f32.partialorder %v2572, 8.507059e+37
      %v2574 = vand.u32 %v2373, 2147483648
      %v2575 = vor.u32 1.1754944e-38, %v2574
      %v2576 = vsel %vm2573, %v2575, %v2571
      %v2577 = vmul.f32 1.0, %v2576
      %v2578 = vrcp.pop %v2376
      %v2579 = vmul.f32 %v2376, %v2578
      %v2580 = vsub.f32 1.0, %v2579
      %v2581 = vmul.f32 %v2578, %v2580
      %v2582 = vadd.f32 %v2578, %v2581
      %vm2583 = vweird.f32 %v2376
      %vm2584 = vweird.f32 %v2578
      %vm2585 = vmor %vm2583, %vm2584
      %v2586 = vsel %vm2585, %v2578, %v2582
      %v2587 = vand.u32 2147483647, %v2376
      %vm2588 = vcmp.eq.f32.partialorder %v2587, 8.507059e+37
      %v2589 = vand.u32 %v2376, 2147483648
      %v2590 = vor.u32 1.1754944e-38, %v2589
      %v2591 = vsel %vm2588, %v2590, %v2586
      %v2592 = vmul.f32 1.0, %v2591
      %v2593 = vrcp.pop %v2379
      %v2594 = vmul.f32 %v2379, %v2593
      %v2595 = vsub.f32 1.0, %v2594
      %v2596 = vmul.f32 %v2593, %v2595
      %v2597 = vadd.f32 %v2593, %v2596
      %vm2598 = vweird.f32 %v2379
      %vm2599 = vweird.f32 %v2593
      %vm2600 = vmor %vm2598, %vm2599
      %v2601 = vsel %vm2600, %v2593, %v2597
      %v2602 = vand.u32 2147483647, %v2379
      %vm2603 = vcmp.eq.f32.partialorder %v2602, 8.507059e+37
      %v2604 = vand.u32 %v2379, 2147483648
      %v2605 = vor.u32 1.1754944e-38, %v2604
      %v2606 = vsel %vm2603, %v2605, %v2601
      %v2607 = vmul.f32 1.0, %v2606
      %v2608 = vrcp.pop %v2382
      %v2609 = vmul.f32 %v2382, %v2608
      %v2610 = vsub.f32 1.0, %v2609
      %v2611 = vmul.f32 %v2608, %v2610
      %v2612 = vadd.f32 %v2608, %v2611
      %vm2613 = vweird.f32 %v2382
      %vm2614 = vweird.f32 %v2608
      %vm2615 = vmor %vm2613, %vm2614
      %v2616 = vsel %vm2615, %v2608, %v2612
      %v2617 = vand.u32 2147483647, %v2382
      %vm2618 = vcmp.eq.f32.partialorder %v2617, 8.507059e+37
      %v2619 = vand.u32 %v2382, 2147483648
      %v2620 = vor.u32 1.1754944e-38, %v2619
      %v2621 = vsel %vm2618, %v2620, %v2616
      %v2622 = vmul.f32 1.0, %v2621
      %v2623 = vrcp.pop %v2385
      %v2624 = vmul.f32 %v2385, %v2623
      %v2625 = vsub.f32 1.0, %v2624
      %v2626 = vmul.f32 %v2623, %v2625
      %v2627 = vadd.f32 %v2623, %v2626
      %vm2628 = vweird.f32 %v2385
      %vm2629 = vweird.f32 %v2623
      %vm2630 = vmor %vm2628, %vm2629
      %v2631 = vsel %vm2630, %v2623, %v2627
      %v2632 = vand.u32 2147483647, %v2385
      %vm2633 = vcmp.eq.f32.partialorder %v2632, 8.507059e+37
      %v2634 = vand.u32 %v2385, 2147483648
      %v2635 = vor.u32 1.1754944e-38, %v2634
      %v2636 = vsel %vm2633, %v2635, %v2631
      %v2637 = vmul.f32 1.0, %v2636
      %v2638 = vrcp.pop %v2388
      %v2639 = vmul.f32 %v2388, %v2638
      %v2640 = vsub.f32 1.0, %v2639
      %v2641 = vmul.f32 %v2638, %v2640
      %v2642 = vadd.f32 %v2638, %v2641
      %vm2643 = vweird.f32 %v2388
      %vm2644 = vweird.f32 %v2638
      %vm2645 = vmor %vm2643, %vm2644
      %v2646 = vsel %vm2645, %v2638, %v2642
      %v2647 = vand.u32 2147483647, %v2388
      %vm2648 = vcmp.eq.f32.partialorder %v2647, 8.507059e+37
      %v2649 = vand.u32 %v2388, 2147483648
      %v2650 = vor.u32 1.1754944e-38, %v2649
      %v2651 = vsel %vm2648, %v2650, %v2646
      %v2652 = vmul.f32 1.0, %v2651
      %v2653 = vrcp.pop %v2391
      %v2654 = vmul.f32 %v2391, %v2653
      %v2655 = vsub.f32 1.0, %v2654
      %v2656 = vmul.f32 %v2653, %v2655
      %v2657 = vadd.f32 %v2653, %v2656
      %vm2658 = vweird.f32 %v2391
      %vm2659 = vweird.f32 %v2653
      %vm2660 = vmor %vm2658, %vm2659
      %v2661 = vsel %vm2660, %v2653, %v2657
      %v2662 = vand.u32 2147483647, %v2391
      %vm2663 = vcmp.eq.f32.partialorder %v2662, 8.507059e+37
      %v2664 = vand.u32 %v2391, 2147483648
      %v2665 = vor.u32 1.1754944e-38, %v2664
      %v2666 = vsel %vm2663, %v2665, %v2661
      %v2667 = vmul.f32 1.0, %v2666
      %v2668 = vrcp.pop %v2394
      %v2669 = vmul.f32 %v2394, %v2668
      %v2670 = vsub.f32 1.0, %v2669
      %v2671 = vmul.f32 %v2668, %v2670
      %v2672 = vadd.f32 %v2668, %v2671
      %vm2673 = vweird.f32 %v2394
      %vm2674 = vweird.f32 %v2668
      %vm2675 = vmor %vm2673, %vm2674
      %v2676 = vsel %vm2675, %v2668, %v2672
      %v2677 = vand.u32 2147483647, %v2394
      %vm2678 = vcmp.eq.f32.partialorder %v2677, 8.507059e+37
      %v2679 = vand.u32 %v2394, 2147483648
      %v2680 = vor.u32 1.1754944e-38, %v2679
      %v2681 = vsel %vm2678, %v2680, %v2676
      %v2682 = vmul.f32 1.0, %v2681
      %v2683 = vrcp.pop %v2397
      %v2684 = vmul.f32 %v2397, %v2683
      %v2685 = vsub.f32 1.0, %v2684
      %v2686 = vmul.f32 %v2683, %v2685
      %v2687 = vadd.f32 %v2683, %v2686
      %vm2688 = vweird.f32 %v2397
      %vm2689 = vweird.f32 %v2683
      %vm2690 = vmor %vm2688, %vm2689
      %v2691 = vsel %vm2690, %v2683, %v2687
      %v2692 = vand.u32 2147483647, %v2397
      %vm2693 = vcmp.eq.f32.partialorder %v2692, 8.507059e+37
      %v2694 = vand.u32 %v2397, 2147483648
      %v2695 = vor.u32 1.1754944e-38, %v2694
      %v2696 = vsel %vm2693, %v2695, %v2691
      %v2697 = vmul.f32 1.0, %v2696
      %v2698 = vrcp.pop %v2400
      %v2699 = vmul.f32 %v2400, %v2698
      %v2700 = vsub.f32 1.0, %v2699
      %v2701 = vmul.f32 %v2698, %v2700
      %v2702 = vadd.f32 %v2698, %v2701
      %vm2703 = vweird.f32 %v2400
      %vm2704 = vweird.f32 %v2698
      %vm2705 = vmor %vm2703, %vm2704
      %v2706 = vsel %vm2705, %v2698, %v2702
      %v2707 = vand.u32 2147483647, %v2400
      %vm2708 = vcmp.eq.f32.partialorder %v2707, 8.507059e+37
      %v2709 = vand.u32 %v2400, 2147483648
      %v2710 = vor.u32 1.1754944e-38, %v2709
      %v2711 = vsel %vm2708, %v2710, %v2706
      %v2712 = vmul.f32 1.0, %v2711
      %v2713 = vrcp.pop %v2403
      %v2714 = vmul.f32 %v2403, %v2713
      %v2715 = vsub.f32 1.0, %v2714
      %v2716 = vmul.f32 %v2713, %v2715
      %v2717 = vadd.f32 %v2713, %v2716
      %vm2718 = vweird.f32 %v2403
      %vm2719 = vweird.f32 %v2713
      %vm2720 = vmor %vm2718, %vm2719
      %v2721 = vsel %vm2720, %v2713, %v2717
      %v2722 = vand.u32 2147483647, %v2403
      %vm2723 = vcmp.eq.f32.partialorder %v2722, 8.507059e+37
      %v2724 = vand.u32 %v2403, 2147483648
      %v2725 = vor.u32 1.1754944e-38, %v2724
      %v2726 = vsel %vm2723, %v2725, %v2721
      %v2727 = vmul.f32 1.0, %v2726
      %v2728 = vrcp.pop %v2406
      %v2729 = vmul.f32 %v2406, %v2728
      %v2730 = vsub.f32 1.0, %v2729
      %v2731 = vmul.f32 %v2728, %v2730
      %v2732 = vadd.f32 %v2728, %v2731
      %vm2733 = vweird.f32 %v2406
      %vm2734 = vweird.f32 %v2728
      %vm2735 = vmor %vm2733, %vm2734
      %v2736 = vsel %vm2735, %v2728, %v2732
      %v2737 = vand.u32 2147483647, %v2406
      %vm2738 = vcmp.eq.f32.partialorder %v2737, 8.507059e+37
      %v2739 = vand.u32 %v2406, 2147483648
      %v2740 = vor.u32 1.1754944e-38, %v2739
      %v2741 = vsel %vm2738, %v2740, %v2736
      %v2742 = vmul.f32 1.0, %v2741
      %v2743 = vrcp.pop %v2409
      %v2744 = vmul.f32 %v2409, %v2743
      %v2745 = vsub.f32 1.0, %v2744
      %v2746 = vmul.f32 %v2743, %v2745
      %v2747 = vadd.f32 %v2743, %v2746
      %vm2748 = vweird.f32 %v2409
      %vm2749 = vweird.f32 %v2743
      %vm2750 = vmor %vm2748, %vm2749
      %v2751 = vsel %vm2750, %v2743, %v2747
      %v2752 = vand.u32 2147483647, %v2409
      %vm2753 = vcmp.eq.f32.partialorder %v2752, 8.507059e+37
      %v2754 = vand.u32 %v2409, 2147483648
      %v2755 = vor.u32 1.1754944e-38, %v2754
      %v2756 = vsel %vm2753, %v2755, %v2751
      %v2757 = vmul.f32 1.0, %v2756
      %v2758 = vrcp.pop %v2412
      %v2759 = vmul.f32 %v2412, %v2758
      %v2760 = vsub.f32 1.0, %v2759
      %v2761 = vmul.f32 %v2758, %v2760
      %v2762 = vadd.f32 %v2758, %v2761
      %vm2763 = vweird.f32 %v2412
      %vm2764 = vweird.f32 %v2758
      %vm2765 = vmor %vm2763, %vm2764
      %v2766 = vsel %vm2765, %v2758, %v2762
      %v2767 = vand.u32 2147483647, %v2412
      %vm2768 = vcmp.eq.f32.partialorder %v2767, 8.507059e+37
      %v2769 = vand.u32 %v2412, 2147483648
      %v2770 = vor.u32 1.1754944e-38, %v2769
      %v2771 = vsel %vm2768, %v2770, %v2766
      %v2772 = vmul.f32 1.0, %v2771
      %v2773 = vrcp.pop %v2415
      %v2774 = vmul.f32 %v2415, %v2773
      %v2775 = vsub.f32 1.0, %v2774
      %v2776 = vmul.f32 %v2773, %v2775
      %v2777 = vadd.f32 %v2773, %v2776
      %vm2778 = vweird.f32 %v2415
      %vm2779 = vweird.f32 %v2773
      %vm2780 = vmor %vm2778, %vm2779
      %v2781 = vsel %vm2780, %v2773, %v2777
      %v2782 = vand.u32 2147483647, %v2415
      %vm2783 = vcmp.eq.f32.partialorder %v2782, 8.507059e+37
      %v2784 = vand.u32 %v2415, 2147483648
      %v2785 = vor.u32 1.1754944e-38, %v2784
      %v2786 = vsel %vm2783, %v2785, %v2781
      %v2787 = vmul.f32 1.0, %v2786
      %v2788 = vrcp.pop %v2418
      %v2789 = vmul.f32 %v2418, %v2788
      %v2790 = vsub.f32 1.0, %v2789
      %v2791 = vmul.f32 %v2788, %v2790
      %v2792 = vadd.f32 %v2788, %v2791
      %vm2793 = vweird.f32 %v2418
      %vm2794 = vweird.f32 %v2788
      %vm2795 = vmor %vm2793, %vm2794
      %v2796 = vsel %vm2795, %v2788, %v2792
      %v2797 = vand.u32 2147483647, %v2418
      %vm2798 = vcmp.eq.f32.partialorder %v2797, 8.507059e+37
      %v2799 = vand.u32 %v2418, 2147483648
      %v2800 = vor.u32 1.1754944e-38, %v2799
      %v2801 = vsel %vm2798, %v2800, %v2796
      %v2802 = vmul.f32 1.0, %v2801
      %v2803 = vrcp.pop %v2421
      %v2804 = vmul.f32 %v2421, %v2803
      %v2805 = vsub.f32 1.0, %v2804
      %v2806 = vmul.f32 %v2803, %v2805
      %v2807 = vadd.f32 %v2803, %v2806
      %vm2808 = vweird.f32 %v2421
      %vm2809 = vweird.f32 %v2803
      %vm2810 = vmor %vm2808, %vm2809
      %v2811 = vsel %vm2810, %v2803, %v2807
      %v2812 = vand.u32 2147483647, %v2421
      %vm2813 = vcmp.eq.f32.partialorder %v2812, 8.507059e+37
      %v2814 = vand.u32 %v2421, 2147483648
      %v2815 = vor.u32 1.1754944e-38, %v2814
      %v2816 = vsel %vm2813, %v2815, %v2811
      %v2817 = vmul.f32 1.0, %v2816
      %v2818 = vrcp.pop %v2424
      %v2819 = vmul.f32 %v2424, %v2818
      %v2820 = vsub.f32 1.0, %v2819
      %v2821 = vmul.f32 %v2818, %v2820
      %v2822 = vadd.f32 %v2818, %v2821
      %vm2823 = vweird.f32 %v2424
      %vm2824 = vweird.f32 %v2818
      %vm2825 = vmor %vm2823, %vm2824
      %v2826 = vsel %vm2825, %v2818, %v2822
      %v2827 = vand.u32 2147483647, %v2424
      %vm2828 = vcmp.eq.f32.partialorder %v2827, 8.507059e+37
      %v2829 = vand.u32 %v2424, 2147483648
      %v2830 = vor.u32 1.1754944e-38, %v2829
      %v2831 = vsel %vm2828, %v2830, %v2826
      %v2832 = vmul.f32 1.0, %v2831
      %v2833 = vrcp.pop %v2427
      %v2834 = vmul.f32 %v2427, %v2833
      %v2835 = vsub.f32 1.0, %v2834
      %v2836 = vmul.f32 %v2833, %v2835
      %v2837 = vadd.f32 %v2833, %v2836
      %vm2838 = vweird.f32 %v2427
      %vm2839 = vweird.f32 %v2833
      %vm2840 = vmor %vm2838, %vm2839
      %v2841 = vsel %vm2840, %v2833, %v2837
      %v2842 = vand.u32 2147483647, %v2427
      %vm2843 = vcmp.eq.f32.partialorder %v2842, 8.507059e+37
      %v2844 = vand.u32 %v2427, 2147483648
      %v2845 = vor.u32 1.1754944e-38, %v2844
      %v2846 = vsel %vm2843, %v2845, %v2841
      %v2847 = vmul.f32 1.0, %v2846
      %v2848 = vrcp.pop %v2430
      %v2849 = vmul.f32 %v2430, %v2848
      %v2850 = vsub.f32 1.0, %v2849
      %v2851 = vmul.f32 %v2848, %v2850
      %v2852 = vadd.f32 %v2848, %v2851
      %vm2853 = vweird.f32 %v2430
      %vm2854 = vweird.f32 %v2848
      %vm2855 = vmor %vm2853, %vm2854
      %v2856 = vsel %vm2855, %v2848, %v2852
      %v2857 = vand.u32 2147483647, %v2430
      %vm2858 = vcmp.eq.f32.partialorder %v2857, 8.507059e+37
      %v2859 = vand.u32 %v2430, 2147483648
      %v2860 = vor.u32 1.1754944e-38, %v2859
      %v2861 = vsel %vm2858, %v2860, %v2856
      %v2862 = vmul.f32 1.0, %v2861
      %v2863 = vrcp.pop %v2433
      %v2864 = vmul.f32 %v2433, %v2863
      %v2865 = vsub.f32 1.0, %v2864
      %v2866 = vmul.f32 %v2863, %v2865
      %v2867 = vadd.f32 %v2863, %v2866
      %vm2868 = vweird.f32 %v2433
      %vm2869 = vweird.f32 %v2863
      %vm2870 = vmor %vm2868, %vm2869
      %v2871 = vsel %vm2870, %v2863, %v2867
      %v2872 = vand.u32 2147483647, %v2433
      %vm2873 = vcmp.eq.f32.partialorder %v2872, 8.507059e+37
      %v2874 = vand.u32 %v2433, 2147483648
      %v2875 = vor.u32 1.1754944e-38, %v2874
      %v2876 = vsel %vm2873, %v2875, %v2871
      %v2877 = vmul.f32 1.0, %v2876
      %v2878 = vrcp.pop %v2436
      %v2879 = vmul.f32 %v2436, %v2878
      %v2880 = vsub.f32 1.0, %v2879
      %v2881 = vmul.f32 %v2878, %v2880
      %v2882 = vadd.f32 %v2878, %v2881
      %vm2883 = vweird.f32 %v2436
      %vm2884 = vweird.f32 %v2878
      %vm2885 = vmor %vm2883, %vm2884
      %v2886 = vsel %vm2885, %v2878, %v2882
      %v2887 = vand.u32 2147483647, %v2436
      %vm2888 = vcmp.eq.f32.partialorder %v2887, 8.507059e+37
      %v2889 = vand.u32 %v2436, 2147483648
      %v2890 = vor.u32 1.1754944e-38, %v2889
      %v2891 = vsel %vm2888, %v2890, %v2886
      %v2892 = vmul.f32 1.0, %v2891
      %v2893 = vrcp.pop %v2439
      %v2894 = vmul.f32 %v2439, %v2893
      %v2895 = vsub.f32 1.0, %v2894
      %v2896 = vmul.f32 %v2893, %v2895
      %v2897 = vadd.f32 %v2893, %v2896
      %vm2898 = vweird.f32 %v2439
      %vm2899 = vweird.f32 %v2893
      %vm2900 = vmor %vm2898, %vm2899
      %v2901 = vsel %vm2900, %v2893, %v2897
      %v2902 = vand.u32 2147483647, %v2439
      %vm2903 = vcmp.eq.f32.partialorder %v2902, 8.507059e+37
      %v2904 = vand.u32 %v2439, 2147483648
      %v2905 = vor.u32 1.1754944e-38, %v2904
      %v2906 = vsel %vm2903, %v2905, %v2901
      %v2907 = vmul.f32 1.0, %v2906
      %v2908 = vrcp.pop %v2442
      %v2909 = vmul.f32 %v2442, %v2908
      %v2910 = vsub.f32 1.0, %v2909
      %v2911 = vmul.f32 %v2908, %v2910
      %v2912 = vadd.f32 %v2908, %v2911
      %vm2913 = vweird.f32 %v2442
      %vm2914 = vweird.f32 %v2908
      %vm2915 = vmor %vm2913, %vm2914
      %v2916 = vsel %vm2915, %v2908, %v2912
      %v2917 = vand.u32 2147483647, %v2442
      %vm2918 = vcmp.eq.f32.partialorder %v2917, 8.507059e+37
      %v2919 = vand.u32 %v2442, 2147483648
      %v2920 = vor.u32 1.1754944e-38, %v2919
      %v2921 = vsel %vm2918, %v2920, %v2916
      %v2922 = vmul.f32 1.0, %v2921
      %v2923 = vmul.f32 %v2284, %v2457
      %v2924 = vmul.f32 %v2286, %v2472
      %v2925 = vmul.f32 %v2288, %v2487
      %v2926 = vmul.f32 %v2290, %v2502
      %v2927 = vmul.f32 %v2292, %v2517
      %v2928 = vmul.f32 %v2294, %v2532
      %v2929 = vmul.f32 %v2296, %v2547
      %v2930 = vmul.f32 %v2298, %v2562
      %v2931 = vmul.f32 %v2300, %v2577
      %v2932 = vmul.f32 %v2302, %v2592
      %v2933 = vmul.f32 %v2304, %v2607
      %v2934 = vmul.f32 %v2306, %v2622
      %v2935 = vmul.f32 %v2308, %v2637
      %v2936 = vmul.f32 %v2310, %v2652
      %v2937 = vmul.f32 %v2312, %v2667
      %v2938 = vmul.f32 %v2314, %v2682
      %v2939 = vmul.f32 %v2316, %v2697
      %v2940 = vmul.f32 %v2318, %v2712
      %v2941 = vmul.f32 %v2320, %v2727
      %v2942 = vmul.f32 %v2322, %v2742
      %v2943 = vmul.f32 %v2324, %v2757
      %v2944 = vmul.f32 %v2326, %v2772
      %v2945 = vmul.f32 %v2328, %v2787
      %v2946 = vmul.f32 %v2330, %v2802
      %v2947 = vmul.f32 %v2332, %v2817
      %v2948 = vmul.f32 %v2334, %v2832
      %v2949 = vmul.f32 %v2336, %v2847
      %v2950 = vmul.f32 %v2338, %v2862
      %v2951 = vmul.f32 %v2340, %v2877
      %v2952 = vmul.f32 %v2342, %v2892
      %v2953 = vmul.f32 %v2344, %v2907
      %v2954 = vmul.f32 %v2346, %v2922
      %v2955 = vpack.c.bf16 %v2923, %v2923
      %v2956 = vpack.c.bf16 %v2924, %v2924
      %v2957 = vpack.c.bf16 %v2925, %v2925
      %v2958 = vpack.c.bf16 %v2926, %v2926
      %v2959 = vpack.c.bf16 %v2927, %v2927
      %v2960 = vpack.c.bf16 %v2928, %v2928
      %v2961 = vpack.c.bf16 %v2929, %v2929
      %v2962 = vpack.c.bf16 %v2930, %v2930
      %v2963 = vpack.c.bf16 %v2931, %v2931
      %v2964 = vpack.c.bf16 %v2932, %v2932
      %v2965 = vpack.c.bf16 %v2933, %v2933
      %v2966 = vpack.c.bf16 %v2934, %v2934
      %v2967 = vpack.c.bf16 %v2935, %v2935
      %v2968 = vpack.c.bf16 %v2936, %v2936
      %v2969 = vpack.c.bf16 %v2937, %v2937
      %v2970 = vpack.c.bf16 %v2938, %v2938
      %v2971 = vpack.c.bf16 %v2939, %v2939
      %v2972 = vpack.c.bf16 %v2940, %v2940
      %v2973 = vpack.c.bf16 %v2941, %v2941
      %v2974 = vpack.c.bf16 %v2942, %v2942
      %v2975 = vpack.c.bf16 %v2943, %v2943
      %v2976 = vpack.c.bf16 %v2944, %v2944
      %v2977 = vpack.c.bf16 %v2945, %v2945
      %v2978 = vpack.c.bf16 %v2946, %v2946
      %v2979 = vpack.c.bf16 %v2947, %v2947
      %v2980 = vpack.c.bf16 %v2948, %v2948
      %v2981 = vpack.c.bf16 %v2949, %v2949
      %v2982 = vpack.c.bf16 %v2950, %v2950
      %v2983 = vpack.c.bf16 %v2951, %v2951
      %v2984 = vpack.c.bf16 %v2952, %v2952
      %v2985 = vpack.c.bf16 %v2953, %v2953
      %v2986 = vpack.c.bf16 %v2954, %v2954
      %s2987 = scalar_lea.vmem %s5, 64
      %v2988 = vld [vmem:[%s2987] sm:$0xff]
      %v2989 = vld [vmem:[%s2987 + $0x8] sm:$0xff]
      %v2990 = vld [vmem:[%s2987 + $0x10] sm:$0xff]
      %v2991 = vld [vmem:[%s2987 + $0x18] sm:$0xff]
      %v2992 = vld [vmem:[%s2987 + $0x20] sm:$0xff]
      %v2993 = vld [vmem:[%s2987 + $0x28] sm:$0xff]
      %v2994 = vld [vmem:[%s2987 + $0x30] sm:$0xff]
      %v2995 = vld [vmem:[%s2987 + $0x38] sm:$0xff]
      %2996 = vrot.lane.b32.xlu0 %v1846, 112
      %v2997 = vpop.permute.xlu0 %2996
      %2998 = vrot.lane.b32.xlu0 %v1847, 112
      %v2999 = vpop.permute.xlu0 %2998
      %3000 = vrot.lane.b32.xlu0 %v1848, 112
      %v3001 = vpop.permute.xlu0 %3000
      %3002 = vrot.lane.b32.xlu0 %v1849, 112
      %v3003 = vpop.permute.xlu0 %3002
      %3004 = vrot.lane.b32.xlu0 %v1846, 48
      %v3005 = vpop.permute.xlu0 %3004
      %3006 = vrot.lane.b32.xlu0 %v1847, 48
      %v3007 = vpop.permute.xlu0 %3006
      %3008 = vrot.lane.b32.xlu0 %v1848, 48
      %v3009 = vpop.permute.xlu0 %3008
      %3010 = vrot.lane.b32.xlu0 %v1849, 48
      %v3011 = vpop.permute.xlu0 %3010
      %v3013 = vsel %vm1858, %v2997, 0
      %v3016 = vsel %vm1858, %v2999, 0
      %v3019 = vsel %vm1858, %v3001, 0
      %v3022 = vsel %vm1858, %v3003, 0
      %v3025 = vsel %vm1858, %v3005, 0
      %v3028 = vsel %vm1858, %v3007, 0
      %v3031 = vsel %vm1858, %v3009, 0
      %v3034 = vsel %vm1858, %v3011, 0
      %3036 = vmatpush.bf16.xpose.msra.mxu0 0
      %3037 = vmatpush.bf16.xpose.msra.mxu0 0
      %3038 = vmatpush.bf16.xpose.msra.mxu0 0
      %3039 = vmatpush.bf16.xpose.msra.mxu0 0
      %3040 = vmatpush.bf16.xpose.msra.mxu0 %v3034
      %3041 = vmatpush.bf16.xpose.msra.mxu0 %v3031
      %3042 = vmatpush.bf16.xpose.msra.mxu0 %v3028
      %3043 = vmatpush.bf16.xpose.msra.mxu0 %v3025
      %3044 = vmatmul.bf16.gmra.mxu0 %v3013
      %v3045 = vpop.f32.mrf.mxu0
      %v3046 = vadd.f32 %v2988, %v3045
      %v3047 = vpop.f32.mrf.mxu0
      %v3048 = vadd.f32 %v2989, %v3047
      %3049 = vmatmul.bf16.gmra.mxu0 %v3016
      %v3050 = vpop.f32.mrf.mxu0
      %v3051 = vadd.f32 %v2990, %v3050
      %v3052 = vpop.f32.mrf.mxu0
      %v3053 = vadd.f32 %v2991, %v3052
      %3054 = vmatmul.bf16.gmra.mxu0 %v3019
      %v3055 = vpop.f32.mrf.mxu0
      %v3056 = vadd.f32 %v2992, %v3055
      %v3057 = vpop.f32.mrf.mxu0
      %v3058 = vadd.f32 %v2993, %v3057
      %3059 = vmatmul.bf16.gmra.mxu0 %v3022
      %v3060 = vpop.f32.mrf.mxu0
      %v3061 = vadd.f32 %v2994, %v3060
      %v3062 = vpop.f32.mrf.mxu0
      %v3063 = vadd.f32 %v2995, %v3062
      %3064 = vdwg.mxu0
      %3065 = vrot.lane.b32.xlu0 %v1928, 112
      %v3066 = vpop.permute.xlu0 %3065
      %3067 = vrot.lane.b32.xlu0 %v1929, 112
      %v3068 = vpop.permute.xlu0 %3067
      %3069 = vrot.lane.b32.xlu0 %v1930, 112
      %v3070 = vpop.permute.xlu0 %3069
      %3071 = vrot.lane.b32.xlu0 %v1931, 112
      %v3072 = vpop.permute.xlu0 %3071
      %3073 = vrot.lane.b32.xlu0 %v1928, 48
      %v3074 = vpop.permute.xlu0 %3073
      %3075 = vrot.lane.b32.xlu0 %v1929, 48
      %v3076 = vpop.permute.xlu0 %3075
      %3077 = vrot.lane.b32.xlu0 %v1930, 48
      %v3078 = vpop.permute.xlu0 %3077
      %3079 = vrot.lane.b32.xlu0 %v1931, 48
      %v3080 = vpop.permute.xlu0 %3079
      %v3082 = vsel %vm1858, %v3066, 0
      %v3085 = vsel %vm1858, %v3068, 0
      %v3088 = vsel %vm1858, %v3070, 0
      %v3091 = vsel %vm1858, %v3072, 0
      %v3094 = vsel %vm1858, %v3074, 0
      %v3097 = vsel %vm1858, %v3076, 0
      %v3100 = vsel %vm1858, %v3078, 0
      %v3103 = vsel %vm1858, %v3080, 0
      %3105 = vmatpush.bf16.xpose.msra.mxu0 0
      %3106 = vmatpush.bf16.xpose.msra.mxu0 0
      %3107 = vmatpush.bf16.xpose.msra.mxu0 0
      %3108 = vmatpush.bf16.xpose.msra.mxu0 0
      %3109 = vmatpush.bf16.xpose.msra.mxu0 %v3103
      %3110 = vmatpush.bf16.xpose.msra.mxu0 %v3100
      %3111 = vmatpush.bf16.xpose.msra.mxu0 %v3097
      %3112 = vmatpush.bf16.xpose.msra.mxu0 %v3094
      %3113 = vmatmul.bf16.gmra.mxu0 %v3082
      %v3114 = vpop.f32.mrf.mxu0
      %v3115 = vadd.f32 %v2988, %v3114
      %v3116 = vpop.f32.mrf.mxu0
      %v3117 = vadd.f32 %v2989, %v3116
      %3118 = vmatmul.bf16.gmra.mxu0 %v3085
      %v3119 = vpop.f32.mrf.mxu0
      %v3120 = vadd.f32 %v2990, %v3119
      %v3121 = vpop.f32.mrf.mxu0
      %v3122 = vadd.f32 %v2991, %v3121
      %3123 = vmatmul.bf16.gmra.mxu0 %v3088
      %v3124 = vpop.f32.mrf.mxu0
      %v3125 = vadd.f32 %v2992, %v3124
      %v3126 = vpop.f32.mrf.mxu0
      %v3127 = vadd.f32 %v2993, %v3126
      %3128 = vmatmul.bf16.gmra.mxu0 %v3091
      %v3129 = vpop.f32.mrf.mxu0
      %v3130 = vadd.f32 %v2994, %v3129
      %v3131 = vpop.f32.mrf.mxu0
      %v3132 = vadd.f32 %v2995, %v3131
      %3133 = vdwg.mxu0
      %3134 = vrot.lane.b32.xlu0 %v2009, 112
      %v3135 = vpop.permute.xlu0 %3134
      %3136 = vrot.lane.b32.xlu0 %v2010, 112
      %v3137 = vpop.permute.xlu0 %3136
      %3138 = vrot.lane.b32.xlu0 %v2011, 112
      %v3139 = vpop.permute.xlu0 %3138
      %3140 = vrot.lane.b32.xlu0 %v2012, 112
      %v3141 = vpop.permute.xlu0 %3140
      %3142 = vrot.lane.b32.xlu0 %v2009, 48
      %v3143 = vpop.permute.xlu0 %3142
      %3144 = vrot.lane.b32.xlu0 %v2010, 48
      %v3145 = vpop.permute.xlu0 %3144
      %3146 = vrot.lane.b32.xlu0 %v2011, 48
      %v3147 = vpop.permute.xlu0 %3146
      %3148 = vrot.lane.b32.xlu0 %v2012, 48
      %v3149 = vpop.permute.xlu0 %3148
      %v3151 = vsel %vm1858, %v3135, 0
      %v3154 = vsel %vm1858, %v3137, 0
      %v3157 = vsel %vm1858, %v3139, 0
      %v3160 = vsel %vm1858, %v3141, 0
      %v3163 = vsel %vm1858, %v3143, 0
      %v3166 = vsel %vm1858, %v3145, 0
      %v3169 = vsel %vm1858, %v3147, 0
      %v3172 = vsel %vm1858, %v3149, 0
      %3174 = vmatpush.bf16.xpose.msra.mxu0 0
      %3175 = vmatpush.bf16.xpose.msra.mxu0 0
      %3176 = vmatpush.bf16.xpose.msra.mxu0 0
      %3177 = vmatpush.bf16.xpose.msra.mxu0 0
      %3178 = vmatpush.bf16.xpose.msra.mxu0 %v3172
      %3179 = vmatpush.bf16.xpose.msra.mxu0 %v3169
      %3180 = vmatpush.bf16.xpose.msra.mxu0 %v3166
      %3181 = vmatpush.bf16.xpose.msra.mxu0 %v3163
      %3182 = vmatmul.bf16.gmra.mxu0 %v3151
      %v3183 = vpop.f32.mrf.mxu0
      %v3184 = vadd.f32 %v2988, %v3183
      %v3185 = vpop.f32.mrf.mxu0
      %v3186 = vadd.f32 %v2989, %v3185
      %3187 = vmatmul.bf16.gmra.mxu0 %v3154
      %v3188 = vpop.f32.mrf.mxu0
      %v3189 = vadd.f32 %v2990, %v3188
      %v3190 = vpop.f32.mrf.mxu0
      %v3191 = vadd.f32 %v2991, %v3190
      %3192 = vmatmul.bf16.gmra.mxu0 %v3157
      %v3193 = vpop.f32.mrf.mxu0
      %v3194 = vadd.f32 %v2992, %v3193
      %v3195 = vpop.f32.mrf.mxu0
      %v3196 = vadd.f32 %v2993, %v3195
      %3197 = vmatmul.bf16.gmra.mxu0 %v3160
      %v3198 = vpop.f32.mrf.mxu0
      %v3199 = vadd.f32 %v2994, %v3198
      %v3200 = vpop.f32.mrf.mxu0
      %v3201 = vadd.f32 %v2995, %v3200
      %3202 = vdwg.mxu0
      %3203 = vrot.lane.b32.xlu0 %v2090, 112
      %v3204 = vpop.permute.xlu0 %3203
      %3205 = vrot.lane.b32.xlu0 %v2091, 112
      %v3206 = vpop.permute.xlu0 %3205
      %3207 = vrot.lane.b32.xlu0 %v2092, 112
      %v3208 = vpop.permute.xlu0 %3207
      %3209 = vrot.lane.b32.xlu0 %v2093, 112
      %v3210 = vpop.permute.xlu0 %3209
      %3211 = vrot.lane.b32.xlu0 %v2090, 48
      %v3212 = vpop.permute.xlu0 %3211
      %3213 = vrot.lane.b32.xlu0 %v2091, 48
      %v3214 = vpop.permute.xlu0 %3213
      %3215 = vrot.lane.b32.xlu0 %v2092, 48
      %v3216 = vpop.permute.xlu0 %3215
      %3217 = vrot.lane.b32.xlu0 %v2093, 48
      %v3218 = vpop.permute.xlu0 %3217
      %v3220 = vsel %vm1858, %v3204, 0
      %v3223 = vsel %vm1858, %v3206, 0
      %v3226 = vsel %vm1858, %v3208, 0
      %v3229 = vsel %vm1858, %v3210, 0
      %v3232 = vsel %vm1858, %v3212, 0
      %v3235 = vsel %vm1858, %v3214, 0
      %v3238 = vsel %vm1858, %v3216, 0
      %v3241 = vsel %vm1858, %v3218, 0
      %3243 = vmatpush.bf16.xpose.msra.mxu0 0
      %3244 = vmatpush.bf16.xpose.msra.mxu0 0
      %3245 = vmatpush.bf16.xpose.msra.mxu0 0
      %3246 = vmatpush.bf16.xpose.msra.mxu0 0
      %3247 = vmatpush.bf16.xpose.msra.mxu0 %v3241
      %3248 = vmatpush.bf16.xpose.msra.mxu0 %v3238
      %3249 = vmatpush.bf16.xpose.msra.mxu0 %v3235
      %3250 = vmatpush.bf16.xpose.msra.mxu0 %v3232
      %3251 = vmatmul.bf16.gmra.mxu0 %v3220
      %v3252 = vpop.f32.mrf.mxu0
      %v3253 = vadd.f32 %v2988, %v3252
      %v3254 = vpop.f32.mrf.mxu0
      %v3255 = vadd.f32 %v2989, %v3254
      %3256 = vmatmul.bf16.gmra.mxu0 %v3223
      %v3257 = vpop.f32.mrf.mxu0
      %v3258 = vadd.f32 %v2990, %v3257
      %v3259 = vpop.f32.mrf.mxu0
      %v3260 = vadd.f32 %v2991, %v3259
      %3261 = vmatmul.bf16.gmra.mxu0 %v3226
      %v3262 = vpop.f32.mrf.mxu0
      %v3263 = vadd.f32 %v2992, %v3262
      %v3264 = vpop.f32.mrf.mxu0
      %v3265 = vadd.f32 %v2993, %v3264
      %3266 = vmatmul.bf16.gmra.mxu0 %v3229
      %v3267 = vpop.f32.mrf.mxu0
      %v3268 = vadd.f32 %v2994, %v3267
      %v3269 = vpop.f32.mrf.mxu0
      %v3270 = vadd.f32 %v2995, %v3269
      %3271 = vdwg.mxu0
      %v3272 = vsel %vm555, %v3046, -inf
      %3273 = vmax.xlane.f32.xlu0 %v3272
      %v3274 = vpop.xlane.xlu0 %3273
      %v3275 = vsel %vm555, %v3048, -inf
      %3276 = vmax.xlane.f32.xlu0 %v3275
      %v3277 = vpop.xlane.xlu0 %3276
      %v3278 = vsel %vm555, %v3051, -inf
      %3279 = vmax.xlane.f32.xlu0 %v3278
      %v3280 = vpop.xlane.xlu0 %3279
      %v3281 = vsel %vm555, %v3053, -inf
      %3282 = vmax.xlane.f32.xlu0 %v3281
      %v3283 = vpop.xlane.xlu0 %3282
      %v3284 = vsel %vm555, %v3056, -inf
      %3285 = vmax.xlane.f32.xlu0 %v3284
      %v3286 = vpop.xlane.xlu0 %3285
      %v3287 = vsel %vm555, %v3058, -inf
      %3288 = vmax.xlane.f32.xlu0 %v3287
      %v3289 = vpop.xlane.xlu0 %3288
      %v3290 = vsel %vm555, %v3061, -inf
      %3291 = vmax.xlane.f32.xlu0 %v3290
      %v3292 = vpop.xlane.xlu0 %3291
      %v3293 = vsel %vm555, %v3063, -inf
      %3294 = vmax.xlane.f32.xlu0 %v3293
      %v3295 = vpop.xlane.xlu0 %3294
      %v3296 = vsel %vm555, %v3115, -inf
      %3297 = vmax.xlane.f32.xlu0 %v3296
      %v3298 = vpop.xlane.xlu0 %3297
      %v3299 = vsel %vm555, %v3117, -inf
      %3300 = vmax.xlane.f32.xlu0 %v3299
      %v3301 = vpop.xlane.xlu0 %3300
      %v3302 = vsel %vm555, %v3120, -inf
      %3303 = vmax.xlane.f32.xlu0 %v3302
      %v3304 = vpop.xlane.xlu0 %3303
      %v3305 = vsel %vm555, %v3122, -inf
      %3306 = vmax.xlane.f32.xlu0 %v3305
      %v3307 = vpop.xlane.xlu0 %3306
      %v3308 = vsel %vm555, %v3125, -inf
      %3309 = vmax.xlane.f32.xlu0 %v3308
      %v3310 = vpop.xlane.xlu0 %3309
      %v3311 = vsel %vm555, %v3127, -inf
      %3312 = vmax.xlane.f32.xlu0 %v3311
      %v3313 = vpop.xlane.xlu0 %3312
      %v3314 = vsel %vm555, %v3130, -inf
      %3315 = vmax.xlane.f32.xlu0 %v3314
      %v3316 = vpop.xlane.xlu0 %3315
      %v3317 = vsel %vm555, %v3132, -inf
      %3318 = vmax.xlane.f32.xlu0 %v3317
      %v3319 = vpop.xlane.xlu0 %3318
      %v3320 = vsel %vm555, %v3184, -inf
      %3321 = vmax.xlane.f32.xlu0 %v3320
      %v3322 = vpop.xlane.xlu0 %3321
      %v3323 = vsel %vm555, %v3186, -inf
      %3324 = vmax.xlane.f32.xlu0 %v3323
      %v3325 = vpop.xlane.xlu0 %3324
      %v3326 = vsel %vm555, %v3189, -inf
      %3327 = vmax.xlane.f32.xlu0 %v3326
      %v3328 = vpop.xlane.xlu0 %3327
      %v3329 = vsel %vm555, %v3191, -inf
      %3330 = vmax.xlane.f32.xlu0 %v3329
      %v3331 = vpop.xlane.xlu0 %3330
      %v3332 = vsel %vm555, %v3194, -inf
      %3333 = vmax.xlane.f32.xlu0 %v3332
      %v3334 = vpop.xlane.xlu0 %3333
      %v3335 = vsel %vm555, %v3196, -inf
      %3336 = vmax.xlane.f32.xlu0 %v3335
      %v3337 = vpop.xlane.xlu0 %3336
      %v3338 = vsel %vm555, %v3199, -inf
      %3339 = vmax.xlane.f32.xlu0 %v3338
      %v3340 = vpop.xlane.xlu0 %3339
      %v3341 = vsel %vm555, %v3201, -inf
      %3342 = vmax.xlane.f32.xlu0 %v3341
      %v3343 = vpop.xlane.xlu0 %3342
      %v3344 = vsel %vm555, %v3253, -inf
      %3345 = vmax.xlane.f32.xlu0 %v3344
      %v3346 = vpop.xlane.xlu0 %3345
      %v3347 = vsel %vm555, %v3255, -inf
      %3348 = vmax.xlane.f32.xlu0 %v3347
      %v3349 = vpop.xlane.xlu0 %3348
      %v3350 = vsel %vm555, %v3258, -inf
      %3351 = vmax.xlane.f32.xlu0 %v3350
      %v3352 = vpop.xlane.xlu0 %3351
      %v3353 = vsel %vm555, %v3260, -inf
      %3354 = vmax.xlane.f32.xlu0 %v3353
      %v3355 = vpop.xlane.xlu0 %3354
      %v3356 = vsel %vm555, %v3263, -inf
      %3357 = vmax.xlane.f32.xlu0 %v3356
      %v3358 = vpop.xlane.xlu0 %3357
      %v3359 = vsel %vm555, %v3265, -inf
      %3360 = vmax.xlane.f32.xlu0 %v3359
      %v3361 = vpop.xlane.xlu0 %3360
      %v3362 = vsel %vm555, %v3268, -inf
      %3363 = vmax.xlane.f32.xlu0 %v3362
      %v3364 = vpop.xlane.xlu0 %3363
      %v3365 = vsel %vm555, %v3270, -inf
      %3366 = vmax.xlane.f32.xlu0 %v3365
      %v3367 = vpop.xlane.xlu0 %3366
      %v3368 = vsub.f32 %v3046, %v3274
      %v3369 = vsub.f32 %v3048, %v3277
      %v3370 = vsub.f32 %v3051, %v3280
      %v3371 = vsub.f32 %v3053, %v3283
      %v3372 = vsub.f32 %v3056, %v3286
      %v3373 = vsub.f32 %v3058, %v3289
      %v3374 = vsub.f32 %v3061, %v3292
      %v3375 = vsub.f32 %v3063, %v3295
      %v3376 = vsub.f32 %v3115, %v3298
      %v3377 = vsub.f32 %v3117, %v3301
      %v3378 = vsub.f32 %v3120, %v3304
      %v3379 = vsub.f32 %v3122, %v3307
      %v3380 = vsub.f32 %v3125, %v3310
      %v3381 = vsub.f32 %v3127, %v3313
      %v3382 = vsub.f32 %v3130, %v3316
      %v3383 = vsub.f32 %v3132, %v3319
      %v3384 = vsub.f32 %v3184, %v3322
      %v3385 = vsub.f32 %v3186, %v3325
      %v3386 = vsub.f32 %v3189, %v3328
      %v3387 = vsub.f32 %v3191, %v3331
      %v3388 = vsub.f32 %v3194, %v3334
      %v3389 = vsub.f32 %v3196, %v3337
      %v3390 = vsub.f32 %v3199, %v3340
      %v3391 = vsub.f32 %v3201, %v3343
      %v3392 = vsub.f32 %v3253, %v3346
      %v3393 = vsub.f32 %v3255, %v3349
      %v3394 = vsub.f32 %v3258, %v3352
      %v3395 = vsub.f32 %v3260, %v3355
      %v3396 = vsub.f32 %v3263, %v3358
      %v3397 = vsub.f32 %v3265, %v3361
      %v3398 = vsub.f32 %v3268, %v3364
      %v3399 = vsub.f32 %v3270, %v3367
      %v3400 = vmul.f32 %v3368, 1.442695
      %v3401 = vpow.pop %v3400
      %v3402 = vmul.f32 %v3369, 1.442695
      %v3403 = vpow.pop %v3402
      %v3404 = vmul.f32 %v3370, 1.442695
      %v3405 = vpow.pop %v3404
      %v3406 = vmul.f32 %v3371, 1.442695
      %v3407 = vpow.pop %v3406
      %v3408 = vmul.f32 %v3372, 1.442695
      %v3409 = vpow.pop %v3408
      %v3410 = vmul.f32 %v3373, 1.442695
      %v3411 = vpow.pop %v3410
      %v3412 = vmul.f32 %v3374, 1.442695
      %v3413 = vpow.pop %v3412
      %v3414 = vmul.f32 %v3375, 1.442695
      %v3415 = vpow.pop %v3414
      %v3416 = vmul.f32 %v3376, 1.442695
      %v3417 = vpow.pop %v3416
      %v3418 = vmul.f32 %v3377, 1.442695
      %v3419 = vpow.pop %v3418
      %v3420 = vmul.f32 %v3378, 1.442695
      %v3421 = vpow.pop %v3420
      %v3422 = vmul.f32 %v3379, 1.442695
      %v3423 = vpow.pop %v3422
      %v3424 = vmul.f32 %v3380, 1.442695
      %v3425 = vpow.pop %v3424
      %v3426 = vmul.f32 %v3381, 1.442695
      %v3427 = vpow.pop %v3426
      %v3428 = vmul.f32 %v3382, 1.442695
      %v3429 = vpow.pop %v3428
      %v3430 = vmul.f32 %v3383, 1.442695
      %v3431 = vpow.pop %v3430
      %v3432 = vmul.f32 %v3384, 1.442695
      %v3433 = vpow.pop %v3432
      %v3434 = vmul.f32 %v3385, 1.442695
      %v3435 = vpow.pop %v3434
      %v3436 = vmul.f32 %v3386, 1.442695
      %v3437 = vpow.pop %v3436
      %v3438 = vmul.f32 %v3387, 1.442695
      %v3439 = vpow.pop %v3438
      %v3440 = vmul.f32 %v3388, 1.442695
      %v3441 = vpow.pop %v3440
      %v3442 = vmul.f32 %v3389, 1.442695
      %v3443 = vpow.pop %v3442
      %v3444 = vmul.f32 %v3390, 1.442695
      %v3445 = vpow.pop %v3444
      %v3446 = vmul.f32 %v3391, 1.442695
      %v3447 = vpow.pop %v3446
      %v3448 = vmul.f32 %v3392, 1.442695
      %v3449 = vpow.pop %v3448
      %v3450 = vmul.f32 %v3393, 1.442695
      %v3451 = vpow.pop %v3450
      %v3452 = vmul.f32 %v3394, 1.442695
      %v3453 = vpow.pop %v3452
      %v3454 = vmul.f32 %v3395, 1.442695
      %v3455 = vpow.pop %v3454
      %v3456 = vmul.f32 %v3396, 1.442695
      %v3457 = vpow.pop %v3456
      %v3458 = vmul.f32 %v3397, 1.442695
      %v3459 = vpow.pop %v3458
      %v3460 = vmul.f32 %v3398, 1.442695
      %v3461 = vpow.pop %v3460
      %v3462 = vmul.f32 %v3399, 1.442695
      %v3463 = vpow.pop %v3462
      %v3464 = vsel %vm555, %v3401, 0.0
      %3465 = vadd.xlane.f32.xlu0 %v3464
      %v3466 = vpop.xlane.xlu0 %3465
      %v3467 = vsel %vm555, %v3403, 0.0
      %3468 = vadd.xlane.f32.xlu0 %v3467
      %v3469 = vpop.xlane.xlu0 %3468
      %v3470 = vsel %vm555, %v3405, 0.0
      %3471 = vadd.xlane.f32.xlu0 %v3470
      %v3472 = vpop.xlane.xlu0 %3471
      %v3473 = vsel %vm555, %v3407, 0.0
      %3474 = vadd.xlane.f32.xlu0 %v3473
      %v3475 = vpop.xlane.xlu0 %3474
      %v3476 = vsel %vm555, %v3409, 0.0
      %3477 = vadd.xlane.f32.xlu0 %v3476
      %v3478 = vpop.xlane.xlu0 %3477
      %v3479 = vsel %vm555, %v3411, 0.0
      %3480 = vadd.xlane.f32.xlu0 %v3479
      %v3481 = vpop.xlane.xlu0 %3480
      %v3482 = vsel %vm555, %v3413, 0.0
      %3483 = vadd.xlane.f32.xlu0 %v3482
      %v3484 = vpop.xlane.xlu0 %3483
      %v3485 = vsel %vm555, %v3415, 0.0
      %3486 = vadd.xlane.f32.xlu0 %v3485
      %v3487 = vpop.xlane.xlu0 %3486
      %v3488 = vsel %vm555, %v3417, 0.0
      %3489 = vadd.xlane.f32.xlu0 %v3488
      %v3490 = vpop.xlane.xlu0 %3489
      %v3491 = vsel %vm555, %v3419, 0.0
      %3492 = vadd.xlane.f32.xlu0 %v3491
      %v3493 = vpop.xlane.xlu0 %3492
      %v3494 = vsel %vm555, %v3421, 0.0
      %3495 = vadd.xlane.f32.xlu0 %v3494
      %v3496 = vpop.xlane.xlu0 %3495
      %v3497 = vsel %vm555, %v3423, 0.0
      %3498 = vadd.xlane.f32.xlu0 %v3497
      %v3499 = vpop.xlane.xlu0 %3498
      %v3500 = vsel %vm555, %v3425, 0.0
      %3501 = vadd.xlane.f32.xlu0 %v3500
      %v3502 = vpop.xlane.xlu0 %3501
      %v3503 = vsel %vm555, %v3427, 0.0
      %3504 = vadd.xlane.f32.xlu0 %v3503
      %v3505 = vpop.xlane.xlu0 %3504
      %v3506 = vsel %vm555, %v3429, 0.0
      %3507 = vadd.xlane.f32.xlu0 %v3506
      %v3508 = vpop.xlane.xlu0 %3507
      %v3509 = vsel %vm555, %v3431, 0.0
      %3510 = vadd.xlane.f32.xlu0 %v3509
      %v3511 = vpop.xlane.xlu0 %3510
      %v3512 = vsel %vm555, %v3433, 0.0
      %3513 = vadd.xlane.f32.xlu0 %v3512
      %v3514 = vpop.xlane.xlu0 %3513
      %v3515 = vsel %vm555, %v3435, 0.0
      %3516 = vadd.xlane.f32.xlu0 %v3515
      %v3517 = vpop.xlane.xlu0 %3516
      %v3518 = vsel %vm555, %v3437, 0.0
      %3519 = vadd.xlane.f32.xlu0 %v3518
      %v3520 = vpop.xlane.xlu0 %3519
      %v3521 = vsel %vm555, %v3439, 0.0
      %3522 = vadd.xlane.f32.xlu0 %v3521
      %v3523 = vpop.xlane.xlu0 %3522
      %v3524 = vsel %vm555, %v3441, 0.0
      %3525 = vadd.xlane.f32.xlu0 %v3524
      %v3526 = vpop.xlane.xlu0 %3525
      %v3527 = vsel %vm555, %v3443, 0.0
      %3528 = vadd.xlane.f32.xlu0 %v3527
      %v3529 = vpop.xlane.xlu0 %3528
      %v3530 = vsel %vm555, %v3445, 0.0
      %3531 = vadd.xlane.f32.xlu0 %v3530
      %v3532 = vpop.xlane.xlu0 %3531
      %v3533 = vsel %vm555, %v3447, 0.0
      %3534 = vadd.xlane.f32.xlu0 %v3533
      %v3535 = vpop.xlane.xlu0 %3534
      %v3536 = vsel %vm555, %v3449, 0.0
      %3537 = vadd.xlane.f32.xlu0 %v3536
      %v3538 = vpop.xlane.xlu0 %3537
      %v3539 = vsel %vm555, %v3451, 0.0
      %3540 = vadd.xlane.f32.xlu0 %v3539
      %v3541 = vpop.xlane.xlu0 %3540
      %v3542 = vsel %vm555, %v3453, 0.0
      %3543 = vadd.xlane.f32.xlu0 %v3542
      %v3544 = vpop.xlane.xlu0 %3543
      %v3545 = vsel %vm555, %v3455, 0.0
      %3546 = vadd.xlane.f32.xlu0 %v3545
      %v3547 = vpop.xlane.xlu0 %3546
      %v3548 = vsel %vm555, %v3457, 0.0
      %3549 = vadd.xlane.f32.xlu0 %v3548
      %v3550 = vpop.xlane.xlu0 %3549
      %v3551 = vsel %vm555, %v3459, 0.0
      %3552 = vadd.xlane.f32.xlu0 %v3551
      %v3553 = vpop.xlane.xlu0 %3552
      %v3554 = vsel %vm555, %v3461, 0.0
      %3555 = vadd.xlane.f32.xlu0 %v3554
      %v3556 = vpop.xlane.xlu0 %3555
      %v3557 = vsel %vm555, %v3463, 0.0
      %3558 = vadd.xlane.f32.xlu0 %v3557
      %v3559 = vpop.xlane.xlu0 %3558
      %v3560 = vrcp.pop %v3466
      %v3561 = vmul.f32 %v3466, %v3560
      %v3562 = vsub.f32 1.0, %v3561
      %v3563 = vmul.f32 %v3560, %v3562
      %v3564 = vadd.f32 %v3560, %v3563
      %vm3565 = vweird.f32 %v3466
      %vm3566 = vweird.f32 %v3560
      %vm3567 = vmor %vm3565, %vm3566
      %v3568 = vsel %vm3567, %v3560, %v3564
      %v3569 = vand.u32 2147483647, %v3466
      %vm3570 = vcmp.eq.f32.partialorder %v3569, 8.507059e+37
      %v3571 = vand.u32 %v3466, 2147483648
      %v3572 = vor.u32 1.1754944e-38, %v3571
      %v3573 = vsel %vm3570, %v3572, %v3568
      %v3574 = vmul.f32 1.0, %v3573
      %v3575 = vrcp.pop %v3469
      %v3576 = vmul.f32 %v3469, %v3575
      %v3577 = vsub.f32 1.0, %v3576
      %v3578 = vmul.f32 %v3575, %v3577
      %v3579 = vadd.f32 %v3575, %v3578
      %vm3580 = vweird.f32 %v3469
      %vm3581 = vweird.f32 %v3575
      %vm3582 = vmor %vm3580, %vm3581
      %v3583 = vsel %vm3582, %v3575, %v3579
      %v3584 = vand.u32 2147483647, %v3469
      %vm3585 = vcmp.eq.f32.partialorder %v3584, 8.507059e+37
      %v3586 = vand.u32 %v3469, 2147483648
      %v3587 = vor.u32 1.1754944e-38, %v3586
      %v3588 = vsel %vm3585, %v3587, %v3583
      %v3589 = vmul.f32 1.0, %v3588
      %v3590 = vrcp.pop %v3472
      %v3591 = vmul.f32 %v3472, %v3590
      %v3592 = vsub.f32 1.0, %v3591
      %v3593 = vmul.f32 %v3590, %v3592
      %v3594 = vadd.f32 %v3590, %v3593
      %vm3595 = vweird.f32 %v3472
      %vm3596 = vweird.f32 %v3590
      %vm3597 = vmor %vm3595, %vm3596
      %v3598 = vsel %vm3597, %v3590, %v3594
      %v3599 = vand.u32 2147483647, %v3472
      %vm3600 = vcmp.eq.f32.partialorder %v3599, 8.507059e+37
      %v3601 = vand.u32 %v3472, 2147483648
      %v3602 = vor.u32 1.1754944e-38, %v3601
      %v3603 = vsel %vm3600, %v3602, %v3598
      %v3604 = vmul.f32 1.0, %v3603
      %v3605 = vrcp.pop %v3475
      %v3606 = vmul.f32 %v3475, %v3605
      %v3607 = vsub.f32 1.0, %v3606
      %v3608 = vmul.f32 %v3605, %v3607
      %v3609 = vadd.f32 %v3605, %v3608
      %vm3610 = vweird.f32 %v3475
      %vm3611 = vweird.f32 %v3605
      %vm3612 = vmor %vm3610, %vm3611
      %v3613 = vsel %vm3612, %v3605, %v3609
      %v3614 = vand.u32 2147483647, %v3475
      %vm3615 = vcmp.eq.f32.partialorder %v3614, 8.507059e+37
      %v3616 = vand.u32 %v3475, 2147483648
      %v3617 = vor.u32 1.1754944e-38, %v3616
      %v3618 = vsel %vm3615, %v3617, %v3613
      %v3619 = vmul.f32 1.0, %v3618
      %v3620 = vrcp.pop %v3478
      %v3621 = vmul.f32 %v3478, %v3620
      %v3622 = vsub.f32 1.0, %v3621
      %v3623 = vmul.f32 %v3620, %v3622
      %v3624 = vadd.f32 %v3620, %v3623
      %vm3625 = vweird.f32 %v3478
      %vm3626 = vweird.f32 %v3620
      %vm3627 = vmor %vm3625, %vm3626
      %v3628 = vsel %vm3627, %v3620, %v3624
      %v3629 = vand.u32 2147483647, %v3478
      %vm3630 = vcmp.eq.f32.partialorder %v3629, 8.507059e+37
      %v3631 = vand.u32 %v3478, 2147483648
      %v3632 = vor.u32 1.1754944e-38, %v3631
      %v3633 = vsel %vm3630, %v3632, %v3628
      %v3634 = vmul.f32 1.0, %v3633
      %v3635 = vrcp.pop %v3481
      %v3636 = vmul.f32 %v3481, %v3635
      %v3637 = vsub.f32 1.0, %v3636
      %v3638 = vmul.f32 %v3635, %v3637
      %v3639 = vadd.f32 %v3635, %v3638
      %vm3640 = vweird.f32 %v3481
      %vm3641 = vweird.f32 %v3635
      %vm3642 = vmor %vm3640, %vm3641
      %v3643 = vsel %vm3642, %v3635, %v3639
      %v3644 = vand.u32 2147483647, %v3481
      %vm3645 = vcmp.eq.f32.partialorder %v3644, 8.507059e+37
      %v3646 = vand.u32 %v3481, 2147483648
      %v3647 = vor.u32 1.1754944e-38, %v3646
      %v3648 = vsel %vm3645, %v3647, %v3643
      %v3649 = vmul.f32 1.0, %v3648
      %v3650 = vrcp.pop %v3484
      %v3651 = vmul.f32 %v3484, %v3650
      %v3652 = vsub.f32 1.0, %v3651
      %v3653 = vmul.f32 %v3650, %v3652
      %v3654 = vadd.f32 %v3650, %v3653
      %vm3655 = vweird.f32 %v3484
      %vm3656 = vweird.f32 %v3650
      %vm3657 = vmor %vm3655, %vm3656
      %v3658 = vsel %vm3657, %v3650, %v3654
      %v3659 = vand.u32 2147483647, %v3484
      %vm3660 = vcmp.eq.f32.partialorder %v3659, 8.507059e+37
      %v3661 = vand.u32 %v3484, 2147483648
      %v3662 = vor.u32 1.1754944e-38, %v3661
      %v3663 = vsel %vm3660, %v3662, %v3658
      %v3664 = vmul.f32 1.0, %v3663
      %v3665 = vrcp.pop %v3487
      %v3666 = vmul.f32 %v3487, %v3665
      %v3667 = vsub.f32 1.0, %v3666
      %v3668 = vmul.f32 %v3665, %v3667
      %v3669 = vadd.f32 %v3665, %v3668
      %vm3670 = vweird.f32 %v3487
      %vm3671 = vweird.f32 %v3665
      %vm3672 = vmor %vm3670, %vm3671
      %v3673 = vsel %vm3672, %v3665, %v3669
      %v3674 = vand.u32 2147483647, %v3487
      %vm3675 = vcmp.eq.f32.partialorder %v3674, 8.507059e+37
      %v3676 = vand.u32 %v3487, 2147483648
      %v3677 = vor.u32 1.1754944e-38, %v3676
      %v3678 = vsel %vm3675, %v3677, %v3673
      %v3679 = vmul.f32 1.0, %v3678
      %v3680 = vrcp.pop %v3490
      %v3681 = vmul.f32 %v3490, %v3680
      %v3682 = vsub.f32 1.0, %v3681
      %v3683 = vmul.f32 %v3680, %v3682
      %v3684 = vadd.f32 %v3680, %v3683
      %vm3685 = vweird.f32 %v3490
      %vm3686 = vweird.f32 %v3680
      %vm3687 = vmor %vm3685, %vm3686
      %v3688 = vsel %vm3687, %v3680, %v3684
      %v3689 = vand.u32 2147483647, %v3490
      %vm3690 = vcmp.eq.f32.partialorder %v3689, 8.507059e+37
      %v3691 = vand.u32 %v3490, 2147483648
      %v3692 = vor.u32 1.1754944e-38, %v3691
      %v3693 = vsel %vm3690, %v3692, %v3688
      %v3694 = vmul.f32 1.0, %v3693
      %v3695 = vrcp.pop %v3493
      %v3696 = vmul.f32 %v3493, %v3695
      %v3697 = vsub.f32 1.0, %v3696
      %v3698 = vmul.f32 %v3695, %v3697
      %v3699 = vadd.f32 %v3695, %v3698
      %vm3700 = vweird.f32 %v3493
      %vm3701 = vweird.f32 %v3695
      %vm3702 = vmor %vm3700, %vm3701
      %v3703 = vsel %vm3702, %v3695, %v3699
      %v3704 = vand.u32 2147483647, %v3493
      %vm3705 = vcmp.eq.f32.partialorder %v3704, 8.507059e+37
      %v3706 = vand.u32 %v3493, 2147483648
      %v3707 = vor.u32 1.1754944e-38, %v3706
      %v3708 = vsel %vm3705, %v3707, %v3703
      %v3709 = vmul.f32 1.0, %v3708
      %v3710 = vrcp.pop %v3496
      %v3711 = vmul.f32 %v3496, %v3710
      %v3712 = vsub.f32 1.0, %v3711
      %v3713 = vmul.f32 %v3710, %v3712
      %v3714 = vadd.f32 %v3710, %v3713
      %vm3715 = vweird.f32 %v3496
      %vm3716 = vweird.f32 %v3710
      %vm3717 = vmor %vm3715, %vm3716
      %v3718 = vsel %vm3717, %v3710, %v3714
      %v3719 = vand.u32 2147483647, %v3496
      %vm3720 = vcmp.eq.f32.partialorder %v3719, 8.507059e+37
      %v3721 = vand.u32 %v3496, 2147483648
      %v3722 = vor.u32 1.1754944e-38, %v3721
      %v3723 = vsel %vm3720, %v3722, %v3718
      %v3724 = vmul.f32 1.0, %v3723
      %v3725 = vrcp.pop %v3499
      %v3726 = vmul.f32 %v3499, %v3725
      %v3727 = vsub.f32 1.0, %v3726
      %v3728 = vmul.f32 %v3725, %v3727
      %v3729 = vadd.f32 %v3725, %v3728
      %vm3730 = vweird.f32 %v3499
      %vm3731 = vweird.f32 %v3725
      %vm3732 = vmor %vm3730, %vm3731
      %v3733 = vsel %vm3732, %v3725, %v3729
      %v3734 = vand.u32 2147483647, %v3499
      %vm3735 = vcmp.eq.f32.partialorder %v3734, 8.507059e+37
      %v3736 = vand.u32 %v3499, 2147483648
      %v3737 = vor.u32 1.1754944e-38, %v3736
      %v3738 = vsel %vm3735, %v3737, %v3733
      %v3739 = vmul.f32 1.0, %v3738
      %v3740 = vrcp.pop %v3502
      %v3741 = vmul.f32 %v3502, %v3740
      %v3742 = vsub.f32 1.0, %v3741
      %v3743 = vmul.f32 %v3740, %v3742
      %v3744 = vadd.f32 %v3740, %v3743
      %vm3745 = vweird.f32 %v3502
      %vm3746 = vweird.f32 %v3740
      %vm3747 = vmor %vm3745, %vm3746
      %v3748 = vsel %vm3747, %v3740, %v3744
      %v3749 = vand.u32 2147483647, %v3502
      %vm3750 = vcmp.eq.f32.partialorder %v3749, 8.507059e+37
      %v3751 = vand.u32 %v3502, 2147483648
      %v3752 = vor.u32 1.1754944e-38, %v3751
      %v3753 = vsel %vm3750, %v3752, %v3748
      %v3754 = vmul.f32 1.0, %v3753
      %v3755 = vrcp.pop %v3505
      %v3756 = vmul.f32 %v3505, %v3755
      %v3757 = vsub.f32 1.0, %v3756
      %v3758 = vmul.f32 %v3755, %v3757
      %v3759 = vadd.f32 %v3755, %v3758
      %vm3760 = vweird.f32 %v3505
      %vm3761 = vweird.f32 %v3755
      %vm3762 = vmor %vm3760, %vm3761
      %v3763 = vsel %vm3762, %v3755, %v3759
      %v3764 = vand.u32 2147483647, %v3505
      %vm3765 = vcmp.eq.f32.partialorder %v3764, 8.507059e+37
      %v3766 = vand.u32 %v3505, 2147483648
      %v3767 = vor.u32 1.1754944e-38, %v3766
      %v3768 = vsel %vm3765, %v3767, %v3763
      %v3769 = vmul.f32 1.0, %v3768
      %v3770 = vrcp.pop %v3508
      %v3771 = vmul.f32 %v3508, %v3770
      %v3772 = vsub.f32 1.0, %v3771
      %v3773 = vmul.f32 %v3770, %v3772
      %v3774 = vadd.f32 %v3770, %v3773
      %vm3775 = vweird.f32 %v3508
      %vm3776 = vweird.f32 %v3770
      %vm3777 = vmor %vm3775, %vm3776
      %v3778 = vsel %vm3777, %v3770, %v3774
      %v3779 = vand.u32 2147483647, %v3508
      %vm3780 = vcmp.eq.f32.partialorder %v3779, 8.507059e+37
      %v3781 = vand.u32 %v3508, 2147483648
      %v3782 = vor.u32 1.1754944e-38, %v3781
      %v3783 = vsel %vm3780, %v3782, %v3778
      %v3784 = vmul.f32 1.0, %v3783
      %v3785 = vrcp.pop %v3511
      %v3786 = vmul.f32 %v3511, %v3785
      %v3787 = vsub.f32 1.0, %v3786
      %v3788 = vmul.f32 %v3785, %v3787
      %v3789 = vadd.f32 %v3785, %v3788
      %vm3790 = vweird.f32 %v3511
      %vm3791 = vweird.f32 %v3785
      %vm3792 = vmor %vm3790, %vm3791
      %v3793 = vsel %vm3792, %v3785, %v3789
      %v3794 = vand.u32 2147483647, %v3511
      %vm3795 = vcmp.eq.f32.partialorder %v3794, 8.507059e+37
      %v3796 = vand.u32 %v3511, 2147483648
      %v3797 = vor.u32 1.1754944e-38, %v3796
      %v3798 = vsel %vm3795, %v3797, %v3793
      %v3799 = vmul.f32 1.0, %v3798
      %v3800 = vrcp.pop %v3514
      %v3801 = vmul.f32 %v3514, %v3800
      %v3802 = vsub.f32 1.0, %v3801
      %v3803 = vmul.f32 %v3800, %v3802
      %v3804 = vadd.f32 %v3800, %v3803
      %vm3805 = vweird.f32 %v3514
      %vm3806 = vweird.f32 %v3800
      %vm3807 = vmor %vm3805, %vm3806
      %v3808 = vsel %vm3807, %v3800, %v3804
      %v3809 = vand.u32 2147483647, %v3514
      %vm3810 = vcmp.eq.f32.partialorder %v3809, 8.507059e+37
      %v3811 = vand.u32 %v3514, 2147483648
      %v3812 = vor.u32 1.1754944e-38, %v3811
      %v3813 = vsel %vm3810, %v3812, %v3808
      %v3814 = vmul.f32 1.0, %v3813
      %v3815 = vrcp.pop %v3517
      %v3816 = vmul.f32 %v3517, %v3815
      %v3817 = vsub.f32 1.0, %v3816
      %v3818 = vmul.f32 %v3815, %v3817
      %v3819 = vadd.f32 %v3815, %v3818
      %vm3820 = vweird.f32 %v3517
      %vm3821 = vweird.f32 %v3815
      %vm3822 = vmor %vm3820, %vm3821
      %v3823 = vsel %vm3822, %v3815, %v3819
      %v3824 = vand.u32 2147483647, %v3517
      %vm3825 = vcmp.eq.f32.partialorder %v3824, 8.507059e+37
      %v3826 = vand.u32 %v3517, 2147483648
      %v3827 = vor.u32 1.1754944e-38, %v3826
      %v3828 = vsel %vm3825, %v3827, %v3823
      %v3829 = vmul.f32 1.0, %v3828
      %v3830 = vrcp.pop %v3520
      %v3831 = vmul.f32 %v3520, %v3830
      %v3832 = vsub.f32 1.0, %v3831
      %v3833 = vmul.f32 %v3830, %v3832
      %v3834 = vadd.f32 %v3830, %v3833
      %vm3835 = vweird.f32 %v3520
      %vm3836 = vweird.f32 %v3830
      %vm3837 = vmor %vm3835, %vm3836
      %v3838 = vsel %vm3837, %v3830, %v3834
      %v3839 = vand.u32 2147483647, %v3520
      %vm3840 = vcmp.eq.f32.partialorder %v3839, 8.507059e+37
      %v3841 = vand.u32 %v3520, 2147483648
      %v3842 = vor.u32 1.1754944e-38, %v3841
      %v3843 = vsel %vm3840, %v3842, %v3838
      %v3844 = vmul.f32 1.0, %v3843
      %v3845 = vrcp.pop %v3523
      %v3846 = vmul.f32 %v3523, %v3845
      %v3847 = vsub.f32 1.0, %v3846
      %v3848 = vmul.f32 %v3845, %v3847
      %v3849 = vadd.f32 %v3845, %v3848
      %vm3850 = vweird.f32 %v3523
      %vm3851 = vweird.f32 %v3845
      %vm3852 = vmor %vm3850, %vm3851
      %v3853 = vsel %vm3852, %v3845, %v3849
      %v3854 = vand.u32 2147483647, %v3523
      %vm3855 = vcmp.eq.f32.partialorder %v3854, 8.507059e+37
      %v3856 = vand.u32 %v3523, 2147483648
      %v3857 = vor.u32 1.1754944e-38, %v3856
      %v3858 = vsel %vm3855, %v3857, %v3853
      %v3859 = vmul.f32 1.0, %v3858
      %v3860 = vrcp.pop %v3526
      %v3861 = vmul.f32 %v3526, %v3860
      %v3862 = vsub.f32 1.0, %v3861
      %v3863 = vmul.f32 %v3860, %v3862
      %v3864 = vadd.f32 %v3860, %v3863
      %vm3865 = vweird.f32 %v3526
      %vm3866 = vweird.f32 %v3860
      %vm3867 = vmor %vm3865, %vm3866
      %v3868 = vsel %vm3867, %v3860, %v3864
      %v3869 = vand.u32 2147483647, %v3526
      %vm3870 = vcmp.eq.f32.partialorder %v3869, 8.507059e+37
      %v3871 = vand.u32 %v3526, 2147483648
      %v3872 = vor.u32 1.1754944e-38, %v3871
      %v3873 = vsel %vm3870, %v3872, %v3868
      %v3874 = vmul.f32 1.0, %v3873
      %v3875 = vrcp.pop %v3529
      %v3876 = vmul.f32 %v3529, %v3875
      %v3877 = vsub.f32 1.0, %v3876
      %v3878 = vmul.f32 %v3875, %v3877
      %v3879 = vadd.f32 %v3875, %v3878
      %vm3880 = vweird.f32 %v3529
      %vm3881 = vweird.f32 %v3875
      %vm3882 = vmor %vm3880, %vm3881
      %v3883 = vsel %vm3882, %v3875, %v3879
      %v3884 = vand.u32 2147483647, %v3529
      %vm3885 = vcmp.eq.f32.partialorder %v3884, 8.507059e+37
      %v3886 = vand.u32 %v3529, 2147483648
      %v3887 = vor.u32 1.1754944e-38, %v3886
      %v3888 = vsel %vm3885, %v3887, %v3883
      %v3889 = vmul.f32 1.0, %v3888
      %v3890 = vrcp.pop %v3532
      %v3891 = vmul.f32 %v3532, %v3890
      %v3892 = vsub.f32 1.0, %v3891
      %v3893 = vmul.f32 %v3890, %v3892
      %v3894 = vadd.f32 %v3890, %v3893
      %vm3895 = vweird.f32 %v3532
      %vm3896 = vweird.f32 %v3890
      %vm3897 = vmor %vm3895, %vm3896
      %v3898 = vsel %vm3897, %v3890, %v3894
      %v3899 = vand.u32 2147483647, %v3532
      %vm3900 = vcmp.eq.f32.partialorder %v3899, 8.507059e+37
      %v3901 = vand.u32 %v3532, 2147483648
      %v3902 = vor.u32 1.1754944e-38, %v3901
      %v3903 = vsel %vm3900, %v3902, %v3898
      %v3904 = vmul.f32 1.0, %v3903
      %v3905 = vrcp.pop %v3535
      %v3906 = vmul.f32 %v3535, %v3905
      %v3907 = vsub.f32 1.0, %v3906
      %v3908 = vmul.f32 %v3905, %v3907
      %v3909 = vadd.f32 %v3905, %v3908
      %vm3910 = vweird.f32 %v3535
      %vm3911 = vweird.f32 %v3905
      %vm3912 = vmor %vm3910, %vm3911
      %v3913 = vsel %vm3912, %v3905, %v3909
      %v3914 = vand.u32 2147483647, %v3535
      %vm3915 = vcmp.eq.f32.partialorder %v3914, 8.507059e+37
      %v3916 = vand.u32 %v3535, 2147483648
      %v3917 = vor.u32 1.1754944e-38, %v3916
      %v3918 = vsel %vm3915, %v3917, %v3913
      %v3919 = vmul.f32 1.0, %v3918
      %v3920 = vrcp.pop %v3538
      %v3921 = vmul.f32 %v3538, %v3920
      %v3922 = vsub.f32 1.0, %v3921
      %v3923 = vmul.f32 %v3920, %v3922
      %v3924 = vadd.f32 %v3920, %v3923
      %vm3925 = vweird.f32 %v3538
      %vm3926 = vweird.f32 %v3920
      %vm3927 = vmor %vm3925, %vm3926
      %v3928 = vsel %vm3927, %v3920, %v3924
      %v3929 = vand.u32 2147483647, %v3538
      %vm3930 = vcmp.eq.f32.partialorder %v3929, 8.507059e+37
      %v3931 = vand.u32 %v3538, 2147483648
      %v3932 = vor.u32 1.1754944e-38, %v3931
      %v3933 = vsel %vm3930, %v3932, %v3928
      %v3934 = vmul.f32 1.0, %v3933
      %v3935 = vrcp.pop %v3541
      %v3936 = vmul.f32 %v3541, %v3935
      %v3937 = vsub.f32 1.0, %v3936
      %v3938 = vmul.f32 %v3935, %v3937
      %v3939 = vadd.f32 %v3935, %v3938
      %vm3940 = vweird.f32 %v3541
      %vm3941 = vweird.f32 %v3935
      %vm3942 = vmor %vm3940, %vm3941
      %v3943 = vsel %vm3942, %v3935, %v3939
      %v3944 = vand.u32 2147483647, %v3541
      %vm3945 = vcmp.eq.f32.partialorder %v3944, 8.507059e+37
      %v3946 = vand.u32 %v3541, 2147483648
      %v3947 = vor.u32 1.1754944e-38, %v3946
      %v3948 = vsel %vm3945, %v3947, %v3943
      %v3949 = vmul.f32 1.0, %v3948
      %v3950 = vrcp.pop %v3544
      %v3951 = vmul.f32 %v3544, %v3950
      %v3952 = vsub.f32 1.0, %v3951
      %v3953 = vmul.f32 %v3950, %v3952
      %v3954 = vadd.f32 %v3950, %v3953
      %vm3955 = vweird.f32 %v3544
      %vm3956 = vweird.f32 %v3950
      %vm3957 = vmor %vm3955, %vm3956
      %v3958 = vsel %vm3957, %v3950, %v3954
      %v3959 = vand.u32 2147483647, %v3544
      %vm3960 = vcmp.eq.f32.partialorder %v3959, 8.507059e+37
      %v3961 = vand.u32 %v3544, 2147483648
      %v3962 = vor.u32 1.1754944e-38, %v3961
      %v3963 = vsel %vm3960, %v3962, %v3958
      %v3964 = vmul.f32 1.0, %v3963
      %v3965 = vrcp.pop %v3547
      %v3966 = vmul.f32 %v3547, %v3965
      %v3967 = vsub.f32 1.0, %v3966
      %v3968 = vmul.f32 %v3965, %v3967
      %v3969 = vadd.f32 %v3965, %v3968
      %vm3970 = vweird.f32 %v3547
      %vm3971 = vweird.f32 %v3965
      %vm3972 = vmor %vm3970, %vm3971
      %v3973 = vsel %vm3972, %v3965, %v3969
      %v3974 = vand.u32 2147483647, %v3547
      %vm3975 = vcmp.eq.f32.partialorder %v3974, 8.507059e+37
      %v3976 = vand.u32 %v3547, 2147483648
      %v3977 = vor.u32 1.1754944e-38, %v3976
      %v3978 = vsel %vm3975, %v3977, %v3973
      %v3979 = vmul.f32 1.0, %v3978
      %v3980 = vrcp.pop %v3550
      %v3981 = vmul.f32 %v3550, %v3980
      %v3982 = vsub.f32 1.0, %v3981
      %v3983 = vmul.f32 %v3980, %v3982
      %v3984 = vadd.f32 %v3980, %v3983
      %vm3985 = vweird.f32 %v3550
      %vm3986 = vweird.f32 %v3980
      %vm3987 = vmor %vm3985, %vm3986
      %v3988 = vsel %vm3987, %v3980, %v3984
      %v3989 = vand.u32 2147483647, %v3550
      %vm3990 = vcmp.eq.f32.partialorder %v3989, 8.507059e+37
      %v3991 = vand.u32 %v3550, 2147483648
      %v3992 = vor.u32 1.1754944e-38, %v3991
      %v3993 = vsel %vm3990, %v3992, %v3988
      %v3994 = vmul.f32 1.0, %v3993
      %v3995 = vrcp.pop %v3553
      %v3996 = vmul.f32 %v3553, %v3995
      %v3997 = vsub.f32 1.0, %v3996
      %v3998 = vmul.f32 %v3995, %v3997
      %v3999 = vadd.f32 %v3995, %v3998
      %vm4000 = vweird.f32 %v3553
      %vm4001 = vweird.f32 %v3995
      %vm4002 = vmor %vm4000, %vm4001
      %v4003 = vsel %vm4002, %v3995, %v3999
      %v4004 = vand.u32 2147483647, %v3553
      %vm4005 = vcmp.eq.f32.partialorder %v4004, 8.507059e+37
      %v4006 = vand.u32 %v3553, 2147483648
      %v4007 = vor.u32 1.1754944e-38, %v4006
      %v4008 = vsel %vm4005, %v4007, %v4003
      %v4009 = vmul.f32 1.0, %v4008
      %v4010 = vrcp.pop %v3556
      %v4011 = vmul.f32 %v3556, %v4010
      %v4012 = vsub.f32 1.0, %v4011
      %v4013 = vmul.f32 %v4010, %v4012
      %v4014 = vadd.f32 %v4010, %v4013
      %vm4015 = vweird.f32 %v3556
      %vm4016 = vweird.f32 %v4010
      %vm4017 = vmor %vm4015, %vm4016
      %v4018 = vsel %vm4017, %v4010, %v4014
      %v4019 = vand.u32 2147483647, %v3556
      %vm4020 = vcmp.eq.f32.partialorder %v4019, 8.507059e+37
      %v4021 = vand.u32 %v3556, 2147483648
      %v4022 = vor.u32 1.1754944e-38, %v4021
      %v4023 = vsel %vm4020, %v4022, %v4018
      %v4024 = vmul.f32 1.0, %v4023
      %v4025 = vrcp.pop %v3559
      %v4026 = vmul.f32 %v3559, %v4025
      %v4027 = vsub.f32 1.0, %v4026
      %v4028 = vmul.f32 %v4025, %v4027
      %v4029 = vadd.f32 %v4025, %v4028
      %vm4030 = vweird.f32 %v3559
      %vm4031 = vweird.f32 %v4025
      %vm4032 = vmor %vm4030, %vm4031
      %v4033 = vsel %vm4032, %v4025, %v4029
      %v4034 = vand.u32 2147483647, %v3559
      %vm4035 = vcmp.eq.f32.partialorder %v4034, 8.507059e+37
      %v4036 = vand.u32 %v3559, 2147483648
      %v4037 = vor.u32 1.1754944e-38, %v4036
      %v4038 = vsel %vm4035, %v4037, %v4033
      %v4039 = vmul.f32 1.0, %v4038
      %v4040 = vmul.f32 %v3401, %v3574
      %v4041 = vmul.f32 %v3403, %v3589
      %v4042 = vmul.f32 %v3405, %v3604
      %v4043 = vmul.f32 %v3407, %v3619
      %v4044 = vmul.f32 %v3409, %v3634
      %v4045 = vmul.f32 %v3411, %v3649
      %v4046 = vmul.f32 %v3413, %v3664
      %v4047 = vmul.f32 %v3415, %v3679
      %v4048 = vmul.f32 %v3417, %v3694
      %v4049 = vmul.f32 %v3419, %v3709
      %v4050 = vmul.f32 %v3421, %v3724
      %v4051 = vmul.f32 %v3423, %v3739
      %v4052 = vmul.f32 %v3425, %v3754
      %v4053 = vmul.f32 %v3427, %v3769
      %v4054 = vmul.f32 %v3429, %v3784
      %v4055 = vmul.f32 %v3431, %v3799
      %v4056 = vmul.f32 %v3433, %v3814
      %v4057 = vmul.f32 %v3435, %v3829
      %v4058 = vmul.f32 %v3437, %v3844
      %v4059 = vmul.f32 %v3439, %v3859
      %v4060 = vmul.f32 %v3441, %v3874
      %v4061 = vmul.f32 %v3443, %v3889
      %v4062 = vmul.f32 %v3445, %v3904
      %v4063 = vmul.f32 %v3447, %v3919
      %v4064 = vmul.f32 %v3449, %v3934
      %v4065 = vmul.f32 %v3451, %v3949
      %v4066 = vmul.f32 %v3453, %v3964
      %v4067 = vmul.f32 %v3455, %v3979
      %v4068 = vmul.f32 %v3457, %v3994
      %v4069 = vmul.f32 %v3459, %v4009
      %v4070 = vmul.f32 %v3461, %v4024
      %v4071 = vmul.f32 %v3463, %v4039
      %v4072 = vpack.c.bf16 %v4040, %v4040
      %v4073 = vpack.c.bf16 %v4041, %v4041
      %v4074 = vpack.c.bf16 %v4042, %v4042
      %v4075 = vpack.c.bf16 %v4043, %v4043
      %v4076 = vpack.c.bf16 %v4044, %v4044
      %v4077 = vpack.c.bf16 %v4045, %v4045
      %v4078 = vpack.c.bf16 %v4046, %v4046
      %v4079 = vpack.c.bf16 %v4047, %v4047
      %v4080 = vpack.c.bf16 %v4048, %v4048
      %v4081 = vpack.c.bf16 %v4049, %v4049
      %v4082 = vpack.c.bf16 %v4050, %v4050
      %v4083 = vpack.c.bf16 %v4051, %v4051
      %v4084 = vpack.c.bf16 %v4052, %v4052
      %v4085 = vpack.c.bf16 %v4053, %v4053
      %v4086 = vpack.c.bf16 %v4054, %v4054
      %v4087 = vpack.c.bf16 %v4055, %v4055
      %v4088 = vpack.c.bf16 %v4056, %v4056
      %v4089 = vpack.c.bf16 %v4057, %v4057
      %v4090 = vpack.c.bf16 %v4058, %v4058
      %v4091 = vpack.c.bf16 %v4059, %v4059
      %v4092 = vpack.c.bf16 %v4060, %v4060
      %v4093 = vpack.c.bf16 %v4061, %v4061
      %v4094 = vpack.c.bf16 %v4062, %v4062
      %v4095 = vpack.c.bf16 %v4063, %v4063
      %v4096 = vpack.c.bf16 %v4064, %v4064
      %v4097 = vpack.c.bf16 %v4065, %v4065
      %v4098 = vpack.c.bf16 %v4066, %v4066
      %v4099 = vpack.c.bf16 %v4067, %v4067
      %v4100 = vpack.c.bf16 %v4068, %v4068
      %v4101 = vpack.c.bf16 %v4069, %v4069
      %v4102 = vpack.c.bf16 %v4070, %v4070
      %v4103 = vpack.c.bf16 %v4071, %v4071
      %4104 = vrot.lane.b32.xlu0 %v1758, 64
      %v4105 = vpop.permute.xlu0 %4104
      %4106 = vrot.lane.b32.xlu0 %v1760, 64
      %v4107 = vpop.permute.xlu0 %4106
      %4108 = vrot.lane.b32.xlu0 %v1762, 64
      %v4109 = vpop.permute.xlu0 %4108
      %4110 = vrot.lane.b32.xlu0 %v1764, 64
      %v4111 = vpop.permute.xlu0 %4110
      %4112 = vrot.lane.b32.xlu0 %v1766, 64
      %v4113 = vpop.permute.xlu0 %4112
      %4114 = vrot.lane.b32.xlu0 %v1768, 64
      %v4115 = vpop.permute.xlu0 %4114
      %4116 = vrot.lane.b32.xlu0 %v1770, 64
      %v4117 = vpop.permute.xlu0 %4116
      %4118 = vrot.lane.b32.xlu0 %v1772, 64
      %v4119 = vpop.permute.xlu0 %4118
      %v4120 = vrot.slane %v4105, 4
      %v4121 = vrot.slane %v4107, 4
      %v4122 = vrot.slane %v4109, 4
      %v4123 = vrot.slane %v4111, 4
      %v4124 = vrot.slane %v4113, 4
      %v4125 = vrot.slane %v4115, 4
      %v4126 = vrot.slane %v4117, 4
      %v4127 = vrot.slane %v4119, 4
      %v4136 = vunpack.c.l.b16 %v4072
      %v4137 = vunpack.c.l.b16 %v4073
      %v4138 = vunpack.c.l.b16 %v4074
      %v4139 = vunpack.c.l.b16 %v4075
      %v4140 = vunpack.c.l.b16 %v4076
      %v4141 = vunpack.c.l.b16 %v4077
      %v4142 = vunpack.c.l.b16 %v4078
      %v4143 = vunpack.c.l.b16 %v4079
      %v4144 = vpack.c.b16 %v4137, %v4136
      %v4145 = vpack.c.b16 %v4139, %v4138
      %v4146 = vpack.c.b16 %v4141, %v4140
      %v4147 = vpack.c.b16 %v4143, %v4142
      %v4148 = vunpack.c.l.b16 %v4120
      %v4149 = vunpack.c.l.b16 %v4121
      %v4150 = vunpack.c.l.b16 %v4122
      %v4151 = vunpack.c.l.b16 %v4123
      %v4152 = vunpack.c.l.b16 %v4124
      %v4153 = vunpack.c.l.b16 %v4125
      %v4154 = vunpack.c.l.b16 %v4126
      %v4155 = vunpack.c.l.b16 %v4127
      %v4156 = vpack.c.b16 %v4149, %v4148
      %v4157 = vpack.c.b16 %v4151, %v4150
      %v4158 = vpack.c.b16 %v4153, %v4152
      %v4159 = vpack.c.b16 %v4155, %v4154
      %v4165 = vsel %vm555, %v4144, 0
      %v4168 = vsel %vm555, %v4145, 0
      %v4171 = vsel %vm555, %v4146, 0
      %v4174 = vsel %vm555, %v4147, 0
      %4176 = vmatpush.bf16.msra.mxu0 0
      %4177 = vmatpush.bf16.msra.mxu0 0
      %4178 = vmatpush.bf16.msra.mxu0 0
      %4179 = vmatpush.bf16.msra.mxu0 0
      %4180 = vmatpush.bf16.msra.mxu0 %v4159
      %4181 = vmatpush.bf16.msra.mxu0 %v4158
      %4182 = vmatpush.bf16.msra.mxu0 %v4157
      %4183 = vmatpush.bf16.msra.mxu0 %v4156
      %4184 = vmatmul.bf16.gmra.mxu0 %v4165
      %v4185 = vpop.f32.mrf.mxu0
      %v4186 = vadd.f32 0.0, %v4185
      %v4187 = vpop.f32.mrf.mxu0
      %v4188 = vadd.f32 0.0, %v4187
      %4189 = vmatmul.bf16.gmra.mxu0 %v4168
      %v4190 = vpop.f32.mrf.mxu0
      %v4191 = vadd.f32 0.0, %v4190
      %v4192 = vpop.f32.mrf.mxu0
      %v4193 = vadd.f32 0.0, %v4192
      %4194 = vmatmul.bf16.gmra.mxu0 %v4171
      %v4195 = vpop.f32.mrf.mxu0
      %v4196 = vadd.f32 0.0, %v4195
      %v4197 = vpop.f32.mrf.mxu0
      %v4198 = vadd.f32 0.0, %v4197
      %4199 = vmatmul.bf16.gmra.mxu0 %v4174
      %v4200 = vpop.f32.mrf.mxu0
      %v4201 = vadd.f32 0.0, %v4200
      %v4202 = vpop.f32.mrf.mxu0
      %v4203 = vadd.f32 0.0, %v4202
      %4204 = vdwg.mxu0
      %4205 = vrot.lane.b32.xlu0 %v1774, 64
      %v4206 = vpop.permute.xlu0 %4205
      %4207 = vrot.lane.b32.xlu0 %v1776, 64
      %v4208 = vpop.permute.xlu0 %4207
      %4209 = vrot.lane.b32.xlu0 %v1778, 64
      %v4210 = vpop.permute.xlu0 %4209
      %4211 = vrot.lane.b32.xlu0 %v1780, 64
      %v4212 = vpop.permute.xlu0 %4211
      %4213 = vrot.lane.b32.xlu0 %v1782, 64
      %v4214 = vpop.permute.xlu0 %4213
      %4215 = vrot.lane.b32.xlu0 %v1784, 64
      %v4216 = vpop.permute.xlu0 %4215
      %4217 = vrot.lane.b32.xlu0 %v1786, 64
      %v4218 = vpop.permute.xlu0 %4217
      %4219 = vrot.lane.b32.xlu0 %v1788, 64
      %v4220 = vpop.permute.xlu0 %4219
      %v4221 = vrot.slane %v4206, 4
      %v4222 = vrot.slane %v4208, 4
      %v4223 = vrot.slane %v4210, 4
      %v4224 = vrot.slane %v4212, 4
      %v4225 = vrot.slane %v4214, 4
      %v4226 = vrot.slane %v4216, 4
      %v4227 = vrot.slane %v4218, 4
      %v4228 = vrot.slane %v4220, 4
      %v4237 = vunpack.c.l.b16 %v4080
      %v4238 = vunpack.c.l.b16 %v4081
      %v4239 = vunpack.c.l.b16 %v4082
      %v4240 = vunpack.c.l.b16 %v4083
      %v4241 = vunpack.c.l.b16 %v4084
      %v4242 = vunpack.c.l.b16 %v4085
      %v4243 = vunpack.c.l.b16 %v4086
      %v4244 = vunpack.c.l.b16 %v4087
      %v4245 = vpack.c.b16 %v4238, %v4237
      %v4246 = vpack.c.b16 %v4240, %v4239
      %v4247 = vpack.c.b16 %v4242, %v4241
      %v4248 = vpack.c.b16 %v4244, %v4243
      %v4249 = vunpack.c.l.b16 %v4221
      %v4250 = vunpack.c.l.b16 %v4222
      %v4251 = vunpack.c.l.b16 %v4223
      %v4252 = vunpack.c.l.b16 %v4224
      %v4253 = vunpack.c.l.b16 %v4225
      %v4254 = vunpack.c.l.b16 %v4226
      %v4255 = vunpack.c.l.b16 %v4227
      %v4256 = vunpack.c.l.b16 %v4228
      %v4257 = vpack.c.b16 %v4250, %v4249
      %v4258 = vpack.c.b16 %v4252, %v4251
      %v4259 = vpack.c.b16 %v4254, %v4253
      %v4260 = vpack.c.b16 %v4256, %v4255
      %v4266 = vsel %vm555, %v4245, 0
      %v4269 = vsel %vm555, %v4246, 0
      %v4272 = vsel %vm555, %v4247, 0
      %v4275 = vsel %vm555, %v4248, 0
      %4277 = vmatpush.bf16.msra.mxu0 0
      %4278 = vmatpush.bf16.msra.mxu0 0
      %4279 = vmatpush.bf16.msra.mxu0 0
      %4280 = vmatpush.bf16.msra.mxu0 0
      %4281 = vmatpush.bf16.msra.mxu0 %v4260
      %4282 = vmatpush.bf16.msra.mxu0 %v4259
      %4283 = vmatpush.bf16.msra.mxu0 %v4258
      %4284 = vmatpush.bf16.msra.mxu0 %v4257
      %4285 = vmatmul.bf16.gmra.mxu0 %v4266
      %v4286 = vpop.f32.mrf.mxu0
      %v4287 = vadd.f32 0.0, %v4286
      %v4288 = vpop.f32.mrf.mxu0
      %v4289 = vadd.f32 0.0, %v4288
      %4290 = vmatmul.bf16.gmra.mxu0 %v4269
      %v4291 = vpop.f32.mrf.mxu0
      %v4292 = vadd.f32 0.0, %v4291
      %v4293 = vpop.f32.mrf.mxu0
      %v4294 = vadd.f32 0.0, %v4293
      %4295 = vmatmul.bf16.gmra.mxu0 %v4272
      %v4296 = vpop.f32.mrf.mxu0
      %v4297 = vadd.f32 0.0, %v4296
      %v4298 = vpop.f32.mrf.mxu0
      %v4299 = vadd.f32 0.0, %v4298
      %4300 = vmatmul.bf16.gmra.mxu0 %v4275
      %v4301 = vpop.f32.mrf.mxu0
      %v4302 = vadd.f32 0.0, %v4301
      %v4303 = vpop.f32.mrf.mxu0
      %v4304 = vadd.f32 0.0, %v4303
      %4305 = vdwg.mxu0
      %4306 = vrot.lane.b32.xlu0 %v1790, 64
      %v4307 = vpop.permute.xlu0 %4306
      %4308 = vrot.lane.b32.xlu0 %v1792, 64
      %v4309 = vpop.permute.xlu0 %4308
      %4310 = vrot.lane.b32.xlu0 %v1794, 64
      %v4311 = vpop.permute.xlu0 %4310
      %4312 = vrot.lane.b32.xlu0 %v1796, 64
      %v4313 = vpop.permute.xlu0 %4312
      %4314 = vrot.lane.b32.xlu0 %v1798, 64
      %v4315 = vpop.permute.xlu0 %4314
      %4316 = vrot.lane.b32.xlu0 %v1800, 64
      %v4317 = vpop.permute.xlu0 %4316
      %4318 = vrot.lane.b32.xlu0 %v1802, 64
      %v4319 = vpop.permute.xlu0 %4318
      %4320 = vrot.lane.b32.xlu0 %v1804, 64
      %v4321 = vpop.permute.xlu0 %4320
      %v4322 = vrot.slane %v4307, 4
      %v4323 = vrot.slane %v4309, 4
      %v4324 = vrot.slane %v4311, 4
      %v4325 = vrot.slane %v4313, 4
      %v4326 = vrot.slane %v4315, 4
      %v4327 = vrot.slane %v4317, 4
      %v4328 = vrot.slane %v4319, 4
      %v4329 = vrot.slane %v4321, 4
      %v4338 = vunpack.c.l.b16 %v4088
      %v4339 = vunpack.c.l.b16 %v4089
      %v4340 = vunpack.c.l.b16 %v4090
      %v4341 = vunpack.c.l.b16 %v4091
      %v4342 = vunpack.c.l.b16 %v4092
      %v4343 = vunpack.c.l.b16 %v4093
      %v4344 = vunpack.c.l.b16 %v4094
      %v4345 = vunpack.c.l.b16 %v4095
      %v4346 = vpack.c.b16 %v4339, %v4338
      %v4347 = vpack.c.b16 %v4341, %v4340
      %v4348 = vpack.c.b16 %v4343, %v4342
      %v4349 = vpack.c.b16 %v4345, %v4344
      %v4350 = vunpack.c.l.b16 %v4322
      %v4351 = vunpack.c.l.b16 %v4323
      %v4352 = vunpack.c.l.b16 %v4324
      %v4353 = vunpack.c.l.b16 %v4325
      %v4354 = vunpack.c.l.b16 %v4326
      %v4355 = vunpack.c.l.b16 %v4327
      %v4356 = vunpack.c.l.b16 %v4328
      %v4357 = vunpack.c.l.b16 %v4329
      %v4358 = vpack.c.b16 %v4351, %v4350
      %v4359 = vpack.c.b16 %v4353, %v4352
      %v4360 = vpack.c.b16 %v4355, %v4354
      %v4361 = vpack.c.b16 %v4357, %v4356
      %v4367 = vsel %vm555, %v4346, 0
      %v4370 = vsel %vm555, %v4347, 0
      %v4373 = vsel %vm555, %v4348, 0
      %v4376 = vsel %vm555, %v4349, 0
      %4378 = vmatpush.bf16.msra.mxu0 0
      %4379 = vmatpush.bf16.msra.mxu0 0
      %4380 = vmatpush.bf16.msra.mxu0 0
      %4381 = vmatpush.bf16.msra.mxu0 0
      %4382 = vmatpush.bf16.msra.mxu0 %v4361
      %4383 = vmatpush.bf16.msra.mxu0 %v4360
      %4384 = vmatpush.bf16.msra.mxu0 %v4359
      %4385 = vmatpush.bf16.msra.mxu0 %v4358
      %4386 = vmatmul.bf16.gmra.mxu0 %v4367
      %v4387 = vpop.f32.mrf.mxu0
      %v4388 = vadd.f32 0.0, %v4387
      %v4389 = vpop.f32.mrf.mxu0
      %v4390 = vadd.f32 0.0, %v4389
      %4391 = vmatmul.bf16.gmra.mxu0 %v4370
      %v4392 = vpop.f32.mrf.mxu0
      %v4393 = vadd.f32 0.0, %v4392
      %v4394 = vpop.f32.mrf.mxu0
      %v4395 = vadd.f32 0.0, %v4394
      %4396 = vmatmul.bf16.gmra.mxu0 %v4373
      %v4397 = vpop.f32.mrf.mxu0
      %v4398 = vadd.f32 0.0, %v4397
      %v4399 = vpop.f32.mrf.mxu0
      %v4400 = vadd.f32 0.0, %v4399
      %4401 = vmatmul.bf16.gmra.mxu0 %v4376
      %v4402 = vpop.f32.mrf.mxu0
      %v4403 = vadd.f32 0.0, %v4402
      %v4404 = vpop.f32.mrf.mxu0
      %v4405 = vadd.f32 0.0, %v4404
      %4406 = vdwg.mxu0
      %4407 = vrot.lane.b32.xlu0 %v1806, 64
      %v4408 = vpop.permute.xlu0 %4407
      %4409 = vrot.lane.b32.xlu0 %v1808, 64
      %v4410 = vpop.permute.xlu0 %4409
      %4411 = vrot.lane.b32.xlu0 %v1810, 64
      %v4412 = vpop.permute.xlu0 %4411
      %4413 = vrot.lane.b32.xlu0 %v1812, 64
      %v4414 = vpop.permute.xlu0 %4413
      %4415 = vrot.lane.b32.xlu0 %v1814, 64
      %v4416 = vpop.permute.xlu0 %4415
      %4417 = vrot.lane.b32.xlu0 %v1816, 64
      %v4418 = vpop.permute.xlu0 %4417
      %4419 = vrot.lane.b32.xlu0 %v1818, 64
      %v4420 = vpop.permute.xlu0 %4419
      %4421 = vrot.lane.b32.xlu0 %v1820, 64
      %v4422 = vpop.permute.xlu0 %4421
      %v4423 = vrot.slane %v4408, 4
      %v4424 = vrot.slane %v4410, 4
      %v4425 = vrot.slane %v4412, 4
      %v4426 = vrot.slane %v4414, 4
      %v4427 = vrot.slane %v4416, 4
      %v4428 = vrot.slane %v4418, 4
      %v4429 = vrot.slane %v4420, 4
      %v4430 = vrot.slane %v4422, 4
      %v4439 = vunpack.c.l.b16 %v4096
      %v4440 = vunpack.c.l.b16 %v4097
      %v4441 = vunpack.c.l.b16 %v4098
      %v4442 = vunpack.c.l.b16 %v4099
      %v4443 = vunpack.c.l.b16 %v4100
      %v4444 = vunpack.c.l.b16 %v4101
      %v4445 = vunpack.c.l.b16 %v4102
      %v4446 = vunpack.c.l.b16 %v4103
      %v4447 = vpack.c.b16 %v4440, %v4439
      %v4448 = vpack.c.b16 %v4442, %v4441
      %v4449 = vpack.c.b16 %v4444, %v4443
      %v4450 = vpack.c.b16 %v4446, %v4445
      %v4451 = vunpack.c.l.b16 %v4423
      %v4452 = vunpack.c.l.b16 %v4424
      %v4453 = vunpack.c.l.b16 %v4425
      %v4454 = vunpack.c.l.b16 %v4426
      %v4455 = vunpack.c.l.b16 %v4427
      %v4456 = vunpack.c.l.b16 %v4428
      %v4457 = vunpack.c.l.b16 %v4429
      %v4458 = vunpack.c.l.b16 %v4430
      %v4459 = vpack.c.b16 %v4452, %v4451
      %v4460 = vpack.c.b16 %v4454, %v4453
      %v4461 = vpack.c.b16 %v4456, %v4455
      %v4462 = vpack.c.b16 %v4458, %v4457
      %v4468 = vsel %vm555, %v4447, 0
      %v4471 = vsel %vm555, %v4448, 0
      %v4474 = vsel %vm555, %v4449, 0
      %v4477 = vsel %vm555, %v4450, 0
      %4479 = vmatpush.bf16.msra.mxu0 0
      %4480 = vmatpush.bf16.msra.mxu0 0
      %4481 = vmatpush.bf16.msra.mxu0 0
      %4482 = vmatpush.bf16.msra.mxu0 0
      %4483 = vmatpush.bf16.msra.mxu0 %v4462
      %4484 = vmatpush.bf16.msra.mxu0 %v4461
      %4485 = vmatpush.bf16.msra.mxu0 %v4460
      %4486 = vmatpush.bf16.msra.mxu0 %v4459
      %4487 = vmatmul.bf16.gmra.mxu0 %v4468
      %v4488 = vpop.f32.mrf.mxu0
      %v4489 = vadd.f32 0.0, %v4488
      %v4490 = vpop.f32.mrf.mxu0
      %v4491 = vadd.f32 0.0, %v4490
      %4492 = vmatmul.bf16.gmra.mxu0 %v4471
      %v4493 = vpop.f32.mrf.mxu0
      %v4494 = vadd.f32 0.0, %v4493
      %v4495 = vpop.f32.mrf.mxu0
      %v4496 = vadd.f32 0.0, %v4495
      %4497 = vmatmul.bf16.gmra.mxu0 %v4474
      %v4498 = vpop.f32.mrf.mxu0
      %v4499 = vadd.f32 0.0, %v4498
      %v4500 = vpop.f32.mrf.mxu0
      %v4501 = vadd.f32 0.0, %v4500
      %4502 = vmatmul.bf16.gmra.mxu0 %v4477
      %v4503 = vpop.f32.mrf.mxu0
      %v4504 = vadd.f32 0.0, %v4503
      %v4505 = vpop.f32.mrf.mxu0
      %v4506 = vadd.f32 0.0, %v4505
      %4507 = vdwg.mxu0
      %v4508 = vrot.slane %v1758, 4
      %v4509 = vrot.slane %v1760, 4
      %v4510 = vrot.slane %v1762, 4
      %v4511 = vrot.slane %v1764, 4
      %v4512 = vrot.slane %v1766, 4
      %v4513 = vrot.slane %v1768, 4
      %v4514 = vrot.slane %v1770, 4
      %v4515 = vrot.slane %v1772, 4
      %v4524 = vunpack.c.l.b16 %v2955
      %v4525 = vunpack.c.l.b16 %v2956
      %v4526 = vunpack.c.l.b16 %v2957
      %v4527 = vunpack.c.l.b16 %v2958
      %v4528 = vunpack.c.l.b16 %v2959
      %v4529 = vunpack.c.l.b16 %v2960
      %v4530 = vunpack.c.l.b16 %v2961
      %v4531 = vunpack.c.l.b16 %v2962
      %v4532 = vpack.c.b16 %v4525, %v4524
      %v4533 = vpack.c.b16 %v4527, %v4526
      %v4534 = vpack.c.b16 %v4529, %v4528
      %v4535 = vpack.c.b16 %v4531, %v4530
      %v4536 = vunpack.c.l.b16 %v4508
      %v4537 = vunpack.c.l.b16 %v4509
      %v4538 = vunpack.c.l.b16 %v4510
      %v4539 = vunpack.c.l.b16 %v4511
      %v4540 = vunpack.c.l.b16 %v4512
      %v4541 = vunpack.c.l.b16 %v4513
      %v4542 = vunpack.c.l.b16 %v4514
      %v4543 = vunpack.c.l.b16 %v4515
      %v4544 = vpack.c.b16 %v4537, %v4536
      %v4545 = vpack.c.b16 %v4539, %v4538
      %v4546 = vpack.c.b16 %v4541, %v4540
      %v4547 = vpack.c.b16 %v4543, %v4542
      %v4553 = vsel %vm555, %v4532, 0
      %v4556 = vsel %vm555, %v4533, 0
      %v4559 = vsel %vm555, %v4534, 0
      %v4562 = vsel %vm555, %v4535, 0
      %4564 = vmatpush.bf16.msra.mxu0 0
      %4565 = vmatpush.bf16.msra.mxu0 0
      %4566 = vmatpush.bf16.msra.mxu0 0
      %4567 = vmatpush.bf16.msra.mxu0 0
      %4568 = vmatpush.bf16.msra.mxu0 %v4547
      %4569 = vmatpush.bf16.msra.mxu0 %v4546
      %4570 = vmatpush.bf16.msra.mxu0 %v4545
      %4571 = vmatpush.bf16.msra.mxu0 %v4544
      %4572 = vmatmul.bf16.gmra.mxu0 %v4553
      %v4573 = vpop.f32.mrf.mxu0
      %v4574 = vadd.f32 %v4186, %v4573
      %v4575 = vpop.f32.mrf.mxu0
      %v4576 = vadd.f32 %v4188, %v4575
      %4577 = vmatmul.bf16.gmra.mxu0 %v4556
      %v4578 = vpop.f32.mrf.mxu0
      %v4579 = vadd.f32 %v4191, %v4578
      %v4580 = vpop.f32.mrf.mxu0
      %v4581 = vadd.f32 %v4193, %v4580
      %4582 = vmatmul.bf16.gmra.mxu0 %v4559
      %v4583 = vpop.f32.mrf.mxu0
      %v4584 = vadd.f32 %v4196, %v4583
      %v4585 = vpop.f32.mrf.mxu0
      %v4586 = vadd.f32 %v4198, %v4585
      %4587 = vmatmul.bf16.gmra.mxu0 %v4562
      %v4588 = vpop.f32.mrf.mxu0
      %v4589 = vadd.f32 %v4201, %v4588
      %v4590 = vpop.f32.mrf.mxu0
      %v4591 = vadd.f32 %v4203, %v4590
      %4592 = vdwg.mxu0
      %v4593 = vrot.slane %v1774, 4
      %v4594 = vrot.slane %v1776, 4
      %v4595 = vrot.slane %v1778, 4
      %v4596 = vrot.slane %v1780, 4
      %v4597 = vrot.slane %v1782, 4
      %v4598 = vrot.slane %v1784, 4
      %v4599 = vrot.slane %v1786, 4
      %v4600 = vrot.slane %v1788, 4
      %v4609 = vunpack.c.l.b16 %v2963
      %v4610 = vunpack.c.l.b16 %v2964
      %v4611 = vunpack.c.l.b16 %v2965
      %v4612 = vunpack.c.l.b16 %v2966
      %v4613 = vunpack.c.l.b16 %v2967
      %v4614 = vunpack.c.l.b16 %v2968
      %v4615 = vunpack.c.l.b16 %v2969
      %v4616 = vunpack.c.l.b16 %v2970
      %v4617 = vpack.c.b16 %v4610, %v4609
      %v4618 = vpack.c.b16 %v4612, %v4611
      %v4619 = vpack.c.b16 %v4614, %v4613
      %v4620 = vpack.c.b16 %v4616, %v4615
      %v4621 = vunpack.c.l.b16 %v4593
      %v4622 = vunpack.c.l.b16 %v4594
      %v4623 = vunpack.c.l.b16 %v4595
      %v4624 = vunpack.c.l.b16 %v4596
      %v4625 = vunpack.c.l.b16 %v4597
      %v4626 = vunpack.c.l.b16 %v4598
      %v4627 = vunpack.c.l.b16 %v4599
      %v4628 = vunpack.c.l.b16 %v4600
      %v4629 = vpack.c.b16 %v4622, %v4621
      %v4630 = vpack.c.b16 %v4624, %v4623
      %v4631 = vpack.c.b16 %v4626, %v4625
      %v4632 = vpack.c.b16 %v4628, %v4627
      %v4638 = vsel %vm555, %v4617, 0
      %v4641 = vsel %vm555, %v4618, 0
      %v4644 = vsel %vm555, %v4619, 0
      %v4647 = vsel %vm555, %v4620, 0
      %4649 = vmatpush.bf16.msra.mxu0 0
      %4650 = vmatpush.bf16.msra.mxu0 0
      %4651 = vmatpush.bf16.msra.mxu0 0
      %4652 = vmatpush.bf16.msra.mxu0 0
      %4653 = vmatpush.bf16.msra.mxu0 %v4632
      %4654 = vmatpush.bf16.msra.mxu0 %v4631
      %4655 = vmatpush.bf16.msra.mxu0 %v4630
      %4656 = vmatpush.bf16.msra.mxu0 %v4629
      %4657 = vmatmul.bf16.gmra.mxu0 %v4638
      %v4658 = vpop.f32.mrf.mxu0
      %v4659 = vadd.f32 %v4287, %v4658
      %v4660 = vpop.f32.mrf.mxu0
      %v4661 = vadd.f32 %v4289, %v4660
      %4662 = vmatmul.bf16.gmra.mxu0 %v4641
      %v4663 = vpop.f32.mrf.mxu0
      %v4664 = vadd.f32 %v4292, %v4663
      %v4665 = vpop.f32.mrf.mxu0
      %v4666 = vadd.f32 %v4294, %v4665
      %4667 = vmatmul.bf16.gmra.mxu0 %v4644
      %v4668 = vpop.f32.mrf.mxu0
      %v4669 = vadd.f32 %v4297, %v4668
      %v4670 = vpop.f32.mrf.mxu0
      %v4671 = vadd.f32 %v4299, %v4670
      %4672 = vmatmul.bf16.gmra.mxu0 %v4647
      %v4673 = vpop.f32.mrf.mxu0
      %v4674 = vadd.f32 %v4302, %v4673
      %v4675 = vpop.f32.mrf.mxu0
      %v4676 = vadd.f32 %v4304, %v4675
      %4677 = vdwg.mxu0
      %v4678 = vrot.slane %v1790, 4
      %v4679 = vrot.slane %v1792, 4
      %v4680 = vrot.slane %v1794, 4
      %v4681 = vrot.slane %v1796, 4
      %v4682 = vrot.slane %v1798, 4
      %v4683 = vrot.slane %v1800, 4
      %v4684 = vrot.slane %v1802, 4
      %v4685 = vrot.slane %v1804, 4
      %v4694 = vunpack.c.l.b16 %v2971
      %v4695 = vunpack.c.l.b16 %v2972
      %v4696 = vunpack.c.l.b16 %v2973
      %v4697 = vunpack.c.l.b16 %v2974
      %v4698 = vunpack.c.l.b16 %v2975
      %v4699 = vunpack.c.l.b16 %v2976
      %v4700 = vunpack.c.l.b16 %v2977
      %v4701 = vunpack.c.l.b16 %v2978
      %v4702 = vpack.c.b16 %v4695, %v4694
      %v4703 = vpack.c.b16 %v4697, %v4696
      %v4704 = vpack.c.b16 %v4699, %v4698
      %v4705 = vpack.c.b16 %v4701, %v4700
      %v4706 = vunpack.c.l.b16 %v4678
      %v4707 = vunpack.c.l.b16 %v4679
      %v4708 = vunpack.c.l.b16 %v4680
      %v4709 = vunpack.c.l.b16 %v4681
      %v4710 = vunpack.c.l.b16 %v4682
      %v4711 = vunpack.c.l.b16 %v4683
      %v4712 = vunpack.c.l.b16 %v4684
      %v4713 = vunpack.c.l.b16 %v4685
      %v4714 = vpack.c.b16 %v4707, %v4706
      %v4715 = vpack.c.b16 %v4709, %v4708
      %v4716 = vpack.c.b16 %v4711, %v4710
      %v4717 = vpack.c.b16 %v4713, %v4712
      %v4723 = vsel %vm555, %v4702, 0
      %v4726 = vsel %vm555, %v4703, 0
      %v4729 = vsel %vm555, %v4704, 0
      %v4732 = vsel %vm555, %v4705, 0
      %4734 = vmatpush.bf16.msra.mxu0 0
      %4735 = vmatpush.bf16.msra.mxu0 0
      %4736 = vmatpush.bf16.msra.mxu0 0
      %4737 = vmatpush.bf16.msra.mxu0 0
      %4738 = vmatpush.bf16.msra.mxu0 %v4717
      %4739 = vmatpush.bf16.msra.mxu0 %v4716
      %4740 = vmatpush.bf16.msra.mxu0 %v4715
      %4741 = vmatpush.bf16.msra.mxu0 %v4714
      %4742 = vmatmul.bf16.gmra.mxu0 %v4723
      %v4743 = vpop.f32.mrf.mxu0
      %v4744 = vadd.f32 %v4388, %v4743
      %v4745 = vpop.f32.mrf.mxu0
      %v4746 = vadd.f32 %v4390, %v4745
      %4747 = vmatmul.bf16.gmra.mxu0 %v4726
      %v4748 = vpop.f32.mrf.mxu0
      %v4749 = vadd.f32 %v4393, %v4748
      %v4750 = vpop.f32.mrf.mxu0
      %v4751 = vadd.f32 %v4395, %v4750
      %4752 = vmatmul.bf16.gmra.mxu0 %v4729
      %v4753 = vpop.f32.mrf.mxu0
      %v4754 = vadd.f32 %v4398, %v4753
      %v4755 = vpop.f32.mrf.mxu0
      %v4756 = vadd.f32 %v4400, %v4755
      %4757 = vmatmul.bf16.gmra.mxu0 %v4732
      %v4758 = vpop.f32.mrf.mxu0
      %v4759 = vadd.f32 %v4403, %v4758
      %v4760 = vpop.f32.mrf.mxu0
      %v4761 = vadd.f32 %v4405, %v4760
      %4762 = vdwg.mxu0
      %v4763 = vrot.slane %v1806, 4
      %v4764 = vrot.slane %v1808, 4
      %v4765 = vrot.slane %v1810, 4
      %v4766 = vrot.slane %v1812, 4
      %v4767 = vrot.slane %v1814, 4
      %v4768 = vrot.slane %v1816, 4
      %v4769 = vrot.slane %v1818, 4
      %v4770 = vrot.slane %v1820, 4
      %v4779 = vunpack.c.l.b16 %v2979
      %v4780 = vunpack.c.l.b16 %v2980
      %v4781 = vunpack.c.l.b16 %v2981
      %v4782 = vunpack.c.l.b16 %v2982
      %v4783 = vunpack.c.l.b16 %v2983
      %v4784 = vunpack.c.l.b16 %v2984
      %v4785 = vunpack.c.l.b16 %v2985
      %v4786 = vunpack.c.l.b16 %v2986
      %v4787 = vpack.c.b16 %v4780, %v4779
      %v4788 = vpack.c.b16 %v4782, %v4781
      %v4789 = vpack.c.b16 %v4784, %v4783
      %v4790 = vpack.c.b16 %v4786, %v4785
      %v4791 = vunpack.c.l.b16 %v4763
      %v4792 = vunpack.c.l.b16 %v4764
      %v4793 = vunpack.c.l.b16 %v4765
      %v4794 = vunpack.c.l.b16 %v4766
      %v4795 = vunpack.c.l.b16 %v4767
      %v4796 = vunpack.c.l.b16 %v4768
      %v4797 = vunpack.c.l.b16 %v4769
      %v4798 = vunpack.c.l.b16 %v4770
      %v4799 = vpack.c.b16 %v4792, %v4791
      %v4800 = vpack.c.b16 %v4794, %v4793
      %v4801 = vpack.c.b16 %v4796, %v4795
      %v4802 = vpack.c.b16 %v4798, %v4797
      %v4808 = vsel %vm555, %v4787, 0
      %v4811 = vsel %vm555, %v4788, 0
      %v4814 = vsel %vm555, %v4789, 0
      %v4817 = vsel %vm555, %v4790, 0
      %4819 = vmatpush.bf16.msra.mxu0 0
      %4820 = vmatpush.bf16.msra.mxu0 0
      %4821 = vmatpush.bf16.msra.mxu0 0
      %4822 = vmatpush.bf16.msra.mxu0 0
      %4823 = vmatpush.bf16.msra.mxu0 %v4802
      %4824 = vmatpush.bf16.msra.mxu0 %v4801
      %4825 = vmatpush.bf16.msra.mxu0 %v4800
      %4826 = vmatpush.bf16.msra.mxu0 %v4799
      %4827 = vmatmul.bf16.gmra.mxu0 %v4808
      %v4828 = vpop.f32.mrf.mxu0
      %v4829 = vadd.f32 %v4489, %v4828
      %v4830 = vpop.f32.mrf.mxu0
      %v4831 = vadd.f32 %v4491, %v4830
      %4832 = vmatmul.bf16.gmra.mxu0 %v4811
      %v4833 = vpop.f32.mrf.mxu0
      %v4834 = vadd.f32 %v4494, %v4833
      %v4835 = vpop.f32.mrf.mxu0
      %v4836 = vadd.f32 %v4496, %v4835
      %4837 = vmatmul.bf16.gmra.mxu0 %v4814
      %v4838 = vpop.f32.mrf.mxu0
      %v4839 = vadd.f32 %v4499, %v4838
      %v4840 = vpop.f32.mrf.mxu0
      %v4841 = vadd.f32 %v4501, %v4840
      %4842 = vmatmul.bf16.gmra.mxu0 %v4817
      %v4843 = vpop.f32.mrf.mxu0
      %v4844 = vadd.f32 %v4504, %v4843
      %v4845 = vpop.f32.mrf.mxu0
      %v4846 = vadd.f32 %v4506, %v4845
      %4847 = vdwg.mxu0
      %s4848 = scalar_lea.vmem %s5, 128
      %v4849 = vld [vmem:[%s4848] sm:$0xff]
      %v4850 = vld [vmem:[%s4848 + $0x8] sm:$0xff]
      %v4851 = vld [vmem:[%s4848 + $0x10] sm:$0xff]
      %v4852 = vld [vmem:[%s4848 + $0x18] sm:$0xff]
      %v4853 = vld [vmem:[%s4848 + $0x20] sm:$0xff]
      %v4854 = vld [vmem:[%s4848 + $0x28] sm:$0xff]
      %v4855 = vld [vmem:[%s4848 + $0x30] sm:$0xff]
      %v4856 = vld [vmem:[%s4848 + $0x38] sm:$0xff]
      %4857 = vrot.lane.b32.xlu0 %v1846, 96
      %v4858 = vpop.permute.xlu0 %4857
      %4859 = vrot.lane.b32.xlu0 %v1847, 96
      %v4860 = vpop.permute.xlu0 %4859
      %4861 = vrot.lane.b32.xlu0 %v1848, 96
      %v4862 = vpop.permute.xlu0 %4861
      %4863 = vrot.lane.b32.xlu0 %v1849, 96
      %v4864 = vpop.permute.xlu0 %4863
      %4865 = vrot.lane.b32.xlu0 %v1846, 32
      %v4866 = vpop.permute.xlu0 %4865
      %4867 = vrot.lane.b32.xlu0 %v1847, 32
      %v4868 = vpop.permute.xlu0 %4867
      %4869 = vrot.lane.b32.xlu0 %v1848, 32
      %v4870 = vpop.permute.xlu0 %4869
      %4871 = vrot.lane.b32.xlu0 %v1849, 32
      %v4872 = vpop.permute.xlu0 %4871
      %v4874 = vsel %vm1858, %v4858, 0
      %v4877 = vsel %vm1858, %v4860, 0
      %v4880 = vsel %vm1858, %v4862, 0
      %v4883 = vsel %vm1858, %v4864, 0
      %v4886 = vsel %vm1858, %v4866, 0
      %v4889 = vsel %vm1858, %v4868, 0
      %v4892 = vsel %vm1858, %v4870, 0
      %v4895 = vsel %vm1858, %v4872, 0
      %4897 = vmatpush.bf16.xpose.msra.mxu0 0
      %4898 = vmatpush.bf16.xpose.msra.mxu0 0
      %4899 = vmatpush.bf16.xpose.msra.mxu0 0
      %4900 = vmatpush.bf16.xpose.msra.mxu0 0
      %4901 = vmatpush.bf16.xpose.msra.mxu0 %v4895
      %4902 = vmatpush.bf16.xpose.msra.mxu0 %v4892
      %4903 = vmatpush.bf16.xpose.msra.mxu0 %v4889
      %4904 = vmatpush.bf16.xpose.msra.mxu0 %v4886
      %4905 = vmatmul.bf16.gmra.mxu0 %v4874
      %v4906 = vpop.f32.mrf.mxu0
      %v4907 = vadd.f32 %v4849, %v4906
      %v4908 = vpop.f32.mrf.mxu0
      %v4909 = vadd.f32 %v4850, %v4908
      %4910 = vmatmul.bf16.gmra.mxu0 %v4877
      %v4911 = vpop.f32.mrf.mxu0
      %v4912 = vadd.f32 %v4851, %v4911
      %v4913 = vpop.f32.mrf.mxu0
      %v4914 = vadd.f32 %v4852, %v4913
      %4915 = vmatmul.bf16.gmra.mxu0 %v4880
      %v4916 = vpop.f32.mrf.mxu0
      %v4917 = vadd.f32 %v4853, %v4916
      %v4918 = vpop.f32.mrf.mxu0
      %v4919 = vadd.f32 %v4854, %v4918
      %4920 = vmatmul.bf16.gmra.mxu0 %v4883
      %v4921 = vpop.f32.mrf.mxu0
      %v4922 = vadd.f32 %v4855, %v4921
      %v4923 = vpop.f32.mrf.mxu0
      %v4924 = vadd.f32 %v4856, %v4923
      %4925 = vdwg.mxu0
      %4926 = vrot.lane.b32.xlu0 %v1928, 96
      %v4927 = vpop.permute.xlu0 %4926
      %4928 = vrot.lane.b32.xlu0 %v1929, 96
      %v4929 = vpop.permute.xlu0 %4928
      %4930 = vrot.lane.b32.xlu0 %v1930, 96
      %v4931 = vpop.permute.xlu0 %4930
      %4932 = vrot.lane.b32.xlu0 %v1931, 96
      %v4933 = vpop.permute.xlu0 %4932
      %4934 = vrot.lane.b32.xlu0 %v1928, 32
      %v4935 = vpop.permute.xlu0 %4934
      %4936 = vrot.lane.b32.xlu0 %v1929, 32
      %v4937 = vpop.permute.xlu0 %4936
      %4938 = vrot.lane.b32.xlu0 %v1930, 32
      %v4939 = vpop.permute.xlu0 %4938
      %4940 = vrot.lane.b32.xlu0 %v1931, 32
      %v4941 = vpop.permute.xlu0 %4940
      %v4943 = vsel %vm1858, %v4927, 0
      %v4946 = vsel %vm1858, %v4929, 0
      %v4949 = vsel %vm1858, %v4931, 0
      %v4952 = vsel %vm1858, %v4933, 0
      %v4955 = vsel %vm1858, %v4935, 0
      %v4958 = vsel %vm1858, %v4937, 0
      %v4961 = vsel %vm1858, %v4939, 0
      %v4964 = vsel %vm1858, %v4941, 0
      %4966 = vmatpush.bf16.xpose.msra.mxu0 0
      %4967 = vmatpush.bf16.xpose.msra.mxu0 0
      %4968 = vmatpush.bf16.xpose.msra.mxu0 0
      %4969 = vmatpush.bf16.xpose.msra.mxu0 0
      %4970 = vmatpush.bf16.xpose.msra.mxu0 %v4964
      %4971 = vmatpush.bf16.xpose.msra.mxu0 %v4961
      %4972 = vmatpush.bf16.xpose.msra.mxu0 %v4958
      %4973 = vmatpush.bf16.xpose.msra.mxu0 %v4955
      %4974 = vmatmul.bf16.gmra.mxu0 %v4943
      %v4975 = vpop.f32.mrf.mxu0
      %v4976 = vadd.f32 %v4849, %v4975
      %v4977 = vpop.f32.mrf.mxu0
      %v4978 = vadd.f32 %v4850, %v4977
      %4979 = vmatmul.bf16.gmra.mxu0 %v4946
      %v4980 = vpop.f32.mrf.mxu0
      %v4981 = vadd.f32 %v4851, %v4980
      %v4982 = vpop.f32.mrf.mxu0
      %v4983 = vadd.f32 %v4852, %v4982
      %4984 = vmatmul.bf16.gmra.mxu0 %v4949
      %v4985 = vpop.f32.mrf.mxu0
      %v4986 = vadd.f32 %v4853, %v4985
      %v4987 = vpop.f32.mrf.mxu0
      %v4988 = vadd.f32 %v4854, %v4987
      %4989 = vmatmul.bf16.gmra.mxu0 %v4952
      %v4990 = vpop.f32.mrf.mxu0
      %v4991 = vadd.f32 %v4855, %v4990
      %v4992 = vpop.f32.mrf.mxu0
      %v4993 = vadd.f32 %v4856, %v4992
      %4994 = vdwg.mxu0
      %4995 = vrot.lane.b32.xlu0 %v2009, 96
      %v4996 = vpop.permute.xlu0 %4995
      %4997 = vrot.lane.b32.xlu0 %v2010, 96
      %v4998 = vpop.permute.xlu0 %4997
      %4999 = vrot.lane.b32.xlu0 %v2011, 96
      %v5000 = vpop.permute.xlu0 %4999
      %5001 = vrot.lane.b32.xlu0 %v2012, 96
      %v5002 = vpop.permute.xlu0 %5001
      %5003 = vrot.lane.b32.xlu0 %v2009, 32
      %v5004 = vpop.permute.xlu0 %5003
      %5005 = vrot.lane.b32.xlu0 %v2010, 32
      %v5006 = vpop.permute.xlu0 %5005
      %5007 = vrot.lane.b32.xlu0 %v2011, 32
      %v5008 = vpop.permute.xlu0 %5007
      %5009 = vrot.lane.b32.xlu0 %v2012, 32
      %v5010 = vpop.permute.xlu0 %5009
      %v5012 = vsel %vm1858, %v4996, 0
      %v5015 = vsel %vm1858, %v4998, 0
      %v5018 = vsel %vm1858, %v5000, 0
      %v5021 = vsel %vm1858, %v5002, 0
      %v5024 = vsel %vm1858, %v5004, 0
      %v5027 = vsel %vm1858, %v5006, 0
      %v5030 = vsel %vm1858, %v5008, 0
      %v5033 = vsel %vm1858, %v5010, 0
      %5035 = vmatpush.bf16.xpose.msra.mxu0 0
      %5036 = vmatpush.bf16.xpose.msra.mxu0 0
      %5037 = vmatpush.bf16.xpose.msra.mxu0 0
      %5038 = vmatpush.bf16.xpose.msra.mxu0 0
      %5039 = vmatpush.bf16.xpose.msra.mxu0 %v5033
      %5040 = vmatpush.bf16.xpose.msra.mxu0 %v5030
      %5041 = vmatpush.bf16.xpose.msra.mxu0 %v5027
      %5042 = vmatpush.bf16.xpose.msra.mxu0 %v5024
      %5043 = vmatmul.bf16.gmra.mxu0 %v5012
      %v5044 = vpop.f32.mrf.mxu0
      %v5045 = vadd.f32 %v4849, %v5044
      %v5046 = vpop.f32.mrf.mxu0
      %v5047 = vadd.f32 %v4850, %v5046
      %5048 = vmatmul.bf16.gmra.mxu0 %v5015
      %v5049 = vpop.f32.mrf.mxu0
      %v5050 = vadd.f32 %v4851, %v5049
      %v5051 = vpop.f32.mrf.mxu0
      %v5052 = vadd.f32 %v4852, %v5051
      %5053 = vmatmul.bf16.gmra.mxu0 %v5018
      %v5054 = vpop.f32.mrf.mxu0
      %v5055 = vadd.f32 %v4853, %v5054
      %v5056 = vpop.f32.mrf.mxu0
      %v5057 = vadd.f32 %v4854, %v5056
      %5058 = vmatmul.bf16.gmra.mxu0 %v5021
      %v5059 = vpop.f32.mrf.mxu0
      %v5060 = vadd.f32 %v4855, %v5059
      %v5061 = vpop.f32.mrf.mxu0
      %v5062 = vadd.f32 %v4856, %v5061
      %5063 = vdwg.mxu0
      %5064 = vrot.lane.b32.xlu0 %v2090, 96
      %v5065 = vpop.permute.xlu0 %5064
      %5066 = vrot.lane.b32.xlu0 %v2091, 96
      %v5067 = vpop.permute.xlu0 %5066
      %5068 = vrot.lane.b32.xlu0 %v2092, 96
      %v5069 = vpop.permute.xlu0 %5068
      %5070 = vrot.lane.b32.xlu0 %v2093, 96
      %v5071 = vpop.permute.xlu0 %5070
      %5072 = vrot.lane.b32.xlu0 %v2090, 32
      %v5073 = vpop.permute.xlu0 %5072
      %5074 = vrot.lane.b32.xlu0 %v2091, 32
      %v5075 = vpop.permute.xlu0 %5074
      %5076 = vrot.lane.b32.xlu0 %v2092, 32
      %v5077 = vpop.permute.xlu0 %5076
      %5078 = vrot.lane.b32.xlu0 %v2093, 32
      %v5079 = vpop.permute.xlu0 %5078
      %v5081 = vsel %vm1858, %v5065, 0
      %v5084 = vsel %vm1858, %v5067, 0
      %v5087 = vsel %vm1858, %v5069, 0
      %v5090 = vsel %vm1858, %v5071, 0
      %v5093 = vsel %vm1858, %v5073, 0
      %v5096 = vsel %vm1858, %v5075, 0
      %v5099 = vsel %vm1858, %v5077, 0
      %v5102 = vsel %vm1858, %v5079, 0
      %5104 = vmatpush.bf16.xpose.msra.mxu0 0
      %5105 = vmatpush.bf16.xpose.msra.mxu0 0
      %5106 = vmatpush.bf16.xpose.msra.mxu0 0
      %5107 = vmatpush.bf16.xpose.msra.mxu0 0
      %5108 = vmatpush.bf16.xpose.msra.mxu0 %v5102
      %5109 = vmatpush.bf16.xpose.msra.mxu0 %v5099
      %5110 = vmatpush.bf16.xpose.msra.mxu0 %v5096
      %5111 = vmatpush.bf16.xpose.msra.mxu0 %v5093
      %5112 = vmatmul.bf16.gmra.mxu0 %v5081
      %v5113 = vpop.f32.mrf.mxu0
      %v5114 = vadd.f32 %v4849, %v5113
      %v5115 = vpop.f32.mrf.mxu0
      %v5116 = vadd.f32 %v4850, %v5115
      %5117 = vmatmul.bf16.gmra.mxu0 %v5084
      %v5118 = vpop.f32.mrf.mxu0
      %v5119 = vadd.f32 %v4851, %v5118
      %v5120 = vpop.f32.mrf.mxu0
      %v5121 = vadd.f32 %v4852, %v5120
      %5122 = vmatmul.bf16.gmra.mxu0 %v5087
      %v5123 = vpop.f32.mrf.mxu0
      %v5124 = vadd.f32 %v4853, %v5123
      %v5125 = vpop.f32.mrf.mxu0
      %v5126 = vadd.f32 %v4854, %v5125
      %5127 = vmatmul.bf16.gmra.mxu0 %v5090
      %v5128 = vpop.f32.mrf.mxu0
      %v5129 = vadd.f32 %v4855, %v5128
      %v5130 = vpop.f32.mrf.mxu0
      %v5131 = vadd.f32 %v4856, %v5130
      %5132 = vdwg.mxu0
      %v5133 = vsel %vm555, %v4907, -inf
      %5134 = vmax.xlane.f32.xlu0 %v5133
      %v5135 = vpop.xlane.xlu0 %5134
      %v5136 = vsel %vm555, %v4909, -inf
      %5137 = vmax.xlane.f32.xlu0 %v5136
      %v5138 = vpop.xlane.xlu0 %5137
      %v5139 = vsel %vm555, %v4912, -inf
      %5140 = vmax.xlane.f32.xlu0 %v5139
      %v5141 = vpop.xlane.xlu0 %5140
      %v5142 = vsel %vm555, %v4914, -inf
      %5143 = vmax.xlane.f32.xlu0 %v5142
      %v5144 = vpop.xlane.xlu0 %5143
      %v5145 = vsel %vm555, %v4917, -inf
      %5146 = vmax.xlane.f32.xlu0 %v5145
      %v5147 = vpop.xlane.xlu0 %5146
      %v5148 = vsel %vm555, %v4919, -inf
      %5149 = vmax.xlane.f32.xlu0 %v5148
      %v5150 = vpop.xlane.xlu0 %5149
      %v5151 = vsel %vm555, %v4922, -inf
      %5152 = vmax.xlane.f32.xlu0 %v5151
      %v5153 = vpop.xlane.xlu0 %5152
      %v5154 = vsel %vm555, %v4924, -inf
      %5155 = vmax.xlane.f32.xlu0 %v5154
      %v5156 = vpop.xlane.xlu0 %5155
      %v5157 = vsel %vm555, %v4976, -inf
      %5158 = vmax.xlane.f32.xlu0 %v5157
      %v5159 = vpop.xlane.xlu0 %5158
      %v5160 = vsel %vm555, %v4978, -inf
      %5161 = vmax.xlane.f32.xlu0 %v5160
      %v5162 = vpop.xlane.xlu0 %5161
      %v5163 = vsel %vm555, %v4981, -inf
      %5164 = vmax.xlane.f32.xlu0 %v5163
      %v5165 = vpop.xlane.xlu0 %5164
      %v5166 = vsel %vm555, %v4983, -inf
      %5167 = vmax.xlane.f32.xlu0 %v5166
      %v5168 = vpop.xlane.xlu0 %5167
      %v5169 = vsel %vm555, %v4986, -inf
      %5170 = vmax.xlane.f32.xlu0 %v5169
      %v5171 = vpop.xlane.xlu0 %5170
      %v5172 = vsel %vm555, %v4988, -inf
      %5173 = vmax.xlane.f32.xlu0 %v5172
      %v5174 = vpop.xlane.xlu0 %5173
      %v5175 = vsel %vm555, %v4991, -inf
      %5176 = vmax.xlane.f32.xlu0 %v5175
      %v5177 = vpop.xlane.xlu0 %5176
      %v5178 = vsel %vm555, %v4993, -inf
      %5179 = vmax.xlane.f32.xlu0 %v5178
      %v5180 = vpop.xlane.xlu0 %5179
      %v5181 = vsel %vm555, %v5045, -inf
      %5182 = vmax.xlane.f32.xlu0 %v5181
      %v5183 = vpop.xlane.xlu0 %5182
      %v5184 = vsel %vm555, %v5047, -inf
      %5185 = vmax.xlane.f32.xlu0 %v5184
      %v5186 = vpop.xlane.xlu0 %5185
      %v5187 = vsel %vm555, %v5050, -inf
      %5188 = vmax.xlane.f32.xlu0 %v5187
      %v5189 = vpop.xlane.xlu0 %5188
      %v5190 = vsel %vm555, %v5052, -inf
      %5191 = vmax.xlane.f32.xlu0 %v5190
      %v5192 = vpop.xlane.xlu0 %5191
      %v5193 = vsel %vm555, %v5055, -inf
      %5194 = vmax.xlane.f32.xlu0 %v5193
      %v5195 = vpop.xlane.xlu0 %5194
      %v5196 = vsel %vm555, %v5057, -inf
      %5197 = vmax.xlane.f32.xlu0 %v5196
      %v5198 = vpop.xlane.xlu0 %5197
      %v5199 = vsel %vm555, %v5060, -inf
      %5200 = vmax.xlane.f32.xlu0 %v5199
      %v5201 = vpop.xlane.xlu0 %5200
      %v5202 = vsel %vm555, %v5062, -inf
      %5203 = vmax.xlane.f32.xlu0 %v5202
      %v5204 = vpop.xlane.xlu0 %5203
      %v5205 = vsel %vm555, %v5114, -inf
      %5206 = vmax.xlane.f32.xlu0 %v5205
      %v5207 = vpop.xlane.xlu0 %5206
      %v5208 = vsel %vm555, %v5116, -inf
      %5209 = vmax.xlane.f32.xlu0 %v5208
      %v5210 = vpop.xlane.xlu0 %5209
      %v5211 = vsel %vm555, %v5119, -inf
      %5212 = vmax.xlane.f32.xlu0 %v5211
      %v5213 = vpop.xlane.xlu0 %5212
      %v5214 = vsel %vm555, %v5121, -inf
      %5215 = vmax.xlane.f32.xlu0 %v5214
      %v5216 = vpop.xlane.xlu0 %5215
      %v5217 = vsel %vm555, %v5124, -inf
      %5218 = vmax.xlane.f32.xlu0 %v5217
      %v5219 = vpop.xlane.xlu0 %5218
      %v5220 = vsel %vm555, %v5126, -inf
      %5221 = vmax.xlane.f32.xlu0 %v5220
      %v5222 = vpop.xlane.xlu0 %5221
      %v5223 = vsel %vm555, %v5129, -inf
      %5224 = vmax.xlane.f32.xlu0 %v5223
      %v5225 = vpop.xlane.xlu0 %5224
      %v5226 = vsel %vm555, %v5131, -inf
      %5227 = vmax.xlane.f32.xlu0 %v5226
      %v5228 = vpop.xlane.xlu0 %5227
      %v5229 = vsub.f32 %v4907, %v5135
      %v5230 = vsub.f32 %v4909, %v5138
      %v5231 = vsub.f32 %v4912, %v5141
      %v5232 = vsub.f32 %v4914, %v5144
      %v5233 = vsub.f32 %v4917, %v5147
      %v5234 = vsub.f32 %v4919, %v5150
      %v5235 = vsub.f32 %v4922, %v5153
      %v5236 = vsub.f32 %v4924, %v5156
      %v5237 = vsub.f32 %v4976, %v5159
      %v5238 = vsub.f32 %v4978, %v5162
      %v5239 = vsub.f32 %v4981, %v5165
      %v5240 = vsub.f32 %v4983, %v5168
      %v5241 = vsub.f32 %v4986, %v5171
      %v5242 = vsub.f32 %v4988, %v5174
      %v5243 = vsub.f32 %v4991, %v5177
      %v5244 = vsub.f32 %v4993, %v5180
      %v5245 = vsub.f32 %v5045, %v5183
      %v5246 = vsub.f32 %v5047, %v5186
      %v5247 = vsub.f32 %v5050, %v5189
      %v5248 = vsub.f32 %v5052, %v5192
      %v5249 = vsub.f32 %v5055, %v5195
      %v5250 = vsub.f32 %v5057, %v5198
      %v5251 = vsub.f32 %v5060, %v5201
      %v5252 = vsub.f32 %v5062, %v5204
      %v5253 = vsub.f32 %v5114, %v5207
      %v5254 = vsub.f32 %v5116, %v5210
      %v5255 = vsub.f32 %v5119, %v5213
      %v5256 = vsub.f32 %v5121, %v5216
      %v5257 = vsub.f32 %v5124, %v5219
      %v5258 = vsub.f32 %v5126, %v5222
      %v5259 = vsub.f32 %v5129, %v5225
      %v5260 = vsub.f32 %v5131, %v5228
      %v5261 = vmul.f32 %v5229, 1.442695
      %v5262 = vpow.pop %v5261
      %v5263 = vmul.f32 %v5230, 1.442695
      %v5264 = vpow.pop %v5263
      %v5265 = vmul.f32 %v5231, 1.442695
      %v5266 = vpow.pop %v5265
      %v5267 = vmul.f32 %v5232, 1.442695
      %v5268 = vpow.pop %v5267
      %v5269 = vmul.f32 %v5233, 1.442695
      %v5270 = vpow.pop %v5269
      %v5271 = vmul.f32 %v5234, 1.442695
      %v5272 = vpow.pop %v5271
      %v5273 = vmul.f32 %v5235, 1.442695
      %v5274 = vpow.pop %v5273
      %v5275 = vmul.f32 %v5236, 1.442695
      %v5276 = vpow.pop %v5275
      %v5277 = vmul.f32 %v5237, 1.442695
      %v5278 = vpow.pop %v5277
      %v5279 = vmul.f32 %v5238, 1.442695
      %v5280 = vpow.pop %v5279
      %v5281 = vmul.f32 %v5239, 1.442695
      %v5282 = vpow.pop %v5281
      %v5283 = vmul.f32 %v5240, 1.442695
      %v5284 = vpow.pop %v5283
      %v5285 = vmul.f32 %v5241, 1.442695
      %v5286 = vpow.pop %v5285
      %v5287 = vmul.f32 %v5242, 1.442695
      %v5288 = vpow.pop %v5287
      %v5289 = vmul.f32 %v5243, 1.442695
      %v5290 = vpow.pop %v5289
      %v5291 = vmul.f32 %v5244, 1.442695
      %v5292 = vpow.pop %v5291
      %v5293 = vmul.f32 %v5245, 1.442695
      %v5294 = vpow.pop %v5293
      %v5295 = vmul.f32 %v5246, 1.442695
      %v5296 = vpow.pop %v5295
      %v5297 = vmul.f32 %v5247, 1.442695
      %v5298 = vpow.pop %v5297
      %v5299 = vmul.f32 %v5248, 1.442695
      %v5300 = vpow.pop %v5299
      %v5301 = vmul.f32 %v5249, 1.442695
      %v5302 = vpow.pop %v5301
      %v5303 = vmul.f32 %v5250, 1.442695
      %v5304 = vpow.pop %v5303
      %v5305 = vmul.f32 %v5251, 1.442695
      %v5306 = vpow.pop %v5305
      %v5307 = vmul.f32 %v5252, 1.442695
      %v5308 = vpow.pop %v5307
      %v5309 = vmul.f32 %v5253, 1.442695
      %v5310 = vpow.pop %v5309
      %v5311 = vmul.f32 %v5254, 1.442695
      %v5312 = vpow.pop %v5311
      %v5313 = vmul.f32 %v5255, 1.442695
      %v5314 = vpow.pop %v5313
      %v5315 = vmul.f32 %v5256, 1.442695
      %v5316 = vpow.pop %v5315
      %v5317 = vmul.f32 %v5257, 1.442695
      %v5318 = vpow.pop %v5317
      %v5319 = vmul.f32 %v5258, 1.442695
      %v5320 = vpow.pop %v5319
      %v5321 = vmul.f32 %v5259, 1.442695
      %v5322 = vpow.pop %v5321
      %v5323 = vmul.f32 %v5260, 1.442695
      %v5324 = vpow.pop %v5323
      %v5325 = vsel %vm555, %v5262, 0.0
      %5326 = vadd.xlane.f32.xlu0 %v5325
      %v5327 = vpop.xlane.xlu0 %5326
      %v5328 = vsel %vm555, %v5264, 0.0
      %5329 = vadd.xlane.f32.xlu0 %v5328
      %v5330 = vpop.xlane.xlu0 %5329
      %v5331 = vsel %vm555, %v5266, 0.0
      %5332 = vadd.xlane.f32.xlu0 %v5331
      %v5333 = vpop.xlane.xlu0 %5332
      %v5334 = vsel %vm555, %v5268, 0.0
      %5335 = vadd.xlane.f32.xlu0 %v5334
      %v5336 = vpop.xlane.xlu0 %5335
      %v5337 = vsel %vm555, %v5270, 0.0
      %5338 = vadd.xlane.f32.xlu0 %v5337
      %v5339 = vpop.xlane.xlu0 %5338
      %v5340 = vsel %vm555, %v5272, 0.0
      %5341 = vadd.xlane.f32.xlu0 %v5340
      %v5342 = vpop.xlane.xlu0 %5341
      %v5343 = vsel %vm555, %v5274, 0.0
      %5344 = vadd.xlane.f32.xlu0 %v5343
      %v5345 = vpop.xlane.xlu0 %5344
      %v5346 = vsel %vm555, %v5276, 0.0
      %5347 = vadd.xlane.f32.xlu0 %v5346
      %v5348 = vpop.xlane.xlu0 %5347
      %v5349 = vsel %vm555, %v5278, 0.0
      %5350 = vadd.xlane.f32.xlu0 %v5349
      %v5351 = vpop.xlane.xlu0 %5350
      %v5352 = vsel %vm555, %v5280, 0.0
      %5353 = vadd.xlane.f32.xlu0 %v5352
      %v5354 = vpop.xlane.xlu0 %5353
      %v5355 = vsel %vm555, %v5282, 0.0
      %5356 = vadd.xlane.f32.xlu0 %v5355
      %v5357 = vpop.xlane.xlu0 %5356
      %v5358 = vsel %vm555, %v5284, 0.0
      %5359 = vadd.xlane.f32.xlu0 %v5358
      %v5360 = vpop.xlane.xlu0 %5359
      %v5361 = vsel %vm555, %v5286, 0.0
      %5362 = vadd.xlane.f32.xlu0 %v5361
      %v5363 = vpop.xlane.xlu0 %5362
      %v5364 = vsel %vm555, %v5288, 0.0
      %5365 = vadd.xlane.f32.xlu0 %v5364
      %v5366 = vpop.xlane.xlu0 %5365
      %v5367 = vsel %vm555, %v5290, 0.0
      %5368 = vadd.xlane.f32.xlu0 %v5367
      %v5369 = vpop.xlane.xlu0 %5368
      %v5370 = vsel %vm555, %v5292, 0.0
      %5371 = vadd.xlane.f32.xlu0 %v5370
      %v5372 = vpop.xlane.xlu0 %5371
      %v5373 = vsel %vm555, %v5294, 0.0
      %5374 = vadd.xlane.f32.xlu0 %v5373
      %v5375 = vpop.xlane.xlu0 %5374
      %v5376 = vsel %vm555, %v5296, 0.0
      %5377 = vadd.xlane.f32.xlu0 %v5376
      %v5378 = vpop.xlane.xlu0 %5377
      %v5379 = vsel %vm555, %v5298, 0.0
      %5380 = vadd.xlane.f32.xlu0 %v5379
      %v5381 = vpop.xlane.xlu0 %5380
      %v5382 = vsel %vm555, %v5300, 0.0
      %5383 = vadd.xlane.f32.xlu0 %v5382
      %v5384 = vpop.xlane.xlu0 %5383
      %v5385 = vsel %vm555, %v5302, 0.0
      %5386 = vadd.xlane.f32.xlu0 %v5385
      %v5387 = vpop.xlane.xlu0 %5386
      %v5388 = vsel %vm555, %v5304, 0.0
      %5389 = vadd.xlane.f32.xlu0 %v5388
      %v5390 = vpop.xlane.xlu0 %5389
      %v5391 = vsel %vm555, %v5306, 0.0
      %5392 = vadd.xlane.f32.xlu0 %v5391
      %v5393 = vpop.xlane.xlu0 %5392
      %v5394 = vsel %vm555, %v5308, 0.0
      %5395 = vadd.xlane.f32.xlu0 %v5394
      %v5396 = vpop.xlane.xlu0 %5395
      %v5397 = vsel %vm555, %v5310, 0.0
      %5398 = vadd.xlane.f32.xlu0 %v5397
      %v5399 = vpop.xlane.xlu0 %5398
      %v5400 = vsel %vm555, %v5312, 0.0
      %5401 = vadd.xlane.f32.xlu0 %v5400
      %v5402 = vpop.xlane.xlu0 %5401
      %v5403 = vsel %vm555, %v5314, 0.0
      %5404 = vadd.xlane.f32.xlu0 %v5403
      %v5405 = vpop.xlane.xlu0 %5404
      %v5406 = vsel %vm555, %v5316, 0.0
      %5407 = vadd.xlane.f32.xlu0 %v5406
      %v5408 = vpop.xlane.xlu0 %5407
      %v5409 = vsel %vm555, %v5318, 0.0
      %5410 = vadd.xlane.f32.xlu0 %v5409
      %v5411 = vpop.xlane.xlu0 %5410
      %v5412 = vsel %vm555, %v5320, 0.0
      %5413 = vadd.xlane.f32.xlu0 %v5412
      %v5414 = vpop.xlane.xlu0 %5413
      %v5415 = vsel %vm555, %v5322, 0.0
      %5416 = vadd.xlane.f32.xlu0 %v5415
      %v5417 = vpop.xlane.xlu0 %5416
      %v5418 = vsel %vm555, %v5324, 0.0
      %5419 = vadd.xlane.f32.xlu0 %v5418
      %v5420 = vpop.xlane.xlu0 %5419
      %v5421 = vrcp.pop %v5327
      %v5422 = vmul.f32 %v5327, %v5421
      %v5423 = vsub.f32 1.0, %v5422
      %v5424 = vmul.f32 %v5421, %v5423
      %v5425 = vadd.f32 %v5421, %v5424
      %vm5426 = vweird.f32 %v5327
      %vm5427 = vweird.f32 %v5421
      %vm5428 = vmor %vm5426, %vm5427
      %v5429 = vsel %vm5428, %v5421, %v5425
      %v5430 = vand.u32 2147483647, %v5327
      %vm5431 = vcmp.eq.f32.partialorder %v5430, 8.507059e+37
      %v5432 = vand.u32 %v5327, 2147483648
      %v5433 = vor.u32 1.1754944e-38, %v5432
      %v5434 = vsel %vm5431, %v5433, %v5429
      %v5435 = vmul.f32 1.0, %v5434
      %v5436 = vrcp.pop %v5330
      %v5437 = vmul.f32 %v5330, %v5436
      %v5438 = vsub.f32 1.0, %v5437
      %v5439 = vmul.f32 %v5436, %v5438
      %v5440 = vadd.f32 %v5436, %v5439
      %vm5441 = vweird.f32 %v5330
      %vm5442 = vweird.f32 %v5436
      %vm5443 = vmor %vm5441, %vm5442
      %v5444 = vsel %vm5443, %v5436, %v5440
      %v5445 = vand.u32 2147483647, %v5330
      %vm5446 = vcmp.eq.f32.partialorder %v5445, 8.507059e+37
      %v5447 = vand.u32 %v5330, 2147483648
      %v5448 = vor.u32 1.1754944e-38, %v5447
      %v5449 = vsel %vm5446, %v5448, %v5444
      %v5450 = vmul.f32 1.0, %v5449
      %v5451 = vrcp.pop %v5333
      %v5452 = vmul.f32 %v5333, %v5451
      %v5453 = vsub.f32 1.0, %v5452
      %v5454 = vmul.f32 %v5451, %v5453
      %v5455 = vadd.f32 %v5451, %v5454
      %vm5456 = vweird.f32 %v5333
      %vm5457 = vweird.f32 %v5451
      %vm5458 = vmor %vm5456, %vm5457
      %v5459 = vsel %vm5458, %v5451, %v5455
      %v5460 = vand.u32 2147483647, %v5333
      %vm5461 = vcmp.eq.f32.partialorder %v5460, 8.507059e+37
      %v5462 = vand.u32 %v5333, 2147483648
      %v5463 = vor.u32 1.1754944e-38, %v5462
      %v5464 = vsel %vm5461, %v5463, %v5459
      %v5465 = vmul.f32 1.0, %v5464
      %v5466 = vrcp.pop %v5336
      %v5467 = vmul.f32 %v5336, %v5466
      %v5468 = vsub.f32 1.0, %v5467
      %v5469 = vmul.f32 %v5466, %v5468
      %v5470 = vadd.f32 %v5466, %v5469
      %vm5471 = vweird.f32 %v5336
      %vm5472 = vweird.f32 %v5466
      %vm5473 = vmor %vm5471, %vm5472
      %v5474 = vsel %vm5473, %v5466, %v5470
      %v5475 = vand.u32 2147483647, %v5336
      %vm5476 = vcmp.eq.f32.partialorder %v5475, 8.507059e+37
      %v5477 = vand.u32 %v5336, 2147483648
      %v5478 = vor.u32 1.1754944e-38, %v5477
      %v5479 = vsel %vm5476, %v5478, %v5474
      %v5480 = vmul.f32 1.0, %v5479
      %v5481 = vrcp.pop %v5339
      %v5482 = vmul.f32 %v5339, %v5481
      %v5483 = vsub.f32 1.0, %v5482
      %v5484 = vmul.f32 %v5481, %v5483
      %v5485 = vadd.f32 %v5481, %v5484
      %vm5486 = vweird.f32 %v5339
      %vm5487 = vweird.f32 %v5481
      %vm5488 = vmor %vm5486, %vm5487
      %v5489 = vsel %vm5488, %v5481, %v5485
      %v5490 = vand.u32 2147483647, %v5339
      %vm5491 = vcmp.eq.f32.partialorder %v5490, 8.507059e+37
      %v5492 = vand.u32 %v5339, 2147483648
      %v5493 = vor.u32 1.1754944e-38, %v5492
      %v5494 = vsel %vm5491, %v5493, %v5489
      %v5495 = vmul.f32 1.0, %v5494
      %v5496 = vrcp.pop %v5342
      %v5497 = vmul.f32 %v5342, %v5496
      %v5498 = vsub.f32 1.0, %v5497
      %v5499 = vmul.f32 %v5496, %v5498
      %v5500 = vadd.f32 %v5496, %v5499
      %vm5501 = vweird.f32 %v5342
      %vm5502 = vweird.f32 %v5496
      %vm5503 = vmor %vm5501, %vm5502
      %v5504 = vsel %vm5503, %v5496, %v5500
      %v5505 = vand.u32 2147483647, %v5342
      %vm5506 = vcmp.eq.f32.partialorder %v5505, 8.507059e+37
      %v5507 = vand.u32 %v5342, 2147483648
      %v5508 = vor.u32 1.1754944e-38, %v5507
      %v5509 = vsel %vm5506, %v5508, %v5504
      %v5510 = vmul.f32 1.0, %v5509
      %v5511 = vrcp.pop %v5345
      %v5512 = vmul.f32 %v5345, %v5511
      %v5513 = vsub.f32 1.0, %v5512
      %v5514 = vmul.f32 %v5511, %v5513
      %v5515 = vadd.f32 %v5511, %v5514
      %vm5516 = vweird.f32 %v5345
      %vm5517 = vweird.f32 %v5511
      %vm5518 = vmor %vm5516, %vm5517
      %v5519 = vsel %vm5518, %v5511, %v5515
      %v5520 = vand.u32 2147483647, %v5345
      %vm5521 = vcmp.eq.f32.partialorder %v5520, 8.507059e+37
      %v5522 = vand.u32 %v5345, 2147483648
      %v5523 = vor.u32 1.1754944e-38, %v5522
      %v5524 = vsel %vm5521, %v5523, %v5519
      %v5525 = vmul.f32 1.0, %v5524
      %v5526 = vrcp.pop %v5348
      %v5527 = vmul.f32 %v5348, %v5526
      %v5528 = vsub.f32 1.0, %v5527
      %v5529 = vmul.f32 %v5526, %v5528
      %v5530 = vadd.f32 %v5526, %v5529
      %vm5531 = vweird.f32 %v5348
      %vm5532 = vweird.f32 %v5526
      %vm5533 = vmor %vm5531, %vm5532
      %v5534 = vsel %vm5533, %v5526, %v5530
      %v5535 = vand.u32 2147483647, %v5348
      %vm5536 = vcmp.eq.f32.partialorder %v5535, 8.507059e+37
      %v5537 = vand.u32 %v5348, 2147483648
      %v5538 = vor.u32 1.1754944e-38, %v5537
      %v5539 = vsel %vm5536, %v5538, %v5534
      %v5540 = vmul.f32 1.0, %v5539
      %v5541 = vrcp.pop %v5351
      %v5542 = vmul.f32 %v5351, %v5541
      %v5543 = vsub.f32 1.0, %v5542
      %v5544 = vmul.f32 %v5541, %v5543
      %v5545 = vadd.f32 %v5541, %v5544
      %vm5546 = vweird.f32 %v5351
      %vm5547 = vweird.f32 %v5541
      %vm5548 = vmor %vm5546, %vm5547
      %v5549 = vsel %vm5548, %v5541, %v5545
      %v5550 = vand.u32 2147483647, %v5351
      %vm5551 = vcmp.eq.f32.partialorder %v5550, 8.507059e+37
      %v5552 = vand.u32 %v5351, 2147483648
      %v5553 = vor.u32 1.1754944e-38, %v5552
      %v5554 = vsel %vm5551, %v5553, %v5549
      %v5555 = vmul.f32 1.0, %v5554
      %v5556 = vrcp.pop %v5354
      %v5557 = vmul.f32 %v5354, %v5556
      %v5558 = vsub.f32 1.0, %v5557
      %v5559 = vmul.f32 %v5556, %v5558
      %v5560 = vadd.f32 %v5556, %v5559
      %vm5561 = vweird.f32 %v5354
      %vm5562 = vweird.f32 %v5556
      %vm5563 = vmor %vm5561, %vm5562
      %v5564 = vsel %vm5563, %v5556, %v5560
      %v5565 = vand.u32 2147483647, %v5354
      %vm5566 = vcmp.eq.f32.partialorder %v5565, 8.507059e+37
      %v5567 = vand.u32 %v5354, 2147483648
      %v5568 = vor.u32 1.1754944e-38, %v5567
      %v5569 = vsel %vm5566, %v5568, %v5564
      %v5570 = vmul.f32 1.0, %v5569
      %v5571 = vrcp.pop %v5357
      %v5572 = vmul.f32 %v5357, %v5571
      %v5573 = vsub.f32 1.0, %v5572
      %v5574 = vmul.f32 %v5571, %v5573
      %v5575 = vadd.f32 %v5571, %v5574
      %vm5576 = vweird.f32 %v5357
      %vm5577 = vweird.f32 %v5571
      %vm5578 = vmor %vm5576, %vm5577
      %v5579 = vsel %vm5578, %v5571, %v5575
      %v5580 = vand.u32 2147483647, %v5357
      %vm5581 = vcmp.eq.f32.partialorder %v5580, 8.507059e+37
      %v5582 = vand.u32 %v5357, 2147483648
      %v5583 = vor.u32 1.1754944e-38, %v5582
      %v5584 = vsel %vm5581, %v5583, %v5579
      %v5585 = vmul.f32 1.0, %v5584
      %v5586 = vrcp.pop %v5360
      %v5587 = vmul.f32 %v5360, %v5586
      %v5588 = vsub.f32 1.0, %v5587
      %v5589 = vmul.f32 %v5586, %v5588
      %v5590 = vadd.f32 %v5586, %v5589
      %vm5591 = vweird.f32 %v5360
      %vm5592 = vweird.f32 %v5586
      %vm5593 = vmor %vm5591, %vm5592
      %v5594 = vsel %vm5593, %v5586, %v5590
      %v5595 = vand.u32 2147483647, %v5360
      %vm5596 = vcmp.eq.f32.partialorder %v5595, 8.507059e+37
      %v5597 = vand.u32 %v5360, 2147483648
      %v5598 = vor.u32 1.1754944e-38, %v5597
      %v5599 = vsel %vm5596, %v5598, %v5594
      %v5600 = vmul.f32 1.0, %v5599
      %v5601 = vrcp.pop %v5363
      %v5602 = vmul.f32 %v5363, %v5601
      %v5603 = vsub.f32 1.0, %v5602
      %v5604 = vmul.f32 %v5601, %v5603
      %v5605 = vadd.f32 %v5601, %v5604
      %vm5606 = vweird.f32 %v5363
      %vm5607 = vweird.f32 %v5601
      %vm5608 = vmor %vm5606, %vm5607
      %v5609 = vsel %vm5608, %v5601, %v5605
      %v5610 = vand.u32 2147483647, %v5363
      %vm5611 = vcmp.eq.f32.partialorder %v5610, 8.507059e+37
      %v5612 = vand.u32 %v5363, 2147483648
      %v5613 = vor.u32 1.1754944e-38, %v5612
      %v5614 = vsel %vm5611, %v5613, %v5609
      %v5615 = vmul.f32 1.0, %v5614
      %v5616 = vrcp.pop %v5366
      %v5617 = vmul.f32 %v5366, %v5616
      %v5618 = vsub.f32 1.0, %v5617
      %v5619 = vmul.f32 %v5616, %v5618
      %v5620 = vadd.f32 %v5616, %v5619
      %vm5621 = vweird.f32 %v5366
      %vm5622 = vweird.f32 %v5616
      %vm5623 = vmor %vm5621, %vm5622
      %v5624 = vsel %vm5623, %v5616, %v5620
      %v5625 = vand.u32 2147483647, %v5366
      %vm5626 = vcmp.eq.f32.partialorder %v5625, 8.507059e+37
      %v5627 = vand.u32 %v5366, 2147483648
      %v5628 = vor.u32 1.1754944e-38, %v5627
      %v5629 = vsel %vm5626, %v5628, %v5624
      %v5630 = vmul.f32 1.0, %v5629
      %v5631 = vrcp.pop %v5369
      %v5632 = vmul.f32 %v5369, %v5631
      %v5633 = vsub.f32 1.0, %v5632
      %v5634 = vmul.f32 %v5631, %v5633
      %v5635 = vadd.f32 %v5631, %v5634
      %vm5636 = vweird.f32 %v5369
      %vm5637 = vweird.f32 %v5631
      %vm5638 = vmor %vm5636, %vm5637
      %v5639 = vsel %vm5638, %v5631, %v5635
      %v5640 = vand.u32 2147483647, %v5369
      %vm5641 = vcmp.eq.f32.partialorder %v5640, 8.507059e+37
      %v5642 = vand.u32 %v5369, 2147483648
      %v5643 = vor.u32 1.1754944e-38, %v5642
      %v5644 = vsel %vm5641, %v5643, %v5639
      %v5645 = vmul.f32 1.0, %v5644
      %v5646 = vrcp.pop %v5372
      %v5647 = vmul.f32 %v5372, %v5646
      %v5648 = vsub.f32 1.0, %v5647
      %v5649 = vmul.f32 %v5646, %v5648
      %v5650 = vadd.f32 %v5646, %v5649
      %vm5651 = vweird.f32 %v5372
      %vm5652 = vweird.f32 %v5646
      %vm5653 = vmor %vm5651, %vm5652
      %v5654 = vsel %vm5653, %v5646, %v5650
      %v5655 = vand.u32 2147483647, %v5372
      %vm5656 = vcmp.eq.f32.partialorder %v5655, 8.507059e+37
      %v5657 = vand.u32 %v5372, 2147483648
      %v5658 = vor.u32 1.1754944e-38, %v5657
      %v5659 = vsel %vm5656, %v5658, %v5654
      %v5660 = vmul.f32 1.0, %v5659
      %v5661 = vrcp.pop %v5375
      %v5662 = vmul.f32 %v5375, %v5661
      %v5663 = vsub.f32 1.0, %v5662
      %v5664 = vmul.f32 %v5661, %v5663
      %v5665 = vadd.f32 %v5661, %v5664
      %vm5666 = vweird.f32 %v5375
      %vm5667 = vweird.f32 %v5661
      %vm5668 = vmor %vm5666, %vm5667
      %v5669 = vsel %vm5668, %v5661, %v5665
      %v5670 = vand.u32 2147483647, %v5375
      %vm5671 = vcmp.eq.f32.partialorder %v5670, 8.507059e+37
      %v5672 = vand.u32 %v5375, 2147483648
      %v5673 = vor.u32 1.1754944e-38, %v5672
      %v5674 = vsel %vm5671, %v5673, %v5669
      %v5675 = vmul.f32 1.0, %v5674
      %v5676 = vrcp.pop %v5378
      %v5677 = vmul.f32 %v5378, %v5676
      %v5678 = vsub.f32 1.0, %v5677
      %v5679 = vmul.f32 %v5676, %v5678
      %v5680 = vadd.f32 %v5676, %v5679
      %vm5681 = vweird.f32 %v5378
      %vm5682 = vweird.f32 %v5676
      %vm5683 = vmor %vm5681, %vm5682
      %v5684 = vsel %vm5683, %v5676, %v5680
      %v5685 = vand.u32 2147483647, %v5378
      %vm5686 = vcmp.eq.f32.partialorder %v5685, 8.507059e+37
      %v5687 = vand.u32 %v5378, 2147483648
      %v5688 = vor.u32 1.1754944e-38, %v5687
      %v5689 = vsel %vm5686, %v5688, %v5684
      %v5690 = vmul.f32 1.0, %v5689
      %v5691 = vrcp.pop %v5381
      %v5692 = vmul.f32 %v5381, %v5691
      %v5693 = vsub.f32 1.0, %v5692
      %v5694 = vmul.f32 %v5691, %v5693
      %v5695 = vadd.f32 %v5691, %v5694
      %vm5696 = vweird.f32 %v5381
      %vm5697 = vweird.f32 %v5691
      %vm5698 = vmor %vm5696, %vm5697
      %v5699 = vsel %vm5698, %v5691, %v5695
      %v5700 = vand.u32 2147483647, %v5381
      %vm5701 = vcmp.eq.f32.partialorder %v5700, 8.507059e+37
      %v5702 = vand.u32 %v5381, 2147483648
      %v5703 = vor.u32 1.1754944e-38, %v5702
      %v5704 = vsel %vm5701, %v5703, %v5699
      %v5705 = vmul.f32 1.0, %v5704
      %v5706 = vrcp.pop %v5384
      %v5707 = vmul.f32 %v5384, %v5706
      %v5708 = vsub.f32 1.0, %v5707
      %v5709 = vmul.f32 %v5706, %v5708
      %v5710 = vadd.f32 %v5706, %v5709
      %vm5711 = vweird.f32 %v5384
      %vm5712 = vweird.f32 %v5706
      %vm5713 = vmor %vm5711, %vm5712
      %v5714 = vsel %vm5713, %v5706, %v5710
      %v5715 = vand.u32 2147483647, %v5384
      %vm5716 = vcmp.eq.f32.partialorder %v5715, 8.507059e+37
      %v5717 = vand.u32 %v5384, 2147483648
      %v5718 = vor.u32 1.1754944e-38, %v5717
      %v5719 = vsel %vm5716, %v5718, %v5714
      %v5720 = vmul.f32 1.0, %v5719
      %v5721 = vrcp.pop %v5387
      %v5722 = vmul.f32 %v5387, %v5721
      %v5723 = vsub.f32 1.0, %v5722
      %v5724 = vmul.f32 %v5721, %v5723
      %v5725 = vadd.f32 %v5721, %v5724
      %vm5726 = vweird.f32 %v5387
      %vm5727 = vweird.f32 %v5721
      %vm5728 = vmor %vm5726, %vm5727
      %v5729 = vsel %vm5728, %v5721, %v5725
      %v5730 = vand.u32 2147483647, %v5387
      %vm5731 = vcmp.eq.f32.partialorder %v5730, 8.507059e+37
      %v5732 = vand.u32 %v5387, 2147483648
      %v5733 = vor.u32 1.1754944e-38, %v5732
      %v5734 = vsel %vm5731, %v5733, %v5729
      %v5735 = vmul.f32 1.0, %v5734
      %v5736 = vrcp.pop %v5390
      %v5737 = vmul.f32 %v5390, %v5736
      %v5738 = vsub.f32 1.0, %v5737
      %v5739 = vmul.f32 %v5736, %v5738
      %v5740 = vadd.f32 %v5736, %v5739
      %vm5741 = vweird.f32 %v5390
      %vm5742 = vweird.f32 %v5736
      %vm5743 = vmor %vm5741, %vm5742
      %v5744 = vsel %vm5743, %v5736, %v5740
      %v5745 = vand.u32 2147483647, %v5390
      %vm5746 = vcmp.eq.f32.partialorder %v5745, 8.507059e+37
      %v5747 = vand.u32 %v5390, 2147483648
      %v5748 = vor.u32 1.1754944e-38, %v5747
      %v5749 = vsel %vm5746, %v5748, %v5744
      %v5750 = vmul.f32 1.0, %v5749
      %v5751 = vrcp.pop %v5393
      %v5752 = vmul.f32 %v5393, %v5751
      %v5753 = vsub.f32 1.0, %v5752
      %v5754 = vmul.f32 %v5751, %v5753
      %v5755 = vadd.f32 %v5751, %v5754
      %vm5756 = vweird.f32 %v5393
      %vm5757 = vweird.f32 %v5751
      %vm5758 = vmor %vm5756, %vm5757
      %v5759 = vsel %vm5758, %v5751, %v5755
      %v5760 = vand.u32 2147483647, %v5393
      %vm5761 = vcmp.eq.f32.partialorder %v5760, 8.507059e+37
      %v5762 = vand.u32 %v5393, 2147483648
      %v5763 = vor.u32 1.1754944e-38, %v5762
      %v5764 = vsel %vm5761, %v5763, %v5759
      %v5765 = vmul.f32 1.0, %v5764
      %v5766 = vrcp.pop %v5396
      %v5767 = vmul.f32 %v5396, %v5766
      %v5768 = vsub.f32 1.0, %v5767
      %v5769 = vmul.f32 %v5766, %v5768
      %v5770 = vadd.f32 %v5766, %v5769
      %vm5771 = vweird.f32 %v5396
      %vm5772 = vweird.f32 %v5766
      %vm5773 = vmor %vm5771, %vm5772
      %v5774 = vsel %vm5773, %v5766, %v5770
      %v5775 = vand.u32 2147483647, %v5396
      %vm5776 = vcmp.eq.f32.partialorder %v5775, 8.507059e+37
      %v5777 = vand.u32 %v5396, 2147483648
      %v5778 = vor.u32 1.1754944e-38, %v5777
      %v5779 = vsel %vm5776, %v5778, %v5774
      %v5780 = vmul.f32 1.0, %v5779
      %v5781 = vrcp.pop %v5399
      %v5782 = vmul.f32 %v5399, %v5781
      %v5783 = vsub.f32 1.0, %v5782
      %v5784 = vmul.f32 %v5781, %v5783
      %v5785 = vadd.f32 %v5781, %v5784
      %vm5786 = vweird.f32 %v5399
      %vm5787 = vweird.f32 %v5781
      %vm5788 = vmor %vm5786, %vm5787
      %v5789 = vsel %vm5788, %v5781, %v5785
      %v5790 = vand.u32 2147483647, %v5399
      %vm5791 = vcmp.eq.f32.partialorder %v5790, 8.507059e+37
      %v5792 = vand.u32 %v5399, 2147483648
      %v5793 = vor.u32 1.1754944e-38, %v5792
      %v5794 = vsel %vm5791, %v5793, %v5789
      %v5795 = vmul.f32 1.0, %v5794
      %v5796 = vrcp.pop %v5402
      %v5797 = vmul.f32 %v5402, %v5796
      %v5798 = vsub.f32 1.0, %v5797
      %v5799 = vmul.f32 %v5796, %v5798
      %v5800 = vadd.f32 %v5796, %v5799
      %vm5801 = vweird.f32 %v5402
      %vm5802 = vweird.f32 %v5796
      %vm5803 = vmor %vm5801, %vm5802
      %v5804 = vsel %vm5803, %v5796, %v5800
      %v5805 = vand.u32 2147483647, %v5402
      %vm5806 = vcmp.eq.f32.partialorder %v5805, 8.507059e+37
      %v5807 = vand.u32 %v5402, 2147483648
      %v5808 = vor.u32 1.1754944e-38, %v5807
      %v5809 = vsel %vm5806, %v5808, %v5804
      %v5810 = vmul.f32 1.0, %v5809
      %v5811 = vrcp.pop %v5405
      %v5812 = vmul.f32 %v5405, %v5811
      %v5813 = vsub.f32 1.0, %v5812
      %v5814 = vmul.f32 %v5811, %v5813
      %v5815 = vadd.f32 %v5811, %v5814
      %vm5816 = vweird.f32 %v5405
      %vm5817 = vweird.f32 %v5811
      %vm5818 = vmor %vm5816, %vm5817
      %v5819 = vsel %vm5818, %v5811, %v5815
      %v5820 = vand.u32 2147483647, %v5405
      %vm5821 = vcmp.eq.f32.partialorder %v5820, 8.507059e+37
      %v5822 = vand.u32 %v5405, 2147483648
      %v5823 = vor.u32 1.1754944e-38, %v5822
      %v5824 = vsel %vm5821, %v5823, %v5819
      %v5825 = vmul.f32 1.0, %v5824
      %v5826 = vrcp.pop %v5408
      %v5827 = vmul.f32 %v5408, %v5826
      %v5828 = vsub.f32 1.0, %v5827
      %v5829 = vmul.f32 %v5826, %v5828
      %v5830 = vadd.f32 %v5826, %v5829
      %vm5831 = vweird.f32 %v5408
      %vm5832 = vweird.f32 %v5826
      %vm5833 = vmor %vm5831, %vm5832
      %v5834 = vsel %vm5833, %v5826, %v5830
      %v5835 = vand.u32 2147483647, %v5408
      %vm5836 = vcmp.eq.f32.partialorder %v5835, 8.507059e+37
      %v5837 = vand.u32 %v5408, 2147483648
      %v5838 = vor.u32 1.1754944e-38, %v5837
      %v5839 = vsel %vm5836, %v5838, %v5834
      %v5840 = vmul.f32 1.0, %v5839
      %v5841 = vrcp.pop %v5411
      %v5842 = vmul.f32 %v5411, %v5841
      %v5843 = vsub.f32 1.0, %v5842
      %v5844 = vmul.f32 %v5841, %v5843
      %v5845 = vadd.f32 %v5841, %v5844
      %vm5846 = vweird.f32 %v5411
      %vm5847 = vweird.f32 %v5841
      %vm5848 = vmor %vm5846, %vm5847
      %v5849 = vsel %vm5848, %v5841, %v5845
      %v5850 = vand.u32 2147483647, %v5411
      %vm5851 = vcmp.eq.f32.partialorder %v5850, 8.507059e+37
      %v5852 = vand.u32 %v5411, 2147483648
      %v5853 = vor.u32 1.1754944e-38, %v5852
      %v5854 = vsel %vm5851, %v5853, %v5849
      %v5855 = vmul.f32 1.0, %v5854
      %v5856 = vrcp.pop %v5414
      %v5857 = vmul.f32 %v5414, %v5856
      %v5858 = vsub.f32 1.0, %v5857
      %v5859 = vmul.f32 %v5856, %v5858
      %v5860 = vadd.f32 %v5856, %v5859
      %vm5861 = vweird.f32 %v5414
      %vm5862 = vweird.f32 %v5856
      %vm5863 = vmor %vm5861, %vm5862
      %v5864 = vsel %vm5863, %v5856, %v5860
      %v5865 = vand.u32 2147483647, %v5414
      %vm5866 = vcmp.eq.f32.partialorder %v5865, 8.507059e+37
      %v5867 = vand.u32 %v5414, 2147483648
      %v5868 = vor.u32 1.1754944e-38, %v5867
      %v5869 = vsel %vm5866, %v5868, %v5864
      %v5870 = vmul.f32 1.0, %v5869
      %v5871 = vrcp.pop %v5417
      %v5872 = vmul.f32 %v5417, %v5871
      %v5873 = vsub.f32 1.0, %v5872
      %v5874 = vmul.f32 %v5871, %v5873
      %v5875 = vadd.f32 %v5871, %v5874
      %vm5876 = vweird.f32 %v5417
      %vm5877 = vweird.f32 %v5871
      %vm5878 = vmor %vm5876, %vm5877
      %v5879 = vsel %vm5878, %v5871, %v5875
      %v5880 = vand.u32 2147483647, %v5417
      %vm5881 = vcmp.eq.f32.partialorder %v5880, 8.507059e+37
      %v5882 = vand.u32 %v5417, 2147483648
      %v5883 = vor.u32 1.1754944e-38, %v5882
      %v5884 = vsel %vm5881, %v5883, %v5879
      %v5885 = vmul.f32 1.0, %v5884
      %v5886 = vrcp.pop %v5420
      %v5887 = vmul.f32 %v5420, %v5886
      %v5888 = vsub.f32 1.0, %v5887
      %v5889 = vmul.f32 %v5886, %v5888
      %v5890 = vadd.f32 %v5886, %v5889
      %vm5891 = vweird.f32 %v5420
      %vm5892 = vweird.f32 %v5886
      %vm5893 = vmor %vm5891, %vm5892
      %v5894 = vsel %vm5893, %v5886, %v5890
      %v5895 = vand.u32 2147483647, %v5420
      %vm5896 = vcmp.eq.f32.partialorder %v5895, 8.507059e+37
      %v5897 = vand.u32 %v5420, 2147483648
      %v5898 = vor.u32 1.1754944e-38, %v5897
      %v5899 = vsel %vm5896, %v5898, %v5894
      %v5900 = vmul.f32 1.0, %v5899
      %v5901 = vmul.f32 %v5262, %v5435
      %v5902 = vmul.f32 %v5264, %v5450
      %v5903 = vmul.f32 %v5266, %v5465
      %v5904 = vmul.f32 %v5268, %v5480
      %v5905 = vmul.f32 %v5270, %v5495
      %v5906 = vmul.f32 %v5272, %v5510
      %v5907 = vmul.f32 %v5274, %v5525
      %v5908 = vmul.f32 %v5276, %v5540
      %v5909 = vmul.f32 %v5278, %v5555
      %v5910 = vmul.f32 %v5280, %v5570
      %v5911 = vmul.f32 %v5282, %v5585
      %v5912 = vmul.f32 %v5284, %v5600
      %v5913 = vmul.f32 %v5286, %v5615
      %v5914 = vmul.f32 %v5288, %v5630
      %v5915 = vmul.f32 %v5290, %v5645
      %v5916 = vmul.f32 %v5292, %v5660
      %v5917 = vmul.f32 %v5294, %v5675
      %v5918 = vmul.f32 %v5296, %v5690
      %v5919 = vmul.f32 %v5298, %v5705
      %v5920 = vmul.f32 %v5300, %v5720
      %v5921 = vmul.f32 %v5302, %v5735
      %v5922 = vmul.f32 %v5304, %v5750
      %v5923 = vmul.f32 %v5306, %v5765
      %v5924 = vmul.f32 %v5308, %v5780
      %v5925 = vmul.f32 %v5310, %v5795
      %v5926 = vmul.f32 %v5312, %v5810
      %v5927 = vmul.f32 %v5314, %v5825
      %v5928 = vmul.f32 %v5316, %v5840
      %v5929 = vmul.f32 %v5318, %v5855
      %v5930 = vmul.f32 %v5320, %v5870
      %v5931 = vmul.f32 %v5322, %v5885
      %v5932 = vmul.f32 %v5324, %v5900
      %v5933 = vpack.c.bf16 %v5901, %v5901
      %v5934 = vpack.c.bf16 %v5902, %v5902
      %v5935 = vpack.c.bf16 %v5903, %v5903
      %v5936 = vpack.c.bf16 %v5904, %v5904
      %v5937 = vpack.c.bf16 %v5905, %v5905
      %v5938 = vpack.c.bf16 %v5906, %v5906
      %v5939 = vpack.c.bf16 %v5907, %v5907
      %v5940 = vpack.c.bf16 %v5908, %v5908
      %v5941 = vpack.c.bf16 %v5909, %v5909
      %v5942 = vpack.c.bf16 %v5910, %v5910
      %v5943 = vpack.c.bf16 %v5911, %v5911
      %v5944 = vpack.c.bf16 %v5912, %v5912
      %v5945 = vpack.c.bf16 %v5913, %v5913
      %v5946 = vpack.c.bf16 %v5914, %v5914
      %v5947 = vpack.c.bf16 %v5915, %v5915
      %v5948 = vpack.c.bf16 %v5916, %v5916
      %v5949 = vpack.c.bf16 %v5917, %v5917
      %v5950 = vpack.c.bf16 %v5918, %v5918
      %v5951 = vpack.c.bf16 %v5919, %v5919
      %v5952 = vpack.c.bf16 %v5920, %v5920
      %v5953 = vpack.c.bf16 %v5921, %v5921
      %v5954 = vpack.c.bf16 %v5922, %v5922
      %v5955 = vpack.c.bf16 %v5923, %v5923
      %v5956 = vpack.c.bf16 %v5924, %v5924
      %v5957 = vpack.c.bf16 %v5925, %v5925
      %v5958 = vpack.c.bf16 %v5926, %v5926
      %v5959 = vpack.c.bf16 %v5927, %v5927
      %v5960 = vpack.c.bf16 %v5928, %v5928
      %v5961 = vpack.c.bf16 %v5929, %v5929
      %v5962 = vpack.c.bf16 %v5930, %v5930
      %v5963 = vpack.c.bf16 %v5931, %v5931
      %v5964 = vpack.c.bf16 %v5932, %v5932
      %v5973 = vunpack.c.l.b16 %v5933
      %v5974 = vunpack.c.l.b16 %v5934
      %v5975 = vunpack.c.l.b16 %v5935
      %v5976 = vunpack.c.l.b16 %v5936
      %v5977 = vunpack.c.l.b16 %v5937
      %v5978 = vunpack.c.l.b16 %v5938
      %v5979 = vunpack.c.l.b16 %v5939
      %v5980 = vunpack.c.l.b16 %v5940
      %v5981 = vpack.c.b16 %v5974, %v5973
      %v5982 = vpack.c.b16 %v5976, %v5975
      %v5983 = vpack.c.b16 %v5978, %v5977
      %v5984 = vpack.c.b16 %v5980, %v5979
      %v5993 = vunpack.c.l.b16 %v1759
      %v5994 = vunpack.c.l.b16 %v1761
      %v5995 = vunpack.c.l.b16 %v1763
      %v5996 = vunpack.c.l.b16 %v1765
      %v5997 = vunpack.c.l.b16 %v1767
      %v5998 = vunpack.c.l.b16 %v1769
      %v5999 = vunpack.c.l.b16 %v1771
      %v6000 = vunpack.c.l.b16 %v1773
      %v6001 = vpack.c.b16 %v5994, %v5993
      %v6002 = vpack.c.b16 %v5996, %v5995
      %v6003 = vpack.c.b16 %v5998, %v5997
      %v6004 = vpack.c.b16 %v6000, %v5999
      %v6010 = vsel %vm555, %v5981, 0
      %v6013 = vsel %vm555, %v5982, 0
      %v6016 = vsel %vm555, %v5983, 0
      %v6019 = vsel %vm555, %v5984, 0
      %6021 = vmatpush.bf16.msra.mxu0 0
      %6022 = vmatpush.bf16.msra.mxu0 0
      %6023 = vmatpush.bf16.msra.mxu0 0
      %6024 = vmatpush.bf16.msra.mxu0 0
      %6025 = vmatpush.bf16.msra.mxu0 %v6004
      %6026 = vmatpush.bf16.msra.mxu0 %v6003
      %6027 = vmatpush.bf16.msra.mxu0 %v6002
      %6028 = vmatpush.bf16.msra.mxu0 %v6001
      %6029 = vmatmul.bf16.gmra.mxu0 %v6010
      %v6030 = vpop.f32.mrf.mxu0
      %v6031 = vadd.f32 0.0, %v6030
      %v6032 = vpop.f32.mrf.mxu0
      %v6033 = vadd.f32 0.0, %v6032
      %6034 = vmatmul.bf16.gmra.mxu0 %v6013
      %v6035 = vpop.f32.mrf.mxu0
      %v6036 = vadd.f32 0.0, %v6035
      %v6037 = vpop.f32.mrf.mxu0
      %v6038 = vadd.f32 0.0, %v6037
      %6039 = vmatmul.bf16.gmra.mxu0 %v6016
      %v6040 = vpop.f32.mrf.mxu0
      %v6041 = vadd.f32 0.0, %v6040
      %v6042 = vpop.f32.mrf.mxu0
      %v6043 = vadd.f32 0.0, %v6042
      %6044 = vmatmul.bf16.gmra.mxu0 %v6019
      %v6045 = vpop.f32.mrf.mxu0
      %v6046 = vadd.f32 0.0, %v6045
      %v6047 = vpop.f32.mrf.mxu0
      %v6048 = vadd.f32 0.0, %v6047
      %6049 = vdwg.mxu0
      %v6058 = vunpack.c.l.b16 %v5941
      %v6059 = vunpack.c.l.b16 %v5942
      %v6060 = vunpack.c.l.b16 %v5943
      %v6061 = vunpack.c.l.b16 %v5944
      %v6062 = vunpack.c.l.b16 %v5945
      %v6063 = vunpack.c.l.b16 %v5946
      %v6064 = vunpack.c.l.b16 %v5947
      %v6065 = vunpack.c.l.b16 %v5948
      %v6066 = vpack.c.b16 %v6059, %v6058
      %v6067 = vpack.c.b16 %v6061, %v6060
      %v6068 = vpack.c.b16 %v6063, %v6062
      %v6069 = vpack.c.b16 %v6065, %v6064
      %v6078 = vunpack.c.l.b16 %v1775
      %v6079 = vunpack.c.l.b16 %v1777
      %v6080 = vunpack.c.l.b16 %v1779
      %v6081 = vunpack.c.l.b16 %v1781
      %v6082 = vunpack.c.l.b16 %v1783
      %v6083 = vunpack.c.l.b16 %v1785
      %v6084 = vunpack.c.l.b16 %v1787
      %v6085 = vunpack.c.l.b16 %v1789
      %v6086 = vpack.c.b16 %v6079, %v6078
      %v6087 = vpack.c.b16 %v6081, %v6080
      %v6088 = vpack.c.b16 %v6083, %v6082
      %v6089 = vpack.c.b16 %v6085, %v6084
      %v6095 = vsel %vm555, %v6066, 0
      %v6098 = vsel %vm555, %v6067, 0
      %v6101 = vsel %vm555, %v6068, 0
      %v6104 = vsel %vm555, %v6069, 0
      %6106 = vmatpush.bf16.msra.mxu0 0
      %6107 = vmatpush.bf16.msra.mxu0 0
      %6108 = vmatpush.bf16.msra.mxu0 0
      %6109 = vmatpush.bf16.msra.mxu0 0
      %6110 = vmatpush.bf16.msra.mxu0 %v6089
      %6111 = vmatpush.bf16.msra.mxu0 %v6088
      %6112 = vmatpush.bf16.msra.mxu0 %v6087
      %6113 = vmatpush.bf16.msra.mxu0 %v6086
      %6114 = vmatmul.bf16.gmra.mxu0 %v6095
      %v6115 = vpop.f32.mrf.mxu0
      %v6116 = vadd.f32 0.0, %v6115
      %v6117 = vpop.f32.mrf.mxu0
      %v6118 = vadd.f32 0.0, %v6117
      %6119 = vmatmul.bf16.gmra.mxu0 %v6098
      %v6120 = vpop.f32.mrf.mxu0
      %v6121 = vadd.f32 0.0, %v6120
      %v6122 = vpop.f32.mrf.mxu0
      %v6123 = vadd.f32 0.0, %v6122
      %6124 = vmatmul.bf16.gmra.mxu0 %v6101
      %v6125 = vpop.f32.mrf.mxu0
      %v6126 = vadd.f32 0.0, %v6125
      %v6127 = vpop.f32.mrf.mxu0
      %v6128 = vadd.f32 0.0, %v6127
      %6129 = vmatmul.bf16.gmra.mxu0 %v6104
      %v6130 = vpop.f32.mrf.mxu0
      %v6131 = vadd.f32 0.0, %v6130
      %v6132 = vpop.f32.mrf.mxu0
      %v6133 = vadd.f32 0.0, %v6132
      %6134 = vdwg.mxu0
      %v6143 = vunpack.c.l.b16 %v5949
      %v6144 = vunpack.c.l.b16 %v5950
      %v6145 = vunpack.c.l.b16 %v5951
      %v6146 = vunpack.c.l.b16 %v5952
      %v6147 = vunpack.c.l.b16 %v5953
      %v6148 = vunpack.c.l.b16 %v5954
      %v6149 = vunpack.c.l.b16 %v5955
      %v6150 = vunpack.c.l.b16 %v5956
      %v6151 = vpack.c.b16 %v6144, %v6143
      %v6152 = vpack.c.b16 %v6146, %v6145
      %v6153 = vpack.c.b16 %v6148, %v6147
      %v6154 = vpack.c.b16 %v6150, %v6149
      %v6163 = vunpack.c.l.b16 %v1791
      %v6164 = vunpack.c.l.b16 %v1793
      %v6165 = vunpack.c.l.b16 %v1795
      %v6166 = vunpack.c.l.b16 %v1797
      %v6167 = vunpack.c.l.b16 %v1799
      %v6168 = vunpack.c.l.b16 %v1801
      %v6169 = vunpack.c.l.b16 %v1803
      %v6170 = vunpack.c.l.b16 %v1805
      %v6171 = vpack.c.b16 %v6164, %v6163
      %v6172 = vpack.c.b16 %v6166, %v6165
      %v6173 = vpack.c.b16 %v6168, %v6167
      %v6174 = vpack.c.b16 %v6170, %v6169
      %v6180 = vsel %vm555, %v6151, 0
      %v6183 = vsel %vm555, %v6152, 0
      %v6186 = vsel %vm555, %v6153, 0
      %v6189 = vsel %vm555, %v6154, 0
      %6191 = vmatpush.bf16.msra.mxu0 0
      %6192 = vmatpush.bf16.msra.mxu0 0
      %6193 = vmatpush.bf16.msra.mxu0 0
      %6194 = vmatpush.bf16.msra.mxu0 0
      %6195 = vmatpush.bf16.msra.mxu0 %v6174
      %6196 = vmatpush.bf16.msra.mxu0 %v6173
      %6197 = vmatpush.bf16.msra.mxu0 %v6172
      %6198 = vmatpush.bf16.msra.mxu0 %v6171
      %6199 = vmatmul.bf16.gmra.mxu0 %v6180
      %v6200 = vpop.f32.mrf.mxu0
      %v6201 = vadd.f32 0.0, %v6200
      %v6202 = vpop.f32.mrf.mxu0
      %v6203 = vadd.f32 0.0, %v6202
      %6204 = vmatmul.bf16.gmra.mxu0 %v6183
      %v6205 = vpop.f32.mrf.mxu0
      %v6206 = vadd.f32 0.0, %v6205
      %v6207 = vpop.f32.mrf.mxu0
      %v6208 = vadd.f32 0.0, %v6207
      %6209 = vmatmul.bf16.gmra.mxu0 %v6186
      %v6210 = vpop.f32.mrf.mxu0
      %v6211 = vadd.f32 0.0, %v6210
      %v6212 = vpop.f32.mrf.mxu0
      %v6213 = vadd.f32 0.0, %v6212
      %6214 = vmatmul.bf16.gmra.mxu0 %v6189
      %v6215 = vpop.f32.mrf.mxu0
      %v6216 = vadd.f32 0.0, %v6215
      %v6217 = vpop.f32.mrf.mxu0
      %v6218 = vadd.f32 0.0, %v6217
      %6219 = vdwg.mxu0
      %v6228 = vunpack.c.l.b16 %v5957
      %v6229 = vunpack.c.l.b16 %v5958
      %v6230 = vunpack.c.l.b16 %v5959
      %v6231 = vunpack.c.l.b16 %v5960
      %v6232 = vunpack.c.l.b16 %v5961
      %v6233 = vunpack.c.l.b16 %v5962
      %v6234 = vunpack.c.l.b16 %v5963
      %v6235 = vunpack.c.l.b16 %v5964
      %v6236 = vpack.c.b16 %v6229, %v6228
      %v6237 = vpack.c.b16 %v6231, %v6230
      %v6238 = vpack.c.b16 %v6233, %v6232
      %v6239 = vpack.c.b16 %v6235, %v6234
      %v6248 = vunpack.c.l.b16 %v1807
      %v6249 = vunpack.c.l.b16 %v1809
      %v6250 = vunpack.c.l.b16 %v1811
      %v6251 = vunpack.c.l.b16 %v1813
      %v6252 = vunpack.c.l.b16 %v1815
      %v6253 = vunpack.c.l.b16 %v1817
      %v6254 = vunpack.c.l.b16 %v1819
      %v6255 = vunpack.c.l.b16 %v1821
      %v6256 = vpack.c.b16 %v6249, %v6248
      %v6257 = vpack.c.b16 %v6251, %v6250
      %v6258 = vpack.c.b16 %v6253, %v6252
      %v6259 = vpack.c.b16 %v6255, %v6254
      %v6265 = vsel %vm555, %v6236, 0
      %v6268 = vsel %vm555, %v6237, 0
      %v6271 = vsel %vm555, %v6238, 0
      %v6274 = vsel %vm555, %v6239, 0
      %6276 = vmatpush.bf16.msra.mxu0 0
      %6277 = vmatpush.bf16.msra.mxu0 0
      %6278 = vmatpush.bf16.msra.mxu0 0
      %6279 = vmatpush.bf16.msra.mxu0 0
      %6280 = vmatpush.bf16.msra.mxu0 %v6259
      %6281 = vmatpush.bf16.msra.mxu0 %v6258
      %6282 = vmatpush.bf16.msra.mxu0 %v6257
      %6283 = vmatpush.bf16.msra.mxu0 %v6256
      %6284 = vmatmul.bf16.gmra.mxu0 %v6265
      %v6285 = vpop.f32.mrf.mxu0
      %v6286 = vadd.f32 0.0, %v6285
      %v6287 = vpop.f32.mrf.mxu0
      %v6288 = vadd.f32 0.0, %v6287
      %6289 = vmatmul.bf16.gmra.mxu0 %v6268
      %v6290 = vpop.f32.mrf.mxu0
      %v6291 = vadd.f32 0.0, %v6290
      %v6292 = vpop.f32.mrf.mxu0
      %v6293 = vadd.f32 0.0, %v6292
      %6294 = vmatmul.bf16.gmra.mxu0 %v6271
      %v6295 = vpop.f32.mrf.mxu0
      %v6296 = vadd.f32 0.0, %v6295
      %v6297 = vpop.f32.mrf.mxu0
      %v6298 = vadd.f32 0.0, %v6297
      %6299 = vmatmul.bf16.gmra.mxu0 %v6274
      %v6300 = vpop.f32.mrf.mxu0
      %v6301 = vadd.f32 0.0, %v6300
      %v6302 = vpop.f32.mrf.mxu0
      %v6303 = vadd.f32 0.0, %v6302
      %6304 = vdwg.mxu0
      %v6305 = vadd.f32 %v4574, %v6031
      %v6306 = vadd.f32 %v4576, %v6033
      %v6307 = vadd.f32 %v4579, %v6036
      %v6308 = vadd.f32 %v4581, %v6038
      %v6309 = vadd.f32 %v4584, %v6041
      %v6310 = vadd.f32 %v4586, %v6043
      %v6311 = vadd.f32 %v4589, %v6046
      %v6312 = vadd.f32 %v4591, %v6048
      %v6313 = vadd.f32 %v4659, %v6116
      %v6314 = vadd.f32 %v4661, %v6118
      %v6315 = vadd.f32 %v4664, %v6121
      %v6316 = vadd.f32 %v4666, %v6123
      %v6317 = vadd.f32 %v4669, %v6126
      %v6318 = vadd.f32 %v4671, %v6128
      %v6319 = vadd.f32 %v4674, %v6131
      %v6320 = vadd.f32 %v4676, %v6133
      %v6321 = vadd.f32 %v4744, %v6201
      %v6322 = vadd.f32 %v4746, %v6203
      %v6323 = vadd.f32 %v4749, %v6206
      %v6324 = vadd.f32 %v4751, %v6208
      %v6325 = vadd.f32 %v4754, %v6211
      %v6326 = vadd.f32 %v4756, %v6213
      %v6327 = vadd.f32 %v4759, %v6216
      %v6328 = vadd.f32 %v4761, %v6218
      %v6329 = vadd.f32 %v4829, %v6286
      %v6330 = vadd.f32 %v4831, %v6288
      %v6331 = vadd.f32 %v4834, %v6291
      %v6332 = vadd.f32 %v4836, %v6293
      %v6333 = vadd.f32 %v4839, %v6296
      %v6334 = vadd.f32 %v4841, %v6298
      %v6335 = vadd.f32 %v4844, %v6301
      %v6336 = vadd.f32 %v4846, %v6303
      %s6337 = scalar_lea.vmem %s5, 192
      %v6338 = vld [vmem:[%s6337] sm:$0xff]
      %v6339 = vld [vmem:[%s6337 + $0x8] sm:$0xff]
      %v6340 = vld [vmem:[%s6337 + $0x10] sm:$0xff]
      %v6341 = vld [vmem:[%s6337 + $0x18] sm:$0xff]
      %v6342 = vld [vmem:[%s6337 + $0x20] sm:$0xff]
      %v6343 = vld [vmem:[%s6337 + $0x28] sm:$0xff]
      %v6344 = vld [vmem:[%s6337 + $0x30] sm:$0xff]
      %v6345 = vld [vmem:[%s6337 + $0x38] sm:$0xff]
      %6346 = vrot.lane.b32.xlu0 %v1846, 80
      %v6347 = vpop.permute.xlu0 %6346
      %6348 = vrot.lane.b32.xlu0 %v1847, 80
      %v6349 = vpop.permute.xlu0 %6348
      %6350 = vrot.lane.b32.xlu0 %v1848, 80
      %v6351 = vpop.permute.xlu0 %6350
      %6352 = vrot.lane.b32.xlu0 %v1849, 80
      %v6353 = vpop.permute.xlu0 %6352
      %6354 = vrot.lane.b32.xlu0 %v1846, 16
      %v6355 = vpop.permute.xlu0 %6354
      %6356 = vrot.lane.b32.xlu0 %v1847, 16
      %v6357 = vpop.permute.xlu0 %6356
      %6358 = vrot.lane.b32.xlu0 %v1848, 16
      %v6359 = vpop.permute.xlu0 %6358
      %6360 = vrot.lane.b32.xlu0 %v1849, 16
      %v6361 = vpop.permute.xlu0 %6360
      %v6363 = vsel %vm1858, %v6347, 0
      %v6366 = vsel %vm1858, %v6349, 0
      %v6369 = vsel %vm1858, %v6351, 0
      %v6372 = vsel %vm1858, %v6353, 0
      %v6375 = vsel %vm1858, %v6355, 0
      %v6378 = vsel %vm1858, %v6357, 0
      %v6381 = vsel %vm1858, %v6359, 0
      %v6384 = vsel %vm1858, %v6361, 0
      %6386 = vmatpush.bf16.xpose.msra.mxu0 0
      %6387 = vmatpush.bf16.xpose.msra.mxu0 0
      %6388 = vmatpush.bf16.xpose.msra.mxu0 0
      %6389 = vmatpush.bf16.xpose.msra.mxu0 0
      %6390 = vmatpush.bf16.xpose.msra.mxu0 %v6384
      %6391 = vmatpush.bf16.xpose.msra.mxu0 %v6381
      %6392 = vmatpush.bf16.xpose.msra.mxu0 %v6378
      %6393 = vmatpush.bf16.xpose.msra.mxu0 %v6375
      %6394 = vmatmul.bf16.gmra.mxu0 %v6363
      %v6395 = vpop.f32.mrf.mxu0
      %v6396 = vadd.f32 %v6338, %v6395
      %v6397 = vpop.f32.mrf.mxu0
      %v6398 = vadd.f32 %v6339, %v6397
      %6399 = vmatmul.bf16.gmra.mxu0 %v6366
      %v6400 = vpop.f32.mrf.mxu0
      %v6401 = vadd.f32 %v6340, %v6400
      %v6402 = vpop.f32.mrf.mxu0
      %v6403 = vadd.f32 %v6341, %v6402
      %6404 = vmatmul.bf16.gmra.mxu0 %v6369
      %v6405 = vpop.f32.mrf.mxu0
      %v6406 = vadd.f32 %v6342, %v6405
      %v6407 = vpop.f32.mrf.mxu0
      %v6408 = vadd.f32 %v6343, %v6407
      %6409 = vmatmul.bf16.gmra.mxu0 %v6372
      %v6410 = vpop.f32.mrf.mxu0
      %v6411 = vadd.f32 %v6344, %v6410
      %v6412 = vpop.f32.mrf.mxu0
      %v6413 = vadd.f32 %v6345, %v6412
      %6414 = vdwg.mxu0
      %6415 = vrot.lane.b32.xlu0 %v1928, 80
      %v6416 = vpop.permute.xlu0 %6415
      %6417 = vrot.lane.b32.xlu0 %v1929, 80
      %v6418 = vpop.permute.xlu0 %6417
      %6419 = vrot.lane.b32.xlu0 %v1930, 80
      %v6420 = vpop.permute.xlu0 %6419
      %6421 = vrot.lane.b32.xlu0 %v1931, 80
      %v6422 = vpop.permute.xlu0 %6421
      %6423 = vrot.lane.b32.xlu0 %v1928, 16
      %v6424 = vpop.permute.xlu0 %6423
      %6425 = vrot.lane.b32.xlu0 %v1929, 16
      %v6426 = vpop.permute.xlu0 %6425
      %6427 = vrot.lane.b32.xlu0 %v1930, 16
      %v6428 = vpop.permute.xlu0 %6427
      %6429 = vrot.lane.b32.xlu0 %v1931, 16
      %v6430 = vpop.permute.xlu0 %6429
      %v6432 = vsel %vm1858, %v6416, 0
      %v6435 = vsel %vm1858, %v6418, 0
      %v6438 = vsel %vm1858, %v6420, 0
      %v6441 = vsel %vm1858, %v6422, 0
      %v6444 = vsel %vm1858, %v6424, 0
      %v6447 = vsel %vm1858, %v6426, 0
      %v6450 = vsel %vm1858, %v6428, 0
      %v6453 = vsel %vm1858, %v6430, 0
      %6455 = vmatpush.bf16.xpose.msra.mxu0 0
      %6456 = vmatpush.bf16.xpose.msra.mxu0 0
      %6457 = vmatpush.bf16.xpose.msra.mxu0 0
      %6458 = vmatpush.bf16.xpose.msra.mxu0 0
      %6459 = vmatpush.bf16.xpose.msra.mxu0 %v6453
      %6460 = vmatpush.bf16.xpose.msra.mxu0 %v6450
      %6461 = vmatpush.bf16.xpose.msra.mxu0 %v6447
      %6462 = vmatpush.bf16.xpose.msra.mxu0 %v6444
      %6463 = vmatmul.bf16.gmra.mxu0 %v6432
      %v6464 = vpop.f32.mrf.mxu0
      %v6465 = vadd.f32 %v6338, %v6464
      %v6466 = vpop.f32.mrf.mxu0
      %v6467 = vadd.f32 %v6339, %v6466
      %6468 = vmatmul.bf16.gmra.mxu0 %v6435
      %v6469 = vpop.f32.mrf.mxu0
      %v6470 = vadd.f32 %v6340, %v6469
      %v6471 = vpop.f32.mrf.mxu0
      %v6472 = vadd.f32 %v6341, %v6471
      %6473 = vmatmul.bf16.gmra.mxu0 %v6438
      %v6474 = vpop.f32.mrf.mxu0
      %v6475 = vadd.f32 %v6342, %v6474
      %v6476 = vpop.f32.mrf.mxu0
      %v6477 = vadd.f32 %v6343, %v6476
      %6478 = vmatmul.bf16.gmra.mxu0 %v6441
      %v6479 = vpop.f32.mrf.mxu0
      %v6480 = vadd.f32 %v6344, %v6479
      %v6481 = vpop.f32.mrf.mxu0
      %v6482 = vadd.f32 %v6345, %v6481
      %6483 = vdwg.mxu0
      %6484 = vrot.lane.b32.xlu0 %v2009, 80
      %v6485 = vpop.permute.xlu0 %6484
      %6486 = vrot.lane.b32.xlu0 %v2010, 80
      %v6487 = vpop.permute.xlu0 %6486
      %6488 = vrot.lane.b32.xlu0 %v2011, 80
      %v6489 = vpop.permute.xlu0 %6488
      %6490 = vrot.lane.b32.xlu0 %v2012, 80
      %v6491 = vpop.permute.xlu0 %6490
      %6492 = vrot.lane.b32.xlu0 %v2009, 16
      %v6493 = vpop.permute.xlu0 %6492
      %6494 = vrot.lane.b32.xlu0 %v2010, 16
      %v6495 = vpop.permute.xlu0 %6494
      %6496 = vrot.lane.b32.xlu0 %v2011, 16
      %v6497 = vpop.permute.xlu0 %6496
      %6498 = vrot.lane.b32.xlu0 %v2012, 16
      %v6499 = vpop.permute.xlu0 %6498
      %v6501 = vsel %vm1858, %v6485, 0
      %v6504 = vsel %vm1858, %v6487, 0
      %v6507 = vsel %vm1858, %v6489, 0
      %v6510 = vsel %vm1858, %v6491, 0
      %v6513 = vsel %vm1858, %v6493, 0
      %v6516 = vsel %vm1858, %v6495, 0
      %v6519 = vsel %vm1858, %v6497, 0
      %v6522 = vsel %vm1858, %v6499, 0
      %6524 = vmatpush.bf16.xpose.msra.mxu0 0
      %6525 = vmatpush.bf16.xpose.msra.mxu0 0
      %6526 = vmatpush.bf16.xpose.msra.mxu0 0
      %6527 = vmatpush.bf16.xpose.msra.mxu0 0
      %6528 = vmatpush.bf16.xpose.msra.mxu0 %v6522
      %6529 = vmatpush.bf16.xpose.msra.mxu0 %v6519
      %6530 = vmatpush.bf16.xpose.msra.mxu0 %v6516
      %6531 = vmatpush.bf16.xpose.msra.mxu0 %v6513
      %6532 = vmatmul.bf16.gmra.mxu0 %v6501
      %v6533 = vpop.f32.mrf.mxu0
      %v6534 = vadd.f32 %v6338, %v6533
      %v6535 = vpop.f32.mrf.mxu0
      %v6536 = vadd.f32 %v6339, %v6535
      %6537 = vmatmul.bf16.gmra.mxu0 %v6504
      %v6538 = vpop.f32.mrf.mxu0
      %v6539 = vadd.f32 %v6340, %v6538
      %v6540 = vpop.f32.mrf.mxu0
      %v6541 = vadd.f32 %v6341, %v6540
      %6542 = vmatmul.bf16.gmra.mxu0 %v6507
      %v6543 = vpop.f32.mrf.mxu0
      %v6544 = vadd.f32 %v6342, %v6543
      %v6545 = vpop.f32.mrf.mxu0
      %v6546 = vadd.f32 %v6343, %v6545
      %6547 = vmatmul.bf16.gmra.mxu0 %v6510
      %v6548 = vpop.f32.mrf.mxu0
      %v6549 = vadd.f32 %v6344, %v6548
      %v6550 = vpop.f32.mrf.mxu0
      %v6551 = vadd.f32 %v6345, %v6550
      %6552 = vdwg.mxu0
      %6553 = vrot.lane.b32.xlu0 %v2090, 80
      %v6554 = vpop.permute.xlu0 %6553
      %6555 = vrot.lane.b32.xlu0 %v2091, 80
      %v6556 = vpop.permute.xlu0 %6555
      %6557 = vrot.lane.b32.xlu0 %v2092, 80
      %v6558 = vpop.permute.xlu0 %6557
      %6559 = vrot.lane.b32.xlu0 %v2093, 80
      %v6560 = vpop.permute.xlu0 %6559
      %6561 = vrot.lane.b32.xlu0 %v2090, 16
      %v6562 = vpop.permute.xlu0 %6561
      %6563 = vrot.lane.b32.xlu0 %v2091, 16
      %v6564 = vpop.permute.xlu0 %6563
      %6565 = vrot.lane.b32.xlu0 %v2092, 16
      %v6566 = vpop.permute.xlu0 %6565
      %6567 = vrot.lane.b32.xlu0 %v2093, 16
      %v6568 = vpop.permute.xlu0 %6567
      %v6570 = vsel %vm1858, %v6554, 0
      %v6573 = vsel %vm1858, %v6556, 0
      %v6576 = vsel %vm1858, %v6558, 0
      %v6579 = vsel %vm1858, %v6560, 0
      %v6582 = vsel %vm1858, %v6562, 0
      %v6585 = vsel %vm1858, %v6564, 0
      %v6588 = vsel %vm1858, %v6566, 0
      %v6591 = vsel %vm1858, %v6568, 0
      %6593 = vmatpush.bf16.xpose.msra.mxu0 0
      %6594 = vmatpush.bf16.xpose.msra.mxu0 0
      %6595 = vmatpush.bf16.xpose.msra.mxu0 0
      %6596 = vmatpush.bf16.xpose.msra.mxu0 0
      %6597 = vmatpush.bf16.xpose.msra.mxu0 %v6591
      %6598 = vmatpush.bf16.xpose.msra.mxu0 %v6588
      %6599 = vmatpush.bf16.xpose.msra.mxu0 %v6585
      %6600 = vmatpush.bf16.xpose.msra.mxu0 %v6582
      %6601 = vmatmul.bf16.gmra.mxu0 %v6570
      %v6602 = vpop.f32.mrf.mxu0
      %v6603 = vadd.f32 %v6338, %v6602
      %v6604 = vpop.f32.mrf.mxu0
      %v6605 = vadd.f32 %v6339, %v6604
      %6606 = vmatmul.bf16.gmra.mxu0 %v6573
      %v6607 = vpop.f32.mrf.mxu0
      %v6608 = vadd.f32 %v6340, %v6607
      %v6609 = vpop.f32.mrf.mxu0
      %v6610 = vadd.f32 %v6341, %v6609
      %6611 = vmatmul.bf16.gmra.mxu0 %v6576
      %v6612 = vpop.f32.mrf.mxu0
      %v6613 = vadd.f32 %v6342, %v6612
      %v6614 = vpop.f32.mrf.mxu0
      %v6615 = vadd.f32 %v6343, %v6614
      %6616 = vmatmul.bf16.gmra.mxu0 %v6579
      %v6617 = vpop.f32.mrf.mxu0
      %v6618 = vadd.f32 %v6344, %v6617
      %v6619 = vpop.f32.mrf.mxu0
      %v6620 = vadd.f32 %v6345, %v6619
      %6621 = vdwg.mxu0
      %v6622 = vsel %vm555, %v6396, -inf
      %6623 = vmax.xlane.f32.xlu0 %v6622
      %v6624 = vpop.xlane.xlu0 %6623
      %v6625 = vsel %vm555, %v6398, -inf
      %6626 = vmax.xlane.f32.xlu0 %v6625
      %v6627 = vpop.xlane.xlu0 %6626
      %v6628 = vsel %vm555, %v6401, -inf
      %6629 = vmax.xlane.f32.xlu0 %v6628
      %v6630 = vpop.xlane.xlu0 %6629
      %v6631 = vsel %vm555, %v6403, -inf
      %6632 = vmax.xlane.f32.xlu0 %v6631
      %v6633 = vpop.xlane.xlu0 %6632
      %v6634 = vsel %vm555, %v6406, -inf
      %6635 = vmax.xlane.f32.xlu0 %v6634
      %v6636 = vpop.xlane.xlu0 %6635
      %v6637 = vsel %vm555, %v6408, -inf
      %6638 = vmax.xlane.f32.xlu0 %v6637
      %v6639 = vpop.xlane.xlu0 %6638
      %v6640 = vsel %vm555, %v6411, -inf
      %6641 = vmax.xlane.f32.xlu0 %v6640
      %v6642 = vpop.xlane.xlu0 %6641
      %v6643 = vsel %vm555, %v6413, -inf
      %6644 = vmax.xlane.f32.xlu0 %v6643
      %v6645 = vpop.xlane.xlu0 %6644
      %v6646 = vsel %vm555, %v6465, -inf
      %6647 = vmax.xlane.f32.xlu0 %v6646
      %v6648 = vpop.xlane.xlu0 %6647
      %v6649 = vsel %vm555, %v6467, -inf
      %6650 = vmax.xlane.f32.xlu0 %v6649
      %v6651 = vpop.xlane.xlu0 %6650
      %v6652 = vsel %vm555, %v6470, -inf
      %6653 = vmax.xlane.f32.xlu0 %v6652
      %v6654 = vpop.xlane.xlu0 %6653
      %v6655 = vsel %vm555, %v6472, -inf
      %6656 = vmax.xlane.f32.xlu0 %v6655
      %v6657 = vpop.xlane.xlu0 %6656
      %v6658 = vsel %vm555, %v6475, -inf
      %6659 = vmax.xlane.f32.xlu0 %v6658
      %v6660 = vpop.xlane.xlu0 %6659
      %v6661 = vsel %vm555, %v6477, -inf
      %6662 = vmax.xlane.f32.xlu0 %v6661
      %v6663 = vpop.xlane.xlu0 %6662
      %v6664 = vsel %vm555, %v6480, -inf
      %6665 = vmax.xlane.f32.xlu0 %v6664
      %v6666 = vpop.xlane.xlu0 %6665
      %v6667 = vsel %vm555, %v6482, -inf
      %6668 = vmax.xlane.f32.xlu0 %v6667
      %v6669 = vpop.xlane.xlu0 %6668
      %v6670 = vsel %vm555, %v6534, -inf
      %6671 = vmax.xlane.f32.xlu0 %v6670
      %v6672 = vpop.xlane.xlu0 %6671
      %v6673 = vsel %vm555, %v6536, -inf
      %6674 = vmax.xlane.f32.xlu0 %v6673
      %v6675 = vpop.xlane.xlu0 %6674
      %v6676 = vsel %vm555, %v6539, -inf
      %6677 = vmax.xlane.f32.xlu0 %v6676
      %v6678 = vpop.xlane.xlu0 %6677
      %v6679 = vsel %vm555, %v6541, -inf
      %6680 = vmax.xlane.f32.xlu0 %v6679
      %v6681 = vpop.xlane.xlu0 %6680
      %v6682 = vsel %vm555, %v6544, -inf
      %6683 = vmax.xlane.f32.xlu0 %v6682
      %v6684 = vpop.xlane.xlu0 %6683
      %v6685 = vsel %vm555, %v6546, -inf
      %6686 = vmax.xlane.f32.xlu0 %v6685
      %v6687 = vpop.xlane.xlu0 %6686
      %v6688 = vsel %vm555, %v6549, -inf
      %6689 = vmax.xlane.f32.xlu0 %v6688
      %v6690 = vpop.xlane.xlu0 %6689
      %v6691 = vsel %vm555, %v6551, -inf
      %6692 = vmax.xlane.f32.xlu0 %v6691
      %v6693 = vpop.xlane.xlu0 %6692
      %v6694 = vsel %vm555, %v6603, -inf
      %6695 = vmax.xlane.f32.xlu0 %v6694
      %v6696 = vpop.xlane.xlu0 %6695
      %v6697 = vsel %vm555, %v6605, -inf
      %6698 = vmax.xlane.f32.xlu0 %v6697
      %v6699 = vpop.xlane.xlu0 %6698
      %v6700 = vsel %vm555, %v6608, -inf
      %6701 = vmax.xlane.f32.xlu0 %v6700
      %v6702 = vpop.xlane.xlu0 %6701
      %v6703 = vsel %vm555, %v6610, -inf
      %6704 = vmax.xlane.f32.xlu0 %v6703
      %v6705 = vpop.xlane.xlu0 %6704
      %v6706 = vsel %vm555, %v6613, -inf
      %6707 = vmax.xlane.f32.xlu0 %v6706
      %v6708 = vpop.xlane.xlu0 %6707
      %v6709 = vsel %vm555, %v6615, -inf
      %6710 = vmax.xlane.f32.xlu0 %v6709
      %v6711 = vpop.xlane.xlu0 %6710
      %v6712 = vsel %vm555, %v6618, -inf
      %6713 = vmax.xlane.f32.xlu0 %v6712
      %v6714 = vpop.xlane.xlu0 %6713
      %v6715 = vsel %vm555, %v6620, -inf
      %6716 = vmax.xlane.f32.xlu0 %v6715
      %v6717 = vpop.xlane.xlu0 %6716
      %v6718 = vsub.f32 %v6396, %v6624
      %v6719 = vsub.f32 %v6398, %v6627
      %v6720 = vsub.f32 %v6401, %v6630
      %v6721 = vsub.f32 %v6403, %v6633
      %v6722 = vsub.f32 %v6406, %v6636
      %v6723 = vsub.f32 %v6408, %v6639
      %v6724 = vsub.f32 %v6411, %v6642
      %v6725 = vsub.f32 %v6413, %v6645
      %v6726 = vsub.f32 %v6465, %v6648
      %v6727 = vsub.f32 %v6467, %v6651
      %v6728 = vsub.f32 %v6470, %v6654
      %v6729 = vsub.f32 %v6472, %v6657
      %v6730 = vsub.f32 %v6475, %v6660
      %v6731 = vsub.f32 %v6477, %v6663
      %v6732 = vsub.f32 %v6480, %v6666
      %v6733 = vsub.f32 %v6482, %v6669
      %v6734 = vsub.f32 %v6534, %v6672
      %v6735 = vsub.f32 %v6536, %v6675
      %v6736 = vsub.f32 %v6539, %v6678
      %v6737 = vsub.f32 %v6541, %v6681
      %v6738 = vsub.f32 %v6544, %v6684
      %v6739 = vsub.f32 %v6546, %v6687
      %v6740 = vsub.f32 %v6549, %v6690
      %v6741 = vsub.f32 %v6551, %v6693
      %v6742 = vsub.f32 %v6603, %v6696
      %v6743 = vsub.f32 %v6605, %v6699
      %v6744 = vsub.f32 %v6608, %v6702
      %v6745 = vsub.f32 %v6610, %v6705
      %v6746 = vsub.f32 %v6613, %v6708
      %v6747 = vsub.f32 %v6615, %v6711
      %v6748 = vsub.f32 %v6618, %v6714
      %v6749 = vsub.f32 %v6620, %v6717
      %v6750 = vmul.f32 %v6718, 1.442695
      %v6751 = vpow.pop %v6750
      %v6752 = vmul.f32 %v6719, 1.442695
      %v6753 = vpow.pop %v6752
      %v6754 = vmul.f32 %v6720, 1.442695
      %v6755 = vpow.pop %v6754
      %v6756 = vmul.f32 %v6721, 1.442695
      %v6757 = vpow.pop %v6756
      %v6758 = vmul.f32 %v6722, 1.442695
      %v6759 = vpow.pop %v6758
      %v6760 = vmul.f32 %v6723, 1.442695
      %v6761 = vpow.pop %v6760
      %v6762 = vmul.f32 %v6724, 1.442695
      %v6763 = vpow.pop %v6762
      %v6764 = vmul.f32 %v6725, 1.442695
      %v6765 = vpow.pop %v6764
      %v6766 = vmul.f32 %v6726, 1.442695
      %v6767 = vpow.pop %v6766
      %v6768 = vmul.f32 %v6727, 1.442695
      %v6769 = vpow.pop %v6768
      %v6770 = vmul.f32 %v6728, 1.442695
      %v6771 = vpow.pop %v6770
      %v6772 = vmul.f32 %v6729, 1.442695
      %v6773 = vpow.pop %v6772
      %v6774 = vmul.f32 %v6730, 1.442695
      %v6775 = vpow.pop %v6774
      %v6776 = vmul.f32 %v6731, 1.442695
      %v6777 = vpow.pop %v6776
      %v6778 = vmul.f32 %v6732, 1.442695
      %v6779 = vpow.pop %v6778
      %v6780 = vmul.f32 %v6733, 1.442695
      %v6781 = vpow.pop %v6780
      %v6782 = vmul.f32 %v6734, 1.442695
      %v6783 = vpow.pop %v6782
      %v6784 = vmul.f32 %v6735, 1.442695
      %v6785 = vpow.pop %v6784
      %v6786 = vmul.f32 %v6736, 1.442695
      %v6787 = vpow.pop %v6786
      %v6788 = vmul.f32 %v6737, 1.442695
      %v6789 = vpow.pop %v6788
      %v6790 = vmul.f32 %v6738, 1.442695
      %v6791 = vpow.pop %v6790
      %v6792 = vmul.f32 %v6739, 1.442695
      %v6793 = vpow.pop %v6792
      %v6794 = vmul.f32 %v6740, 1.442695
      %v6795 = vpow.pop %v6794
      %v6796 = vmul.f32 %v6741, 1.442695
      %v6797 = vpow.pop %v6796
      %v6798 = vmul.f32 %v6742, 1.442695
      %v6799 = vpow.pop %v6798
      %v6800 = vmul.f32 %v6743, 1.442695
      %v6801 = vpow.pop %v6800
      %v6802 = vmul.f32 %v6744, 1.442695
      %v6803 = vpow.pop %v6802
      %v6804 = vmul.f32 %v6745, 1.442695
      %v6805 = vpow.pop %v6804
      %v6806 = vmul.f32 %v6746, 1.442695
      %v6807 = vpow.pop %v6806
      %v6808 = vmul.f32 %v6747, 1.442695
      %v6809 = vpow.pop %v6808
      %v6810 = vmul.f32 %v6748, 1.442695
      %v6811 = vpow.pop %v6810
      %v6812 = vmul.f32 %v6749, 1.442695
      %v6813 = vpow.pop %v6812
      %v6814 = vsel %vm555, %v6751, 0.0
      %6815 = vadd.xlane.f32.xlu0 %v6814
      %v6816 = vpop.xlane.xlu0 %6815
      %v6817 = vsel %vm555, %v6753, 0.0
      %6818 = vadd.xlane.f32.xlu0 %v6817
      %v6819 = vpop.xlane.xlu0 %6818
      %v6820 = vsel %vm555, %v6755, 0.0
      %6821 = vadd.xlane.f32.xlu0 %v6820
      %v6822 = vpop.xlane.xlu0 %6821
      %v6823 = vsel %vm555, %v6757, 0.0
      %6824 = vadd.xlane.f32.xlu0 %v6823
      %v6825 = vpop.xlane.xlu0 %6824
      %v6826 = vsel %vm555, %v6759, 0.0
      %6827 = vadd.xlane.f32.xlu0 %v6826
      %v6828 = vpop.xlane.xlu0 %6827
      %v6829 = vsel %vm555, %v6761, 0.0
      %6830 = vadd.xlane.f32.xlu0 %v6829
      %v6831 = vpop.xlane.xlu0 %6830
      %v6832 = vsel %vm555, %v6763, 0.0
      %6833 = vadd.xlane.f32.xlu0 %v6832
      %v6834 = vpop.xlane.xlu0 %6833
      %v6835 = vsel %vm555, %v6765, 0.0
      %6836 = vadd.xlane.f32.xlu0 %v6835
      %v6837 = vpop.xlane.xlu0 %6836
      %v6838 = vsel %vm555, %v6767, 0.0
      %6839 = vadd.xlane.f32.xlu0 %v6838
      %v6840 = vpop.xlane.xlu0 %6839
      %v6841 = vsel %vm555, %v6769, 0.0
      %6842 = vadd.xlane.f32.xlu0 %v6841
      %v6843 = vpop.xlane.xlu0 %6842
      %v6844 = vsel %vm555, %v6771, 0.0
      %6845 = vadd.xlane.f32.xlu0 %v6844
      %v6846 = vpop.xlane.xlu0 %6845
      %v6847 = vsel %vm555, %v6773, 0.0
      %6848 = vadd.xlane.f32.xlu0 %v6847
      %v6849 = vpop.xlane.xlu0 %6848
      %v6850 = vsel %vm555, %v6775, 0.0
      %6851 = vadd.xlane.f32.xlu0 %v6850
      %v6852 = vpop.xlane.xlu0 %6851
      %v6853 = vsel %vm555, %v6777, 0.0
      %6854 = vadd.xlane.f32.xlu0 %v6853
      %v6855 = vpop.xlane.xlu0 %6854
      %v6856 = vsel %vm555, %v6779, 0.0
      %6857 = vadd.xlane.f32.xlu0 %v6856
      %v6858 = vpop.xlane.xlu0 %6857
      %v6859 = vsel %vm555, %v6781, 0.0
      %6860 = vadd.xlane.f32.xlu0 %v6859
      %v6861 = vpop.xlane.xlu0 %6860
      %v6862 = vsel %vm555, %v6783, 0.0
      %6863 = vadd.xlane.f32.xlu0 %v6862
      %v6864 = vpop.xlane.xlu0 %6863
      %v6865 = vsel %vm555, %v6785, 0.0
      %6866 = vadd.xlane.f32.xlu0 %v6865
      %v6867 = vpop.xlane.xlu0 %6866
      %v6868 = vsel %vm555, %v6787, 0.0
      %6869 = vadd.xlane.f32.xlu0 %v6868
      %v6870 = vpop.xlane.xlu0 %6869
      %v6871 = vsel %vm555, %v6789, 0.0
      %6872 = vadd.xlane.f32.xlu0 %v6871
      %v6873 = vpop.xlane.xlu0 %6872
      %v6874 = vsel %vm555, %v6791, 0.0
      %6875 = vadd.xlane.f32.xlu0 %v6874
      %v6876 = vpop.xlane.xlu0 %6875
      %v6877 = vsel %vm555, %v6793, 0.0
      %6878 = vadd.xlane.f32.xlu0 %v6877
      %v6879 = vpop.xlane.xlu0 %6878
      %v6880 = vsel %vm555, %v6795, 0.0
      %6881 = vadd.xlane.f32.xlu0 %v6880
      %v6882 = vpop.xlane.xlu0 %6881
      %v6883 = vsel %vm555, %v6797, 0.0
      %6884 = vadd.xlane.f32.xlu0 %v6883
      %v6885 = vpop.xlane.xlu0 %6884
      %v6886 = vsel %vm555, %v6799, 0.0
      %6887 = vadd.xlane.f32.xlu0 %v6886
      %v6888 = vpop.xlane.xlu0 %6887
      %v6889 = vsel %vm555, %v6801, 0.0
      %6890 = vadd.xlane.f32.xlu0 %v6889
      %v6891 = vpop.xlane.xlu0 %6890
      %v6892 = vsel %vm555, %v6803, 0.0
      %6893 = vadd.xlane.f32.xlu0 %v6892
      %v6894 = vpop.xlane.xlu0 %6893
      %v6895 = vsel %vm555, %v6805, 0.0
      %6896 = vadd.xlane.f32.xlu0 %v6895
      %v6897 = vpop.xlane.xlu0 %6896
      %v6898 = vsel %vm555, %v6807, 0.0
      %6899 = vadd.xlane.f32.xlu0 %v6898
      %v6900 = vpop.xlane.xlu0 %6899
      %v6901 = vsel %vm555, %v6809, 0.0
      %6902 = vadd.xlane.f32.xlu0 %v6901
      %v6903 = vpop.xlane.xlu0 %6902
      %v6904 = vsel %vm555, %v6811, 0.0
      %6905 = vadd.xlane.f32.xlu0 %v6904
      %v6906 = vpop.xlane.xlu0 %6905
      %v6907 = vsel %vm555, %v6813, 0.0
      %6908 = vadd.xlane.f32.xlu0 %v6907
      %v6909 = vpop.xlane.xlu0 %6908
      %v6910 = vrcp.pop %v6816
      %v6911 = vmul.f32 %v6816, %v6910
      %v6912 = vsub.f32 1.0, %v6911
      %v6913 = vmul.f32 %v6910, %v6912
      %v6914 = vadd.f32 %v6910, %v6913
      %vm6915 = vweird.f32 %v6816
      %vm6916 = vweird.f32 %v6910
      %vm6917 = vmor %vm6915, %vm6916
      %v6918 = vsel %vm6917, %v6910, %v6914
      %v6919 = vand.u32 2147483647, %v6816
      %vm6920 = vcmp.eq.f32.partialorder %v6919, 8.507059e+37
      %v6921 = vand.u32 %v6816, 2147483648
      %v6922 = vor.u32 1.1754944e-38, %v6921
      %v6923 = vsel %vm6920, %v6922, %v6918
      %v6924 = vmul.f32 1.0, %v6923
      %v6925 = vrcp.pop %v6819
      %v6926 = vmul.f32 %v6819, %v6925
      %v6927 = vsub.f32 1.0, %v6926
      %v6928 = vmul.f32 %v6925, %v6927
      %v6929 = vadd.f32 %v6925, %v6928
      %vm6930 = vweird.f32 %v6819
      %vm6931 = vweird.f32 %v6925
      %vm6932 = vmor %vm6930, %vm6931
      %v6933 = vsel %vm6932, %v6925, %v6929
      %v6934 = vand.u32 2147483647, %v6819
      %vm6935 = vcmp.eq.f32.partialorder %v6934, 8.507059e+37
      %v6936 = vand.u32 %v6819, 2147483648
      %v6937 = vor.u32 1.1754944e-38, %v6936
      %v6938 = vsel %vm6935, %v6937, %v6933
      %v6939 = vmul.f32 1.0, %v6938
      %v6940 = vrcp.pop %v6822
      %v6941 = vmul.f32 %v6822, %v6940
      %v6942 = vsub.f32 1.0, %v6941
      %v6943 = vmul.f32 %v6940, %v6942
      %v6944 = vadd.f32 %v6940, %v6943
      %vm6945 = vweird.f32 %v6822
      %vm6946 = vweird.f32 %v6940
      %vm6947 = vmor %vm6945, %vm6946
      %v6948 = vsel %vm6947, %v6940, %v6944
      %v6949 = vand.u32 2147483647, %v6822
      %vm6950 = vcmp.eq.f32.partialorder %v6949, 8.507059e+37
      %v6951 = vand.u32 %v6822, 2147483648
      %v6952 = vor.u32 1.1754944e-38, %v6951
      %v6953 = vsel %vm6950, %v6952, %v6948
      %v6954 = vmul.f32 1.0, %v6953
      %v6955 = vrcp.pop %v6825
      %v6956 = vmul.f32 %v6825, %v6955
      %v6957 = vsub.f32 1.0, %v6956
      %v6958 = vmul.f32 %v6955, %v6957
      %v6959 = vadd.f32 %v6955, %v6958
      %vm6960 = vweird.f32 %v6825
      %vm6961 = vweird.f32 %v6955
      %vm6962 = vmor %vm6960, %vm6961
      %v6963 = vsel %vm6962, %v6955, %v6959
      %v6964 = vand.u32 2147483647, %v6825
      %vm6965 = vcmp.eq.f32.partialorder %v6964, 8.507059e+37
      %v6966 = vand.u32 %v6825, 2147483648
      %v6967 = vor.u32 1.1754944e-38, %v6966
      %v6968 = vsel %vm6965, %v6967, %v6963
      %v6969 = vmul.f32 1.0, %v6968
      %v6970 = vrcp.pop %v6828
      %v6971 = vmul.f32 %v6828, %v6970
      %v6972 = vsub.f32 1.0, %v6971
      %v6973 = vmul.f32 %v6970, %v6972
      %v6974 = vadd.f32 %v6970, %v6973
      %vm6975 = vweird.f32 %v6828
      %vm6976 = vweird.f32 %v6970
      %vm6977 = vmor %vm6975, %vm6976
      %v6978 = vsel %vm6977, %v6970, %v6974
      %v6979 = vand.u32 2147483647, %v6828
      %vm6980 = vcmp.eq.f32.partialorder %v6979, 8.507059e+37
      %v6981 = vand.u32 %v6828, 2147483648
      %v6982 = vor.u32 1.1754944e-38, %v6981
      %v6983 = vsel %vm6980, %v6982, %v6978
      %v6984 = vmul.f32 1.0, %v6983
      %v6985 = vrcp.pop %v6831
      %v6986 = vmul.f32 %v6831, %v6985
      %v6987 = vsub.f32 1.0, %v6986
      %v6988 = vmul.f32 %v6985, %v6987
      %v6989 = vadd.f32 %v6985, %v6988
      %vm6990 = vweird.f32 %v6831
      %vm6991 = vweird.f32 %v6985
      %vm6992 = vmor %vm6990, %vm6991
      %v6993 = vsel %vm6992, %v6985, %v6989
      %v6994 = vand.u32 2147483647, %v6831
      %vm6995 = vcmp.eq.f32.partialorder %v6994, 8.507059e+37
      %v6996 = vand.u32 %v6831, 2147483648
      %v6997 = vor.u32 1.1754944e-38, %v6996
      %v6998 = vsel %vm6995, %v6997, %v6993
      %v6999 = vmul.f32 1.0, %v6998
      %v7000 = vrcp.pop %v6834
      %v7001 = vmul.f32 %v6834, %v7000
      %v7002 = vsub.f32 1.0, %v7001
      %v7003 = vmul.f32 %v7000, %v7002
      %v7004 = vadd.f32 %v7000, %v7003
      %vm7005 = vweird.f32 %v6834
      %vm7006 = vweird.f32 %v7000
      %vm7007 = vmor %vm7005, %vm7006
      %v7008 = vsel %vm7007, %v7000, %v7004
      %v7009 = vand.u32 2147483647, %v6834
      %vm7010 = vcmp.eq.f32.partialorder %v7009, 8.507059e+37
      %v7011 = vand.u32 %v6834, 2147483648
      %v7012 = vor.u32 1.1754944e-38, %v7011
      %v7013 = vsel %vm7010, %v7012, %v7008
      %v7014 = vmul.f32 1.0, %v7013
      %v7015 = vrcp.pop %v6837
      %v7016 = vmul.f32 %v6837, %v7015
      %v7017 = vsub.f32 1.0, %v7016
      %v7018 = vmul.f32 %v7015, %v7017
      %v7019 = vadd.f32 %v7015, %v7018
      %vm7020 = vweird.f32 %v6837
      %vm7021 = vweird.f32 %v7015
      %vm7022 = vmor %vm7020, %vm7021
      %v7023 = vsel %vm7022, %v7015, %v7019
      %v7024 = vand.u32 2147483647, %v6837
      %vm7025 = vcmp.eq.f32.partialorder %v7024, 8.507059e+37
      %v7026 = vand.u32 %v6837, 2147483648
      %v7027 = vor.u32 1.1754944e-38, %v7026
      %v7028 = vsel %vm7025, %v7027, %v7023
      %v7029 = vmul.f32 1.0, %v7028
      %v7030 = vrcp.pop %v6840
      %v7031 = vmul.f32 %v6840, %v7030
      %v7032 = vsub.f32 1.0, %v7031
      %v7033 = vmul.f32 %v7030, %v7032
      %v7034 = vadd.f32 %v7030, %v7033
      %vm7035 = vweird.f32 %v6840
      %vm7036 = vweird.f32 %v7030
      %vm7037 = vmor %vm7035, %vm7036
      %v7038 = vsel %vm7037, %v7030, %v7034
      %v7039 = vand.u32 2147483647, %v6840
      %vm7040 = vcmp.eq.f32.partialorder %v7039, 8.507059e+37
      %v7041 = vand.u32 %v6840, 2147483648
      %v7042 = vor.u32 1.1754944e-38, %v7041
      %v7043 = vsel %vm7040, %v7042, %v7038
      %v7044 = vmul.f32 1.0, %v7043
      %v7045 = vrcp.pop %v6843
      %v7046 = vmul.f32 %v6843, %v7045
      %v7047 = vsub.f32 1.0, %v7046
      %v7048 = vmul.f32 %v7045, %v7047
      %v7049 = vadd.f32 %v7045, %v7048
      %vm7050 = vweird.f32 %v6843
      %vm7051 = vweird.f32 %v7045
      %vm7052 = vmor %vm7050, %vm7051
      %v7053 = vsel %vm7052, %v7045, %v7049
      %v7054 = vand.u32 2147483647, %v6843
      %vm7055 = vcmp.eq.f32.partialorder %v7054, 8.507059e+37
      %v7056 = vand.u32 %v6843, 2147483648
      %v7057 = vor.u32 1.1754944e-38, %v7056
      %v7058 = vsel %vm7055, %v7057, %v7053
      %v7059 = vmul.f32 1.0, %v7058
      %v7060 = vrcp.pop %v6846
      %v7061 = vmul.f32 %v6846, %v7060
      %v7062 = vsub.f32 1.0, %v7061
      %v7063 = vmul.f32 %v7060, %v7062
      %v7064 = vadd.f32 %v7060, %v7063
      %vm7065 = vweird.f32 %v6846
      %vm7066 = vweird.f32 %v7060
      %vm7067 = vmor %vm7065, %vm7066
      %v7068 = vsel %vm7067, %v7060, %v7064
      %v7069 = vand.u32 2147483647, %v6846
      %vm7070 = vcmp.eq.f32.partialorder %v7069, 8.507059e+37
      %v7071 = vand.u32 %v6846, 2147483648
      %v7072 = vor.u32 1.1754944e-38, %v7071
      %v7073 = vsel %vm7070, %v7072, %v7068
      %v7074 = vmul.f32 1.0, %v7073
      %v7075 = vrcp.pop %v6849
      %v7076 = vmul.f32 %v6849, %v7075
      %v7077 = vsub.f32 1.0, %v7076
      %v7078 = vmul.f32 %v7075, %v7077
      %v7079 = vadd.f32 %v7075, %v7078
      %vm7080 = vweird.f32 %v6849
      %vm7081 = vweird.f32 %v7075
      %vm7082 = vmor %vm7080, %vm7081
      %v7083 = vsel %vm7082, %v7075, %v7079
      %v7084 = vand.u32 2147483647, %v6849
      %vm7085 = vcmp.eq.f32.partialorder %v7084, 8.507059e+37
      %v7086 = vand.u32 %v6849, 2147483648
      %v7087 = vor.u32 1.1754944e-38, %v7086
      %v7088 = vsel %vm7085, %v7087, %v7083
      %v7089 = vmul.f32 1.0, %v7088
      %v7090 = vrcp.pop %v6852
      %v7091 = vmul.f32 %v6852, %v7090
      %v7092 = vsub.f32 1.0, %v7091
      %v7093 = vmul.f32 %v7090, %v7092
      %v7094 = vadd.f32 %v7090, %v7093
      %vm7095 = vweird.f32 %v6852
      %vm7096 = vweird.f32 %v7090
      %vm7097 = vmor %vm7095, %vm7096
      %v7098 = vsel %vm7097, %v7090, %v7094
      %v7099 = vand.u32 2147483647, %v6852
      %vm7100 = vcmp.eq.f32.partialorder %v7099, 8.507059e+37
      %v7101 = vand.u32 %v6852, 2147483648
      %v7102 = vor.u32 1.1754944e-38, %v7101
      %v7103 = vsel %vm7100, %v7102, %v7098
      %v7104 = vmul.f32 1.0, %v7103
      %v7105 = vrcp.pop %v6855
      %v7106 = vmul.f32 %v6855, %v7105
      %v7107 = vsub.f32 1.0, %v7106
      %v7108 = vmul.f32 %v7105, %v7107
      %v7109 = vadd.f32 %v7105, %v7108
      %vm7110 = vweird.f32 %v6855
      %vm7111 = vweird.f32 %v7105
      %vm7112 = vmor %vm7110, %vm7111
      %v7113 = vsel %vm7112, %v7105, %v7109
      %v7114 = vand.u32 2147483647, %v6855
      %vm7115 = vcmp.eq.f32.partialorder %v7114, 8.507059e+37
      %v7116 = vand.u32 %v6855, 2147483648
      %v7117 = vor.u32 1.1754944e-38, %v7116
      %v7118 = vsel %vm7115, %v7117, %v7113
      %v7119 = vmul.f32 1.0, %v7118
      %v7120 = vrcp.pop %v6858
      %v7121 = vmul.f32 %v6858, %v7120
      %v7122 = vsub.f32 1.0, %v7121
      %v7123 = vmul.f32 %v7120, %v7122
      %v7124 = vadd.f32 %v7120, %v7123
      %vm7125 = vweird.f32 %v6858
      %vm7126 = vweird.f32 %v7120
      %vm7127 = vmor %vm7125, %vm7126
      %v7128 = vsel %vm7127, %v7120, %v7124
      %v7129 = vand.u32 2147483647, %v6858
      %vm7130 = vcmp.eq.f32.partialorder %v7129, 8.507059e+37
      %v7131 = vand.u32 %v6858, 2147483648
      %v7132 = vor.u32 1.1754944e-38, %v7131
      %v7133 = vsel %vm7130, %v7132, %v7128
      %v7134 = vmul.f32 1.0, %v7133
      %v7135 = vrcp.pop %v6861
      %v7136 = vmul.f32 %v6861, %v7135
      %v7137 = vsub.f32 1.0, %v7136
      %v7138 = vmul.f32 %v7135, %v7137
      %v7139 = vadd.f32 %v7135, %v7138
      %vm7140 = vweird.f32 %v6861
      %vm7141 = vweird.f32 %v7135
      %vm7142 = vmor %vm7140, %vm7141
      %v7143 = vsel %vm7142, %v7135, %v7139
      %v7144 = vand.u32 2147483647, %v6861
      %vm7145 = vcmp.eq.f32.partialorder %v7144, 8.507059e+37
      %v7146 = vand.u32 %v6861, 2147483648
      %v7147 = vor.u32 1.1754944e-38, %v7146
      %v7148 = vsel %vm7145, %v7147, %v7143
      %v7149 = vmul.f32 1.0, %v7148
      %v7150 = vrcp.pop %v6864
      %v7151 = vmul.f32 %v6864, %v7150
      %v7152 = vsub.f32 1.0, %v7151
      %v7153 = vmul.f32 %v7150, %v7152
      %v7154 = vadd.f32 %v7150, %v7153
      %vm7155 = vweird.f32 %v6864
      %vm7156 = vweird.f32 %v7150
      %vm7157 = vmor %vm7155, %vm7156
      %v7158 = vsel %vm7157, %v7150, %v7154
      %v7159 = vand.u32 2147483647, %v6864
      %vm7160 = vcmp.eq.f32.partialorder %v7159, 8.507059e+37
      %v7161 = vand.u32 %v6864, 2147483648
      %v7162 = vor.u32 1.1754944e-38, %v7161
      %v7163 = vsel %vm7160, %v7162, %v7158
      %v7164 = vmul.f32 1.0, %v7163
      %v7165 = vrcp.pop %v6867
      %v7166 = vmul.f32 %v6867, %v7165
      %v7167 = vsub.f32 1.0, %v7166
      %v7168 = vmul.f32 %v7165, %v7167
      %v7169 = vadd.f32 %v7165, %v7168
      %vm7170 = vweird.f32 %v6867
      %vm7171 = vweird.f32 %v7165
      %vm7172 = vmor %vm7170, %vm7171
      %v7173 = vsel %vm7172, %v7165, %v7169
      %v7174 = vand.u32 2147483647, %v6867
      %vm7175 = vcmp.eq.f32.partialorder %v7174, 8.507059e+37
      %v7176 = vand.u32 %v6867, 2147483648
      %v7177 = vor.u32 1.1754944e-38, %v7176
      %v7178 = vsel %vm7175, %v7177, %v7173
      %v7179 = vmul.f32 1.0, %v7178
      %v7180 = vrcp.pop %v6870
      %v7181 = vmul.f32 %v6870, %v7180
      %v7182 = vsub.f32 1.0, %v7181
      %v7183 = vmul.f32 %v7180, %v7182
      %v7184 = vadd.f32 %v7180, %v7183
      %vm7185 = vweird.f32 %v6870
      %vm7186 = vweird.f32 %v7180
      %vm7187 = vmor %vm7185, %vm7186
      %v7188 = vsel %vm7187, %v7180, %v7184
      %v7189 = vand.u32 2147483647, %v6870
      %vm7190 = vcmp.eq.f32.partialorder %v7189, 8.507059e+37
      %v7191 = vand.u32 %v6870, 2147483648
      %v7192 = vor.u32 1.1754944e-38, %v7191
      %v7193 = vsel %vm7190, %v7192, %v7188
      %v7194 = vmul.f32 1.0, %v7193
      %v7195 = vrcp.pop %v6873
      %v7196 = vmul.f32 %v6873, %v7195
      %v7197 = vsub.f32 1.0, %v7196
      %v7198 = vmul.f32 %v7195, %v7197
      %v7199 = vadd.f32 %v7195, %v7198
      %vm7200 = vweird.f32 %v6873
      %vm7201 = vweird.f32 %v7195
      %vm7202 = vmor %vm7200, %vm7201
      %v7203 = vsel %vm7202, %v7195, %v7199
      %v7204 = vand.u32 2147483647, %v6873
      %vm7205 = vcmp.eq.f32.partialorder %v7204, 8.507059e+37
      %v7206 = vand.u32 %v6873, 2147483648
      %v7207 = vor.u32 1.1754944e-38, %v7206
      %v7208 = vsel %vm7205, %v7207, %v7203
      %v7209 = vmul.f32 1.0, %v7208
      %v7210 = vrcp.pop %v6876
      %v7211 = vmul.f32 %v6876, %v7210
      %v7212 = vsub.f32 1.0, %v7211
      %v7213 = vmul.f32 %v7210, %v7212
      %v7214 = vadd.f32 %v7210, %v7213
      %vm7215 = vweird.f32 %v6876
      %vm7216 = vweird.f32 %v7210
      %vm7217 = vmor %vm7215, %vm7216
      %v7218 = vsel %vm7217, %v7210, %v7214
      %v7219 = vand.u32 2147483647, %v6876
      %vm7220 = vcmp.eq.f32.partialorder %v7219, 8.507059e+37
      %v7221 = vand.u32 %v6876, 2147483648
      %v7222 = vor.u32 1.1754944e-38, %v7221
      %v7223 = vsel %vm7220, %v7222, %v7218
      %v7224 = vmul.f32 1.0, %v7223
      %v7225 = vrcp.pop %v6879
      %v7226 = vmul.f32 %v6879, %v7225
      %v7227 = vsub.f32 1.0, %v7226
      %v7228 = vmul.f32 %v7225, %v7227
      %v7229 = vadd.f32 %v7225, %v7228
      %vm7230 = vweird.f32 %v6879
      %vm7231 = vweird.f32 %v7225
      %vm7232 = vmor %vm7230, %vm7231
      %v7233 = vsel %vm7232, %v7225, %v7229
      %v7234 = vand.u32 2147483647, %v6879
      %vm7235 = vcmp.eq.f32.partialorder %v7234, 8.507059e+37
      %v7236 = vand.u32 %v6879, 2147483648
      %v7237 = vor.u32 1.1754944e-38, %v7236
      %v7238 = vsel %vm7235, %v7237, %v7233
      %v7239 = vmul.f32 1.0, %v7238
      %v7240 = vrcp.pop %v6882
      %v7241 = vmul.f32 %v6882, %v7240
      %v7242 = vsub.f32 1.0, %v7241
      %v7243 = vmul.f32 %v7240, %v7242
      %v7244 = vadd.f32 %v7240, %v7243
      %vm7245 = vweird.f32 %v6882
      %vm7246 = vweird.f32 %v7240
      %vm7247 = vmor %vm7245, %vm7246
      %v7248 = vsel %vm7247, %v7240, %v7244
      %v7249 = vand.u32 2147483647, %v6882
      %vm7250 = vcmp.eq.f32.partialorder %v7249, 8.507059e+37
      %v7251 = vand.u32 %v6882, 2147483648
      %v7252 = vor.u32 1.1754944e-38, %v7251
      %v7253 = vsel %vm7250, %v7252, %v7248
      %v7254 = vmul.f32 1.0, %v7253
      %v7255 = vrcp.pop %v6885
      %v7256 = vmul.f32 %v6885, %v7255
      %v7257 = vsub.f32 1.0, %v7256
      %v7258 = vmul.f32 %v7255, %v7257
      %v7259 = vadd.f32 %v7255, %v7258
      %vm7260 = vweird.f32 %v6885
      %vm7261 = vweird.f32 %v7255
      %vm7262 = vmor %vm7260, %vm7261
      %v7263 = vsel %vm7262, %v7255, %v7259
      %v7264 = vand.u32 2147483647, %v6885
      %vm7265 = vcmp.eq.f32.partialorder %v7264, 8.507059e+37
      %v7266 = vand.u32 %v6885, 2147483648
      %v7267 = vor.u32 1.1754944e-38, %v7266
      %v7268 = vsel %vm7265, %v7267, %v7263
      %v7269 = vmul.f32 1.0, %v7268
      %v7270 = vrcp.pop %v6888
      %v7271 = vmul.f32 %v6888, %v7270
      %v7272 = vsub.f32 1.0, %v7271
      %v7273 = vmul.f32 %v7270, %v7272
      %v7274 = vadd.f32 %v7270, %v7273
      %vm7275 = vweird.f32 %v6888
      %vm7276 = vweird.f32 %v7270
      %vm7277 = vmor %vm7275, %vm7276
      %v7278 = vsel %vm7277, %v7270, %v7274
      %v7279 = vand.u32 2147483647, %v6888
      %vm7280 = vcmp.eq.f32.partialorder %v7279, 8.507059e+37
      %v7281 = vand.u32 %v6888, 2147483648
      %v7282 = vor.u32 1.1754944e-38, %v7281
      %v7283 = vsel %vm7280, %v7282, %v7278
      %v7284 = vmul.f32 1.0, %v7283
      %v7285 = vrcp.pop %v6891
      %v7286 = vmul.f32 %v6891, %v7285
      %v7287 = vsub.f32 1.0, %v7286
      %v7288 = vmul.f32 %v7285, %v7287
      %v7289 = vadd.f32 %v7285, %v7288
      %vm7290 = vweird.f32 %v6891
      %vm7291 = vweird.f32 %v7285
      %vm7292 = vmor %vm7290, %vm7291
      %v7293 = vsel %vm7292, %v7285, %v7289
      %v7294 = vand.u32 2147483647, %v6891
      %vm7295 = vcmp.eq.f32.partialorder %v7294, 8.507059e+37
      %v7296 = vand.u32 %v6891, 2147483648
      %v7297 = vor.u32 1.1754944e-38, %v7296
      %v7298 = vsel %vm7295, %v7297, %v7293
      %v7299 = vmul.f32 1.0, %v7298
      %v7300 = vrcp.pop %v6894
      %v7301 = vmul.f32 %v6894, %v7300
      %v7302 = vsub.f32 1.0, %v7301
      %v7303 = vmul.f32 %v7300, %v7302
      %v7304 = vadd.f32 %v7300, %v7303
      %vm7305 = vweird.f32 %v6894
      %vm7306 = vweird.f32 %v7300
      %vm7307 = vmor %vm7305, %vm7306
      %v7308 = vsel %vm7307, %v7300, %v7304
      %v7309 = vand.u32 2147483647, %v6894
      %vm7310 = vcmp.eq.f32.partialorder %v7309, 8.507059e+37
      %v7311 = vand.u32 %v6894, 2147483648
      %v7312 = vor.u32 1.1754944e-38, %v7311
      %v7313 = vsel %vm7310, %v7312, %v7308
      %v7314 = vmul.f32 1.0, %v7313
      %v7315 = vrcp.pop %v6897
      %v7316 = vmul.f32 %v6897, %v7315
      %v7317 = vsub.f32 1.0, %v7316
      %v7318 = vmul.f32 %v7315, %v7317
      %v7319 = vadd.f32 %v7315, %v7318
      %vm7320 = vweird.f32 %v6897
      %vm7321 = vweird.f32 %v7315
      %vm7322 = vmor %vm7320, %vm7321
      %v7323 = vsel %vm7322, %v7315, %v7319
      %v7324 = vand.u32 2147483647, %v6897
      %vm7325 = vcmp.eq.f32.partialorder %v7324, 8.507059e+37
      %v7326 = vand.u32 %v6897, 2147483648
      %v7327 = vor.u32 1.1754944e-38, %v7326
      %v7328 = vsel %vm7325, %v7327, %v7323
      %v7329 = vmul.f32 1.0, %v7328
      %v7330 = vrcp.pop %v6900
      %v7331 = vmul.f32 %v6900, %v7330
      %v7332 = vsub.f32 1.0, %v7331
      %v7333 = vmul.f32 %v7330, %v7332
      %v7334 = vadd.f32 %v7330, %v7333
      %vm7335 = vweird.f32 %v6900
      %vm7336 = vweird.f32 %v7330
      %vm7337 = vmor %vm7335, %vm7336
      %v7338 = vsel %vm7337, %v7330, %v7334
      %v7339 = vand.u32 2147483647, %v6900
      %vm7340 = vcmp.eq.f32.partialorder %v7339, 8.507059e+37
      %v7341 = vand.u32 %v6900, 2147483648
      %v7342 = vor.u32 1.1754944e-38, %v7341
      %v7343 = vsel %vm7340, %v7342, %v7338
      %v7344 = vmul.f32 1.0, %v7343
      %v7345 = vrcp.pop %v6903
      %v7346 = vmul.f32 %v6903, %v7345
      %v7347 = vsub.f32 1.0, %v7346
      %v7348 = vmul.f32 %v7345, %v7347
      %v7349 = vadd.f32 %v7345, %v7348
      %vm7350 = vweird.f32 %v6903
      %vm7351 = vweird.f32 %v7345
      %vm7352 = vmor %vm7350, %vm7351
      %v7353 = vsel %vm7352, %v7345, %v7349
      %v7354 = vand.u32 2147483647, %v6903
      %vm7355 = vcmp.eq.f32.partialorder %v7354, 8.507059e+37
      %v7356 = vand.u32 %v6903, 2147483648
      %v7357 = vor.u32 1.1754944e-38, %v7356
      %v7358 = vsel %vm7355, %v7357, %v7353
      %v7359 = vmul.f32 1.0, %v7358
      %v7360 = vrcp.pop %v6906
      %v7361 = vmul.f32 %v6906, %v7360
      %v7362 = vsub.f32 1.0, %v7361
      %v7363 = vmul.f32 %v7360, %v7362
      %v7364 = vadd.f32 %v7360, %v7363
      %vm7365 = vweird.f32 %v6906
      %vm7366 = vweird.f32 %v7360
      %vm7367 = vmor %vm7365, %vm7366
      %v7368 = vsel %vm7367, %v7360, %v7364
      %v7369 = vand.u32 2147483647, %v6906
      %vm7370 = vcmp.eq.f32.partialorder %v7369, 8.507059e+37
      %v7371 = vand.u32 %v6906, 2147483648
      %v7372 = vor.u32 1.1754944e-38, %v7371
      %v7373 = vsel %vm7370, %v7372, %v7368
      %v7374 = vmul.f32 1.0, %v7373
      %v7375 = vrcp.pop %v6909
      %v7376 = vmul.f32 %v6909, %v7375
      %v7377 = vsub.f32 1.0, %v7376
      %v7378 = vmul.f32 %v7375, %v7377
      %v7379 = vadd.f32 %v7375, %v7378
      %vm7380 = vweird.f32 %v6909
      %vm7381 = vweird.f32 %v7375
      %vm7382 = vmor %vm7380, %vm7381
      %v7383 = vsel %vm7382, %v7375, %v7379
      %v7384 = vand.u32 2147483647, %v6909
      %vm7385 = vcmp.eq.f32.partialorder %v7384, 8.507059e+37
      %v7386 = vand.u32 %v6909, 2147483648
      %v7387 = vor.u32 1.1754944e-38, %v7386
      %v7388 = vsel %vm7385, %v7387, %v7383
      %v7389 = vmul.f32 1.0, %v7388
      %v7390 = vmul.f32 %v6751, %v6924
      %v7391 = vmul.f32 %v6753, %v6939
      %v7392 = vmul.f32 %v6755, %v6954
      %v7393 = vmul.f32 %v6757, %v6969
      %v7394 = vmul.f32 %v6759, %v6984
      %v7395 = vmul.f32 %v6761, %v6999
      %v7396 = vmul.f32 %v6763, %v7014
      %v7397 = vmul.f32 %v6765, %v7029
      %v7398 = vmul.f32 %v6767, %v7044
      %v7399 = vmul.f32 %v6769, %v7059
      %v7400 = vmul.f32 %v6771, %v7074
      %v7401 = vmul.f32 %v6773, %v7089
      %v7402 = vmul.f32 %v6775, %v7104
      %v7403 = vmul.f32 %v6777, %v7119
      %v7404 = vmul.f32 %v6779, %v7134
      %v7405 = vmul.f32 %v6781, %v7149
      %v7406 = vmul.f32 %v6783, %v7164
      %v7407 = vmul.f32 %v6785, %v7179
      %v7408 = vmul.f32 %v6787, %v7194
      %v7409 = vmul.f32 %v6789, %v7209
      %v7410 = vmul.f32 %v6791, %v7224
      %v7411 = vmul.f32 %v6793, %v7239
      %v7412 = vmul.f32 %v6795, %v7254
      %v7413 = vmul.f32 %v6797, %v7269
      %v7414 = vmul.f32 %v6799, %v7284
      %v7415 = vmul.f32 %v6801, %v7299
      %v7416 = vmul.f32 %v6803, %v7314
      %v7417 = vmul.f32 %v6805, %v7329
      %v7418 = vmul.f32 %v6807, %v7344
      %v7419 = vmul.f32 %v6809, %v7359
      %v7420 = vmul.f32 %v6811, %v7374
      %v7421 = vmul.f32 %v6813, %v7389
      %v7422 = vpack.c.bf16 %v7390, %v7390
      %v7423 = vpack.c.bf16 %v7391, %v7391
      %v7424 = vpack.c.bf16 %v7392, %v7392
      %v7425 = vpack.c.bf16 %v7393, %v7393
      %v7426 = vpack.c.bf16 %v7394, %v7394
      %v7427 = vpack.c.bf16 %v7395, %v7395
      %v7428 = vpack.c.bf16 %v7396, %v7396
      %v7429 = vpack.c.bf16 %v7397, %v7397
      %v7430 = vpack.c.bf16 %v7398, %v7398
      %v7431 = vpack.c.bf16 %v7399, %v7399
      %v7432 = vpack.c.bf16 %v7400, %v7400
      %v7433 = vpack.c.bf16 %v7401, %v7401
      %v7434 = vpack.c.bf16 %v7402, %v7402
      %v7435 = vpack.c.bf16 %v7403, %v7403
      %v7436 = vpack.c.bf16 %v7404, %v7404
      %v7437 = vpack.c.bf16 %v7405, %v7405
      %v7438 = vpack.c.bf16 %v7406, %v7406
      %v7439 = vpack.c.bf16 %v7407, %v7407
      %v7440 = vpack.c.bf16 %v7408, %v7408
      %v7441 = vpack.c.bf16 %v7409, %v7409
      %v7442 = vpack.c.bf16 %v7410, %v7410
      %v7443 = vpack.c.bf16 %v7411, %v7411
      %v7444 = vpack.c.bf16 %v7412, %v7412
      %v7445 = vpack.c.bf16 %v7413, %v7413
      %v7446 = vpack.c.bf16 %v7414, %v7414
      %v7447 = vpack.c.bf16 %v7415, %v7415
      %v7448 = vpack.c.bf16 %v7416, %v7416
      %v7449 = vpack.c.bf16 %v7417, %v7417
      %v7450 = vpack.c.bf16 %v7418, %v7418
      %v7451 = vpack.c.bf16 %v7419, %v7419
      %v7452 = vpack.c.bf16 %v7420, %v7420
      %v7453 = vpack.c.bf16 %v7421, %v7421
      %v7462 = vunpack.c.l.b16 %v7422
      %v7463 = vunpack.c.l.b16 %v7423
      %v7464 = vunpack.c.l.b16 %v7424
      %v7465 = vunpack.c.l.b16 %v7425
      %v7466 = vunpack.c.l.b16 %v7426
      %v7467 = vunpack.c.l.b16 %v7427
      %v7468 = vunpack.c.l.b16 %v7428
      %v7469 = vunpack.c.l.b16 %v7429
      %v7470 = vpack.c.b16 %v7463, %v7462
      %v7471 = vpack.c.b16 %v7465, %v7464
      %v7472 = vpack.c.b16 %v7467, %v7466
      %v7473 = vpack.c.b16 %v7469, %v7468
      %7474 = vrot.lane.b32.xlu0 %v6001, 64
      %v7475 = vpop.permute.xlu0 %7474
      %7476 = vrot.lane.b32.xlu0 %v6002, 64
      %v7477 = vpop.permute.xlu0 %7476
      %7478 = vrot.lane.b32.xlu0 %v6003, 64
      %v7479 = vpop.permute.xlu0 %7478
      %7480 = vrot.lane.b32.xlu0 %v6004, 64
      %v7481 = vpop.permute.xlu0 %7480
      %v7487 = vsel %vm555, %v7470, 0
      %v7490 = vsel %vm555, %v7471, 0
      %v7493 = vsel %vm555, %v7472, 0
      %v7496 = vsel %vm555, %v7473, 0
      %7498 = vmatpush.bf16.msra.mxu0 0
      %7499 = vmatpush.bf16.msra.mxu0 0
      %7500 = vmatpush.bf16.msra.mxu0 0
      %7501 = vmatpush.bf16.msra.mxu0 0
      %7502 = vmatpush.bf16.msra.mxu0 %v7481
      %7503 = vmatpush.bf16.msra.mxu0 %v7479
      %7504 = vmatpush.bf16.msra.mxu0 %v7477
      %7505 = vmatpush.bf16.msra.mxu0 %v7475
      %7506 = vmatmul.bf16.gmra.mxu0 %v7487
      %v7507 = vpop.f32.mrf.mxu0
      %v7508 = vadd.f32 0.0, %v7507
      %v7509 = vpop.f32.mrf.mxu0
      %v7510 = vadd.f32 0.0, %v7509
      %7511 = vmatmul.bf16.gmra.mxu0 %v7490
      %v7512 = vpop.f32.mrf.mxu0
      %v7513 = vadd.f32 0.0, %v7512
      %v7514 = vpop.f32.mrf.mxu0
      %v7515 = vadd.f32 0.0, %v7514
      %7516 = vmatmul.bf16.gmra.mxu0 %v7493
      %v7517 = vpop.f32.mrf.mxu0
      %v7518 = vadd.f32 0.0, %v7517
      %v7519 = vpop.f32.mrf.mxu0
      %v7520 = vadd.f32 0.0, %v7519
      %7521 = vmatmul.bf16.gmra.mxu0 %v7496
      %v7522 = vpop.f32.mrf.mxu0
      %v7523 = vadd.f32 0.0, %v7522
      %v7524 = vpop.f32.mrf.mxu0
      %v7525 = vadd.f32 0.0, %v7524
      %7526 = vdwg.mxu0
      %v7535 = vunpack.c.l.b16 %v7430
      %v7536 = vunpack.c.l.b16 %v7431
      %v7537 = vunpack.c.l.b16 %v7432
      %v7538 = vunpack.c.l.b16 %v7433
      %v7539 = vunpack.c.l.b16 %v7434
      %v7540 = vunpack.c.l.b16 %v7435
      %v7541 = vunpack.c.l.b16 %v7436
      %v7542 = vunpack.c.l.b16 %v7437
      %v7543 = vpack.c.b16 %v7536, %v7535
      %v7544 = vpack.c.b16 %v7538, %v7537
      %v7545 = vpack.c.b16 %v7540, %v7539
      %v7546 = vpack.c.b16 %v7542, %v7541
      %7547 = vrot.lane.b32.xlu0 %v6086, 64
      %v7548 = vpop.permute.xlu0 %7547
      %7549 = vrot.lane.b32.xlu0 %v6087, 64
      %v7550 = vpop.permute.xlu0 %7549
      %7551 = vrot.lane.b32.xlu0 %v6088, 64
      %v7552 = vpop.permute.xlu0 %7551
      %7553 = vrot.lane.b32.xlu0 %v6089, 64
      %v7554 = vpop.permute.xlu0 %7553
      %v7560 = vsel %vm555, %v7543, 0
      %v7563 = vsel %vm555, %v7544, 0
      %v7566 = vsel %vm555, %v7545, 0
      %v7569 = vsel %vm555, %v7546, 0
      %7571 = vmatpush.bf16.msra.mxu0 0
      %7572 = vmatpush.bf16.msra.mxu0 0
      %7573 = vmatpush.bf16.msra.mxu0 0
      %7574 = vmatpush.bf16.msra.mxu0 0
      %7575 = vmatpush.bf16.msra.mxu0 %v7554
      %7576 = vmatpush.bf16.msra.mxu0 %v7552
      %7577 = vmatpush.bf16.msra.mxu0 %v7550
      %7578 = vmatpush.bf16.msra.mxu0 %v7548
      %7579 = vmatmul.bf16.gmra.mxu0 %v7560
      %v7580 = vpop.f32.mrf.mxu0
      %v7581 = vadd.f32 0.0, %v7580
      %v7582 = vpop.f32.mrf.mxu0
      %v7583 = vadd.f32 0.0, %v7582
      %7584 = vmatmul.bf16.gmra.mxu0 %v7563
      %v7585 = vpop.f32.mrf.mxu0
      %v7586 = vadd.f32 0.0, %v7585
      %v7587 = vpop.f32.mrf.mxu0
      %v7588 = vadd.f32 0.0, %v7587
      %7589 = vmatmul.bf16.gmra.mxu0 %v7566
      %v7590 = vpop.f32.mrf.mxu0
      %v7591 = vadd.f32 0.0, %v7590
      %v7592 = vpop.f32.mrf.mxu0
      %v7593 = vadd.f32 0.0, %v7592
      %7594 = vmatmul.bf16.gmra.mxu0 %v7569
      %v7595 = vpop.f32.mrf.mxu0
      %v7596 = vadd.f32 0.0, %v7595
      %v7597 = vpop.f32.mrf.mxu0
      %v7598 = vadd.f32 0.0, %v7597
      %7599 = vdwg.mxu0
      %v7608 = vunpack.c.l.b16 %v7438
      %v7609 = vunpack.c.l.b16 %v7439
      %v7610 = vunpack.c.l.b16 %v7440
      %v7611 = vunpack.c.l.b16 %v7441
      %v7612 = vunpack.c.l.b16 %v7442
      %v7613 = vunpack.c.l.b16 %v7443
      %v7614 = vunpack.c.l.b16 %v7444
      %v7615 = vunpack.c.l.b16 %v7445
      %v7616 = vpack.c.b16 %v7609, %v7608
      %v7617 = vpack.c.b16 %v7611, %v7610
      %v7618 = vpack.c.b16 %v7613, %v7612
      %v7619 = vpack.c.b16 %v7615, %v7614
      %7620 = vrot.lane.b32.xlu0 %v6171, 64
      %v7621 = vpop.permute.xlu0 %7620
      %7622 = vrot.lane.b32.xlu0 %v6172, 64
      %v7623 = vpop.permute.xlu0 %7622
      %7624 = vrot.lane.b32.xlu0 %v6173, 64
      %v7625 = vpop.permute.xlu0 %7624
      %7626 = vrot.lane.b32.xlu0 %v6174, 64
      %v7627 = vpop.permute.xlu0 %7626
      %v7633 = vsel %vm555, %v7616, 0
      %v7636 = vsel %vm555, %v7617, 0
      %v7639 = vsel %vm555, %v7618, 0
      %v7642 = vsel %vm555, %v7619, 0
      %7644 = vmatpush.bf16.msra.mxu0 0
      %7645 = vmatpush.bf16.msra.mxu0 0
      %7646 = vmatpush.bf16.msra.mxu0 0
      %7647 = vmatpush.bf16.msra.mxu0 0
      %7648 = vmatpush.bf16.msra.mxu0 %v7627
      %7649 = vmatpush.bf16.msra.mxu0 %v7625
      %7650 = vmatpush.bf16.msra.mxu0 %v7623
      %7651 = vmatpush.bf16.msra.mxu0 %v7621
      %7652 = vmatmul.bf16.gmra.mxu0 %v7633
      %v7653 = vpop.f32.mrf.mxu0
      %v7654 = vadd.f32 0.0, %v7653
      %v7655 = vpop.f32.mrf.mxu0
      %v7656 = vadd.f32 0.0, %v7655
      %7657 = vmatmul.bf16.gmra.mxu0 %v7636
      %v7658 = vpop.f32.mrf.mxu0
      %v7659 = vadd.f32 0.0, %v7658
      %v7660 = vpop.f32.mrf.mxu0
      %v7661 = vadd.f32 0.0, %v7660
      %7662 = vmatmul.bf16.gmra.mxu0 %v7639
      %v7663 = vpop.f32.mrf.mxu0
      %v7664 = vadd.f32 0.0, %v7663
      %v7665 = vpop.f32.mrf.mxu0
      %v7666 = vadd.f32 0.0, %v7665
      %7667 = vmatmul.bf16.gmra.mxu0 %v7642
      %v7668 = vpop.f32.mrf.mxu0
      %v7669 = vadd.f32 0.0, %v7668
      %v7670 = vpop.f32.mrf.mxu0
      %v7671 = vadd.f32 0.0, %v7670
      %7672 = vdwg.mxu0
      %v7681 = vunpack.c.l.b16 %v7446
      %v7682 = vunpack.c.l.b16 %v7447
      %v7683 = vunpack.c.l.b16 %v7448
      %v7684 = vunpack.c.l.b16 %v7449
      %v7685 = vunpack.c.l.b16 %v7450
      %v7686 = vunpack.c.l.b16 %v7451
      %v7687 = vunpack.c.l.b16 %v7452
      %v7688 = vunpack.c.l.b16 %v7453
      %v7689 = vpack.c.b16 %v7682, %v7681
      %v7690 = vpack.c.b16 %v7684, %v7683
      %v7691 = vpack.c.b16 %v7686, %v7685
      %v7692 = vpack.c.b16 %v7688, %v7687
      %7693 = vrot.lane.b32.xlu0 %v6256, 64
      %v7694 = vpop.permute.xlu0 %7693
      %7695 = vrot.lane.b32.xlu0 %v6257, 64
      %v7696 = vpop.permute.xlu0 %7695
      %7697 = vrot.lane.b32.xlu0 %v6258, 64
      %v7698 = vpop.permute.xlu0 %7697
      %7699 = vrot.lane.b32.xlu0 %v6259, 64
      %v7700 = vpop.permute.xlu0 %7699
      %v7706 = vsel %vm555, %v7689, 0
      %v7709 = vsel %vm555, %v7690, 0
      %v7712 = vsel %vm555, %v7691, 0
      %v7715 = vsel %vm555, %v7692, 0
      %7717 = vmatpush.bf16.msra.mxu0 0
      %7718 = vmatpush.bf16.msra.mxu0 0
      %7719 = vmatpush.bf16.msra.mxu0 0
      %7720 = vmatpush.bf16.msra.mxu0 0
      %7721 = vmatpush.bf16.msra.mxu0 %v7700
      %7722 = vmatpush.bf16.msra.mxu0 %v7698
      %7723 = vmatpush.bf16.msra.mxu0 %v7696
      %7724 = vmatpush.bf16.msra.mxu0 %v7694
      %7725 = vmatmul.bf16.gmra.mxu0 %v7706
      %v7726 = vpop.f32.mrf.mxu0
      %v7727 = vadd.f32 0.0, %v7726
      %v7728 = vpop.f32.mrf.mxu0
      %v7729 = vadd.f32 0.0, %v7728
      %7730 = vmatmul.bf16.gmra.mxu0 %v7709
      %v7731 = vpop.f32.mrf.mxu0
      %v7732 = vadd.f32 0.0, %v7731
      %v7733 = vpop.f32.mrf.mxu0
      %v7734 = vadd.f32 0.0, %v7733
      %7735 = vmatmul.bf16.gmra.mxu0 %v7712
      %v7736 = vpop.f32.mrf.mxu0
      %v7737 = vadd.f32 0.0, %v7736
      %v7738 = vpop.f32.mrf.mxu0
      %v7739 = vadd.f32 0.0, %v7738
      %7740 = vmatmul.bf16.gmra.mxu0 %v7715
      %v7741 = vpop.f32.mrf.mxu0
      %v7742 = vadd.f32 0.0, %v7741
      %v7743 = vpop.f32.mrf.mxu0
      %v7744 = vadd.f32 0.0, %v7743
      %7745 = vdwg.mxu0
      %v7746 = vadd.f32 %v6305, %v7508
      %v7747 = vadd.f32 %v6306, %v7510
      %v7748 = vadd.f32 %v6307, %v7513
      %v7749 = vadd.f32 %v6308, %v7515
      %v7750 = vadd.f32 %v6309, %v7518
      %v7751 = vadd.f32 %v6310, %v7520
      %v7752 = vadd.f32 %v6311, %v7523
      %v7753 = vadd.f32 %v6312, %v7525
      %v7754 = vadd.f32 %v6313, %v7581
      %v7755 = vadd.f32 %v6314, %v7583
      %v7756 = vadd.f32 %v6315, %v7586
      %v7757 = vadd.f32 %v6316, %v7588
      %v7758 = vadd.f32 %v6317, %v7591
      %v7759 = vadd.f32 %v6318, %v7593
      %v7760 = vadd.f32 %v6319, %v7596
      %v7761 = vadd.f32 %v6320, %v7598
      %v7762 = vadd.f32 %v6321, %v7654
      %v7763 = vadd.f32 %v6322, %v7656
      %v7764 = vadd.f32 %v6323, %v7659
      %v7765 = vadd.f32 %v6324, %v7661
      %v7766 = vadd.f32 %v6325, %v7664
      %v7767 = vadd.f32 %v6326, %v7666
      %v7768 = vadd.f32 %v6327, %v7669
      %v7769 = vadd.f32 %v6328, %v7671
      %v7770 = vadd.f32 %v6329, %v7727
      %v7771 = vadd.f32 %v6330, %v7729
      %v7772 = vadd.f32 %v6331, %v7732
      %v7773 = vadd.f32 %v6332, %v7734
      %v7774 = vadd.f32 %v6333, %v7737
      %v7775 = vadd.f32 %v6334, %v7739
      %v7776 = vadd.f32 %v6335, %v7742
      %v7777 = vadd.f32 %v6336, %v7744
      %v7778 = vld [vmem:[%s6] sm:$0x1]
      %v7780 = vperm.slane %v7778, 0
      %v7782 = vadd.f32 %v7746, %v7780
      %v7783 = vadd.f32 %v7754, %v7780
      %v7784 = vadd.f32 %v7747, %v7780
      %v7785 = vadd.f32 %v7755, %v7780
      %v7786 = vadd.f32 %v7748, %v7780
      %v7787 = vadd.f32 %v7756, %v7780
      %v7788 = vadd.f32 %v7749, %v7780
      %v7789 = vadd.f32 %v7757, %v7780
      %v7790 = vadd.f32 %v7750, %v7780
      %v7791 = vadd.f32 %v7758, %v7780
      %v7792 = vadd.f32 %v7751, %v7780
      %v7793 = vadd.f32 %v7759, %v7780
      %v7794 = vadd.f32 %v7752, %v7780
      %v7795 = vadd.f32 %v7760, %v7780
      %v7796 = vadd.f32 %v7753, %v7780
      %v7797 = vadd.f32 %v7761, %v7780
      %v7798 = vadd.f32 %v7762, %v7780
      %v7799 = vadd.f32 %v7770, %v7780
      %v7800 = vadd.f32 %v7763, %v7780
      %v7801 = vadd.f32 %v7771, %v7780
      %v7802 = vadd.f32 %v7764, %v7780
      %v7803 = vadd.f32 %v7772, %v7780
      %v7804 = vadd.f32 %v7765, %v7780
      %v7805 = vadd.f32 %v7773, %v7780
      %v7806 = vadd.f32 %v7766, %v7780
      %v7807 = vadd.f32 %v7774, %v7780
      %v7808 = vadd.f32 %v7767, %v7780
      %v7809 = vadd.f32 %v7775, %v7780
      %v7810 = vadd.f32 %v7768, %v7780
      %v7811 = vadd.f32 %v7776, %v7780
      %v7812 = vadd.f32 %v7769, %v7780
      %v7813 = vadd.f32 %v7777, %v7780
      %v7814 = vadd.f32 %v523, %v7782
      %v7815 = vadd.f32 %v524, %v7783
      %v7816 = vadd.f32 %v525, %v7784
      %v7817 = vadd.f32 %v526, %v7785
      %v7818 = vadd.f32 %v527, %v7786
      %v7819 = vadd.f32 %v528, %v7787
      %v7820 = vadd.f32 %v529, %v7788
      %v7821 = vadd.f32 %v530, %v7789
      %v7822 = vadd.f32 %v531, %v7790
      %v7823 = vadd.f32 %v532, %v7791
      %v7824 = vadd.f32 %v533, %v7792
      %v7825 = vadd.f32 %v534, %v7793
      %v7826 = vadd.f32 %v535, %v7794
      %v7827 = vadd.f32 %v536, %v7795
      %v7828 = vadd.f32 %v537, %v7796
      %v7829 = vadd.f32 %v538, %v7797
      %v7830 = vadd.f32 %v539, %v7798
      %v7831 = vadd.f32 %v540, %v7799
      %v7832 = vadd.f32 %v541, %v7800
      %v7833 = vadd.f32 %v542, %v7801
      %v7834 = vadd.f32 %v543, %v7802
      %v7835 = vadd.f32 %v544, %v7803
      %v7836 = vadd.f32 %v545, %v7804
      %v7837 = vadd.f32 %v546, %v7805
      %v7838 = vadd.f32 %v547, %v7806
      %v7839 = vadd.f32 %v548, %v7807
      %v7840 = vadd.f32 %v549, %v7808
      %v7841 = vadd.f32 %v550, %v7809
      %v7842 = vadd.f32 %v551, %v7810
      %v7843 = vadd.f32 %v552, %v7811
      %v7844 = vadd.f32 %v553, %v7812
      %v7845 = vadd.f32 %v554, %v7813
      %7846 = vst.msk [vmem:[#allocation2] sm:$0xff] %vm555, 0.0
      %7847 = vst.msk [vmem:[#allocation2 + $0x8] sm:$0xff] %vm555, 0.0
      %7848 = vst.msk [vmem:[#allocation2 + $0x10] sm:$0xff] %vm555, 0.0
      %7849 = vst.msk [vmem:[#allocation2 + $0x18] sm:$0xff] %vm555, 0.0
      %s7850 = scalar_lea.vmem [#allocation2], 544
      %7851 = vst.msk [vmem:[%s7850] sm:$0xff] %vm555, 0.0
      %7852 = vst.msk [vmem:[%s7850 + $0x8] sm:$0xff] %vm555, 0.0
      %7853 = vst.msk [vmem:[%s7850 + $0x10] sm:$0xff] %vm555, 0.0
      %7854 = vst.msk [vmem:[%s7850 + $0x18] sm:$0xff] %vm555, 0.0
      %s7855 = scalar_lea.vmem [#allocation2], 32
      %7856 = vst.msk [vmem:[%s7855] sm:$0xff] %vm555, 0.0
      %7857 = vst.msk [vmem:[%s7855 + $0x20] sm:$0xff] %vm555, 0.0
      %7858 = vst.msk [vmem:[%s7855 + $0x40] sm:$0xff] %vm555, 0.0
      %7859 = vst.msk [vmem:[%s7855 + $0x60] sm:$0xff] %vm555, 0.0
      %7860 = vst.msk [vmem:[%s7855 + $0x80] sm:$0xff] %vm555, 0.0
      %7861 = vst.msk [vmem:[%s7855 + $0xa0] sm:$0xff] %vm555, 0.0
      %7862 = vst.msk [vmem:[%s7855 + $0xc0] sm:$0xff] %vm555, 0.0
      %7863 = vst.msk [vmem:[%s7855 + $0xe0] sm:$0xff] %vm555, 0.0
      %7864 = vst.msk [vmem:[%s7855 + $0x100] sm:$0xff] %vm555, 0.0
      %7865 = vst.msk [vmem:[%s7855 + $0x120] sm:$0xff] %vm555, 0.0
      %7866 = vst.msk [vmem:[%s7855 + $0x140] sm:$0xff] %vm555, 0.0
      %7867 = vst.msk [vmem:[%s7855 + $0x160] sm:$0xff] %vm555, 0.0
      %7868 = vst.msk [vmem:[%s7855 + $0x180] sm:$0xff] %vm555, 0.0
      %7869 = vst.msk [vmem:[%s7855 + $0x1a0] sm:$0xff] %vm555, 0.0
      %7870 = vst.msk [vmem:[%s7855 + $0x1c0] sm:$0xff] %vm555, 0.0
      %7871 = vst.msk [vmem:[%s7855 + $0x1e0] sm:$0xff] %vm555, 0.0
      %7872 = vst.msk [vmem:[%s7855 + $0x18] sm:$0xff] %vm555, 0.0
      %7873 = vst.msk [vmem:[%s7855 + $0x38] sm:$0xff] %vm555, 0.0
      %7874 = vst.msk [vmem:[%s7855 + $0x58] sm:$0xff] %vm555, 0.0
      %7875 = vst.msk [vmem:[%s7855 + $0x78] sm:$0xff] %vm555, 0.0
      %7876 = vst.msk [vmem:[%s7855 + $0x98] sm:$0xff] %vm555, 0.0
      %7877 = vst.msk [vmem:[%s7855 + $0xb8] sm:$0xff] %vm555, 0.0
      %7878 = vst.msk [vmem:[%s7855 + $0xd8] sm:$0xff] %vm555, 0.0
      %7879 = vst.msk [vmem:[%s7855 + $0xf8] sm:$0xff] %vm555, 0.0
      %7880 = vst.msk [vmem:[%s7855 + $0x118] sm:$0xff] %vm555, 0.0
      %7881 = vst.msk [vmem:[%s7855 + $0x138] sm:$0xff] %vm555, 0.0
      %7882 = vst.msk [vmem:[%s7855 + $0x158] sm:$0xff] %vm555, 0.0
      %7883 = vst.msk [vmem:[%s7855 + $0x178] sm:$0xff] %vm555, 0.0
      %7884 = vst.msk [vmem:[%s7855 + $0x198] sm:$0xff] %vm555, 0.0
      %7885 = vst.msk [vmem:[%s7855 + $0x1b8] sm:$0xff] %vm555, 0.0
      %7886 = vst.msk [vmem:[%s7855 + $0x1d8] sm:$0xff] %vm555, 0.0
      %7887 = vst.msk [vmem:[%s7855 + $0x1f8] sm:$0xff] %vm555, 0.0
      %7888 = vst.msk [vmem:[%s7855 + $0x8] sm:$0xff] %vm555, %v7814
      %7889 = vst.msk [vmem:[%s7855 + $0x10] sm:$0xff] %vm555, %v7815
      %7890 = vst.msk [vmem:[%s7855 + $0x28] sm:$0xff] %vm555, %v7816
      %7891 = vst.msk [vmem:[%s7855 + $0x30] sm:$0xff] %vm555, %v7817
      %7892 = vst.msk [vmem:[%s7855 + $0x48] sm:$0xff] %vm555, %v7818
      %7893 = vst.msk [vmem:[%s7855 + $0x50] sm:$0xff] %vm555, %v7819
      %7894 = vst.msk [vmem:[%s7855 + $0x68] sm:$0xff] %vm555, %v7820
      %7895 = vst.msk [vmem:[%s7855 + $0x70] sm:$0xff] %vm555, %v7821
      %7896 = vst.msk [vmem:[%s7855 + $0x88] sm:$0xff] %vm555, %v7822
      %7897 = vst.msk [vmem:[%s7855 + $0x90] sm:$0xff] %vm555, %v7823
      %7898 = vst.msk [vmem:[%s7855 + $0xa8] sm:$0xff] %vm555, %v7824
      %7899 = vst.msk [vmem:[%s7855 + $0xb0] sm:$0xff] %vm555, %v7825
      %7900 = vst.msk [vmem:[%s7855 + $0xc8] sm:$0xff] %vm555, %v7826
      %7901 = vst.msk [vmem:[%s7855 + $0xd0] sm:$0xff] %vm555, %v7827
      %7902 = vst.msk [vmem:[%s7855 + $0xe8] sm:$0xff] %vm555, %v7828
      %7903 = vst.msk [vmem:[%s7855 + $0xf0] sm:$0xff] %vm555, %v7829
      %7904 = vst.msk [vmem:[%s7855 + $0x108] sm:$0xff] %vm555, %v7830
      %7905 = vst.msk [vmem:[%s7855 + $0x110] sm:$0xff] %vm555, %v7831
      %7906 = vst.msk [vmem:[%s7855 + $0x128] sm:$0xff] %vm555, %v7832
      %7907 = vst.msk [vmem:[%s7855 + $0x130] sm:$0xff] %vm555, %v7833
      %7908 = vst.msk [vmem:[%s7855 + $0x148] sm:$0xff] %vm555, %v7834
      %7909 = vst.msk [vmem:[%s7855 + $0x150] sm:$0xff] %vm555, %v7835
      %7910 = vst.msk [vmem:[%s7855 + $0x168] sm:$0xff] %vm555, %v7836
      %7911 = vst.msk [vmem:[%s7855 + $0x170] sm:$0xff] %vm555, %v7837
      %7912 = vst.msk [vmem:[%s7855 + $0x188] sm:$0xff] %vm555, %v7838
      %7913 = vst.msk [vmem:[%s7855 + $0x190] sm:$0xff] %vm555, %v7839
      %7914 = vst.msk [vmem:[%s7855 + $0x1a8] sm:$0xff] %vm555, %v7840
      %7915 = vst.msk [vmem:[%s7855 + $0x1b0] sm:$0xff] %vm555, %v7841
      %7916 = vst.msk [vmem:[%s7855 + $0x1c8] sm:$0xff] %vm555, %v7842
      %7917 = vst.msk [vmem:[%s7855 + $0x1d0] sm:$0xff] %vm555, %v7843
      %7918 = vst.msk [vmem:[%s7855 + $0x1e8] sm:$0xff] %vm555, %v7844
      %7919 = vst.msk [vmem:[%s7855 + $0x1f0] sm:$0xff] %vm555, %v7845
      %v7920 = vld [vmem:[%s7] sm:$0xff]
      %v7921 = vld [vmem:[%s7 + $0x8] sm:$0x1]
      %v7922 = vld [vmem:[#allocation2 + $0x7] sm:$0xff]
      %v7923 = vld [vmem:[#allocation2 + $0xf] sm:$0xff]
      %v7924 = vld [vmem:[#allocation2 + $0x27] sm:$0xff]
      %v7925 = vld [vmem:[#allocation2 + $0x2f] sm:$0xff]
      %v7926 = vld [vmem:[#allocation2 + $0x47] sm:$0xff]
      %v7927 = vld [vmem:[#allocation2 + $0x4f] sm:$0xff]
      %v7928 = vld [vmem:[#allocation2 + $0x67] sm:$0xff]
      %v7929 = vld [vmem:[#allocation2 + $0x6f] sm:$0xff]
      %v7930 = vld [vmem:[#allocation2 + $0x87] sm:$0xff]
      %v7931 = vld [vmem:[#allocation2 + $0x8f] sm:$0xff]
      %v7932 = vld [vmem:[#allocation2 + $0xa7] sm:$0xff]
      %v7933 = vld [vmem:[#allocation2 + $0xaf] sm:$0xff]
      %v7934 = vld [vmem:[#allocation2 + $0xc7] sm:$0xff]
      %v7935 = vld [vmem:[#allocation2 + $0xcf] sm:$0xff]
      %v7936 = vld [vmem:[#allocation2 + $0xe7] sm:$0xff]
      %v7937 = vld [vmem:[#allocation2 + $0xef] sm:$0xff]
      %v7938 = vld [vmem:[#allocation2 + $0x107] sm:$0xff]
      %v7939 = vld [vmem:[#allocation2 + $0x10f] sm:$0xff]
      %v7940 = vld [vmem:[#allocation2 + $0x127] sm:$0xff]
      %v7941 = vld [vmem:[#allocation2 + $0x12f] sm:$0xff]
      %v7942 = vld [vmem:[#allocation2 + $0x147] sm:$0xff]
      %v7943 = vld [vmem:[#allocation2 + $0x14f] sm:$0xff]
      %v7944 = vld [vmem:[#allocation2 + $0x167] sm:$0xff]
      %v7945 = vld [vmem:[#allocation2 + $0x16f] sm:$0xff]
      %v7946 = vld [vmem:[#allocation2 + $0x187] sm:$0xff]
      %v7947 = vld [vmem:[#allocation2 + $0x18f] sm:$0xff]
      %v7948 = vld [vmem:[#allocation2 + $0x1a7] sm:$0xff]
      %v7949 = vld [vmem:[#allocation2 + $0x1af] sm:$0xff]
      %v7950 = vld [vmem:[#allocation2 + $0x1c7] sm:$0xff]
      %v7951 = vld [vmem:[#allocation2 + $0x1cf] sm:$0xff]
      %v7952 = vld [vmem:[#allocation2 + $0x1e7] sm:$0xff]
      %v7953 = vld [vmem:[#allocation2 + $0x1ef] sm:$0xff]
      %v7954 = vld [vmem:[#allocation2 + $0x207] sm:$0xff]
      %v7955 = vld [vmem:[#allocation2 + $0x20f] sm:$0xff]
      %v7956 = vld [vmem:[#allocation2 + $0x227] sm:$0xff]
      %v7957 = vld [vmem:[#allocation2 + $0x22f] sm:$0xff]
      %v7958 = vperm.slane %v7920, 0
      %v7959 = vmul.f32 %v7922, %v7958
      %v7960 = vmul.f32 %v7923, %v7958
      %v7961 = vmul.f32 %v7924, %v7958
      %v7962 = vmul.f32 %v7925, %v7958
      %v7963 = vmul.f32 %v7926, %v7958
      %v7964 = vmul.f32 %v7927, %v7958
      %v7965 = vmul.f32 %v7928, %v7958
      %v7966 = vmul.f32 %v7929, %v7958
      %v7967 = vmul.f32 %v7930, %v7958
      %v7968 = vmul.f32 %v7931, %v7958
      %v7969 = vmul.f32 %v7932, %v7958
      %v7970 = vmul.f32 %v7933, %v7958
      %v7971 = vmul.f32 %v7934, %v7958
      %v7972 = vmul.f32 %v7935, %v7958
      %v7973 = vmul.f32 %v7936, %v7958
      %v7974 = vmul.f32 %v7937, %v7958
      %v7975 = vmul.f32 %v7938, %v7958
      %v7976 = vmul.f32 %v7939, %v7958
      %v7977 = vmul.f32 %v7940, %v7958
      %v7978 = vmul.f32 %v7941, %v7958
      %v7979 = vmul.f32 %v7942, %v7958
      %v7980 = vmul.f32 %v7943, %v7958
      %v7981 = vmul.f32 %v7944, %v7958
      %v7982 = vmul.f32 %v7945, %v7958
      %v7983 = vmul.f32 %v7946, %v7958
      %v7984 = vmul.f32 %v7947, %v7958
      %v7985 = vmul.f32 %v7948, %v7958
      %v7986 = vmul.f32 %v7949, %v7958
      %v7987 = vmul.f32 %v7950, %v7958
      %v7988 = vmul.f32 %v7951, %v7958
      %v7989 = vmul.f32 %v7952, %v7958
      %v7990 = vmul.f32 %v7953, %v7958
      %v7991 = vadd.f32 %v7959, 0.0
      %v7992 = vadd.f32 %v7960, 0.0
      %v7993 = vadd.f32 %v7961, 0.0
      %v7994 = vadd.f32 %v7962, 0.0
      %v7995 = vadd.f32 %v7963, 0.0
      %v7996 = vadd.f32 %v7964, 0.0
      %v7997 = vadd.f32 %v7965, 0.0
      %v7998 = vadd.f32 %v7966, 0.0
      %v7999 = vadd.f32 %v7967, 0.0
      %v8000 = vadd.f32 %v7968, 0.0
      %v8001 = vadd.f32 %v7969, 0.0
      %v8002 = vadd.f32 %v7970, 0.0
      %v8003 = vadd.f32 %v7971, 0.0
      %v8004 = vadd.f32 %v7972, 0.0
      %v8005 = vadd.f32 %v7973, 0.0
      %v8006 = vadd.f32 %v7974, 0.0
      %v8007 = vadd.f32 %v7975, 0.0
      %v8008 = vadd.f32 %v7976, 0.0
      %v8009 = vadd.f32 %v7977, 0.0
      %v8010 = vadd.f32 %v7978, 0.0
      %v8011 = vadd.f32 %v7979, 0.0
      %v8012 = vadd.f32 %v7980, 0.0
      %v8013 = vadd.f32 %v7981, 0.0
      %v8014 = vadd.f32 %v7982, 0.0
      %v8015 = vadd.f32 %v7983, 0.0
      %v8016 = vadd.f32 %v7984, 0.0
      %v8017 = vadd.f32 %v7985, 0.0
      %v8018 = vadd.f32 %v7986, 0.0
      %v8019 = vadd.f32 %v7987, 0.0
      %v8020 = vadd.f32 %v7988, 0.0
      %v8021 = vadd.f32 %v7989, 0.0
      %v8022 = vadd.f32 %v7990, 0.0
      %v8023 = vperm.slane %v7920, 3
      %v8024 = vmul.f32 %v7924, %v8023
      %v8025 = vmul.f32 %v7925, %v8023
      %v8026 = vmul.f32 %v7926, %v8023
      %v8027 = vmul.f32 %v7927, %v8023
      %v8028 = vmul.f32 %v7928, %v8023
      %v8029 = vmul.f32 %v7929, %v8023
      %v8030 = vmul.f32 %v7930, %v8023
      %v8031 = vmul.f32 %v7931, %v8023
      %v8032 = vmul.f32 %v7932, %v8023
      %v8033 = vmul.f32 %v7933, %v8023
      %v8034 = vmul.f32 %v7934, %v8023
      %v8035 = vmul.f32 %v7935, %v8023
      %v8036 = vmul.f32 %v7936, %v8023
      %v8037 = vmul.f32 %v7937, %v8023
      %v8038 = vmul.f32 %v7938, %v8023
      %v8039 = vmul.f32 %v7939, %v8023
      %v8040 = vmul.f32 %v7940, %v8023
      %v8041 = vmul.f32 %v7941, %v8023
      %v8042 = vmul.f32 %v7942, %v8023
      %v8043 = vmul.f32 %v7943, %v8023
      %v8044 = vmul.f32 %v7944, %v8023
      %v8045 = vmul.f32 %v7945, %v8023
      %v8046 = vmul.f32 %v7946, %v8023
      %v8047 = vmul.f32 %v7947, %v8023
      %v8048 = vmul.f32 %v7948, %v8023
      %v8049 = vmul.f32 %v7949, %v8023
      %v8050 = vmul.f32 %v7950, %v8023
      %v8051 = vmul.f32 %v7951, %v8023
      %v8052 = vmul.f32 %v7952, %v8023
      %v8053 = vmul.f32 %v7953, %v8023
      %v8054 = vmul.f32 %v7954, %v8023
      %v8055 = vmul.f32 %v7955, %v8023
      %v8056 = vadd.f32 %v7991, %v8024
      %v8057 = vadd.f32 %v7992, %v8025
      %v8058 = vadd.f32 %v7993, %v8026
      %v8059 = vadd.f32 %v7994, %v8027
      %v8060 = vadd.f32 %v7995, %v8028
      %v8061 = vadd.f32 %v7996, %v8029
      %v8062 = vadd.f32 %v7997, %v8030
      %v8063 = vadd.f32 %v7998, %v8031
      %v8064 = vadd.f32 %v7999, %v8032
      %v8065 = vadd.f32 %v8000, %v8033
      %v8066 = vadd.f32 %v8001, %v8034
      %v8067 = vadd.f32 %v8002, %v8035
      %v8068 = vadd.f32 %v8003, %v8036
      %v8069 = vadd.f32 %v8004, %v8037
      %v8070 = vadd.f32 %v8005, %v8038
      %v8071 = vadd.f32 %v8006, %v8039
      %v8072 = vadd.f32 %v8007, %v8040
      %v8073 = vadd.f32 %v8008, %v8041
      %v8074 = vadd.f32 %v8009, %v8042
      %v8075 = vadd.f32 %v8010, %v8043
      %v8076 = vadd.f32 %v8011, %v8044
      %v8077 = vadd.f32 %v8012, %v8045
      %v8078 = vadd.f32 %v8013, %v8046
      %v8079 = vadd.f32 %v8014, %v8047
      %v8080 = vadd.f32 %v8015, %v8048
      %v8081 = vadd.f32 %v8016, %v8049
      %v8082 = vadd.f32 %v8017, %v8050
      %v8083 = vadd.f32 %v8018, %v8051
      %v8084 = vadd.f32 %v8019, %v8052
      %v8085 = vadd.f32 %v8020, %v8053
      %v8086 = vadd.f32 %v8021, %v8054
      %v8087 = vadd.f32 %v8022, %v8055
      %v8088 = vperm.slane %v7920, 6
      %v8089 = vmul.f32 %v7926, %v8088
      %v8090 = vmul.f32 %v7927, %v8088
      %v8091 = vmul.f32 %v7928, %v8088
      %v8092 = vmul.f32 %v7929, %v8088
      %v8093 = vmul.f32 %v7930, %v8088
      %v8094 = vmul.f32 %v7931, %v8088
      %v8095 = vmul.f32 %v7932, %v8088
      %v8096 = vmul.f32 %v7933, %v8088
      %v8097 = vmul.f32 %v7934, %v8088
      %v8098 = vmul.f32 %v7935, %v8088
      %v8099 = vmul.f32 %v7936, %v8088
      %v8100 = vmul.f32 %v7937, %v8088
      %v8101 = vmul.f32 %v7938, %v8088
      %v8102 = vmul.f32 %v7939, %v8088
      %v8103 = vmul.f32 %v7940, %v8088
      %v8104 = vmul.f32 %v7941, %v8088
      %v8105 = vmul.f32 %v7942, %v8088
      %v8106 = vmul.f32 %v7943, %v8088
      %v8107 = vmul.f32 %v7944, %v8088
      %v8108 = vmul.f32 %v7945, %v8088
      %v8109 = vmul.f32 %v7946, %v8088
      %v8110 = vmul.f32 %v7947, %v8088
      %v8111 = vmul.f32 %v7948, %v8088
      %v8112 = vmul.f32 %v7949, %v8088
      %v8113 = vmul.f32 %v7950, %v8088
      %v8114 = vmul.f32 %v7951, %v8088
      %v8115 = vmul.f32 %v7952, %v8088
      %v8116 = vmul.f32 %v7953, %v8088
      %v8117 = vmul.f32 %v7954, %v8088
      %v8118 = vmul.f32 %v7955, %v8088
      %v8119 = vmul.f32 %v7956, %v8088
      %v8120 = vmul.f32 %v7957, %v8088
      %v8121 = vadd.f32 %v8056, %v8089
      %v8122 = vadd.f32 %v8057, %v8090
      %v8123 = vadd.f32 %v8058, %v8091
      %v8124 = vadd.f32 %v8059, %v8092
      %v8125 = vadd.f32 %v8060, %v8093
      %v8126 = vadd.f32 %v8061, %v8094
      %v8127 = vadd.f32 %v8062, %v8095
      %v8128 = vadd.f32 %v8063, %v8096
      %v8129 = vadd.f32 %v8064, %v8097
      %v8130 = vadd.f32 %v8065, %v8098
      %v8131 = vadd.f32 %v8066, %v8099
      %v8132 = vadd.f32 %v8067, %v8100
      %v8133 = vadd.f32 %v8068, %v8101
      %v8134 = vadd.f32 %v8069, %v8102
      %v8135 = vadd.f32 %v8070, %v8103
      %v8136 = vadd.f32 %v8071, %v8104
      %v8137 = vadd.f32 %v8072, %v8105
      %v8138 = vadd.f32 %v8073, %v8106
      %v8139 = vadd.f32 %v8074, %v8107
      %v8140 = vadd.f32 %v8075, %v8108
      %v8141 = vadd.f32 %v8076, %v8109
      %v8142 = vadd.f32 %v8077, %v8110
      %v8143 = vadd.f32 %v8078, %v8111
      %v8144 = vadd.f32 %v8079, %v8112
      %v8145 = vadd.f32 %v8080, %v8113
      %v8146 = vadd.f32 %v8081, %v8114
      %v8147 = vadd.f32 %v8082, %v8115
      %v8148 = vadd.f32 %v8083, %v8116
      %v8149 = vadd.f32 %v8084, %v8117
      %v8150 = vadd.f32 %v8085, %v8118
      %v8151 = vadd.f32 %v8086, %v8119
      %v8152 = vadd.f32 %v8087, %v8120
      %v8153 = vld [vmem:[#allocation2 + $0x8] sm:$0xff]
      %v8154 = vld [vmem:[#allocation2 + $0x10] sm:$0xff]
      %v8155 = vld [vmem:[#allocation2 + $0x28] sm:$0xff]
      %v8156 = vld [vmem:[#allocation2 + $0x30] sm:$0xff]
      %v8157 = vld [vmem:[#allocation2 + $0x48] sm:$0xff]
      %v8158 = vld [vmem:[#allocation2 + $0x50] sm:$0xff]
      %v8159 = vld [vmem:[#allocation2 + $0x68] sm:$0xff]
      %v8160 = vld [vmem:[#allocation2 + $0x70] sm:$0xff]
      %v8161 = vld [vmem:[#allocation2 + $0x88] sm:$0xff]
      %v8162 = vld [vmem:[#allocation2 + $0x90] sm:$0xff]
      %v8163 = vld [vmem:[#allocation2 + $0xa8] sm:$0xff]
      %v8164 = vld [vmem:[#allocation2 + $0xb0] sm:$0xff]
      %v8165 = vld [vmem:[#allocation2 + $0xc8] sm:$0xff]
      %v8166 = vld [vmem:[#allocation2 + $0xd0] sm:$0xff]
      %v8167 = vld [vmem:[#allocation2 + $0xe8] sm:$0xff]
      %v8168 = vld [vmem:[#allocation2 + $0xf0] sm:$0xff]
      %v8169 = vld [vmem:[#allocation2 + $0x108] sm:$0xff]
      %v8170 = vld [vmem:[#allocation2 + $0x110] sm:$0xff]
      %v8171 = vld [vmem:[#allocation2 + $0x128] sm:$0xff]
      %v8172 = vld [vmem:[#allocation2 + $0x130] sm:$0xff]
      %v8173 = vld [vmem:[#allocation2 + $0x148] sm:$0xff]
      %v8174 = vld [vmem:[#allocation2 + $0x150] sm:$0xff]
      %v8175 = vld [vmem:[#allocation2 + $0x168] sm:$0xff]
      %v8176 = vld [vmem:[#allocation2 + $0x170] sm:$0xff]
      %v8177 = vld [vmem:[#allocation2 + $0x188] sm:$0xff]
      %v8178 = vld [vmem:[#allocation2 + $0x190] sm:$0xff]
      %v8179 = vld [vmem:[#allocation2 + $0x1a8] sm:$0xff]
      %v8180 = vld [vmem:[#allocation2 + $0x1b0] sm:$0xff]
      %v8181 = vld [vmem:[#allocation2 + $0x1c8] sm:$0xff]
      %v8182 = vld [vmem:[#allocation2 + $0x1d0] sm:$0xff]
      %v8183 = vld [vmem:[#allocation2 + $0x1e8] sm:$0xff]
      %v8184 = vld [vmem:[#allocation2 + $0x1f0] sm:$0xff]
      %v8185 = vld [vmem:[#allocation2 + $0x208] sm:$0xff]
      %v8186 = vld [vmem:[#allocation2 + $0x210] sm:$0xff]
      %v8187 = vld [vmem:[#allocation2 + $0x228] sm:$0xff]
      %v8188 = vld [vmem:[#allocation2 + $0x230] sm:$0xff]
      %v8189 = vperm.slane %v7920, 1
      %v8190 = vmul.f32 %v8153, %v8189
      %v8191 = vmul.f32 %v8154, %v8189
      %v8192 = vmul.f32 %v8155, %v8189
      %v8193 = vmul.f32 %v8156, %v8189
      %v8194 = vmul.f32 %v8157, %v8189
      %v8195 = vmul.f32 %v8158, %v8189
      %v8196 = vmul.f32 %v8159, %v8189
      %v8197 = vmul.f32 %v8160, %v8189
      %v8198 = vmul.f32 %v8161, %v8189
      %v8199 = vmul.f32 %v8162, %v8189
      %v8200 = vmul.f32 %v8163, %v8189
      %v8201 = vmul.f32 %v8164, %v8189
      %v8202 = vmul.f32 %v8165, %v8189
      %v8203 = vmul.f32 %v8166, %v8189
      %v8204 = vmul.f32 %v8167, %v8189
      %v8205 = vmul.f32 %v8168, %v8189
      %v8206 = vmul.f32 %v8169, %v8189
      %v8207 = vmul.f32 %v8170, %v8189
      %v8208 = vmul.f32 %v8171, %v8189
      %v8209 = vmul.f32 %v8172, %v8189
      %v8210 = vmul.f32 %v8173, %v8189
      %v8211 = vmul.f32 %v8174, %v8189
      %v8212 = vmul.f32 %v8175, %v8189
      %v8213 = vmul.f32 %v8176, %v8189
      %v8214 = vmul.f32 %v8177, %v8189
      %v8215 = vmul.f32 %v8178, %v8189
      %v8216 = vmul.f32 %v8179, %v8189
      %v8217 = vmul.f32 %v8180, %v8189
      %v8218 = vmul.f32 %v8181, %v8189
      %v8219 = vmul.f32 %v8182, %v8189
      %v8220 = vmul.f32 %v8183, %v8189
      %v8221 = vmul.f32 %v8184, %v8189
      %v8222 = vadd.f32 %v8121, %v8190
      %v8223 = vadd.f32 %v8122, %v8191
      %v8224 = vadd.f32 %v8123, %v8192
      %v8225 = vadd.f32 %v8124, %v8193
      %v8226 = vadd.f32 %v8125, %v8194
      %v8227 = vadd.f32 %v8126, %v8195
      %v8228 = vadd.f32 %v8127, %v8196
      %v8229 = vadd.f32 %v8128, %v8197
      %v8230 = vadd.f32 %v8129, %v8198
      %v8231 = vadd.f32 %v8130, %v8199
      %v8232 = vadd.f32 %v8131, %v8200
      %v8233 = vadd.f32 %v8132, %v8201
      %v8234 = vadd.f32 %v8133, %v8202
      %v8235 = vadd.f32 %v8134, %v8203
      %v8236 = vadd.f32 %v8135, %v8204
      %v8237 = vadd.f32 %v8136, %v8205
      %v8238 = vadd.f32 %v8137, %v8206
      %v8239 = vadd.f32 %v8138, %v8207
      %v8240 = vadd.f32 %v8139, %v8208
      %v8241 = vadd.f32 %v8140, %v8209
      %v8242 = vadd.f32 %v8141, %v8210
      %v8243 = vadd.f32 %v8142, %v8211
      %v8244 = vadd.f32 %v8143, %v8212
      %v8245 = vadd.f32 %v8144, %v8213
      %v8246 = vadd.f32 %v8145, %v8214
      %v8247 = vadd.f32 %v8146, %v8215
      %v8248 = vadd.f32 %v8147, %v8216
      %v8249 = vadd.f32 %v8148, %v8217
      %v8250 = vadd.f32 %v8149, %v8218
      %v8251 = vadd.f32 %v8150, %v8219
      %v8252 = vadd.f32 %v8151, %v8220
      %v8253 = vadd.f32 %v8152, %v8221
      %v8254 = vperm.slane %v7920, 4
      %v8255 = vmul.f32 %v8155, %v8254
      %v8256 = vmul.f32 %v8156, %v8254
      %v8257 = vmul.f32 %v8157, %v8254
      %v8258 = vmul.f32 %v8158, %v8254
      %v8259 = vmul.f32 %v8159, %v8254
      %v8260 = vmul.f32 %v8160, %v8254
      %v8261 = vmul.f32 %v8161, %v8254
      %v8262 = vmul.f32 %v8162, %v8254
      %v8263 = vmul.f32 %v8163, %v8254
      %v8264 = vmul.f32 %v8164, %v8254
      %v8265 = vmul.f32 %v8165, %v8254
      %v8266 = vmul.f32 %v8166, %v8254
      %v8267 = vmul.f32 %v8167, %v8254
      %v8268 = vmul.f32 %v8168, %v8254
      %v8269 = vmul.f32 %v8169, %v8254
      %v8270 = vmul.f32 %v8170, %v8254
      %v8271 = vmul.f32 %v8171, %v8254
      %v8272 = vmul.f32 %v8172, %v8254
      %v8273 = vmul.f32 %v8173, %v8254
      %v8274 = vmul.f32 %v8174, %v8254
      %v8275 = vmul.f32 %v8175, %v8254
      %v8276 = vmul.f32 %v8176, %v8254
      %v8277 = vmul.f32 %v8177, %v8254
      %v8278 = vmul.f32 %v8178, %v8254
      %v8279 = vmul.f32 %v8179, %v8254
      %v8280 = vmul.f32 %v8180, %v8254
      %v8281 = vmul.f32 %v8181, %v8254
      %v8282 = vmul.f32 %v8182, %v8254
      %v8283 = vmul.f32 %v8183, %v8254
      %v8284 = vmul.f32 %v8184, %v8254
      %v8285 = vmul.f32 %v8185, %v8254
      %v8286 = vmul.f32 %v8186, %v8254
      %v8287 = vadd.f32 %v8222, %v8255
      %v8288 = vadd.f32 %v8223, %v8256
      %v8289 = vadd.f32 %v8224, %v8257
      %v8290 = vadd.f32 %v8225, %v8258
      %v8291 = vadd.f32 %v8226, %v8259
      %v8292 = vadd.f32 %v8227, %v8260
      %v8293 = vadd.f32 %v8228, %v8261
      %v8294 = vadd.f32 %v8229, %v8262
      %v8295 = vadd.f32 %v8230, %v8263
      %v8296 = vadd.f32 %v8231, %v8264
      %v8297 = vadd.f32 %v8232, %v8265
      %v8298 = vadd.f32 %v8233, %v8266
      %v8299 = vadd.f32 %v8234, %v8267
      %v8300 = vadd.f32 %v8235, %v8268
      %v8301 = vadd.f32 %v8236, %v8269
      %v8302 = vadd.f32 %v8237, %v8270
      %v8303 = vadd.f32 %v8238, %v8271
      %v8304 = vadd.f32 %v8239, %v8272
      %v8305 = vadd.f32 %v8240, %v8273
      %v8306 = vadd.f32 %v8241, %v8274
      %v8307 = vadd.f32 %v8242, %v8275
      %v8308 = vadd.f32 %v8243, %v8276
      %v8309 = vadd.f32 %v8244, %v8277
      %v8310 = vadd.f32 %v8245, %v8278
      %v8311 = vadd.f32 %v8246, %v8279
      %v8312 = vadd.f32 %v8247, %v8280
      %v8313 = vadd.f32 %v8248, %v8281
      %v8314 = vadd.f32 %v8249, %v8282
      %v8315 = vadd.f32 %v8250, %v8283
      %v8316 = vadd.f32 %v8251, %v8284
      %v8317 = vadd.f32 %v8252, %v8285
      %v8318 = vadd.f32 %v8253, %v8286
      %v8319 = vperm.slane %v7920, 7
      %v8320 = vmul.f32 %v8157, %v8319
      %v8321 = vmul.f32 %v8158, %v8319
      %v8322 = vmul.f32 %v8159, %v8319
      %v8323 = vmul.f32 %v8160, %v8319
      %v8324 = vmul.f32 %v8161, %v8319
      %v8325 = vmul.f32 %v8162, %v8319
      %v8326 = vmul.f32 %v8163, %v8319
      %v8327 = vmul.f32 %v8164, %v8319
      %v8328 = vmul.f32 %v8165, %v8319
      %v8329 = vmul.f32 %v8166, %v8319
      %v8330 = vmul.f32 %v8167, %v8319
      %v8331 = vmul.f32 %v8168, %v8319
      %v8332 = vmul.f32 %v8169, %v8319
      %v8333 = vmul.f32 %v8170, %v8319
      %v8334 = vmul.f32 %v8171, %v8319
      %v8335 = vmul.f32 %v8172, %v8319
      %v8336 = vmul.f32 %v8173, %v8319
      %v8337 = vmul.f32 %v8174, %v8319
      %v8338 = vmul.f32 %v8175, %v8319
      %v8339 = vmul.f32 %v8176, %v8319
      %v8340 = vmul.f32 %v8177, %v8319
      %v8341 = vmul.f32 %v8178, %v8319
      %v8342 = vmul.f32 %v8179, %v8319
      %v8343 = vmul.f32 %v8180, %v8319
      %v8344 = vmul.f32 %v8181, %v8319
      %v8345 = vmul.f32 %v8182, %v8319
      %v8346 = vmul.f32 %v8183, %v8319
      %v8347 = vmul.f32 %v8184, %v8319
      %v8348 = vmul.f32 %v8185, %v8319
      %v8349 = vmul.f32 %v8186, %v8319
      %v8350 = vmul.f32 %v8187, %v8319
      %v8351 = vmul.f32 %v8188, %v8319
      %v8352 = vadd.f32 %v8287, %v8320
      %v8353 = vadd.f32 %v8288, %v8321
      %v8354 = vadd.f32 %v8289, %v8322
      %v8355 = vadd.f32 %v8290, %v8323
      %v8356 = vadd.f32 %v8291, %v8324
      %v8357 = vadd.f32 %v8292, %v8325
      %v8358 = vadd.f32 %v8293, %v8326
      %v8359 = vadd.f32 %v8294, %v8327
      %v8360 = vadd.f32 %v8295, %v8328
      %v8361 = vadd.f32 %v8296, %v8329
      %v8362 = vadd.f32 %v8297, %v8330
      %v8363 = vadd.f32 %v8298, %v8331
      %v8364 = vadd.f32 %v8299, %v8332
      %v8365 = vadd.f32 %v8300, %v8333
      %v8366 = vadd.f32 %v8301, %v8334
      %v8367 = vadd.f32 %v8302, %v8335
      %v8368 = vadd.f32 %v8303, %v8336
      %v8369 = vadd.f32 %v8304, %v8337
      %v8370 = vadd.f32 %v8305, %v8338
      %v8371 = vadd.f32 %v8306, %v8339
      %v8372 = vadd.f32 %v8307, %v8340
      %v8373 = vadd.f32 %v8308, %v8341
      %v8374 = vadd.f32 %v8309, %v8342
      %v8375 = vadd.f32 %v8310, %v8343
      %v8376 = vadd.f32 %v8311, %v8344
      %v8377 = vadd.f32 %v8312, %v8345
      %v8378 = vadd.f32 %v8313, %v8346
      %v8379 = vadd.f32 %v8314, %v8347
      %v8380 = vadd.f32 %v8315, %v8348
      %v8381 = vadd.f32 %v8316, %v8349
      %v8382 = vadd.f32 %v8317, %v8350
      %v8383 = vadd.f32 %v8318, %v8351
      %v8384 = vld [vmem:[#allocation2 + $0x9] sm:$0xff]
      %v8385 = vld [vmem:[#allocation2 + $0x11] sm:$0xff]
      %v8386 = vld [vmem:[#allocation2 + $0x29] sm:$0xff]
      %v8387 = vld [vmem:[#allocation2 + $0x31] sm:$0xff]
      %v8388 = vld [vmem:[#allocation2 + $0x49] sm:$0xff]
      %v8389 = vld [vmem:[#allocation2 + $0x51] sm:$0xff]
      %v8390 = vld [vmem:[#allocation2 + $0x69] sm:$0xff]
      %v8391 = vld [vmem:[#allocation2 + $0x71] sm:$0xff]
      %v8392 = vld [vmem:[#allocation2 + $0x89] sm:$0xff]
      %v8393 = vld [vmem:[#allocation2 + $0x91] sm:$0xff]
      %v8394 = vld [vmem:[#allocation2 + $0xa9] sm:$0xff]
      %v8395 = vld [vmem:[#allocation2 + $0xb1] sm:$0xff]
      %v8396 = vld [vmem:[#allocation2 + $0xc9] sm:$0xff]
      %v8397 = vld [vmem:[#allocation2 + $0xd1] sm:$0xff]
      %v8398 = vld [vmem:[#allocation2 + $0xe9] sm:$0xff]
      %v8399 = vld [vmem:[#allocation2 + $0xf1] sm:$0xff]
      %v8400 = vld [vmem:[#allocation2 + $0x109] sm:$0xff]
      %v8401 = vld [vmem:[#allocation2 + $0x111] sm:$0xff]
      %v8402 = vld [vmem:[#allocation2 + $0x129] sm:$0xff]
      %v8403 = vld [vmem:[#allocation2 + $0x131] sm:$0xff]
      %v8404 = vld [vmem:[#allocation2 + $0x149] sm:$0xff]
      %v8405 = vld [vmem:[#allocation2 + $0x151] sm:$0xff]
      %v8406 = vld [vmem:[#allocation2 + $0x169] sm:$0xff]
      %v8407 = vld [vmem:[#allocation2 + $0x171] sm:$0xff]
      %v8408 = vld [vmem:[#allocation2 + $0x189] sm:$0xff]
      %v8409 = vld [vmem:[#allocation2 + $0x191] sm:$0xff]
      %v8410 = vld [vmem:[#allocation2 + $0x1a9] sm:$0xff]
      %v8411 = vld [vmem:[#allocation2 + $0x1b1] sm:$0xff]
      %v8412 = vld [vmem:[#allocation2 + $0x1c9] sm:$0xff]
      %v8413 = vld [vmem:[#allocation2 + $0x1d1] sm:$0xff]
      %v8414 = vld [vmem:[#allocation2 + $0x1e9] sm:$0xff]
      %v8415 = vld [vmem:[#allocation2 + $0x1f1] sm:$0xff]
      %v8416 = vld [vmem:[#allocation2 + $0x209] sm:$0xff]
      %v8417 = vld [vmem:[#allocation2 + $0x211] sm:$0xff]
      %v8418 = vld [vmem:[#allocation2 + $0x229] sm:$0xff]
      %v8419 = vld [vmem:[#allocation2 + $0x231] sm:$0xff]
      %v8420 = vperm.slane %v7920, 2
      %v8421 = vmul.f32 %v8384, %v8420
      %v8422 = vmul.f32 %v8385, %v8420
      %v8423 = vmul.f32 %v8386, %v8420
      %v8424 = vmul.f32 %v8387, %v8420
      %v8425 = vmul.f32 %v8388, %v8420
      %v8426 = vmul.f32 %v8389, %v8420
      %v8427 = vmul.f32 %v8390, %v8420
      %v8428 = vmul.f32 %v8391, %v8420
      %v8429 = vmul.f32 %v8392, %v8420
      %v8430 = vmul.f32 %v8393, %v8420
      %v8431 = vmul.f32 %v8394, %v8420
      %v8432 = vmul.f32 %v8395, %v8420
      %v8433 = vmul.f32 %v8396, %v8420
      %v8434 = vmul.f32 %v8397, %v8420
      %v8435 = vmul.f32 %v8398, %v8420
      %v8436 = vmul.f32 %v8399, %v8420
      %v8437 = vmul.f32 %v8400, %v8420
      %v8438 = vmul.f32 %v8401, %v8420
      %v8439 = vmul.f32 %v8402, %v8420
      %v8440 = vmul.f32 %v8403, %v8420
      %v8441 = vmul.f32 %v8404, %v8420
      %v8442 = vmul.f32 %v8405, %v8420
      %v8443 = vmul.f32 %v8406, %v8420
      %v8444 = vmul.f32 %v8407, %v8420
      %v8445 = vmul.f32 %v8408, %v8420
      %v8446 = vmul.f32 %v8409, %v8420
      %v8447 = vmul.f32 %v8410, %v8420
      %v8448 = vmul.f32 %v8411, %v8420
      %v8449 = vmul.f32 %v8412, %v8420
      %v8450 = vmul.f32 %v8413, %v8420
      %v8451 = vmul.f32 %v8414, %v8420
      %v8452 = vmul.f32 %v8415, %v8420
      %v8453 = vadd.f32 %v8352, %v8421
      %v8454 = vadd.f32 %v8353, %v8422
      %v8455 = vadd.f32 %v8354, %v8423
      %v8456 = vadd.f32 %v8355, %v8424
      %v8457 = vadd.f32 %v8356, %v8425
      %v8458 = vadd.f32 %v8357, %v8426
      %v8459 = vadd.f32 %v8358, %v8427
      %v8460 = vadd.f32 %v8359, %v8428
      %v8461 = vadd.f32 %v8360, %v8429
      %v8462 = vadd.f32 %v8361, %v8430
      %v8463 = vadd.f32 %v8362, %v8431
      %v8464 = vadd.f32 %v8363, %v8432
      %v8465 = vadd.f32 %v8364, %v8433
      %v8466 = vadd.f32 %v8365, %v8434
      %v8467 = vadd.f32 %v8366, %v8435
      %v8468 = vadd.f32 %v8367, %v8436
      %v8469 = vadd.f32 %v8368, %v8437
      %v8470 = vadd.f32 %v8369, %v8438
      %v8471 = vadd.f32 %v8370, %v8439
      %v8472 = vadd.f32 %v8371, %v8440
      %v8473 = vadd.f32 %v8372, %v8441
      %v8474 = vadd.f32 %v8373, %v8442
      %v8475 = vadd.f32 %v8374, %v8443
      %v8476 = vadd.f32 %v8375, %v8444
      %v8477 = vadd.f32 %v8376, %v8445
      %v8478 = vadd.f32 %v8377, %v8446
      %v8479 = vadd.f32 %v8378, %v8447
      %v8480 = vadd.f32 %v8379, %v8448
      %v8481 = vadd.f32 %v8380, %v8449
      %v8482 = vadd.f32 %v8381, %v8450
      %v8483 = vadd.f32 %v8382, %v8451
      %v8484 = vadd.f32 %v8383, %v8452
      %v8485 = vperm.slane %v7920, 5
      %v8486 = vmul.f32 %v8386, %v8485
      %v8487 = vmul.f32 %v8387, %v8485
      %v8488 = vmul.f32 %v8388, %v8485
      %v8489 = vmul.f32 %v8389, %v8485
      %v8490 = vmul.f32 %v8390, %v8485
      %v8491 = vmul.f32 %v8391, %v8485
      %v8492 = vmul.f32 %v8392, %v8485
      %v8493 = vmul.f32 %v8393, %v8485
      %v8494 = vmul.f32 %v8394, %v8485
      %v8495 = vmul.f32 %v8395, %v8485
      %v8496 = vmul.f32 %v8396, %v8485
      %v8497 = vmul.f32 %v8397, %v8485
      %v8498 = vmul.f32 %v8398, %v8485
      %v8499 = vmul.f32 %v8399, %v8485
      %v8500 = vmul.f32 %v8400, %v8485
      %v8501 = vmul.f32 %v8401, %v8485
      %v8502 = vmul.f32 %v8402, %v8485
      %v8503 = vmul.f32 %v8403, %v8485
      %v8504 = vmul.f32 %v8404, %v8485
      %v8505 = vmul.f32 %v8405, %v8485
      %v8506 = vmul.f32 %v8406, %v8485
      %v8507 = vmul.f32 %v8407, %v8485
      %v8508 = vmul.f32 %v8408, %v8485
      %v8509 = vmul.f32 %v8409, %v8485
      %v8510 = vmul.f32 %v8410, %v8485
      %v8511 = vmul.f32 %v8411, %v8485
      %v8512 = vmul.f32 %v8412, %v8485
      %v8513 = vmul.f32 %v8413, %v8485
      %v8514 = vmul.f32 %v8414, %v8485
      %v8515 = vmul.f32 %v8415, %v8485
      %v8516 = vmul.f32 %v8416, %v8485
      %v8517 = vmul.f32 %v8417, %v8485
      %v8518 = vadd.f32 %v8453, %v8486
      %v8519 = vadd.f32 %v8454, %v8487
      %v8520 = vadd.f32 %v8455, %v8488
      %v8521 = vadd.f32 %v8456, %v8489
      %v8522 = vadd.f32 %v8457, %v8490
      %v8523 = vadd.f32 %v8458, %v8491
      %v8524 = vadd.f32 %v8459, %v8492
      %v8525 = vadd.f32 %v8460, %v8493
      %v8526 = vadd.f32 %v8461, %v8494
      %v8527 = vadd.f32 %v8462, %v8495
      %v8528 = vadd.f32 %v8463, %v8496
      %v8529 = vadd.f32 %v8464, %v8497
      %v8530 = vadd.f32 %v8465, %v8498
      %v8531 = vadd.f32 %v8466, %v8499
      %v8532 = vadd.f32 %v8467, %v8500
      %v8533 = vadd.f32 %v8468, %v8501
      %v8534 = vadd.f32 %v8469, %v8502
      %v8535 = vadd.f32 %v8470, %v8503
      %v8536 = vadd.f32 %v8471, %v8504
      %v8537 = vadd.f32 %v8472, %v8505
      %v8538 = vadd.f32 %v8473, %v8506
      %v8539 = vadd.f32 %v8474, %v8507
      %v8540 = vadd.f32 %v8475, %v8508
      %v8541 = vadd.f32 %v8476, %v8509
      %v8542 = vadd.f32 %v8477, %v8510
      %v8543 = vadd.f32 %v8478, %v8511
      %v8544 = vadd.f32 %v8479, %v8512
      %v8545 = vadd.f32 %v8480, %v8513
      %v8546 = vadd.f32 %v8481, %v8514
      %v8547 = vadd.f32 %v8482, %v8515
      %v8548 = vadd.f32 %v8483, %v8516
      %v8549 = vadd.f32 %v8484, %v8517
      %v8550 = vperm.slane %v7921, 0
      %v8551 = vmul.f32 %v8388, %v8550
      %v8552 = vmul.f32 %v8389, %v8550
      %v8553 = vmul.f32 %v8390, %v8550
      %v8554 = vmul.f32 %v8391, %v8550
      %v8555 = vmul.f32 %v8392, %v8550
      %v8556 = vmul.f32 %v8393, %v8550
      %v8557 = vmul.f32 %v8394, %v8550
      %v8558 = vmul.f32 %v8395, %v8550
      %v8559 = vmul.f32 %v8396, %v8550
      %v8560 = vmul.f32 %v8397, %v8550
      %v8561 = vmul.f32 %v8398, %v8550
      %v8562 = vmul.f32 %v8399, %v8550
      %v8563 = vmul.f32 %v8400, %v8550
      %v8564 = vmul.f32 %v8401, %v8550
      %v8565 = vmul.f32 %v8402, %v8550
      %v8566 = vmul.f32 %v8403, %v8550
      %v8567 = vmul.f32 %v8404, %v8550
      %v8568 = vmul.f32 %v8405, %v8550
      %v8569 = vmul.f32 %v8406, %v8550
      %v8570 = vmul.f32 %v8407, %v8550
      %v8571 = vmul.f32 %v8408, %v8550
      %v8572 = vmul.f32 %v8409, %v8550
      %v8573 = vmul.f32 %v8410, %v8550
      %v8574 = vmul.f32 %v8411, %v8550
      %v8575 = vmul.f32 %v8412, %v8550
      %v8576 = vmul.f32 %v8413, %v8550
      %v8577 = vmul.f32 %v8414, %v8550
      %v8578 = vmul.f32 %v8415, %v8550
      %v8579 = vmul.f32 %v8416, %v8550
      %v8580 = vmul.f32 %v8417, %v8550
      %v8581 = vmul.f32 %v8418, %v8550
      %v8582 = vmul.f32 %v8419, %v8550
      %v8583 = vadd.f32 %v8518, %v8551
      %v8584 = vadd.f32 %v8519, %v8552
      %v8585 = vadd.f32 %v8520, %v8553
      %v8586 = vadd.f32 %v8521, %v8554
      %v8587 = vadd.f32 %v8522, %v8555
      %v8588 = vadd.f32 %v8523, %v8556
      %v8589 = vadd.f32 %v8524, %v8557
      %v8590 = vadd.f32 %v8525, %v8558
      %v8591 = vadd.f32 %v8526, %v8559
      %v8592 = vadd.f32 %v8527, %v8560
      %v8593 = vadd.f32 %v8528, %v8561
      %v8594 = vadd.f32 %v8529, %v8562
      %v8595 = vadd.f32 %v8530, %v8563
      %v8596 = vadd.f32 %v8531, %v8564
      %v8597 = vadd.f32 %v8532, %v8565
      %v8598 = vadd.f32 %v8533, %v8566
      %v8599 = vadd.f32 %v8534, %v8567
      %v8600 = vadd.f32 %v8535, %v8568
      %v8601 = vadd.f32 %v8536, %v8569
      %v8602 = vadd.f32 %v8537, %v8570
      %v8603 = vadd.f32 %v8538, %v8571
      %v8604 = vadd.f32 %v8539, %v8572
      %v8605 = vadd.f32 %v8540, %v8573
      %v8606 = vadd.f32 %v8541, %v8574
      %v8607 = vadd.f32 %v8542, %v8575
      %v8608 = vadd.f32 %v8543, %v8576
      %v8609 = vadd.f32 %v8544, %v8577
      %v8610 = vadd.f32 %v8545, %v8578
      %v8611 = vadd.f32 %v8546, %v8579
      %v8612 = vadd.f32 %v8547, %v8580
      %v8613 = vadd.f32 %v8548, %v8581
      %v8614 = vadd.f32 %v8549, %v8582
      %v8615 = vld [vmem:[%s8] sm:$0x1]
      %v8617 = vperm.slane %v8615, 0
      %v8619 = vmul.f32 %v8583, %v8617
      %v8620 = vmul.f32 %v8584, %v8617
      %v8621 = vmul.f32 %v8585, %v8617
      %v8622 = vmul.f32 %v8586, %v8617
      %v8623 = vmul.f32 %v8587, %v8617
      %v8624 = vmul.f32 %v8588, %v8617
      %v8625 = vmul.f32 %v8589, %v8617
      %v8626 = vmul.f32 %v8590, %v8617
      %v8627 = vmul.f32 %v8591, %v8617
      %v8628 = vmul.f32 %v8592, %v8617
      %v8629 = vmul.f32 %v8593, %v8617
      %v8630 = vmul.f32 %v8594, %v8617
      %v8631 = vmul.f32 %v8595, %v8617
      %v8632 = vmul.f32 %v8596, %v8617
      %v8633 = vmul.f32 %v8597, %v8617
      %v8634 = vmul.f32 %v8598, %v8617
      %v8635 = vmul.f32 %v8599, %v8617
      %v8636 = vmul.f32 %v8600, %v8617
      %v8637 = vmul.f32 %v8601, %v8617
      %v8638 = vmul.f32 %v8602, %v8617
      %v8639 = vmul.f32 %v8603, %v8617
      %v8640 = vmul.f32 %v8604, %v8617
      %v8641 = vmul.f32 %v8605, %v8617
      %v8642 = vmul.f32 %v8606, %v8617
      %v8643 = vmul.f32 %v8607, %v8617
      %v8644 = vmul.f32 %v8608, %v8617
      %v8645 = vmul.f32 %v8609, %v8617
      %v8646 = vmul.f32 %v8610, %v8617
      %v8647 = vmul.f32 %v8611, %v8617
      %v8648 = vmul.f32 %v8612, %v8617
      %v8649 = vmul.f32 %v8613, %v8617
      %v8650 = vmul.f32 %v8614, %v8617
      %v8651 = vld [vmem:[%s9] sm:$0x1]
      %v8653 = vperm.slane %v8651, 0
      %v8655 = vadd.f32 %v8619, %v8653
      %v8656 = vadd.f32 %v8620, %v8653
      %v8657 = vadd.f32 %v8621, %v8653
      %v8658 = vadd.f32 %v8622, %v8653
      %v8659 = vadd.f32 %v8623, %v8653
      %v8660 = vadd.f32 %v8624, %v8653
      %v8661 = vadd.f32 %v8625, %v8653
      %v8662 = vadd.f32 %v8626, %v8653
      %v8663 = vadd.f32 %v8627, %v8653
      %v8664 = vadd.f32 %v8628, %v8653
      %v8665 = vadd.f32 %v8629, %v8653
      %v8666 = vadd.f32 %v8630, %v8653
      %v8667 = vadd.f32 %v8631, %v8653
      %v8668 = vadd.f32 %v8632, %v8653
      %v8669 = vadd.f32 %v8633, %v8653
      %v8670 = vadd.f32 %v8634, %v8653
      %v8671 = vadd.f32 %v8635, %v8653
      %v8672 = vadd.f32 %v8636, %v8653
      %v8673 = vadd.f32 %v8637, %v8653
      %v8674 = vadd.f32 %v8638, %v8653
      %v8675 = vadd.f32 %v8639, %v8653
      %v8676 = vadd.f32 %v8640, %v8653
      %v8677 = vadd.f32 %v8641, %v8653
      %v8678 = vadd.f32 %v8642, %v8653
      %v8679 = vadd.f32 %v8643, %v8653
      %v8680 = vadd.f32 %v8644, %v8653
      %v8681 = vadd.f32 %v8645, %v8653
      %v8682 = vadd.f32 %v8646, %v8653
      %v8683 = vadd.f32 %v8647, %v8653
      %v8684 = vadd.f32 %v8648, %v8653
      %v8685 = vadd.f32 %v8649, %v8653
      %v8686 = vadd.f32 %v8650, %v8653
      %v8687 = vsel %vm555, %v8655, 0.0
      %8688 = vadd.xlane.f32.xlu0 %v8687
      %v8689 = vpop.xlane.xlu0 %8688
      %v8690 = vsel %vm555, %v8656, 0.0
      %8691 = vadd.xlane.f32.xlu0 %v8690
      %v8692 = vpop.xlane.xlu0 %8691
      %v8693 = vsel %vm555, %v8657, 0.0
      %8694 = vadd.xlane.f32.xlu0 %v8693
      %v8695 = vpop.xlane.xlu0 %8694
      %v8696 = vsel %vm555, %v8658, 0.0
      %8697 = vadd.xlane.f32.xlu0 %v8696
      %v8698 = vpop.xlane.xlu0 %8697
      %v8699 = vsel %vm555, %v8659, 0.0
      %8700 = vadd.xlane.f32.xlu0 %v8699
      %v8701 = vpop.xlane.xlu0 %8700
      %v8702 = vsel %vm555, %v8660, 0.0
      %8703 = vadd.xlane.f32.xlu0 %v8702
      %v8704 = vpop.xlane.xlu0 %8703
      %v8705 = vsel %vm555, %v8661, 0.0
      %8706 = vadd.xlane.f32.xlu0 %v8705
      %v8707 = vpop.xlane.xlu0 %8706
      %v8708 = vsel %vm555, %v8662, 0.0
      %8709 = vadd.xlane.f32.xlu0 %v8708
      %v8710 = vpop.xlane.xlu0 %8709
      %v8711 = vsel %vm555, %v8663, 0.0
      %8712 = vadd.xlane.f32.xlu0 %v8711
      %v8713 = vpop.xlane.xlu0 %8712
      %v8714 = vsel %vm555, %v8664, 0.0
      %8715 = vadd.xlane.f32.xlu0 %v8714
      %v8716 = vpop.xlane.xlu0 %8715
      %v8717 = vsel %vm555, %v8665, 0.0
      %8718 = vadd.xlane.f32.xlu0 %v8717
      %v8719 = vpop.xlane.xlu0 %8718
      %v8720 = vsel %vm555, %v8666, 0.0
      %8721 = vadd.xlane.f32.xlu0 %v8720
      %v8722 = vpop.xlane.xlu0 %8721
      %v8723 = vsel %vm555, %v8667, 0.0
      %8724 = vadd.xlane.f32.xlu0 %v8723
      %v8725 = vpop.xlane.xlu0 %8724
      %v8726 = vsel %vm555, %v8668, 0.0
      %8727 = vadd.xlane.f32.xlu0 %v8726
      %v8728 = vpop.xlane.xlu0 %8727
      %v8729 = vsel %vm555, %v8669, 0.0
      %8730 = vadd.xlane.f32.xlu0 %v8729
      %v8731 = vpop.xlane.xlu0 %8730
      %v8732 = vsel %vm555, %v8670, 0.0
      %8733 = vadd.xlane.f32.xlu0 %v8732
      %v8734 = vpop.xlane.xlu0 %8733
      %v8735 = vsel %vm555, %v8671, 0.0
      %8736 = vadd.xlane.f32.xlu0 %v8735
      %v8737 = vpop.xlane.xlu0 %8736
      %v8738 = vsel %vm555, %v8672, 0.0
      %8739 = vadd.xlane.f32.xlu0 %v8738
      %v8740 = vpop.xlane.xlu0 %8739
      %v8741 = vsel %vm555, %v8673, 0.0
      %8742 = vadd.xlane.f32.xlu0 %v8741
      %v8743 = vpop.xlane.xlu0 %8742
      %v8744 = vsel %vm555, %v8674, 0.0
      %8745 = vadd.xlane.f32.xlu0 %v8744
      %v8746 = vpop.xlane.xlu0 %8745
      %v8747 = vsel %vm555, %v8675, 0.0
      %8748 = vadd.xlane.f32.xlu0 %v8747
      %v8749 = vpop.xlane.xlu0 %8748
      %v8750 = vsel %vm555, %v8676, 0.0
      %8751 = vadd.xlane.f32.xlu0 %v8750
      %v8752 = vpop.xlane.xlu0 %8751
      %v8753 = vsel %vm555, %v8677, 0.0
      %8754 = vadd.xlane.f32.xlu0 %v8753
      %v8755 = vpop.xlane.xlu0 %8754
      %v8756 = vsel %vm555, %v8678, 0.0
      %8757 = vadd.xlane.f32.xlu0 %v8756
      %v8758 = vpop.xlane.xlu0 %8757
      %v8759 = vsel %vm555, %v8679, 0.0
      %8760 = vadd.xlane.f32.xlu0 %v8759
      %v8761 = vpop.xlane.xlu0 %8760
      %v8762 = vsel %vm555, %v8680, 0.0
      %8763 = vadd.xlane.f32.xlu0 %v8762
      %v8764 = vpop.xlane.xlu0 %8763
      %v8765 = vsel %vm555, %v8681, 0.0
      %8766 = vadd.xlane.f32.xlu0 %v8765
      %v8767 = vpop.xlane.xlu0 %8766
      %v8768 = vsel %vm555, %v8682, 0.0
      %8769 = vadd.xlane.f32.xlu0 %v8768
      %v8770 = vpop.xlane.xlu0 %8769
      %v8771 = vsel %vm555, %v8683, 0.0
      %8772 = vadd.xlane.f32.xlu0 %v8771
      %v8773 = vpop.xlane.xlu0 %8772
      %v8774 = vsel %vm555, %v8684, 0.0
      %8775 = vadd.xlane.f32.xlu0 %v8774
      %v8776 = vpop.xlane.xlu0 %8775
      %v8777 = vsel %vm555, %v8685, 0.0
      %8778 = vadd.xlane.f32.xlu0 %v8777
      %v8779 = vpop.xlane.xlu0 %8778
      %v8780 = vsel %vm555, %v8686, 0.0
      %8781 = vadd.xlane.f32.xlu0 %v8780
      %v8782 = vpop.xlane.xlu0 %8781
      %v8783 = vmul.f32 %v8689, %v658
      %v8784 = vmul.f32 %v8692, %v658
      %v8785 = vmul.f32 %v8695, %v658
      %v8786 = vmul.f32 %v8698, %v658
      %v8787 = vmul.f32 %v8701, %v658
      %v8788 = vmul.f32 %v8704, %v658
      %v8789 = vmul.f32 %v8707, %v658
      %v8790 = vmul.f32 %v8710, %v658
      %v8791 = vmul.f32 %v8713, %v658
      %v8792 = vmul.f32 %v8716, %v658
      %v8793 = vmul.f32 %v8719, %v658
      %v8794 = vmul.f32 %v8722, %v658
      %v8795 = vmul.f32 %v8725, %v658
      %v8796 = vmul.f32 %v8728, %v658
      %v8797 = vmul.f32 %v8731, %v658
      %v8798 = vmul.f32 %v8734, %v658
      %v8799 = vmul.f32 %v8737, %v658
      %v8800 = vmul.f32 %v8740, %v658
      %v8801 = vmul.f32 %v8743, %v658
      %v8802 = vmul.f32 %v8746, %v658
      %v8803 = vmul.f32 %v8749, %v658
      %v8804 = vmul.f32 %v8752, %v658
      %v8805 = vmul.f32 %v8755, %v658
      %v8806 = vmul.f32 %v8758, %v658
      %v8807 = vmul.f32 %v8761, %v658
      %v8808 = vmul.f32 %v8764, %v658
      %v8809 = vmul.f32 %v8767, %v658
      %v8810 = vmul.f32 %v8770, %v658
      %v8811 = vmul.f32 %v8773, %v658
      %v8812 = vmul.f32 %v8776, %v658
      %v8813 = vmul.f32 %v8779, %v658
      %v8814 = vmul.f32 %v8782, %v658
      %v8815 = vsub.f32 %v8655, %v8783
      %v8816 = vsub.f32 %v8656, %v8784
      %v8817 = vsub.f32 %v8657, %v8785
      %v8818 = vsub.f32 %v8658, %v8786
      %v8819 = vsub.f32 %v8659, %v8787
      %v8820 = vsub.f32 %v8660, %v8788
      %v8821 = vsub.f32 %v8661, %v8789
      %v8822 = vsub.f32 %v8662, %v8790
      %v8823 = vsub.f32 %v8663, %v8791
      %v8824 = vsub.f32 %v8664, %v8792
      %v8825 = vsub.f32 %v8665, %v8793
      %v8826 = vsub.f32 %v8666, %v8794
      %v8827 = vsub.f32 %v8667, %v8795
      %v8828 = vsub.f32 %v8668, %v8796
      %v8829 = vsub.f32 %v8669, %v8797
      %v8830 = vsub.f32 %v8670, %v8798
      %v8831 = vsub.f32 %v8671, %v8799
      %v8832 = vsub.f32 %v8672, %v8800
      %v8833 = vsub.f32 %v8673, %v8801
      %v8834 = vsub.f32 %v8674, %v8802
      %v8835 = vsub.f32 %v8675, %v8803
      %v8836 = vsub.f32 %v8676, %v8804
      %v8837 = vsub.f32 %v8677, %v8805
      %v8838 = vsub.f32 %v8678, %v8806
      %v8839 = vsub.f32 %v8679, %v8807
      %v8840 = vsub.f32 %v8680, %v8808
      %v8841 = vsub.f32 %v8681, %v8809
      %v8842 = vsub.f32 %v8682, %v8810
      %v8843 = vsub.f32 %v8683, %v8811
      %v8844 = vsub.f32 %v8684, %v8812
      %v8845 = vsub.f32 %v8685, %v8813
      %v8846 = vsub.f32 %v8686, %v8814
      %v8847 = vmul.f32 %v8815, %v8815
      %v8848 = vmul.f32 %v8816, %v8816
      %v8849 = vmul.f32 %v8817, %v8817
      %v8850 = vmul.f32 %v8818, %v8818
      %v8851 = vmul.f32 %v8819, %v8819
      %v8852 = vmul.f32 %v8820, %v8820
      %v8853 = vmul.f32 %v8821, %v8821
      %v8854 = vmul.f32 %v8822, %v8822
      %v8855 = vmul.f32 %v8823, %v8823
      %v8856 = vmul.f32 %v8824, %v8824
      %v8857 = vmul.f32 %v8825, %v8825
      %v8858 = vmul.f32 %v8826, %v8826
      %v8859 = vmul.f32 %v8827, %v8827
      %v8860 = vmul.f32 %v8828, %v8828
      %v8861 = vmul.f32 %v8829, %v8829
      %v8862 = vmul.f32 %v8830, %v8830
      %v8863 = vmul.f32 %v8831, %v8831
      %v8864 = vmul.f32 %v8832, %v8832
      %v8865 = vmul.f32 %v8833, %v8833
      %v8866 = vmul.f32 %v8834, %v8834
      %v8867 = vmul.f32 %v8835, %v8835
      %v8868 = vmul.f32 %v8836, %v8836
      %v8869 = vmul.f32 %v8837, %v8837
      %v8870 = vmul.f32 %v8838, %v8838
      %v8871 = vmul.f32 %v8839, %v8839
      %v8872 = vmul.f32 %v8840, %v8840
      %v8873 = vmul.f32 %v8841, %v8841
      %v8874 = vmul.f32 %v8842, %v8842
      %v8875 = vmul.f32 %v8843, %v8843
      %v8876 = vmul.f32 %v8844, %v8844
      %v8877 = vmul.f32 %v8845, %v8845
      %v8878 = vmul.f32 %v8846, %v8846
      %v8879 = vsel %vm555, %v8847, 0.0
      %8880 = vadd.xlane.f32.xlu0 %v8879
      %v8881 = vpop.xlane.xlu0 %8880
      %v8882 = vsel %vm555, %v8848, 0.0
      %8883 = vadd.xlane.f32.xlu0 %v8882
      %v8884 = vpop.xlane.xlu0 %8883
      %v8885 = vsel %vm555, %v8849, 0.0
      %8886 = vadd.xlane.f32.xlu0 %v8885
      %v8887 = vpop.xlane.xlu0 %8886
      %v8888 = vsel %vm555, %v8850, 0.0
      %8889 = vadd.xlane.f32.xlu0 %v8888
      %v8890 = vpop.xlane.xlu0 %8889
      %v8891 = vsel %vm555, %v8851, 0.0
      %8892 = vadd.xlane.f32.xlu0 %v8891
      %v8893 = vpop.xlane.xlu0 %8892
      %v8894 = vsel %vm555, %v8852, 0.0
      %8895 = vadd.xlane.f32.xlu0 %v8894
      %v8896 = vpop.xlane.xlu0 %8895
      %v8897 = vsel %vm555, %v8853, 0.0
      %8898 = vadd.xlane.f32.xlu0 %v8897
      %v8899 = vpop.xlane.xlu0 %8898
      %v8900 = vsel %vm555, %v8854, 0.0
      %8901 = vadd.xlane.f32.xlu0 %v8900
      %v8902 = vpop.xlane.xlu0 %8901
      %v8903 = vsel %vm555, %v8855, 0.0
      %8904 = vadd.xlane.f32.xlu0 %v8903
      %v8905 = vpop.xlane.xlu0 %8904
      %v8906 = vsel %vm555, %v8856, 0.0
      %8907 = vadd.xlane.f32.xlu0 %v8906
      %v8908 = vpop.xlane.xlu0 %8907
      %v8909 = vsel %vm555, %v8857, 0.0
      %8910 = vadd.xlane.f32.xlu0 %v8909
      %v8911 = vpop.xlane.xlu0 %8910
      %v8912 = vsel %vm555, %v8858, 0.0
      %8913 = vadd.xlane.f32.xlu0 %v8912
      %v8914 = vpop.xlane.xlu0 %8913
      %v8915 = vsel %vm555, %v8859, 0.0
      %8916 = vadd.xlane.f32.xlu0 %v8915
      %v8917 = vpop.xlane.xlu0 %8916
      %v8918 = vsel %vm555, %v8860, 0.0
      %8919 = vadd.xlane.f32.xlu0 %v8918
      %v8920 = vpop.xlane.xlu0 %8919
      %v8921 = vsel %vm555, %v8861, 0.0
      %8922 = vadd.xlane.f32.xlu0 %v8921
      %v8923 = vpop.xlane.xlu0 %8922
      %v8924 = vsel %vm555, %v8862, 0.0
      %8925 = vadd.xlane.f32.xlu0 %v8924
      %v8926 = vpop.xlane.xlu0 %8925
      %v8927 = vsel %vm555, %v8863, 0.0
      %8928 = vadd.xlane.f32.xlu0 %v8927
      %v8929 = vpop.xlane.xlu0 %8928
      %v8930 = vsel %vm555, %v8864, 0.0
      %8931 = vadd.xlane.f32.xlu0 %v8930
      %v8932 = vpop.xlane.xlu0 %8931
      %v8933 = vsel %vm555, %v8865, 0.0
      %8934 = vadd.xlane.f32.xlu0 %v8933
      %v8935 = vpop.xlane.xlu0 %8934
      %v8936 = vsel %vm555, %v8866, 0.0
      %8937 = vadd.xlane.f32.xlu0 %v8936
      %v8938 = vpop.xlane.xlu0 %8937
      %v8939 = vsel %vm555, %v8867, 0.0
      %8940 = vadd.xlane.f32.xlu0 %v8939
      %v8941 = vpop.xlane.xlu0 %8940
      %v8942 = vsel %vm555, %v8868, 0.0
      %8943 = vadd.xlane.f32.xlu0 %v8942
      %v8944 = vpop.xlane.xlu0 %8943
      %v8945 = vsel %vm555, %v8869, 0.0
      %8946 = vadd.xlane.f32.xlu0 %v8945
      %v8947 = vpop.xlane.xlu0 %8946
      %v8948 = vsel %vm555, %v8870, 0.0
      %8949 = vadd.xlane.f32.xlu0 %v8948
      %v8950 = vpop.xlane.xlu0 %8949
      %v8951 = vsel %vm555, %v8871, 0.0
      %8952 = vadd.xlane.f32.xlu0 %v8951
      %v8953 = vpop.xlane.xlu0 %8952
      %v8954 = vsel %vm555, %v8872, 0.0
      %8955 = vadd.xlane.f32.xlu0 %v8954
      %v8956 = vpop.xlane.xlu0 %8955
      %v8957 = vsel %vm555, %v8873, 0.0
      %8958 = vadd.xlane.f32.xlu0 %v8957
      %v8959 = vpop.xlane.xlu0 %8958
      %v8960 = vsel %vm555, %v8874, 0.0
      %8961 = vadd.xlane.f32.xlu0 %v8960
      %v8962 = vpop.xlane.xlu0 %8961
      %v8963 = vsel %vm555, %v8875, 0.0
      %8964 = vadd.xlane.f32.xlu0 %v8963
      %v8965 = vpop.xlane.xlu0 %8964
      %v8966 = vsel %vm555, %v8876, 0.0
      %8967 = vadd.xlane.f32.xlu0 %v8966
      %v8968 = vpop.xlane.xlu0 %8967
      %v8969 = vsel %vm555, %v8877, 0.0
      %8970 = vadd.xlane.f32.xlu0 %v8969
      %v8971 = vpop.xlane.xlu0 %8970
      %v8972 = vsel %vm555, %v8878, 0.0
      %8973 = vadd.xlane.f32.xlu0 %v8972
      %v8974 = vpop.xlane.xlu0 %8973
      %v8975 = vmul.f32 %v8881, %v658
      %v8976 = vmul.f32 %v8884, %v658
      %v8977 = vmul.f32 %v8887, %v658
      %v8978 = vmul.f32 %v8890, %v658
      %v8979 = vmul.f32 %v8893, %v658
      %v8980 = vmul.f32 %v8896, %v658
      %v8981 = vmul.f32 %v8899, %v658
      %v8982 = vmul.f32 %v8902, %v658
      %v8983 = vmul.f32 %v8905, %v658
      %v8984 = vmul.f32 %v8908, %v658
      %v8985 = vmul.f32 %v8911, %v658
      %v8986 = vmul.f32 %v8914, %v658
      %v8987 = vmul.f32 %v8917, %v658
      %v8988 = vmul.f32 %v8920, %v658
      %v8989 = vmul.f32 %v8923, %v658
      %v8990 = vmul.f32 %v8926, %v658
      %v8991 = vmul.f32 %v8929, %v658
      %v8992 = vmul.f32 %v8932, %v658
      %v8993 = vmul.f32 %v8935, %v658
      %v8994 = vmul.f32 %v8938, %v658
      %v8995 = vmul.f32 %v8941, %v658
      %v8996 = vmul.f32 %v8944, %v658
      %v8997 = vmul.f32 %v8947, %v658
      %v8998 = vmul.f32 %v8950, %v658
      %v8999 = vmul.f32 %v8953, %v658
      %v9000 = vmul.f32 %v8956, %v658
      %v9001 = vmul.f32 %v8959, %v658
      %v9002 = vmul.f32 %v8962, %v658
      %v9003 = vmul.f32 %v8965, %v658
      %v9004 = vmul.f32 %v8968, %v658
      %v9005 = vmul.f32 %v8971, %v658
      %v9006 = vmul.f32 %v8974, %v658
      %v9007 = vadd.f32 %v8975, 1e-05
      %v9008 = vadd.f32 %v8976, 1e-05
      %v9009 = vadd.f32 %v8977, 1e-05
      %v9010 = vadd.f32 %v8978, 1e-05
      %v9011 = vadd.f32 %v8979, 1e-05
      %v9012 = vadd.f32 %v8980, 1e-05
      %v9013 = vadd.f32 %v8981, 1e-05
      %v9014 = vadd.f32 %v8982, 1e-05
      %v9015 = vadd.f32 %v8983, 1e-05
      %v9016 = vadd.f32 %v8984, 1e-05
      %v9017 = vadd.f32 %v8985, 1e-05
      %v9018 = vadd.f32 %v8986, 1e-05
      %v9019 = vadd.f32 %v8987, 1e-05
      %v9020 = vadd.f32 %v8988, 1e-05
      %v9021 = vadd.f32 %v8989, 1e-05
      %v9022 = vadd.f32 %v8990, 1e-05
      %v9023 = vadd.f32 %v8991, 1e-05
      %v9024 = vadd.f32 %v8992, 1e-05
      %v9025 = vadd.f32 %v8993, 1e-05
      %v9026 = vadd.f32 %v8994, 1e-05
      %v9027 = vadd.f32 %v8995, 1e-05
      %v9028 = vadd.f32 %v8996, 1e-05
      %v9029 = vadd.f32 %v8997, 1e-05
      %v9030 = vadd.f32 %v8998, 1e-05
      %v9031 = vadd.f32 %v8999, 1e-05
      %v9032 = vadd.f32 %v9000, 1e-05
      %v9033 = vadd.f32 %v9001, 1e-05
      %v9034 = vadd.f32 %v9002, 1e-05
      %v9035 = vadd.f32 %v9003, 1e-05
      %v9036 = vadd.f32 %v9004, 1e-05
      %v9037 = vadd.f32 %v9005, 1e-05
      %v9038 = vadd.f32 %v9006, 1e-05
      %v9039 = vrsqrt.pop %v9007
      %v9040 = vmul.f32 %v9039, %v9007
      %v9041 = vmul.f32 %v9040, %v9039
      %v9042 = vmul.f32 0.5, %v9041
      %v9043 = vsub.f32 1.5, %v9042
      %v9044 = vmul.f32 %v9039, %v9043
      %vm9045 = vweird.f32 %v9007
      %vm9046 = vweird.f32 %v9039
      %vm9047 = vmor %vm9045, %vm9046
      %v9048 = vsel %vm9047, %v9039, %v9044
      %v9049 = vrsqrt.pop %v9008
      %v9050 = vmul.f32 %v9049, %v9008
      %v9051 = vmul.f32 %v9050, %v9049
      %v9052 = vmul.f32 0.5, %v9051
      %v9053 = vsub.f32 1.5, %v9052
      %v9054 = vmul.f32 %v9049, %v9053
      %vm9055 = vweird.f32 %v9008
      %vm9056 = vweird.f32 %v9049
      %vm9057 = vmor %vm9055, %vm9056
      %v9058 = vsel %vm9057, %v9049, %v9054
      %v9059 = vrsqrt.pop %v9009
      %v9060 = vmul.f32 %v9059, %v9009
      %v9061 = vmul.f32 %v9060, %v9059
      %v9062 = vmul.f32 0.5, %v9061
      %v9063 = vsub.f32 1.5, %v9062
      %v9064 = vmul.f32 %v9059, %v9063
      %vm9065 = vweird.f32 %v9009
      %vm9066 = vweird.f32 %v9059
      %vm9067 = vmor %vm9065, %vm9066
      %v9068 = vsel %vm9067, %v9059, %v9064
      %v9069 = vrsqrt.pop %v9010
      %v9070 = vmul.f32 %v9069, %v9010
      %v9071 = vmul.f32 %v9070, %v9069
      %v9072 = vmul.f32 0.5, %v9071
      %v9073 = vsub.f32 1.5, %v9072
      %v9074 = vmul.f32 %v9069, %v9073
      %vm9075 = vweird.f32 %v9010
      %vm9076 = vweird.f32 %v9069
      %vm9077 = vmor %vm9075, %vm9076
      %v9078 = vsel %vm9077, %v9069, %v9074
      %v9079 = vrsqrt.pop %v9011
      %v9080 = vmul.f32 %v9079, %v9011
      %v9081 = vmul.f32 %v9080, %v9079
      %v9082 = vmul.f32 0.5, %v9081
      %v9083 = vsub.f32 1.5, %v9082
      %v9084 = vmul.f32 %v9079, %v9083
      %vm9085 = vweird.f32 %v9011
      %vm9086 = vweird.f32 %v9079
      %vm9087 = vmor %vm9085, %vm9086
      %v9088 = vsel %vm9087, %v9079, %v9084
      %v9089 = vrsqrt.pop %v9012
      %v9090 = vmul.f32 %v9089, %v9012
      %v9091 = vmul.f32 %v9090, %v9089
      %v9092 = vmul.f32 0.5, %v9091
      %v9093 = vsub.f32 1.5, %v9092
      %v9094 = vmul.f32 %v9089, %v9093
      %vm9095 = vweird.f32 %v9012
      %vm9096 = vweird.f32 %v9089
      %vm9097 = vmor %vm9095, %vm9096
      %v9098 = vsel %vm9097, %v9089, %v9094
      %v9099 = vrsqrt.pop %v9013
      %v9100 = vmul.f32 %v9099, %v9013
      %v9101 = vmul.f32 %v9100, %v9099
      %v9102 = vmul.f32 0.5, %v9101
      %v9103 = vsub.f32 1.5, %v9102
      %v9104 = vmul.f32 %v9099, %v9103
      %vm9105 = vweird.f32 %v9013
      %vm9106 = vweird.f32 %v9099
      %vm9107 = vmor %vm9105, %vm9106
      %v9108 = vsel %vm9107, %v9099, %v9104
      %v9109 = vrsqrt.pop %v9014
      %v9110 = vmul.f32 %v9109, %v9014
      %v9111 = vmul.f32 %v9110, %v9109
      %v9112 = vmul.f32 0.5, %v9111
      %v9113 = vsub.f32 1.5, %v9112
      %v9114 = vmul.f32 %v9109, %v9113
      %vm9115 = vweird.f32 %v9014
      %vm9116 = vweird.f32 %v9109
      %vm9117 = vmor %vm9115, %vm9116
      %v9118 = vsel %vm9117, %v9109, %v9114
      %v9119 = vrsqrt.pop %v9015
      %v9120 = vmul.f32 %v9119, %v9015
      %v9121 = vmul.f32 %v9120, %v9119
      %v9122 = vmul.f32 0.5, %v9121
      %v9123 = vsub.f32 1.5, %v9122
      %v9124 = vmul.f32 %v9119, %v9123
      %vm9125 = vweird.f32 %v9015
      %vm9126 = vweird.f32 %v9119
      %vm9127 = vmor %vm9125, %vm9126
      %v9128 = vsel %vm9127, %v9119, %v9124
      %v9129 = vrsqrt.pop %v9016
      %v9130 = vmul.f32 %v9129, %v9016
      %v9131 = vmul.f32 %v9130, %v9129
      %v9132 = vmul.f32 0.5, %v9131
      %v9133 = vsub.f32 1.5, %v9132
      %v9134 = vmul.f32 %v9129, %v9133
      %vm9135 = vweird.f32 %v9016
      %vm9136 = vweird.f32 %v9129
      %vm9137 = vmor %vm9135, %vm9136
      %v9138 = vsel %vm9137, %v9129, %v9134
      %v9139 = vrsqrt.pop %v9017
      %v9140 = vmul.f32 %v9139, %v9017
      %v9141 = vmul.f32 %v9140, %v9139
      %v9142 = vmul.f32 0.5, %v9141
      %v9143 = vsub.f32 1.5, %v9142
      %v9144 = vmul.f32 %v9139, %v9143
      %vm9145 = vweird.f32 %v9017
      %vm9146 = vweird.f32 %v9139
      %vm9147 = vmor %vm9145, %vm9146
      %v9148 = vsel %vm9147, %v9139, %v9144
      %v9149 = vrsqrt.pop %v9018
      %v9150 = vmul.f32 %v9149, %v9018
      %v9151 = vmul.f32 %v9150, %v9149
      %v9152 = vmul.f32 0.5, %v9151
      %v9153 = vsub.f32 1.5, %v9152
      %v9154 = vmul.f32 %v9149, %v9153
      %vm9155 = vweird.f32 %v9018
      %vm9156 = vweird.f32 %v9149
      %vm9157 = vmor %vm9155, %vm9156
      %v9158 = vsel %vm9157, %v9149, %v9154
      %v9159 = vrsqrt.pop %v9019
      %v9160 = vmul.f32 %v9159, %v9019
      %v9161 = vmul.f32 %v9160, %v9159
      %v9162 = vmul.f32 0.5, %v9161
      %v9163 = vsub.f32 1.5, %v9162
      %v9164 = vmul.f32 %v9159, %v9163
      %vm9165 = vweird.f32 %v9019
      %vm9166 = vweird.f32 %v9159
      %vm9167 = vmor %vm9165, %vm9166
      %v9168 = vsel %vm9167, %v9159, %v9164
      %v9169 = vrsqrt.pop %v9020
      %v9170 = vmul.f32 %v9169, %v9020
      %v9171 = vmul.f32 %v9170, %v9169
      %v9172 = vmul.f32 0.5, %v9171
      %v9173 = vsub.f32 1.5, %v9172
      %v9174 = vmul.f32 %v9169, %v9173
      %vm9175 = vweird.f32 %v9020
      %vm9176 = vweird.f32 %v9169
      %vm9177 = vmor %vm9175, %vm9176
      %v9178 = vsel %vm9177, %v9169, %v9174
      %v9179 = vrsqrt.pop %v9021
      %v9180 = vmul.f32 %v9179, %v9021
      %v9181 = vmul.f32 %v9180, %v9179
      %v9182 = vmul.f32 0.5, %v9181
      %v9183 = vsub.f32 1.5, %v9182
      %v9184 = vmul.f32 %v9179, %v9183
      %vm9185 = vweird.f32 %v9021
      %vm9186 = vweird.f32 %v9179
      %vm9187 = vmor %vm9185, %vm9186
      %v9188 = vsel %vm9187, %v9179, %v9184
      %v9189 = vrsqrt.pop %v9022
      %v9190 = vmul.f32 %v9189, %v9022
      %v9191 = vmul.f32 %v9190, %v9189
      %v9192 = vmul.f32 0.5, %v9191
      %v9193 = vsub.f32 1.5, %v9192
      %v9194 = vmul.f32 %v9189, %v9193
      %vm9195 = vweird.f32 %v9022
      %vm9196 = vweird.f32 %v9189
      %vm9197 = vmor %vm9195, %vm9196
      %v9198 = vsel %vm9197, %v9189, %v9194
      %v9199 = vrsqrt.pop %v9023
      %v9200 = vmul.f32 %v9199, %v9023
      %v9201 = vmul.f32 %v9200, %v9199
      %v9202 = vmul.f32 0.5, %v9201
      %v9203 = vsub.f32 1.5, %v9202
      %v9204 = vmul.f32 %v9199, %v9203
      %vm9205 = vweird.f32 %v9023
      %vm9206 = vweird.f32 %v9199
      %vm9207 = vmor %vm9205, %vm9206
      %v9208 = vsel %vm9207, %v9199, %v9204
      %v9209 = vrsqrt.pop %v9024
      %v9210 = vmul.f32 %v9209, %v9024
      %v9211 = vmul.f32 %v9210, %v9209
      %v9212 = vmul.f32 0.5, %v9211
      %v9213 = vsub.f32 1.5, %v9212
      %v9214 = vmul.f32 %v9209, %v9213
      %vm9215 = vweird.f32 %v9024
      %vm9216 = vweird.f32 %v9209
      %vm9217 = vmor %vm9215, %vm9216
      %v9218 = vsel %vm9217, %v9209, %v9214
      %v9219 = vrsqrt.pop %v9025
      %v9220 = vmul.f32 %v9219, %v9025
      %v9221 = vmul.f32 %v9220, %v9219
      %v9222 = vmul.f32 0.5, %v9221
      %v9223 = vsub.f32 1.5, %v9222
      %v9224 = vmul.f32 %v9219, %v9223
      %vm9225 = vweird.f32 %v9025
      %vm9226 = vweird.f32 %v9219
      %vm9227 = vmor %vm9225, %vm9226
      %v9228 = vsel %vm9227, %v9219, %v9224
      %v9229 = vrsqrt.pop %v9026
      %v9230 = vmul.f32 %v9229, %v9026
      %v9231 = vmul.f32 %v9230, %v9229
      %v9232 = vmul.f32 0.5, %v9231
      %v9233 = vsub.f32 1.5, %v9232
      %v9234 = vmul.f32 %v9229, %v9233
      %vm9235 = vweird.f32 %v9026
      %vm9236 = vweird.f32 %v9229
      %vm9237 = vmor %vm9235, %vm9236
      %v9238 = vsel %vm9237, %v9229, %v9234
      %v9239 = vrsqrt.pop %v9027
      %v9240 = vmul.f32 %v9239, %v9027
      %v9241 = vmul.f32 %v9240, %v9239
      %v9242 = vmul.f32 0.5, %v9241
      %v9243 = vsub.f32 1.5, %v9242
      %v9244 = vmul.f32 %v9239, %v9243
      %vm9245 = vweird.f32 %v9027
      %vm9246 = vweird.f32 %v9239
      %vm9247 = vmor %vm9245, %vm9246
      %v9248 = vsel %vm9247, %v9239, %v9244
      %v9249 = vrsqrt.pop %v9028
      %v9250 = vmul.f32 %v9249, %v9028
      %v9251 = vmul.f32 %v9250, %v9249
      %v9252 = vmul.f32 0.5, %v9251
      %v9253 = vsub.f32 1.5, %v9252
      %v9254 = vmul.f32 %v9249, %v9253
      %vm9255 = vweird.f32 %v9028
      %vm9256 = vweird.f32 %v9249
      %vm9257 = vmor %vm9255, %vm9256
      %v9258 = vsel %vm9257, %v9249, %v9254
      %v9259 = vrsqrt.pop %v9029
      %v9260 = vmul.f32 %v9259, %v9029
      %v9261 = vmul.f32 %v9260, %v9259
      %v9262 = vmul.f32 0.5, %v9261
      %v9263 = vsub.f32 1.5, %v9262
      %v9264 = vmul.f32 %v9259, %v9263
      %vm9265 = vweird.f32 %v9029
      %vm9266 = vweird.f32 %v9259
      %vm9267 = vmor %vm9265, %vm9266
      %v9268 = vsel %vm9267, %v9259, %v9264
      %v9269 = vrsqrt.pop %v9030
      %v9270 = vmul.f32 %v9269, %v9030
      %v9271 = vmul.f32 %v9270, %v9269
      %v9272 = vmul.f32 0.5, %v9271
      %v9273 = vsub.f32 1.5, %v9272
      %v9274 = vmul.f32 %v9269, %v9273
      %vm9275 = vweird.f32 %v9030
      %vm9276 = vweird.f32 %v9269
      %vm9277 = vmor %vm9275, %vm9276
      %v9278 = vsel %vm9277, %v9269, %v9274
      %v9279 = vrsqrt.pop %v9031
      %v9280 = vmul.f32 %v9279, %v9031
      %v9281 = vmul.f32 %v9280, %v9279
      %v9282 = vmul.f32 0.5, %v9281
      %v9283 = vsub.f32 1.5, %v9282
      %v9284 = vmul.f32 %v9279, %v9283
      %vm9285 = vweird.f32 %v9031
      %vm9286 = vweird.f32 %v9279
      %vm9287 = vmor %vm9285, %vm9286
      %v9288 = vsel %vm9287, %v9279, %v9284
      %v9289 = vrsqrt.pop %v9032
      %v9290 = vmul.f32 %v9289, %v9032
      %v9291 = vmul.f32 %v9290, %v9289
      %v9292 = vmul.f32 0.5, %v9291
      %v9293 = vsub.f32 1.5, %v9292
      %v9294 = vmul.f32 %v9289, %v9293
      %vm9295 = vweird.f32 %v9032
      %vm9296 = vweird.f32 %v9289
      %vm9297 = vmor %vm9295, %vm9296
      %v9298 = vsel %vm9297, %v9289, %v9294
      %v9299 = vrsqrt.pop %v9033
      %v9300 = vmul.f32 %v9299, %v9033
      %v9301 = vmul.f32 %v9300, %v9299
      %v9302 = vmul.f32 0.5, %v9301
      %v9303 = vsub.f32 1.5, %v9302
      %v9304 = vmul.f32 %v9299, %v9303
      %vm9305 = vweird.f32 %v9033
      %vm9306 = vweird.f32 %v9299
      %vm9307 = vmor %vm9305, %vm9306
      %v9308 = vsel %vm9307, %v9299, %v9304
      %v9309 = vrsqrt.pop %v9034
      %v9310 = vmul.f32 %v9309, %v9034
      %v9311 = vmul.f32 %v9310, %v9309
      %v9312 = vmul.f32 0.5, %v9311
      %v9313 = vsub.f32 1.5, %v9312
      %v9314 = vmul.f32 %v9309, %v9313
      %vm9315 = vweird.f32 %v9034
      %vm9316 = vweird.f32 %v9309
      %vm9317 = vmor %vm9315, %vm9316
      %v9318 = vsel %vm9317, %v9309, %v9314
      %v9319 = vrsqrt.pop %v9035
      %v9320 = vmul.f32 %v9319, %v9035
      %v9321 = vmul.f32 %v9320, %v9319
      %v9322 = vmul.f32 0.5, %v9321
      %v9323 = vsub.f32 1.5, %v9322
      %v9324 = vmul.f32 %v9319, %v9323
      %vm9325 = vweird.f32 %v9035
      %vm9326 = vweird.f32 %v9319
      %vm9327 = vmor %vm9325, %vm9326
      %v9328 = vsel %vm9327, %v9319, %v9324
      %v9329 = vrsqrt.pop %v9036
      %v9330 = vmul.f32 %v9329, %v9036
      %v9331 = vmul.f32 %v9330, %v9329
      %v9332 = vmul.f32 0.5, %v9331
      %v9333 = vsub.f32 1.5, %v9332
      %v9334 = vmul.f32 %v9329, %v9333
      %vm9335 = vweird.f32 %v9036
      %vm9336 = vweird.f32 %v9329
      %vm9337 = vmor %vm9335, %vm9336
      %v9338 = vsel %vm9337, %v9329, %v9334
      %v9339 = vrsqrt.pop %v9037
      %v9340 = vmul.f32 %v9339, %v9037
      %v9341 = vmul.f32 %v9340, %v9339
      %v9342 = vmul.f32 0.5, %v9341
      %v9343 = vsub.f32 1.5, %v9342
      %v9344 = vmul.f32 %v9339, %v9343
      %vm9345 = vweird.f32 %v9037
      %vm9346 = vweird.f32 %v9339
      %vm9347 = vmor %vm9345, %vm9346
      %v9348 = vsel %vm9347, %v9339, %v9344
      %v9349 = vrsqrt.pop %v9038
      %v9350 = vmul.f32 %v9349, %v9038
      %v9351 = vmul.f32 %v9350, %v9349
      %v9352 = vmul.f32 0.5, %v9351
      %v9353 = vsub.f32 1.5, %v9352
      %v9354 = vmul.f32 %v9349, %v9353
      %vm9355 = vweird.f32 %v9038
      %vm9356 = vweird.f32 %v9349
      %vm9357 = vmor %vm9355, %vm9356
      %v9358 = vsel %vm9357, %v9349, %v9354
      %v9359 = vmul.f32 %v8815, %v9048
      %v9360 = vmul.f32 %v8816, %v9058
      %v9361 = vmul.f32 %v8817, %v9068
      %v9362 = vmul.f32 %v8818, %v9078
      %v9363 = vmul.f32 %v8819, %v9088
      %v9364 = vmul.f32 %v8820, %v9098
      %v9365 = vmul.f32 %v8821, %v9108
      %v9366 = vmul.f32 %v8822, %v9118
      %v9367 = vmul.f32 %v8823, %v9128
      %v9368 = vmul.f32 %v8824, %v9138
      %v9369 = vmul.f32 %v8825, %v9148
      %v9370 = vmul.f32 %v8826, %v9158
      %v9371 = vmul.f32 %v8827, %v9168
      %v9372 = vmul.f32 %v8828, %v9178
      %v9373 = vmul.f32 %v8829, %v9188
      %v9374 = vmul.f32 %v8830, %v9198
      %v9375 = vmul.f32 %v8831, %v9208
      %v9376 = vmul.f32 %v8832, %v9218
      %v9377 = vmul.f32 %v8833, %v9228
      %v9378 = vmul.f32 %v8834, %v9238
      %v9379 = vmul.f32 %v8835, %v9248
      %v9380 = vmul.f32 %v8836, %v9258
      %v9381 = vmul.f32 %v8837, %v9268
      %v9382 = vmul.f32 %v8838, %v9278
      %v9383 = vmul.f32 %v8839, %v9288
      %v9384 = vmul.f32 %v8840, %v9298
      %v9385 = vmul.f32 %v8841, %v9308
      %v9386 = vmul.f32 %v8842, %v9318
      %v9387 = vmul.f32 %v8843, %v9328
      %v9388 = vmul.f32 %v8844, %v9338
      %v9389 = vmul.f32 %v8845, %v9348
      %v9390 = vmul.f32 %v8846, %v9358
      %v9391 = vld [vmem:[%s10] sm:$0x1]
      %v9393 = vperm.slane %v9391, 0
      %v9395 = vmul.f32 %v9359, %v9393
      %v9396 = vmul.f32 %v9360, %v9393
      %v9397 = vmul.f32 %v9361, %v9393
      %v9398 = vmul.f32 %v9362, %v9393
      %v9399 = vmul.f32 %v9363, %v9393
      %v9400 = vmul.f32 %v9364, %v9393
      %v9401 = vmul.f32 %v9365, %v9393
      %v9402 = vmul.f32 %v9366, %v9393
      %v9403 = vmul.f32 %v9367, %v9393
      %v9404 = vmul.f32 %v9368, %v9393
      %v9405 = vmul.f32 %v9369, %v9393
      %v9406 = vmul.f32 %v9370, %v9393
      %v9407 = vmul.f32 %v9371, %v9393
      %v9408 = vmul.f32 %v9372, %v9393
      %v9409 = vmul.f32 %v9373, %v9393
      %v9410 = vmul.f32 %v9374, %v9393
      %v9411 = vmul.f32 %v9375, %v9393
      %v9412 = vmul.f32 %v9376, %v9393
      %v9413 = vmul.f32 %v9377, %v9393
      %v9414 = vmul.f32 %v9378, %v9393
      %v9415 = vmul.f32 %v9379, %v9393
      %v9416 = vmul.f32 %v9380, %v9393
      %v9417 = vmul.f32 %v9381, %v9393
      %v9418 = vmul.f32 %v9382, %v9393
      %v9419 = vmul.f32 %v9383, %v9393
      %v9420 = vmul.f32 %v9384, %v9393
      %v9421 = vmul.f32 %v9385, %v9393
      %v9422 = vmul.f32 %v9386, %v9393
      %v9423 = vmul.f32 %v9387, %v9393
      %v9424 = vmul.f32 %v9388, %v9393
      %v9425 = vmul.f32 %v9389, %v9393
      %v9426 = vmul.f32 %v9390, %v9393
      %v9427 = vld [vmem:[%s11] sm:$0x1]
      %v9429 = vperm.slane %v9427, 0
      %v9431 = vadd.f32 %v9395, %v9429
      %v9432 = vadd.f32 %v9396, %v9429
      %v9433 = vadd.f32 %v9397, %v9429
      %v9434 = vadd.f32 %v9398, %v9429
      %v9435 = vadd.f32 %v9399, %v9429
      %v9436 = vadd.f32 %v9400, %v9429
      %v9437 = vadd.f32 %v9401, %v9429
      %v9438 = vadd.f32 %v9402, %v9429
      %v9439 = vadd.f32 %v9403, %v9429
      %v9440 = vadd.f32 %v9404, %v9429
      %v9441 = vadd.f32 %v9405, %v9429
      %v9442 = vadd.f32 %v9406, %v9429
      %v9443 = vadd.f32 %v9407, %v9429
      %v9444 = vadd.f32 %v9408, %v9429
      %v9445 = vadd.f32 %v9409, %v9429
      %v9446 = vadd.f32 %v9410, %v9429
      %v9447 = vadd.f32 %v9411, %v9429
      %v9448 = vadd.f32 %v9412, %v9429
      %v9449 = vadd.f32 %v9413, %v9429
      %v9450 = vadd.f32 %v9414, %v9429
      %v9451 = vadd.f32 %v9415, %v9429
      %v9452 = vadd.f32 %v9416, %v9429
      %v9453 = vadd.f32 %v9417, %v9429
      %v9454 = vadd.f32 %v9418, %v9429
      %v9455 = vadd.f32 %v9419, %v9429
      %v9456 = vadd.f32 %v9420, %v9429
      %v9457 = vadd.f32 %v9421, %v9429
      %v9458 = vadd.f32 %v9422, %v9429
      %v9459 = vadd.f32 %v9423, %v9429
      %v9460 = vadd.f32 %v9424, %v9429
      %v9461 = vadd.f32 %v9425, %v9429
      %v9462 = vadd.f32 %v9426, %v9429
      %v9463 = vpack.c.bf16 %v9432, %v9431
      %v9464 = vpack.c.bf16 %v9434, %v9433
      %v9465 = vpack.c.bf16 %v9436, %v9435
      %v9466 = vpack.c.bf16 %v9438, %v9437
      %v9467 = vpack.c.bf16 %v9440, %v9439
      %v9468 = vpack.c.bf16 %v9442, %v9441
      %v9469 = vpack.c.bf16 %v9444, %v9443
      %v9470 = vpack.c.bf16 %v9446, %v9445
      %v9471 = vpack.c.bf16 %v9448, %v9447
      %v9472 = vpack.c.bf16 %v9450, %v9449
      %v9473 = vpack.c.bf16 %v9452, %v9451
      %v9474 = vpack.c.bf16 %v9454, %v9453
      %v9475 = vpack.c.bf16 %v9456, %v9455
      %v9476 = vpack.c.bf16 %v9458, %v9457
      %v9477 = vpack.c.bf16 %v9460, %v9459
      %v9478 = vpack.c.bf16 %v9462, %v9461
      %v9479 = vld [vmem:[%s12] sm:$0xff]
      %v9480 = vld [vmem:[%s12 + $0x8] sm:$0xff]
      %v9481 = vld [vmem:[%s12 + $0x10] sm:$0xff]
      %v9482 = vld [vmem:[%s12 + $0x18] sm:$0xff]
      %v9483 = vld [vmem:[%s12 + $0x20] sm:$0xff]
      %v9484 = vld [vmem:[%s12 + $0x28] sm:$0xff]
      %v9485 = vld [vmem:[%s12 + $0x30] sm:$0xff]
      %v9486 = vld [vmem:[%s12 + $0x38] sm:$0xff]
      %v9487 = vld [vmem:[%s13] sm:$0x3]
      %v9489 = vperm.slane %v9487, 0
      %v9490 = vperm.slane %v9487, 1
      %v9501 = vunpack.c.l.b16 %v9479
      %v9502 = vunpack.c.h.b16 %v9479
      %v9503 = vunpack.c.l.b16 %v9480
      %v9504 = vunpack.c.h.b16 %v9480
      %v9505 = vunpack.c.l.b16 %v9481
      %v9506 = vunpack.c.h.b16 %v9481
      %v9507 = vunpack.c.l.b16 %v9482
      %v9508 = vunpack.c.h.b16 %v9482
      %v9509 = vunpack.c.l.b16 %v9483
      %v9510 = vunpack.c.h.b16 %v9483
      %v9511 = vunpack.c.l.b16 %v9484
      %v9512 = vunpack.c.h.b16 %v9484
      %v9513 = vunpack.c.l.b16 %v9485
      %v9514 = vunpack.c.h.b16 %v9485
      %v9515 = vunpack.c.l.b16 %v9486
      %v9516 = vunpack.c.h.b16 %v9486
      %v9517 = vpack.c.b16 %v9503, %v9501
      %v9518 = vpack.c.b16 %v9504, %v9502
      %v9519 = vpack.c.b16 %v9507, %v9505
      %v9520 = vpack.c.b16 %v9508, %v9506
      %v9521 = vpack.c.b16 %v9511, %v9509
      %v9522 = vpack.c.b16 %v9512, %v9510
      %v9523 = vpack.c.b16 %v9515, %v9513
      %v9524 = vpack.c.b16 %v9516, %v9514
      %v9534 = vsel %vm555, %v9463, 0
      %v9537 = vsel %vm555, %v9464, 0
      %v9540 = vsel %vm555, %v9465, 0
      %v9543 = vsel %vm555, %v9466, 0
      %v9546 = vsel %vm555, %v9467, 0
      %v9549 = vsel %vm555, %v9468, 0
      %v9552 = vsel %vm555, %v9469, 0
      %v9555 = vsel %vm555, %v9470, 0
      %v9558 = vsel %vm555, %v9471, 0
      %v9561 = vsel %vm555, %v9472, 0
      %v9564 = vsel %vm555, %v9473, 0
      %v9567 = vsel %vm555, %v9474, 0
      %v9570 = vsel %vm555, %v9475, 0
      %v9573 = vsel %vm555, %v9476, 0
      %v9576 = vsel %vm555, %v9477, 0
      %v9579 = vsel %vm555, %v9478, 0
      %9581 = vmatpush.bf16.msra.mxu0 0
      %9582 = vmatpush.bf16.msra.mxu0 0
      %9583 = vmatpush.bf16.msra.mxu0 0
      %9584 = vmatpush.bf16.msra.mxu0 0
      %9585 = vmatpush.bf16.msra.mxu0 %v9523
      %9586 = vmatpush.bf16.msra.mxu0 %v9521
      %9587 = vmatpush.bf16.msra.mxu0 %v9519
      %9588 = vmatpush.bf16.msra.mxu0 %v9517
      %9589 = vmatmul.bf16.gmra.mxu0 %v9534
      %v9590 = vpop.f32.mrf.mxu0
      %v9591 = vadd.f32 %v9489, %v9590
      %v9592 = vpop.f32.mrf.mxu0
      %v9593 = vadd.f32 %v9489, %v9592
      %9594 = vmatmul.bf16.gmra.mxu0 %v9537
      %v9595 = vpop.f32.mrf.mxu0
      %v9596 = vadd.f32 %v9489, %v9595
      %v9597 = vpop.f32.mrf.mxu0
      %v9598 = vadd.f32 %v9489, %v9597
      %9599 = vmatmul.bf16.gmra.mxu0 %v9540
      %v9600 = vpop.f32.mrf.mxu0
      %v9601 = vadd.f32 %v9489, %v9600
      %v9602 = vpop.f32.mrf.mxu0
      %v9603 = vadd.f32 %v9489, %v9602
      %9604 = vmatmul.bf16.gmra.mxu0 %v9543
      %v9605 = vpop.f32.mrf.mxu0
      %v9606 = vadd.f32 %v9489, %v9605
      %v9607 = vpop.f32.mrf.mxu0
      %v9608 = vadd.f32 %v9489, %v9607
      %9609 = vmatmul.bf16.gmra.mxu0 %v9546
      %v9610 = vpop.f32.mrf.mxu0
      %v9611 = vadd.f32 %v9489, %v9610
      %v9612 = vpop.f32.mrf.mxu0
      %v9613 = vadd.f32 %v9489, %v9612
      %9614 = vmatmul.bf16.gmra.mxu0 %v9549
      %v9615 = vpop.f32.mrf.mxu0
      %v9616 = vadd.f32 %v9489, %v9615
      %v9617 = vpop.f32.mrf.mxu0
      %v9618 = vadd.f32 %v9489, %v9617
      %9619 = vmatmul.bf16.gmra.mxu0 %v9552
      %v9620 = vpop.f32.mrf.mxu0
      %v9621 = vadd.f32 %v9489, %v9620
      %v9622 = vpop.f32.mrf.mxu0
      %v9623 = vadd.f32 %v9489, %v9622
      %9624 = vmatmul.bf16.gmra.mxu0 %v9555
      %v9625 = vpop.f32.mrf.mxu0
      %v9626 = vadd.f32 %v9489, %v9625
      %v9627 = vpop.f32.mrf.mxu0
      %v9628 = vadd.f32 %v9489, %v9627
      %9629 = vmatmul.bf16.gmra.mxu0 %v9558
      %v9630 = vpop.f32.mrf.mxu0
      %v9631 = vadd.f32 %v9489, %v9630
      %v9632 = vpop.f32.mrf.mxu0
      %v9633 = vadd.f32 %v9489, %v9632
      %9634 = vmatmul.bf16.gmra.mxu0 %v9561
      %v9635 = vpop.f32.mrf.mxu0
      %v9636 = vadd.f32 %v9489, %v9635
      %v9637 = vpop.f32.mrf.mxu0
      %v9638 = vadd.f32 %v9489, %v9637
      %9639 = vmatmul.bf16.gmra.mxu0 %v9564
      %v9640 = vpop.f32.mrf.mxu0
      %v9641 = vadd.f32 %v9489, %v9640
      %v9642 = vpop.f32.mrf.mxu0
      %v9643 = vadd.f32 %v9489, %v9642
      %9644 = vmatmul.bf16.gmra.mxu0 %v9567
      %v9645 = vpop.f32.mrf.mxu0
      %v9646 = vadd.f32 %v9489, %v9645
      %v9647 = vpop.f32.mrf.mxu0
      %v9648 = vadd.f32 %v9489, %v9647
      %9649 = vmatmul.bf16.gmra.mxu0 %v9570
      %v9650 = vpop.f32.mrf.mxu0
      %v9651 = vadd.f32 %v9489, %v9650
      %v9652 = vpop.f32.mrf.mxu0
      %v9653 = vadd.f32 %v9489, %v9652
      %9654 = vmatmul.bf16.gmra.mxu0 %v9573
      %v9655 = vpop.f32.mrf.mxu0
      %v9656 = vadd.f32 %v9489, %v9655
      %v9657 = vpop.f32.mrf.mxu0
      %v9658 = vadd.f32 %v9489, %v9657
      %9659 = vmatmul.bf16.gmra.mxu0 %v9576
      %v9660 = vpop.f32.mrf.mxu0
      %v9661 = vadd.f32 %v9489, %v9660
      %v9662 = vpop.f32.mrf.mxu0
      %v9663 = vadd.f32 %v9489, %v9662
      %9664 = vmatmul.bf16.gmra.mxu0 %v9579
      %v9665 = vpop.f32.mrf.mxu0
      %v9666 = vadd.f32 %v9489, %v9665
      %v9667 = vpop.f32.mrf.mxu0
      %v9668 = vadd.f32 %v9489, %v9667
      %9669 = vdwg.mxu0
      %9670 = vmatpush.bf16.msra.mxu0 0
      %9671 = vmatpush.bf16.msra.mxu0 0
      %9672 = vmatpush.bf16.msra.mxu0 0
      %9673 = vmatpush.bf16.msra.mxu0 0
      %9674 = vmatpush.bf16.msra.mxu0 %v9524
      %9675 = vmatpush.bf16.msra.mxu0 %v9522
      %9676 = vmatpush.bf16.msra.mxu0 %v9520
      %9677 = vmatpush.bf16.msra.mxu0 %v9518
      %9678 = vmatmul.bf16.gmra.mxu0 %v9534
      %v9679 = vpop.f32.mrf.mxu0
      %v9680 = vadd.f32 %v9490, %v9679
      %v9681 = vpop.f32.mrf.mxu0
      %v9682 = vadd.f32 %v9490, %v9681
      %9683 = vmatmul.bf16.gmra.mxu0 %v9537
      %v9684 = vpop.f32.mrf.mxu0
      %v9685 = vadd.f32 %v9490, %v9684
      %v9686 = vpop.f32.mrf.mxu0
      %v9687 = vadd.f32 %v9490, %v9686
      %9688 = vmatmul.bf16.gmra.mxu0 %v9540
      %v9689 = vpop.f32.mrf.mxu0
      %v9690 = vadd.f32 %v9490, %v9689
      %v9691 = vpop.f32.mrf.mxu0
      %v9692 = vadd.f32 %v9490, %v9691
      %9693 = vmatmul.bf16.gmra.mxu0 %v9543
      %v9694 = vpop.f32.mrf.mxu0
      %v9695 = vadd.f32 %v9490, %v9694
      %v9696 = vpop.f32.mrf.mxu0
      %v9697 = vadd.f32 %v9490, %v9696
      %9698 = vmatmul.bf16.gmra.mxu0 %v9546
      %v9699 = vpop.f32.mrf.mxu0
      %v9700 = vadd.f32 %v9490, %v9699
      %v9701 = vpop.f32.mrf.mxu0
      %v9702 = vadd.f32 %v9490, %v9701
      %9703 = vmatmul.bf16.gmra.mxu0 %v9549
      %v9704 = vpop.f32.mrf.mxu0
      %v9705 = vadd.f32 %v9490, %v9704
      %v9706 = vpop.f32.mrf.mxu0
      %v9707 = vadd.f32 %v9490, %v9706
      %9708 = vmatmul.bf16.gmra.mxu0 %v9552
      %v9709 = vpop.f32.mrf.mxu0
      %v9710 = vadd.f32 %v9490, %v9709
      %v9711 = vpop.f32.mrf.mxu0
      %v9712 = vadd.f32 %v9490, %v9711
      %9713 = vmatmul.bf16.gmra.mxu0 %v9555
      %v9714 = vpop.f32.mrf.mxu0
      %v9715 = vadd.f32 %v9490, %v9714
      %v9716 = vpop.f32.mrf.mxu0
      %v9717 = vadd.f32 %v9490, %v9716
      %9718 = vmatmul.bf16.gmra.mxu0 %v9558
      %v9719 = vpop.f32.mrf.mxu0
      %v9720 = vadd.f32 %v9490, %v9719
      %v9721 = vpop.f32.mrf.mxu0
      %v9722 = vadd.f32 %v9490, %v9721
      %9723 = vmatmul.bf16.gmra.mxu0 %v9561
      %v9724 = vpop.f32.mrf.mxu0
      %v9725 = vadd.f32 %v9490, %v9724
      %v9726 = vpop.f32.mrf.mxu0
      %v9727 = vadd.f32 %v9490, %v9726
      %9728 = vmatmul.bf16.gmra.mxu0 %v9564
      %v9729 = vpop.f32.mrf.mxu0
      %v9730 = vadd.f32 %v9490, %v9729
      %v9731 = vpop.f32.mrf.mxu0
      %v9732 = vadd.f32 %v9490, %v9731
      %9733 = vmatmul.bf16.gmra.mxu0 %v9567
      %v9734 = vpop.f32.mrf.mxu0
      %v9735 = vadd.f32 %v9490, %v9734
      %v9736 = vpop.f32.mrf.mxu0
      %v9737 = vadd.f32 %v9490, %v9736
      %9738 = vmatmul.bf16.gmra.mxu0 %v9570
      %v9739 = vpop.f32.mrf.mxu0
      %v9740 = vadd.f32 %v9490, %v9739
      %v9741 = vpop.f32.mrf.mxu0
      %v9742 = vadd.f32 %v9490, %v9741
      %9743 = vmatmul.bf16.gmra.mxu0 %v9573
      %v9744 = vpop.f32.mrf.mxu0
      %v9745 = vadd.f32 %v9490, %v9744
      %v9746 = vpop.f32.mrf.mxu0
      %v9747 = vadd.f32 %v9490, %v9746
      %9748 = vmatmul.bf16.gmra.mxu0 %v9576
      %v9749 = vpop.f32.mrf.mxu0
      %v9750 = vadd.f32 %v9490, %v9749
      %v9751 = vpop.f32.mrf.mxu0
      %v9752 = vadd.f32 %v9490, %v9751
      %9753 = vmatmul.bf16.gmra.mxu0 %v9579
      %v9754 = vpop.f32.mrf.mxu0
      %v9755 = vadd.f32 %v9490, %v9754
      %v9756 = vpop.f32.mrf.mxu0
      %v9757 = vadd.f32 %v9490, %v9756
      %9758 = vdwg.mxu0
      %v9759 = vmul.f32 %v9591, 0.5
      %v9760 = vmul.f32 %v9680, 0.5
      %v9761 = vmul.f32 %v9593, 0.5
      %v9762 = vmul.f32 %v9682, 0.5
      %v9763 = vmul.f32 %v9596, 0.5
      %v9764 = vmul.f32 %v9685, 0.5
      %v9765 = vmul.f32 %v9598, 0.5
      %v9766 = vmul.f32 %v9687, 0.5
      %v9767 = vmul.f32 %v9601, 0.5
      %v9768 = vmul.f32 %v9690, 0.5
      %v9769 = vmul.f32 %v9603, 0.5
      %v9770 = vmul.f32 %v9692, 0.5
      %v9771 = vmul.f32 %v9606, 0.5
      %v9772 = vmul.f32 %v9695, 0.5
      %v9773 = vmul.f32 %v9608, 0.5
      %v9774 = vmul.f32 %v9697, 0.5
      %v9775 = vmul.f32 %v9611, 0.5
      %v9776 = vmul.f32 %v9700, 0.5
      %v9777 = vmul.f32 %v9613, 0.5
      %v9778 = vmul.f32 %v9702, 0.5
      %v9779 = vmul.f32 %v9616, 0.5
      %v9780 = vmul.f32 %v9705, 0.5
      %v9781 = vmul.f32 %v9618, 0.5
      %v9782 = vmul.f32 %v9707, 0.5
      %v9783 = vmul.f32 %v9621, 0.5
      %v9784 = vmul.f32 %v9710, 0.5
      %v9785 = vmul.f32 %v9623, 0.5
      %v9786 = vmul.f32 %v9712, 0.5
      %v9787 = vmul.f32 %v9626, 0.5
      %v9788 = vmul.f32 %v9715, 0.5
      %v9789 = vmul.f32 %v9628, 0.5
      %v9790 = vmul.f32 %v9717, 0.5
      %v9791 = vmul.f32 %v9631, 0.5
      %v9792 = vmul.f32 %v9720, 0.5
      %v9793 = vmul.f32 %v9633, 0.5
      %v9794 = vmul.f32 %v9722, 0.5
      %v9795 = vmul.f32 %v9636, 0.5
      %v9796 = vmul.f32 %v9725, 0.5
      %v9797 = vmul.f32 %v9638, 0.5
      %v9798 = vmul.f32 %v9727, 0.5
      %v9799 = vmul.f32 %v9641, 0.5
      %v9800 = vmul.f32 %v9730, 0.5
      %v9801 = vmul.f32 %v9643, 0.5
      %v9802 = vmul.f32 %v9732, 0.5
      %v9803 = vmul.f32 %v9646, 0.5
      %v9804 = vmul.f32 %v9735, 0.5
      %v9805 = vmul.f32 %v9648, 0.5
      %v9806 = vmul.f32 %v9737, 0.5
      %v9807 = vmul.f32 %v9651, 0.5
      %v9808 = vmul.f32 %v9740, 0.5
      %v9809 = vmul.f32 %v9653, 0.5
      %v9810 = vmul.f32 %v9742, 0.5
      %v9811 = vmul.f32 %v9656, 0.5
      %v9812 = vmul.f32 %v9745, 0.5
      %v9813 = vmul.f32 %v9658, 0.5
      %v9814 = vmul.f32 %v9747, 0.5
      %v9815 = vmul.f32 %v9661, 0.5
      %v9816 = vmul.f32 %v9750, 0.5
      %v9817 = vmul.f32 %v9663, 0.5
      %v9818 = vmul.f32 %v9752, 0.5
      %v9819 = vmul.f32 %v9666, 0.5
      %v9820 = vmul.f32 %v9755, 0.5
      %v9821 = vmul.f32 %v9668, 0.5
      %v9822 = vmul.f32 %v9757, 0.5
      %v9823 = vmul.f32 %v9591, 0.044715
      %v9824 = vmul.f32 %v9680, 0.044715
      %v9825 = vmul.f32 %v9593, 0.044715
      %v9826 = vmul.f32 %v9682, 0.044715
      %v9827 = vmul.f32 %v9596, 0.044715
      %v9828 = vmul.f32 %v9685, 0.044715
      %v9829 = vmul.f32 %v9598, 0.044715
      %v9830 = vmul.f32 %v9687, 0.044715
      %v9831 = vmul.f32 %v9601, 0.044715
      %v9832 = vmul.f32 %v9690, 0.044715
      %v9833 = vmul.f32 %v9603, 0.044715
      %v9834 = vmul.f32 %v9692, 0.044715
      %v9835 = vmul.f32 %v9606, 0.044715
      %v9836 = vmul.f32 %v9695, 0.044715
      %v9837 = vmul.f32 %v9608, 0.044715
      %v9838 = vmul.f32 %v9697, 0.044715
      %v9839 = vmul.f32 %v9611, 0.044715
      %v9840 = vmul.f32 %v9700, 0.044715
      %v9841 = vmul.f32 %v9613, 0.044715
      %v9842 = vmul.f32 %v9702, 0.044715
      %v9843 = vmul.f32 %v9616, 0.044715
      %v9844 = vmul.f32 %v9705, 0.044715
      %v9845 = vmul.f32 %v9618, 0.044715
      %v9846 = vmul.f32 %v9707, 0.044715
      %v9847 = vmul.f32 %v9621, 0.044715
      %v9848 = vmul.f32 %v9710, 0.044715
      %v9849 = vmul.f32 %v9623, 0.044715
      %v9850 = vmul.f32 %v9712, 0.044715
      %v9851 = vmul.f32 %v9626, 0.044715
      %v9852 = vmul.f32 %v9715, 0.044715
      %v9853 = vmul.f32 %v9628, 0.044715
      %v9854 = vmul.f32 %v9717, 0.044715
      %v9855 = vmul.f32 %v9631, 0.044715
      %v9856 = vmul.f32 %v9720, 0.044715
      %v9857 = vmul.f32 %v9633, 0.044715
      %v9858 = vmul.f32 %v9722, 0.044715
      %v9859 = vmul.f32 %v9636, 0.044715
      %v9860 = vmul.f32 %v9725, 0.044715
      %v9861 = vmul.f32 %v9638, 0.044715
      %v9862 = vmul.f32 %v9727, 0.044715
      %v9863 = vmul.f32 %v9641, 0.044715
      %v9864 = vmul.f32 %v9730, 0.044715
      %v9865 = vmul.f32 %v9643, 0.044715
      %v9866 = vmul.f32 %v9732, 0.044715
      %v9867 = vmul.f32 %v9646, 0.044715
      %v9868 = vmul.f32 %v9735, 0.044715
      %v9869 = vmul.f32 %v9648, 0.044715
      %v9870 = vmul.f32 %v9737, 0.044715
      %v9871 = vmul.f32 %v9651, 0.044715
      %v9872 = vmul.f32 %v9740, 0.044715
      %v9873 = vmul.f32 %v9653, 0.044715
      %v9874 = vmul.f32 %v9742, 0.044715
      %v9875 = vmul.f32 %v9656, 0.044715
      %v9876 = vmul.f32 %v9745, 0.044715
      %v9877 = vmul.f32 %v9658, 0.044715
      %v9878 = vmul.f32 %v9747, 0.044715
      %v9879 = vmul.f32 %v9661, 0.044715
      %v9880 = vmul.f32 %v9750, 0.044715
      %v9881 = vmul.f32 %v9663, 0.044715
      %v9882 = vmul.f32 %v9752, 0.044715
      %v9883 = vmul.f32 %v9666, 0.044715
      %v9884 = vmul.f32 %v9755, 0.044715
      %v9885 = vmul.f32 %v9668, 0.044715
      %v9886 = vmul.f32 %v9757, 0.044715
      %v9887 = vmul.f32 %v9823, %v9591
      %v9888 = vmul.f32 %v9824, %v9680
      %v9889 = vmul.f32 %v9825, %v9593
      %v9890 = vmul.f32 %v9826, %v9682
      %v9891 = vmul.f32 %v9827, %v9596
      %v9892 = vmul.f32 %v9828, %v9685
      %v9893 = vmul.f32 %v9829, %v9598
      %v9894 = vmul.f32 %v9830, %v9687
      %v9895 = vmul.f32 %v9831, %v9601
      %v9896 = vmul.f32 %v9832, %v9690
      %v9897 = vmul.f32 %v9833, %v9603
      %v9898 = vmul.f32 %v9834, %v9692
      %v9899 = vmul.f32 %v9835, %v9606
      %v9900 = vmul.f32 %v9836, %v9695
      %v9901 = vmul.f32 %v9837, %v9608
      %v9902 = vmul.f32 %v9838, %v9697
      %v9903 = vmul.f32 %v9839, %v9611
      %v9904 = vmul.f32 %v9840, %v9700
      %v9905 = vmul.f32 %v9841, %v9613
      %v9906 = vmul.f32 %v9842, %v9702
      %v9907 = vmul.f32 %v9843, %v9616
      %v9908 = vmul.f32 %v9844, %v9705
      %v9909 = vmul.f32 %v9845, %v9618
      %v9910 = vmul.f32 %v9846, %v9707
      %v9911 = vmul.f32 %v9847, %v9621
      %v9912 = vmul.f32 %v9848, %v9710
      %v9913 = vmul.f32 %v9849, %v9623
      %v9914 = vmul.f32 %v9850, %v9712
      %v9915 = vmul.f32 %v9851, %v9626
      %v9916 = vmul.f32 %v9852, %v9715
      %v9917 = vmul.f32 %v9853, %v9628
      %v9918 = vmul.f32 %v9854, %v9717
      %v9919 = vmul.f32 %v9855, %v9631
      %v9920 = vmul.f32 %v9856, %v9720
      %v9921 = vmul.f32 %v9857, %v9633
      %v9922 = vmul.f32 %v9858, %v9722
      %v9923 = vmul.f32 %v9859, %v9636
      %v9924 = vmul.f32 %v9860, %v9725
      %v9925 = vmul.f32 %v9861, %v9638
      %v9926 = vmul.f32 %v9862, %v9727
      %v9927 = vmul.f32 %v9863, %v9641
      %v9928 = vmul.f32 %v9864, %v9730
      %v9929 = vmul.f32 %v9865, %v9643
      %v9930 = vmul.f32 %v9866, %v9732
      %v9931 = vmul.f32 %v9867, %v9646
      %v9932 = vmul.f32 %v9868, %v9735
      %v9933 = vmul.f32 %v9869, %v9648
      %v9934 = vmul.f32 %v9870, %v9737
      %v9935 = vmul.f32 %v9871, %v9651
      %v9936 = vmul.f32 %v9872, %v9740
      %v9937 = vmul.f32 %v9873, %v9653
      %v9938 = vmul.f32 %v9874, %v9742
      %v9939 = vmul.f32 %v9875, %v9656
      %v9940 = vmul.f32 %v9876, %v9745
      %v9941 = vmul.f32 %v9877, %v9658
      %v9942 = vmul.f32 %v9878, %v9747
      %v9943 = vmul.f32 %v9879, %v9661
      %v9944 = vmul.f32 %v9880, %v9750
      %v9945 = vmul.f32 %v9881, %v9663
      %v9946 = vmul.f32 %v9882, %v9752
      %v9947 = vmul.f32 %v9883, %v9666
      %v9948 = vmul.f32 %v9884, %v9755
      %v9949 = vmul.f32 %v9885, %v9668
      %v9950 = vmul.f32 %v9886, %v9757
      %v9951 = vmul.f32 %v9887, %v9591
      %v9952 = vmul.f32 %v9888, %v9680
      %v9953 = vmul.f32 %v9889, %v9593
      %v9954 = vmul.f32 %v9890, %v9682
      %v9955 = vmul.f32 %v9891, %v9596
      %v9956 = vmul.f32 %v9892, %v9685
      %v9957 = vmul.f32 %v9893, %v9598
      %v9958 = vmul.f32 %v9894, %v9687
      %v9959 = vmul.f32 %v9895, %v9601
      %v9960 = vmul.f32 %v9896, %v9690
      %v9961 = vmul.f32 %v9897, %v9603
      %v9962 = vmul.f32 %v9898, %v9692
      %v9963 = vmul.f32 %v9899, %v9606
      %v9964 = vmul.f32 %v9900, %v9695
      %v9965 = vmul.f32 %v9901, %v9608
      %v9966 = vmul.f32 %v9902, %v9697
      %v9967 = vmul.f32 %v9903, %v9611
      %v9968 = vmul.f32 %v9904, %v9700
      %v9969 = vmul.f32 %v9905, %v9613
      %v9970 = vmul.f32 %v9906, %v9702
      %v9971 = vmul.f32 %v9907, %v9616
      %v9972 = vmul.f32 %v9908, %v9705
      %v9973 = vmul.f32 %v9909, %v9618
      %v9974 = vmul.f32 %v9910, %v9707
      %v9975 = vmul.f32 %v9911, %v9621
      %v9976 = vmul.f32 %v9912, %v9710
      %v9977 = vmul.f32 %v9913, %v9623
      %v9978 = vmul.f32 %v9914, %v9712
      %v9979 = vmul.f32 %v9915, %v9626
      %v9980 = vmul.f32 %v9916, %v9715
      %v9981 = vmul.f32 %v9917, %v9628
      %v9982 = vmul.f32 %v9918, %v9717
      %v9983 = vmul.f32 %v9919, %v9631
      %v9984 = vmul.f32 %v9920, %v9720
      %v9985 = vmul.f32 %v9921, %v9633
      %v9986 = vmul.f32 %v9922, %v9722
      %v9987 = vmul.f32 %v9923, %v9636
      %v9988 = vmul.f32 %v9924, %v9725
      %v9989 = vmul.f32 %v9925, %v9638
      %v9990 = vmul.f32 %v9926, %v9727
      %v9991 = vmul.f32 %v9927, %v9641
      %v9992 = vmul.f32 %v9928, %v9730
      %v9993 = vmul.f32 %v9929, %v9643
      %v9994 = vmul.f32 %v9930, %v9732
      %v9995 = vmul.f32 %v9931, %v9646
      %v9996 = vmul.f32 %v9932, %v9735
      %v9997 = vmul.f32 %v9933, %v9648
      %v9998 = vmul.f32 %v9934, %v9737
      %v9999 = vmul.f32 %v9935, %v9651
      %v10000 = vmul.f32 %v9936, %v9740
      %v10001 = vmul.f32 %v9937, %v9653
      %v10002 = vmul.f32 %v9938, %v9742
      %v10003 = vmul.f32 %v9939, %v9656
      %v10004 = vmul.f32 %v9940, %v9745
      %v10005 = vmul.f32 %v9941, %v9658
      %v10006 = vmul.f32 %v9942, %v9747
      %v10007 = vmul.f32 %v9943, %v9661
      %v10008 = vmul.f32 %v9944, %v9750
      %v10009 = vmul.f32 %v9945, %v9663
      %v10010 = vmul.f32 %v9946, %v9752
      %v10011 = vmul.f32 %v9947, %v9666
      %v10012 = vmul.f32 %v9948, %v9755
      %v10013 = vmul.f32 %v9949, %v9668
      %v10014 = vmul.f32 %v9950, %v9757
      %v10015 = vadd.f32 %v9591, %v9951
      %v10016 = vadd.f32 %v9680, %v9952
      %v10017 = vadd.f32 %v9593, %v9953
      %v10018 = vadd.f32 %v9682, %v9954
      %v10019 = vadd.f32 %v9596, %v9955
      %v10020 = vadd.f32 %v9685, %v9956
      %v10021 = vadd.f32 %v9598, %v9957
      %v10022 = vadd.f32 %v9687, %v9958
      %v10023 = vadd.f32 %v9601, %v9959
      %v10024 = vadd.f32 %v9690, %v9960
      %v10025 = vadd.f32 %v9603, %v9961
      %v10026 = vadd.f32 %v9692, %v9962
      %v10027 = vadd.f32 %v9606, %v9963
      %v10028 = vadd.f32 %v9695, %v9964
      %v10029 = vadd.f32 %v9608, %v9965
      %v10030 = vadd.f32 %v9697, %v9966
      %v10031 = vadd.f32 %v9611, %v9967
      %v10032 = vadd.f32 %v9700, %v9968
      %v10033 = vadd.f32 %v9613, %v9969
      %v10034 = vadd.f32 %v9702, %v9970
      %v10035 = vadd.f32 %v9616, %v9971
      %v10036 = vadd.f32 %v9705, %v9972
      %v10037 = vadd.f32 %v9618, %v9973
      %v10038 = vadd.f32 %v9707, %v9974
      %v10039 = vadd.f32 %v9621, %v9975
      %v10040 = vadd.f32 %v9710, %v9976
      %v10041 = vadd.f32 %v9623, %v9977
      %v10042 = vadd.f32 %v9712, %v9978
      %v10043 = vadd.f32 %v9626, %v9979
      %v10044 = vadd.f32 %v9715, %v9980
      %v10045 = vadd.f32 %v9628, %v9981
      %v10046 = vadd.f32 %v9717, %v9982
      %v10047 = vadd.f32 %v9631, %v9983
      %v10048 = vadd.f32 %v9720, %v9984
      %v10049 = vadd.f32 %v9633, %v9985
      %v10050 = vadd.f32 %v9722, %v9986
      %v10051 = vadd.f32 %v9636, %v9987
      %v10052 = vadd.f32 %v9725, %v9988
      %v10053 = vadd.f32 %v9638, %v9989
      %v10054 = vadd.f32 %v9727, %v9990
      %v10055 = vadd.f32 %v9641, %v9991
      %v10056 = vadd.f32 %v9730, %v9992
      %v10057 = vadd.f32 %v9643, %v9993
      %v10058 = vadd.f32 %v9732, %v9994
      %v10059 = vadd.f32 %v9646, %v9995
      %v10060 = vadd.f32 %v9735, %v9996
      %v10061 = vadd.f32 %v9648, %v9997
      %v10062 = vadd.f32 %v9737, %v9998
      %v10063 = vadd.f32 %v9651, %v9999
      %v10064 = vadd.f32 %v9740, %v10000
      %v10065 = vadd.f32 %v9653, %v10001
      %v10066 = vadd.f32 %v9742, %v10002
      %v10067 = vadd.f32 %v9656, %v10003
      %v10068 = vadd.f32 %v9745, %v10004
      %v10069 = vadd.f32 %v9658, %v10005
      %v10070 = vadd.f32 %v9747, %v10006
      %v10071 = vadd.f32 %v9661, %v10007
      %v10072 = vadd.f32 %v9750, %v10008
      %v10073 = vadd.f32 %v9663, %v10009
      %v10074 = vadd.f32 %v9752, %v10010
      %v10075 = vadd.f32 %v9666, %v10011
      %v10076 = vadd.f32 %v9755, %v10012
      %v10077 = vadd.f32 %v9668, %v10013
      %v10078 = vadd.f32 %v9757, %v10014
      %v10079 = vmul.f32 %v10015, 0.7978846
      %v10080 = vmul.f32 %v10016, 0.7978846
      %v10081 = vmul.f32 %v10017, 0.7978846
      %v10082 = vmul.f32 %v10018, 0.7978846
      %v10083 = vmul.f32 %v10019, 0.7978846
      %v10084 = vmul.f32 %v10020, 0.7978846
      %v10085 = vmul.f32 %v10021, 0.7978846
      %v10086 = vmul.f32 %v10022, 0.7978846
      %v10087 = vmul.f32 %v10023, 0.7978846
      %v10088 = vmul.f32 %v10024, 0.7978846
      %v10089 = vmul.f32 %v10025, 0.7978846
      %v10090 = vmul.f32 %v10026, 0.7978846
      %v10091 = vmul.f32 %v10027, 0.7978846
      %v10092 = vmul.f32 %v10028, 0.7978846
      %v10093 = vmul.f32 %v10029, 0.7978846
      %v10094 = vmul.f32 %v10030, 0.7978846
      %v10095 = vmul.f32 %v10031, 0.7978846
      %v10096 = vmul.f32 %v10032, 0.7978846
      %v10097 = vmul.f32 %v10033, 0.7978846
      %v10098 = vmul.f32 %v10034, 0.7978846
      %v10099 = vmul.f32 %v10035, 0.7978846
      %v10100 = vmul.f32 %v10036, 0.7978846
      %v10101 = vmul.f32 %v10037, 0.7978846
      %v10102 = vmul.f32 %v10038, 0.7978846
      %v10103 = vmul.f32 %v10039, 0.7978846
      %v10104 = vmul.f32 %v10040, 0.7978846
      %v10105 = vmul.f32 %v10041, 0.7978846
      %v10106 = vmul.f32 %v10042, 0.7978846
      %v10107 = vmul.f32 %v10043, 0.7978846
      %v10108 = vmul.f32 %v10044, 0.7978846
      %v10109 = vmul.f32 %v10045, 0.7978846
      %v10110 = vmul.f32 %v10046, 0.7978846
      %v10111 = vmul.f32 %v10047, 0.7978846
      %v10112 = vmul.f32 %v10048, 0.7978846
      %v10113 = vmul.f32 %v10049, 0.7978846
      %v10114 = vmul.f32 %v10050, 0.7978846
      %v10115 = vmul.f32 %v10051, 0.7978846
      %v10116 = vmul.f32 %v10052, 0.7978846
      %v10117 = vmul.f32 %v10053, 0.7978846
      %v10118 = vmul.f32 %v10054, 0.7978846
      %v10119 = vmul.f32 %v10055, 0.7978846
      %v10120 = vmul.f32 %v10056, 0.7978846
      %v10121 = vmul.f32 %v10057, 0.7978846
      %v10122 = vmul.f32 %v10058, 0.7978846
      %v10123 = vmul.f32 %v10059, 0.7978846
      %v10124 = vmul.f32 %v10060, 0.7978846
      %v10125 = vmul.f32 %v10061, 0.7978846
      %v10126 = vmul.f32 %v10062, 0.7978846
      %v10127 = vmul.f32 %v10063, 0.7978846
      %v10128 = vmul.f32 %v10064, 0.7978846
      %v10129 = vmul.f32 %v10065, 0.7978846
      %v10130 = vmul.f32 %v10066, 0.7978846
      %v10131 = vmul.f32 %v10067, 0.7978846
      %v10132 = vmul.f32 %v10068, 0.7978846
      %v10133 = vmul.f32 %v10069, 0.7978846
      %v10134 = vmul.f32 %v10070, 0.7978846
      %v10135 = vmul.f32 %v10071, 0.7978846
      %v10136 = vmul.f32 %v10072, 0.7978846
      %v10137 = vmul.f32 %v10073, 0.7978846
      %v10138 = vmul.f32 %v10074, 0.7978846
      %v10139 = vmul.f32 %v10075, 0.7978846
      %v10140 = vmul.f32 %v10076, 0.7978846
      %v10141 = vmul.f32 %v10077, 0.7978846
      %v10142 = vmul.f32 %v10078, 0.7978846
      %v10143 = vtanh.pop %v10079
      %v10144 = vtanh.pop %v10080
      %v10145 = vtanh.pop %v10081
      %v10146 = vtanh.pop %v10082
      %v10147 = vtanh.pop %v10083
      %v10148 = vtanh.pop %v10084
      %v10149 = vtanh.pop %v10085
      %v10150 = vtanh.pop %v10086
      %v10151 = vtanh.pop %v10087
      %v10152 = vtanh.pop %v10088
      %v10153 = vtanh.pop %v10089
      %v10154 = vtanh.pop %v10090
      %v10155 = vtanh.pop %v10091
      %v10156 = vtanh.pop %v10092
      %v10157 = vtanh.pop %v10093
      %v10158 = vtanh.pop %v10094
      %v10159 = vtanh.pop %v10095
      %v10160 = vtanh.pop %v10096
      %v10161 = vtanh.pop %v10097
      %v10162 = vtanh.pop %v10098
      %v10163 = vtanh.pop %v10099
      %v10164 = vtanh.pop %v10100
      %v10165 = vtanh.pop %v10101
      %v10166 = vtanh.pop %v10102
      %v10167 = vtanh.pop %v10103
      %v10168 = vtanh.pop %v10104
      %v10169 = vtanh.pop %v10105
      %v10170 = vtanh.pop %v10106
      %v10171 = vtanh.pop %v10107
      %v10172 = vtanh.pop %v10108
      %v10173 = vtanh.pop %v10109
      %v10174 = vtanh.pop %v10110
      %v10175 = vtanh.pop %v10111
      %v10176 = vtanh.pop %v10112
      %v10177 = vtanh.pop %v10113
      %v10178 = vtanh.pop %v10114
      %v10179 = vtanh.pop %v10115
      %v10180 = vtanh.pop %v10116
      %v10181 = vtanh.pop %v10117
      %v10182 = vtanh.pop %v10118
      %v10183 = vtanh.pop %v10119
      %v10184 = vtanh.pop %v10120
      %v10185 = vtanh.pop %v10121
      %v10186 = vtanh.pop %v10122
      %v10187 = vtanh.pop %v10123
      %v10188 = vtanh.pop %v10124
      %v10189 = vtanh.pop %v10125
      %v10190 = vtanh.pop %v10126
      %v10191 = vtanh.pop %v10127
      %v10192 = vtanh.pop %v10128
      %v10193 = vtanh.pop %v10129
      %v10194 = vtanh.pop %v10130
      %v10195 = vtanh.pop %v10131
      %v10196 = vtanh.pop %v10132
      %v10197 = vtanh.pop %v10133
      %v10198 = vtanh.pop %v10134
      %v10199 = vtanh.pop %v10135
      %v10200 = vtanh.pop %v10136
      %v10201 = vtanh.pop %v10137
      %v10202 = vtanh.pop %v10138
      %v10203 = vtanh.pop %v10139
      %v10204 = vtanh.pop %v10140
      %v10205 = vtanh.pop %v10141
      %v10206 = vtanh.pop %v10142
      %v10207 = vadd.f32 %v10143, 1.0
      %v10208 = vadd.f32 %v10144, 1.0
      %v10209 = vadd.f32 %v10145, 1.0
      %v10210 = vadd.f32 %v10146, 1.0
      %v10211 = vadd.f32 %v10147, 1.0
      %v10212 = vadd.f32 %v10148, 1.0
      %v10213 = vadd.f32 %v10149, 1.0
      %v10214 = vadd.f32 %v10150, 1.0
      %v10215 = vadd.f32 %v10151, 1.0
      %v10216 = vadd.f32 %v10152, 1.0
      %v10217 = vadd.f32 %v10153, 1.0
      %v10218 = vadd.f32 %v10154, 1.0
      %v10219 = vadd.f32 %v10155, 1.0
      %v10220 = vadd.f32 %v10156, 1.0
      %v10221 = vadd.f32 %v10157, 1.0
      %v10222 = vadd.f32 %v10158, 1.0
      %v10223 = vadd.f32 %v10159, 1.0
      %v10224 = vadd.f32 %v10160, 1.0
      %v10225 = vadd.f32 %v10161, 1.0
      %v10226 = vadd.f32 %v10162, 1.0
      %v10227 = vadd.f32 %v10163, 1.0
      %v10228 = vadd.f32 %v10164, 1.0
      %v10229 = vadd.f32 %v10165, 1.0
      %v10230 = vadd.f32 %v10166, 1.0
      %v10231 = vadd.f32 %v10167, 1.0
      %v10232 = vadd.f32 %v10168, 1.0
      %v10233 = vadd.f32 %v10169, 1.0
      %v10234 = vadd.f32 %v10170, 1.0
      %v10235 = vadd.f32 %v10171, 1.0
      %v10236 = vadd.f32 %v10172, 1.0
      %v10237 = vadd.f32 %v10173, 1.0
      %v10238 = vadd.f32 %v10174, 1.0
      %v10239 = vadd.f32 %v10175, 1.0
      %v10240 = vadd.f32 %v10176, 1.0
      %v10241 = vadd.f32 %v10177, 1.0
      %v10242 = vadd.f32 %v10178, 1.0
      %v10243 = vadd.f32 %v10179, 1.0
      %v10244 = vadd.f32 %v10180, 1.0
      %v10245 = vadd.f32 %v10181, 1.0
      %v10246 = vadd.f32 %v10182, 1.0
      %v10247 = vadd.f32 %v10183, 1.0
      %v10248 = vadd.f32 %v10184, 1.0
      %v10249 = vadd.f32 %v10185, 1.0
      %v10250 = vadd.f32 %v10186, 1.0
      %v10251 = vadd.f32 %v10187, 1.0
      %v10252 = vadd.f32 %v10188, 1.0
      %v10253 = vadd.f32 %v10189, 1.0
      %v10254 = vadd.f32 %v10190, 1.0
      %v10255 = vadd.f32 %v10191, 1.0
      %v10256 = vadd.f32 %v10192, 1.0
      %v10257 = vadd.f32 %v10193, 1.0
      %v10258 = vadd.f32 %v10194, 1.0
      %v10259 = vadd.f32 %v10195, 1.0
      %v10260 = vadd.f32 %v10196, 1.0
      %v10261 = vadd.f32 %v10197, 1.0
      %v10262 = vadd.f32 %v10198, 1.0
      %v10263 = vadd.f32 %v10199, 1.0
      %v10264 = vadd.f32 %v10200, 1.0
      %v10265 = vadd.f32 %v10201, 1.0
      %v10266 = vadd.f32 %v10202, 1.0
      %v10267 = vadd.f32 %v10203, 1.0
      %v10268 = vadd.f32 %v10204, 1.0
      %v10269 = vadd.f32 %v10205, 1.0
      %v10270 = vadd.f32 %v10206, 1.0
      %v10271 = vmul.f32 %v9759, %v10207
      %v10272 = vmul.f32 %v9760, %v10208
      %v10273 = vmul.f32 %v9761, %v10209
      %v10274 = vmul.f32 %v9762, %v10210
      %v10275 = vmul.f32 %v9763, %v10211
      %v10276 = vmul.f32 %v9764, %v10212
      %v10277 = vmul.f32 %v9765, %v10213
      %v10278 = vmul.f32 %v9766, %v10214
      %v10279 = vmul.f32 %v9767, %v10215
      %v10280 = vmul.f32 %v9768, %v10216
      %v10281 = vmul.f32 %v9769, %v10217
      %v10282 = vmul.f32 %v9770, %v10218
      %v10283 = vmul.f32 %v9771, %v10219
      %v10284 = vmul.f32 %v9772, %v10220
      %v10285 = vmul.f32 %v9773, %v10221
      %v10286 = vmul.f32 %v9774, %v10222
      %v10287 = vmul.f32 %v9775, %v10223
      %v10288 = vmul.f32 %v9776, %v10224
      %v10289 = vmul.f32 %v9777, %v10225
      %v10290 = vmul.f32 %v9778, %v10226
      %v10291 = vmul.f32 %v9779, %v10227
      %v10292 = vmul.f32 %v9780, %v10228
      %v10293 = vmul.f32 %v9781, %v10229
      %v10294 = vmul.f32 %v9782, %v10230
      %v10295 = vmul.f32 %v9783, %v10231
      %v10296 = vmul.f32 %v9784, %v10232
      %v10297 = vmul.f32 %v9785, %v10233
      %v10298 = vmul.f32 %v9786, %v10234
      %v10299 = vmul.f32 %v9787, %v10235
      %v10300 = vmul.f32 %v9788, %v10236
      %v10301 = vmul.f32 %v9789, %v10237
      %v10302 = vmul.f32 %v9790, %v10238
      %v10303 = vmul.f32 %v9791, %v10239
      %v10304 = vmul.f32 %v9792, %v10240
      %v10305 = vmul.f32 %v9793, %v10241
      %v10306 = vmul.f32 %v9794, %v10242
      %v10307 = vmul.f32 %v9795, %v10243
      %v10308 = vmul.f32 %v9796, %v10244
      %v10309 = vmul.f32 %v9797, %v10245
      %v10310 = vmul.f32 %v9798, %v10246
      %v10311 = vmul.f32 %v9799, %v10247
      %v10312 = vmul.f32 %v9800, %v10248
      %v10313 = vmul.f32 %v9801, %v10249
      %v10314 = vmul.f32 %v9802, %v10250
      %v10315 = vmul.f32 %v9803, %v10251
      %v10316 = vmul.f32 %v9804, %v10252
      %v10317 = vmul.f32 %v9805, %v10253
      %v10318 = vmul.f32 %v9806, %v10254
      %v10319 = vmul.f32 %v9807, %v10255
      %v10320 = vmul.f32 %v9808, %v10256
      %v10321 = vmul.f32 %v9809, %v10257
      %v10322 = vmul.f32 %v9810, %v10258
      %v10323 = vmul.f32 %v9811, %v10259
      %v10324 = vmul.f32 %v9812, %v10260
      %v10325 = vmul.f32 %v9813, %v10261
      %v10326 = vmul.f32 %v9814, %v10262
      %v10327 = vmul.f32 %v9815, %v10263
      %v10328 = vmul.f32 %v9816, %v10264
      %v10329 = vmul.f32 %v9817, %v10265
      %v10330 = vmul.f32 %v9818, %v10266
      %v10331 = vmul.f32 %v9819, %v10267
      %v10332 = vmul.f32 %v9820, %v10268
      %v10333 = vmul.f32 %v9821, %v10269
      %v10334 = vmul.f32 %v9822, %v10270
      %v10335 = vpack.c.bf16 %v10273, %v10271
      %v10336 = vpack.c.bf16 %v10274, %v10272
      %v10337 = vpack.c.bf16 %v10277, %v10275
      %v10338 = vpack.c.bf16 %v10278, %v10276
      %v10339 = vpack.c.bf16 %v10281, %v10279
      %v10340 = vpack.c.bf16 %v10282, %v10280
      %v10341 = vpack.c.bf16 %v10285, %v10283
      %v10342 = vpack.c.bf16 %v10286, %v10284
      %v10343 = vpack.c.bf16 %v10289, %v10287
      %v10344 = vpack.c.bf16 %v10290, %v10288
      %v10345 = vpack.c.bf16 %v10293, %v10291
      %v10346 = vpack.c.bf16 %v10294, %v10292
      %v10347 = vpack.c.bf16 %v10297, %v10295
      %v10348 = vpack.c.bf16 %v10298, %v10296
      %v10349 = vpack.c.bf16 %v10301, %v10299
      %v10350 = vpack.c.bf16 %v10302, %v10300
      %v10351 = vpack.c.bf16 %v10305, %v10303
      %v10352 = vpack.c.bf16 %v10306, %v10304
      %v10353 = vpack.c.bf16 %v10309, %v10307
      %v10354 = vpack.c.bf16 %v10310, %v10308
      %v10355 = vpack.c.bf16 %v10313, %v10311
      %v10356 = vpack.c.bf16 %v10314, %v10312
      %v10357 = vpack.c.bf16 %v10317, %v10315
      %v10358 = vpack.c.bf16 %v10318, %v10316
      %v10359 = vpack.c.bf16 %v10321, %v10319
      %v10360 = vpack.c.bf16 %v10322, %v10320
      %v10361 = vpack.c.bf16 %v10325, %v10323
      %v10362 = vpack.c.bf16 %v10326, %v10324
      %v10363 = vpack.c.bf16 %v10329, %v10327
      %v10364 = vpack.c.bf16 %v10330, %v10328
      %v10365 = vpack.c.bf16 %v10333, %v10331
      %v10366 = vpack.c.bf16 %v10334, %v10332
      %v10367 = vld [vmem:[%s14] sm:$0xf]
      %v10368 = vld [vmem:[%s14 + $0x4] sm:$0xf]
      %v10369 = vld [vmem:[%s14 + $0x8] sm:$0xf]
      %v10370 = vld [vmem:[%s14 + $0xc] sm:$0xf]
      %v10371 = vld [vmem:[%s14 + $0x10] sm:$0xf]
      %v10372 = vld [vmem:[%s14 + $0x14] sm:$0xf]
      %v10373 = vld [vmem:[%s14 + $0x18] sm:$0xf]
      %v10374 = vld [vmem:[%s14 + $0x1c] sm:$0xf]
      %v10375 = vld [vmem:[%s14 + $0x20] sm:$0xf]
      %v10376 = vld [vmem:[%s14 + $0x24] sm:$0xf]
      %v10377 = vld [vmem:[%s14 + $0x28] sm:$0xf]
      %v10378 = vld [vmem:[%s14 + $0x2c] sm:$0xf]
      %v10379 = vld [vmem:[%s14 + $0x30] sm:$0xf]
      %v10380 = vld [vmem:[%s14 + $0x34] sm:$0xf]
      %v10381 = vld [vmem:[%s14 + $0x38] sm:$0xf]
      %v10382 = vld [vmem:[%s14 + $0x3c] sm:$0xf]
      %v10383 = vld [vmem:[%s14 + $0x40] sm:$0xf]
      %v10384 = vld [vmem:[%s14 + $0x44] sm:$0xf]
      %v10385 = vld [vmem:[%s14 + $0x48] sm:$0xf]
      %v10386 = vld [vmem:[%s14 + $0x4c] sm:$0xf]
      %v10387 = vld [vmem:[%s14 + $0x50] sm:$0xf]
      %v10388 = vld [vmem:[%s14 + $0x54] sm:$0xf]
      %v10389 = vld [vmem:[%s14 + $0x58] sm:$0xf]
      %v10390 = vld [vmem:[%s14 + $0x5c] sm:$0xf]
      %v10391 = vld [vmem:[%s14 + $0x60] sm:$0xf]
      %v10392 = vld [vmem:[%s14 + $0x64] sm:$0xf]
      %v10393 = vld [vmem:[%s14 + $0x68] sm:$0xf]
      %v10394 = vld [vmem:[%s14 + $0x6c] sm:$0xf]
      %v10395 = vld [vmem:[%s14 + $0x70] sm:$0xf]
      %v10396 = vld [vmem:[%s14 + $0x74] sm:$0xf]
      %v10397 = vld [vmem:[%s14 + $0x78] sm:$0xf]
      %v10398 = vld [vmem:[%s14 + $0x7c] sm:$0xf]
      %v10399 = vld [vmem:[%s15] sm:$0x1]
      %v10401 = vperm.slane %v10399, 0
      %v10435 = vunpack.c.l.b16 %v10367
      %v10436 = vunpack.c.l.b16 %v10368
      %v10437 = vunpack.c.l.b16 %v10369
      %v10438 = vunpack.c.l.b16 %v10370
      %v10439 = vunpack.c.l.b16 %v10371
      %v10440 = vunpack.c.l.b16 %v10372
      %v10441 = vunpack.c.l.b16 %v10373
      %v10442 = vunpack.c.l.b16 %v10374
      %v10443 = vunpack.c.l.b16 %v10375
      %v10444 = vunpack.c.l.b16 %v10376
      %v10445 = vunpack.c.l.b16 %v10377
      %v10446 = vunpack.c.l.b16 %v10378
      %v10447 = vunpack.c.l.b16 %v10379
      %v10448 = vunpack.c.l.b16 %v10380
      %v10449 = vunpack.c.l.b16 %v10381
      %v10450 = vunpack.c.l.b16 %v10382
      %v10451 = vunpack.c.l.b16 %v10383
      %v10452 = vunpack.c.l.b16 %v10384
      %v10453 = vunpack.c.l.b16 %v10385
      %v10454 = vunpack.c.l.b16 %v10386
      %v10455 = vunpack.c.l.b16 %v10387
      %v10456 = vunpack.c.l.b16 %v10388
      %v10457 = vunpack.c.l.b16 %v10389
      %v10458 = vunpack.c.l.b16 %v10390
      %v10459 = vunpack.c.l.b16 %v10391
      %v10460 = vunpack.c.l.b16 %v10392
      %v10461 = vunpack.c.l.b16 %v10393
      %v10462 = vunpack.c.l.b16 %v10394
      %v10463 = vunpack.c.l.b16 %v10395
      %v10464 = vunpack.c.l.b16 %v10396
      %v10465 = vunpack.c.l.b16 %v10397
      %v10466 = vunpack.c.l.b16 %v10398
      %v10467 = vpack.c.b16 %v10436, %v10435
      %v10468 = vpack.c.b16 %v10438, %v10437
      %v10469 = vpack.c.b16 %v10440, %v10439
      %v10470 = vpack.c.b16 %v10442, %v10441
      %v10471 = vpack.c.b16 %v10444, %v10443
      %v10472 = vpack.c.b16 %v10446, %v10445
      %v10473 = vpack.c.b16 %v10448, %v10447
      %v10474 = vpack.c.b16 %v10450, %v10449
      %v10475 = vpack.c.b16 %v10452, %v10451
      %v10476 = vpack.c.b16 %v10454, %v10453
      %v10477 = vpack.c.b16 %v10456, %v10455
      %v10478 = vpack.c.b16 %v10458, %v10457
      %v10479 = vpack.c.b16 %v10460, %v10459
      %v10480 = vpack.c.b16 %v10462, %v10461
      %v10481 = vpack.c.b16 %v10464, %v10463
      %v10482 = vpack.c.b16 %v10466, %v10465
      %10499 = vmatpush.bf16.msra.mxu0 %v10474
      %10500 = vmatpush.bf16.msra.mxu0 %v10473
      %10501 = vmatpush.bf16.msra.mxu0 %v10472
      %10502 = vmatpush.bf16.msra.mxu0 %v10471
      %10503 = vmatpush.bf16.msra.mxu0 %v10470
      %10504 = vmatpush.bf16.msra.mxu0 %v10469
      %10505 = vmatpush.bf16.msra.mxu0 %v10468
      %10506 = vmatpush.bf16.msra.mxu0 %v10467
      %10507 = vmatmul.bf16.gmra.mxu0 %v10335
      %v10508 = vpop.f32.mrf.mxu0
      %v10509 = vadd.f32 %v10401, %v10508
      %v10510 = vpop.f32.mrf.mxu0
      %v10511 = vadd.f32 %v10401, %v10510
      %10512 = vmatmul.bf16.gmra.mxu0 %v10337
      %v10513 = vpop.f32.mrf.mxu0
      %v10514 = vadd.f32 %v10401, %v10513
      %v10515 = vpop.f32.mrf.mxu0
      %v10516 = vadd.f32 %v10401, %v10515
      %10517 = vmatmul.bf16.gmra.mxu0 %v10339
      %v10518 = vpop.f32.mrf.mxu0
      %v10519 = vadd.f32 %v10401, %v10518
      %v10520 = vpop.f32.mrf.mxu0
      %v10521 = vadd.f32 %v10401, %v10520
      %10522 = vmatmul.bf16.gmra.mxu0 %v10341
      %v10523 = vpop.f32.mrf.mxu0
      %v10524 = vadd.f32 %v10401, %v10523
      %v10525 = vpop.f32.mrf.mxu0
      %v10526 = vadd.f32 %v10401, %v10525
      %10527 = vmatmul.bf16.gmra.mxu0 %v10343
      %v10528 = vpop.f32.mrf.mxu0
      %v10529 = vadd.f32 %v10401, %v10528
      %v10530 = vpop.f32.mrf.mxu0
      %v10531 = vadd.f32 %v10401, %v10530
      %10532 = vmatmul.bf16.gmra.mxu0 %v10345
      %v10533 = vpop.f32.mrf.mxu0
      %v10534 = vadd.f32 %v10401, %v10533
      %v10535 = vpop.f32.mrf.mxu0
      %v10536 = vadd.f32 %v10401, %v10535
      %10537 = vmatmul.bf16.gmra.mxu0 %v10347
      %v10538 = vpop.f32.mrf.mxu0
      %v10539 = vadd.f32 %v10401, %v10538
      %v10540 = vpop.f32.mrf.mxu0
      %v10541 = vadd.f32 %v10401, %v10540
      %10542 = vmatmul.bf16.gmra.mxu0 %v10349
      %v10543 = vpop.f32.mrf.mxu0
      %v10544 = vadd.f32 %v10401, %v10543
      %v10545 = vpop.f32.mrf.mxu0
      %v10546 = vadd.f32 %v10401, %v10545
      %10547 = vmatmul.bf16.gmra.mxu0 %v10351
      %v10548 = vpop.f32.mrf.mxu0
      %v10549 = vadd.f32 %v10401, %v10548
      %v10550 = vpop.f32.mrf.mxu0
      %v10551 = vadd.f32 %v10401, %v10550
      %10552 = vmatmul.bf16.gmra.mxu0 %v10353
      %v10553 = vpop.f32.mrf.mxu0
      %v10554 = vadd.f32 %v10401, %v10553
      %v10555 = vpop.f32.mrf.mxu0
      %v10556 = vadd.f32 %v10401, %v10555
      %10557 = vmatmul.bf16.gmra.mxu0 %v10355
      %v10558 = vpop.f32.mrf.mxu0
      %v10559 = vadd.f32 %v10401, %v10558
      %v10560 = vpop.f32.mrf.mxu0
      %v10561 = vadd.f32 %v10401, %v10560
      %10562 = vmatmul.bf16.gmra.mxu0 %v10357
      %v10563 = vpop.f32.mrf.mxu0
      %v10564 = vadd.f32 %v10401, %v10563
      %v10565 = vpop.f32.mrf.mxu0
      %v10566 = vadd.f32 %v10401, %v10565
      %10567 = vmatmul.bf16.gmra.mxu0 %v10359
      %v10568 = vpop.f32.mrf.mxu0
      %v10569 = vadd.f32 %v10401, %v10568
      %v10570 = vpop.f32.mrf.mxu0
      %v10571 = vadd.f32 %v10401, %v10570
      %10572 = vmatmul.bf16.gmra.mxu0 %v10361
      %v10573 = vpop.f32.mrf.mxu0
      %v10574 = vadd.f32 %v10401, %v10573
      %v10575 = vpop.f32.mrf.mxu0
      %v10576 = vadd.f32 %v10401, %v10575
      %10577 = vmatmul.bf16.gmra.mxu0 %v10363
      %v10578 = vpop.f32.mrf.mxu0
      %v10579 = vadd.f32 %v10401, %v10578
      %v10580 = vpop.f32.mrf.mxu0
      %v10581 = vadd.f32 %v10401, %v10580
      %10582 = vmatmul.bf16.gmra.mxu0 %v10365
      %v10583 = vpop.f32.mrf.mxu0
      %v10584 = vadd.f32 %v10401, %v10583
      %v10585 = vpop.f32.mrf.mxu0
      %v10586 = vadd.f32 %v10401, %v10585
      %10587 = vdwg.mxu0
      %10588 = vmatpush.bf16.msra.mxu0 %v10482
      %10589 = vmatpush.bf16.msra.mxu0 %v10481
      %10590 = vmatpush.bf16.msra.mxu0 %v10480
      %10591 = vmatpush.bf16.msra.mxu0 %v10479
      %10592 = vmatpush.bf16.msra.mxu0 %v10478
      %10593 = vmatpush.bf16.msra.mxu0 %v10477
      %10594 = vmatpush.bf16.msra.mxu0 %v10476
      %10595 = vmatpush.bf16.msra.mxu0 %v10475
      %10596 = vmatmul.bf16.gmra.mxu0 %v10336
      %v10597 = vpop.f32.mrf.mxu0
      %v10598 = vadd.f32 %v10509, %v10597
      %v10599 = vpop.f32.mrf.mxu0
      %v10600 = vadd.f32 %v10511, %v10599
      %10601 = vmatmul.bf16.gmra.mxu0 %v10338
      %v10602 = vpop.f32.mrf.mxu0
      %v10603 = vadd.f32 %v10514, %v10602
      %v10604 = vpop.f32.mrf.mxu0
      %v10605 = vadd.f32 %v10516, %v10604
      %10606 = vmatmul.bf16.gmra.mxu0 %v10340
      %v10607 = vpop.f32.mrf.mxu0
      %v10608 = vadd.f32 %v10519, %v10607
      %v10609 = vpop.f32.mrf.mxu0
      %v10610 = vadd.f32 %v10521, %v10609
      %10611 = vmatmul.bf16.gmra.mxu0 %v10342
      %v10612 = vpop.f32.mrf.mxu0
      %v10613 = vadd.f32 %v10524, %v10612
      %v10614 = vpop.f32.mrf.mxu0
      %v10615 = vadd.f32 %v10526, %v10614
      %10616 = vmatmul.bf16.gmra.mxu0 %v10344
      %v10617 = vpop.f32.mrf.mxu0
      %v10618 = vadd.f32 %v10529, %v10617
      %v10619 = vpop.f32.mrf.mxu0
      %v10620 = vadd.f32 %v10531, %v10619
      %10621 = vmatmul.bf16.gmra.mxu0 %v10346
      %v10622 = vpop.f32.mrf.mxu0
      %v10623 = vadd.f32 %v10534, %v10622
      %v10624 = vpop.f32.mrf.mxu0
      %v10625 = vadd.f32 %v10536, %v10624
      %10626 = vmatmul.bf16.gmra.mxu0 %v10348
      %v10627 = vpop.f32.mrf.mxu0
      %v10628 = vadd.f32 %v10539, %v10627
      %v10629 = vpop.f32.mrf.mxu0
      %v10630 = vadd.f32 %v10541, %v10629
      %10631 = vmatmul.bf16.gmra.mxu0 %v10350
      %v10632 = vpop.f32.mrf.mxu0
      %v10633 = vadd.f32 %v10544, %v10632
      %v10634 = vpop.f32.mrf.mxu0
      %v10635 = vadd.f32 %v10546, %v10634
      %10636 = vmatmul.bf16.gmra.mxu0 %v10352
      %v10637 = vpop.f32.mrf.mxu0
      %v10638 = vadd.f32 %v10549, %v10637
      %v10639 = vpop.f32.mrf.mxu0
      %v10640 = vadd.f32 %v10551, %v10639
      %10641 = vmatmul.bf16.gmra.mxu0 %v10354
      %v10642 = vpop.f32.mrf.mxu0
      %v10643 = vadd.f32 %v10554, %v10642
      %v10644 = vpop.f32.mrf.mxu0
      %v10645 = vadd.f32 %v10556, %v10644
      %10646 = vmatmul.bf16.gmra.mxu0 %v10356
      %v10647 = vpop.f32.mrf.mxu0
      %v10648 = vadd.f32 %v10559, %v10647
      %v10649 = vpop.f32.mrf.mxu0
      %v10650 = vadd.f32 %v10561, %v10649
      %10651 = vmatmul.bf16.gmra.mxu0 %v10358
      %v10652 = vpop.f32.mrf.mxu0
      %v10653 = vadd.f32 %v10564, %v10652
      %v10654 = vpop.f32.mrf.mxu0
      %v10655 = vadd.f32 %v10566, %v10654
      %10656 = vmatmul.bf16.gmra.mxu0 %v10360
      %v10657 = vpop.f32.mrf.mxu0
      %v10658 = vadd.f32 %v10569, %v10657
      %v10659 = vpop.f32.mrf.mxu0
      %v10660 = vadd.f32 %v10571, %v10659
      %10661 = vmatmul.bf16.gmra.mxu0 %v10362
      %v10662 = vpop.f32.mrf.mxu0
      %v10663 = vadd.f32 %v10574, %v10662
      %v10664 = vpop.f32.mrf.mxu0
      %v10665 = vadd.f32 %v10576, %v10664
      %10666 = vmatmul.bf16.gmra.mxu0 %v10364
      %v10667 = vpop.f32.mrf.mxu0
      %v10668 = vadd.f32 %v10579, %v10667
      %v10669 = vpop.f32.mrf.mxu0
      %v10670 = vadd.f32 %v10581, %v10669
      %10671 = vmatmul.bf16.gmra.mxu0 %v10366
      %v10672 = vpop.f32.mrf.mxu0
      %v10673 = vadd.f32 %v10584, %v10672
      %v10674 = vpop.f32.mrf.mxu0
      %v10675 = vadd.f32 %v10586, %v10674
      %10676 = vdwg.mxu0
      %v10677 = vadd.f32 %v8655, %v10598
      %v10678 = vadd.f32 %v8656, %v10600
      %v10679 = vadd.f32 %v8657, %v10603
      %v10680 = vadd.f32 %v8658, %v10605
      %v10681 = vadd.f32 %v8659, %v10608
      %v10682 = vadd.f32 %v8660, %v10610
      %v10683 = vadd.f32 %v8661, %v10613
      %v10684 = vadd.f32 %v8662, %v10615
      %v10685 = vadd.f32 %v8663, %v10618
      %v10686 = vadd.f32 %v8664, %v10620
      %v10687 = vadd.f32 %v8665, %v10623
      %v10688 = vadd.f32 %v8666, %v10625
      %v10689 = vadd.f32 %v8667, %v10628
      %v10690 = vadd.f32 %v8668, %v10630
      %v10691 = vadd.f32 %v8669, %v10633
      %v10692 = vadd.f32 %v8670, %v10635
      %v10693 = vadd.f32 %v8671, %v10638
      %v10694 = vadd.f32 %v8672, %v10640
      %v10695 = vadd.f32 %v8673, %v10643
      %v10696 = vadd.f32 %v8674, %v10645
      %v10697 = vadd.f32 %v8675, %v10648
      %v10698 = vadd.f32 %v8676, %v10650
      %v10699 = vadd.f32 %v8677, %v10653
      %v10700 = vadd.f32 %v8678, %v10655
      %v10701 = vadd.f32 %v8679, %v10658
      %v10702 = vadd.f32 %v8680, %v10660
      %v10703 = vadd.f32 %v8681, %v10663
      %v10704 = vadd.f32 %v8682, %v10665
      %v10705 = vadd.f32 %v8683, %v10668
      %v10706 = vadd.f32 %v8684, %v10670
      %v10707 = vadd.f32 %v8685, %v10673
      %v10708 = vadd.f32 %v8686, %v10675
      %10709 = vst.msk [vmem:[%s521] sm:$0xff] %vm555, %v10677
      %10710 = vst.msk [vmem:[%s521 + $0x8] sm:$0xff] %vm555, %v10678
      %10711 = vst.msk [vmem:[%s521 + $0x10] sm:$0xff] %vm555, %v10679
      %10712 = vst.msk [vmem:[%s521 + $0x18] sm:$0xff] %vm555, %v10680
      %10713 = vst.msk [vmem:[%s521 + $0x20] sm:$0xff] %vm555, %v10681
      %10714 = vst.msk [vmem:[%s521 + $0x28] sm:$0xff] %vm555, %v10682
      %10715 = vst.msk [vmem:[%s521 + $0x30] sm:$0xff] %vm555, %v10683
      %10716 = vst.msk [vmem:[%s521 + $0x38] sm:$0xff] %vm555, %v10684
      %10717 = vst.msk [vmem:[%s521 + $0x40] sm:$0xff] %vm555, %v10685
      %10718 = vst.msk [vmem:[%s521 + $0x48] sm:$0xff] %vm555, %v10686
      %10719 = vst.msk [vmem:[%s521 + $0x50] sm:$0xff] %vm555, %v10687
      %10720 = vst.msk [vmem:[%s521 + $0x58] sm:$0xff] %vm555, %v10688
      %10721 = vst.msk [vmem:[%s521 + $0x60] sm:$0xff] %vm555, %v10689
      %10722 = vst.msk [vmem:[%s521 + $0x68] sm:$0xff] %vm555, %v10690
      %10723 = vst.msk [vmem:[%s521 + $0x70] sm:$0xff] %vm555, %v10691
      %10724 = vst.msk [vmem:[%s521 + $0x78] sm:$0xff] %vm555, %v10692
      %10725 = vst.msk [vmem:[%s521 + $0x80] sm:$0xff] %vm555, %v10693
      %10726 = vst.msk [vmem:[%s521 + $0x88] sm:$0xff] %vm555, %v10694
      %10727 = vst.msk [vmem:[%s521 + $0x90] sm:$0xff] %vm555, %v10695
      %10728 = vst.msk [vmem:[%s521 + $0x98] sm:$0xff] %vm555, %v10696
      %10729 = vst.msk [vmem:[%s521 + $0xa0] sm:$0xff] %vm555, %v10697
      %10730 = vst.msk [vmem:[%s521 + $0xa8] sm:$0xff] %vm555, %v10698
      %10731 = vst.msk [vmem:[%s521 + $0xb0] sm:$0xff] %vm555, %v10699
      %10732 = vst.msk [vmem:[%s521 + $0xb8] sm:$0xff] %vm555, %v10700
      %10733 = vst.msk [vmem:[%s521 + $0xc0] sm:$0xff] %vm555, %v10701
      %10734 = vst.msk [vmem:[%s521 + $0xc8] sm:$0xff] %vm555, %v10702
      %10735 = vst.msk [vmem:[%s521 + $0xd0] sm:$0xff] %vm555, %v10703
      %10736 = vst.msk [vmem:[%s521 + $0xd8] sm:$0xff] %vm555, %v10704
      %10737 = vst.msk [vmem:[%s521 + $0xe0] sm:$0xff] %vm555, %v10705
      %10738 = vst.msk [vmem:[%s521 + $0xe8] sm:$0xff] %vm555, %v10706
      %10739 = vst.msk [vmem:[%s521 + $0xf0] sm:$0xff] %vm555, %v10707
      %10740 = vst.msk [vmem:[%s521 + $0xf8] sm:$0xff] %vm555, %v10708
      %p10741 = scmp.lt.s32.totalorder %s27, 1
      %s10742 = scalar_select %p10741, %s27, 1
      %s10743 = smul.addr %s10742, 32
      %s10744 = smul.addr %s10743, 8
      %s10745 = scalar_lea.vmem %s16, %s10744
      // Predicated region
      $region85: #{tiny_vit_block_forward.1} parent=83 // pred_check
        %p10746 = pneg %p386
      $region86: #{tiny_vit_block_forward.1} parent=83 // pred_check_branch
        %10748 = sbr.rel (%p10746) target = $region88
      $region87: #{tiny_vit_block_forward.1} parent=83 // pred_region
        _
      $region88: #{tiny_vit_block_forward.1} parent=83 // pred_fallthru
        _
    $region84: #{tiny_vit_block_forward.1} parent=5 // pred_fallthru
      _
    %p10749 = scmp.le.s32.totalorder 2, %s22
    // Predicated region
    $region89: #{tiny_vit_block_forward.1} parent=5 // pred_check
      %p10750 = pneg %p10749
    $region90: #{tiny_vit_block_forward.1} parent=5 // pred_check_branch
      %10752 = sbr.rel (%p10750) target = $region92
    $region91: #{tiny_vit_block_forward.1} parent=5 // pred_region
      %s10753 = ssub.s32 %s22, 2
      // Predicated region
      $region93: #{tiny_vit_block_forward.1} parent=91 // pred_check
        %p10754 = pneg %p392
      $region94: #{tiny_vit_block_forward.1} parent=91 // pred_check_branch
        %10756 = sbr.rel (%p10754) target = $region96
      $region95: #{tiny_vit_block_forward.1} parent=91 // pred_region
        %p10757 = scmp.lt.s32.totalorder %s28, 1
        %s10758 = scalar_select %p10757, %s28, 1
        %s10759 = smul.addr %s10758, 32
        %s10760 = smul.addr %s10759, 8
        %s10761 = scalar_lea.vmem %s16, %s10760
      $region96: #{tiny_vit_block_forward.1} parent=91 // pred_fallthru
        _
    $region92: #{tiny_vit_block_forward.1} parent=5 // pred_fallthru
      _
  $region6: #{tiny_vit_block_forward.1} parent=0 // loop_footer
    %s26 = sadd.s32 1, %s22
  $region7: #{tiny_vit_block_forward.1} parent=0 // loop_footer_branch
    %21 = sbr.rel target = $region3
  $region8: #{tiny_vit_block_forward.1} parent=0 // loop_exit
    _

</llo_original>
